<compile_context>
chip_gen: v7x
topology: tpu7x:2x2x1
jax: 0.10.0
libtpu: 0.0.40
codegen_flags: <defaults>
</compile_context>

<pallas_src>
import functools

import jax
import jax.numpy as jnp
from jax.experimental import pallas as pl
from jax.experimental.pallas import tpu as pltpu

EPS = 1e-5        # torch.nn.LayerNorm default
NEG_BIG = -1e30   # finite "minus infinity" for the additive mask bias


# ----------------------------- kernel-side math -----------------------------
def _layernorm(x, gamma, beta):
    x = x.astype(jnp.float32)
    mean = jnp.mean(x, axis=-1, keepdims=True)
    var = jnp.mean((x - mean) ** 2, axis=-1, keepdims=True)
    return (x - mean) * jax.lax.rsqrt(var + EPS) * gamma + beta


def _split_heads(t2d, B, S, H, hd):
    """(B*S, H*hd) f32 -> (B*H, S, hd): head-major batch for 3D batched matmuls."""
    if B == 1:
        # Rank-3 relayout (cheapest / most robust lowering) when one sample/step.
        return jnp.transpose(t2d.reshape(S, H, hd), (1, 0, 2))
    return jnp.transpose(t2d.reshape(B, S, H, hd), (0, 2, 1, 3)).reshape(B * H, S, hd)


def _merge_heads(t3d, B, S, H, hd):
    """(B*H, S, hd) -> (B*S, H*hd) with torch's (head, head_dim) column order."""
    if B == 1:
        return jnp.transpose(t3d, (1, 0, 2)).reshape(S, H * hd)
    return jnp.transpose(t3d.reshape(B, H, S, hd), (0, 2, 1, 3)).reshape(B * S, H * hd)


def _mhsa(v, k, q, bias, wv, wk, wq, wo, bo, *, heads, head_dim, cdt):
    """Multi-head attention on (B, S, E) tiles; bias is additive (B, Sq, Sk) f32.

    1/sqrt(embed) is already folded into wq on the host. Every matmul is either
    one (B*S, E) @ (E, E) MXU op or one contraction batched over B*heads --
    no per-sample / per-head Python loops, no stack/concat.
    """
    B, Sk, E = v.shape
    Sq = q.shape[1]
    H, hd = heads, head_dim

    # Batched projections: one (B*S, E) @ (E, E) matmul each (MXU-friendly M).
    V = jnp.dot(v.reshape(B * Sk, E).astype(cdt), wv, preferred_element_type=jnp.float32)
    K = jnp.dot(k.reshape(B * Sk, E).astype(cdt), wk, preferred_element_type=jnp.float32)
    Q = jnp.dot(q.reshape(B * Sq, E).astype(cdt), wq, preferred_element_type=jnp.float32)

    Vh = _split_heads(V, B, Sk, H, hd).astype(cdt)
    Kh = _split_heads(K, B, Sk, H, hd).astype(cdt)
    Qh = _split_heads(Q, B, Sq, H, hd).astype(cdt)

    # One batched QK^T; additive mask broadcast over heads.
    energy = jnp.einsum('zqd,zkd->zqk', Qh, Kh, preferred_element_type=jnp.float32)
    energy = (energy.reshape(B, H, Sq, Sk) + bias[:, None]).reshape(B * H, Sq, Sk)

    m = jnp.max(energy, axis=-1, keepdims=True)
    p = jnp.exp(energy - m)
    l = jnp.sum(p, axis=-1, keepdims=True)
    attn = p * pl.reciprocal(l, approx=True)        # EUP reciprocal, not a VPU divide

    # One batched PV, then a single output projection on (B*Sq, E) rows.
    ctx = jnp.einsum('zqk,zkd->zqd', attn.astype(cdt), Vh,
                     preferred_element_type=jnp.float32)
    out = _merge_heads(ctx, B, Sq, H, hd)           # (B*Sq, E), torch head ordering
    out = jnp.dot(out.astype(cdt), wo, preferred_element_type=jnp.float32) + bo
    return out.reshape(B, Sq, E)


def decoder_block_kernel(
    x_ref, val_ref, key_ref, trg_mask_ref, src_mask_ref,
    wq1, wk1, wv1, wo1, bo1, g0, b0,
    wq2, wk2, wv2, wo2, bo2, g1, b1,
    wff1, bff1, wff2, bff2, g2, b2,
    out_ref, *, heads, head_dim, compute_dtype, flatten_out):
    cdt = compute_dtype
    x = x_ref[...]              # (B, Sq, E) f32
    value = val_ref[...]        # (B, Sk, E)
    key = key_ref[...]          # (B, Sk, E)
    B, Sq, E = x.shape

    # int8 {0,1} masks -> additive f32 biases in-kernel (1 byte/elem over HBM).
    trg_bias = (1.0 - trg_mask_ref[...].astype(jnp.float32)) * NEG_BIG
    src_bias = (1.0 - src_mask_ref[...].astype(jnp.float32)) * NEG_BIG

    # --- decoder self-attention + residual + LayerNorm (dropout = identity) ---
    attn = _mhsa(x, x, x, trg_bias,
                 wv1[...], wk1[...], wq1[...], wo1[...], bo1[0],
                 heads=heads, head_dim=head_dim, cdt=cdt)
    query = _layernorm(attn + x, g0[0], b0[0])

    # --- TransformerBlock: cross attention on (value, key, query) ---
    attn2 = _mhsa(value, key, query, src_bias,
                  wv2[...], wk2[...], wq2[...], wo2[...], bo2[0],
                  heads=heads, head_dim=head_dim, cdt=cdt)
    h = _layernorm(attn2 + query, g1[0], b1[0])

    # --- feed-forward: Linear -> ReLU -> Linear on flattened (B*Sq, E) rows ---
    h2 = h.reshape(B * Sq, E)
    ff = jnp.dot(h2.astype(cdt), wff1[...], preferred_element_type=jnp.float32) + bff1[0]
    ff = jnp.maximum(ff, 0.0)
    ff = jnp.dot(ff.astype(cdt), wff2[...], preferred_element_type=jnp.float32) + bff2[0]
    out = _layernorm(ff.reshape(B, Sq, E) + h, g2[0], b2[0])

    if flatten_out:
        out_ref[0] = out.reshape(B, Sq * E)   # lane-dense store for E < 128
    else:
        out_ref[...] = out                    # E >= 128: store is already lane-dense


# ------------------------------- host wrapper --------------------------------
def _pad_axis(a, axis, multiple):
    pad = (-a.shape[axis]) % multiple
    if pad == 0:
        return a
    widths = [(0, 0)] * a.ndim
    widths[axis] = (0, pad)
    return jnp.pad(a, widths)


def _vmem_capacity_bytes():
    try:
        return int(pltpu.get_tpu_info().vmem_capacity_bytes)
    except Exception:
        return 64 * 1024 * 1024        # v7x-conservative fallback


def _step_vmem_bytes(bt, sq, sk, e, f, heads, act_bytes, weight_bytes):
    """Rough per-grid-step VMEM working set (bytes), used for b_tile selection."""
    f32 = 4
    s_max = max(sq, sk)
    acts = 2 * bt * (sq * e + 2 * sk * e) * f32      # x / value / key, double-buffered
    acts += 2 * bt * (sq * sq + sq * sk)             # int8 masks, double-buffered
    acts += 2 * bt * sq * e * f32                    # output, double-buffered
    proj = 3 * bt * s_max * e * (f32 + act_bytes)    # Q/K/V (f32 + compute-dtype copy)
    attn = 3 * bt * heads * sq * s_max * f32         # scores / exp / attn (f32)
    ffn = bt * sq * f * (f32 + act_bytes)            # FFN hidden activations
    return weight_bytes + acts + proj + attn + ffn


def _pick_b_tile(n, sq, target_rows, vmem_budget, step_bytes_fn):
    """Largest batch tile that fits VMEM and <= target rows per step; prefer an
    even grid with >= 2 steps so v7x's two TensorCores split 'parallel' evenly."""
    divisors = [d for d in range(1, n + 1) if n % d == 0]
    fits = [d for d in divisors if step_bytes_fn(d) <= vmem_budget] or [1]
    small = [d for d in fits if d * sq <= target_rows] or [min(fits)]
    even = [d for d in small if (n // d) % 2 == 0 and n // d >= 2]
    return max(even) if even else max(small)


def decoder_block(x, value, key, src_mask, trg_mask, params, heads,
                  compute_dtype=jnp.bfloat16, target_rows=None):
    N, Sq0, E = x.shape
    Sk0 = value.shape[1]
    assert E % heads == 0, "embed_size must be divisible by heads"
    head_dim = E // heads
    scale_inv = 1.0 / (float(E) ** 0.5)   # module scales by sqrt(embed), not sqrt(head_dim)
    F = params["wff1"].shape[1]

    # Pad sequence dims to multiples of 8 so in-kernel reshapes stay on sublane
    # boundaries (padded keys are masked; padded query rows are sliced off).
    x_p = _pad_axis(x, 1, 8)
    value_p = _pad_axis(value, 1, 8)
    key_p = _pad_axis(key, 1, 8)
    Sq, Sk = x_p.shape[1], value_p.shape[1]

    # Masks -> compact int8 {0,1}; expanded to additive biases inside the kernel.
    trg_m = _pad_axis(_pad_axis((trg_mask != 0).astype(jnp.int8), 1, 8), 2, 8)
    src_m = _pad_axis(_pad_axis((src_mask != 0).astype(jnp.int8), 1, 8), 2, 8)

    mm = lambda w: w.astype(compute_dtype)   # MXU operand weights (bf16 by default)
    f32 = lambda w: w.astype(jnp.float32)    # biases / LayerNorm params stay f32
    weights = [
        # 1/sqrt(E) folded into the query projections (scaled in f32, then cast).
        mm(params["wq1"] * scale_inv), mm(params["wk1"]), mm(params["wv1"]), mm(params["wo1"]),
        f32(params["bo1"]), f32(params["g0"]), f32(params["b0"]),
        mm(params["wq2"] * scale_inv), mm(params["wk2"]), mm(params["wv2"]), mm(params["wo2"]),
        f32(params["bo2"]), f32(params["g1"]), f32(params["b1"]),
        mm(params["wff1"]), f32(params["bff1"]), mm(params["wff2"]), f32(params["bff2"]),
        f32(params["g2"]), f32(params["b2"]),
    ]

    weight_bytes = sum(int(w.size) * w.dtype.itemsize for w in weights)
    act_bytes = jnp.dtype(compute_dtype).itemsize
    capacity = _vmem_capacity_bytes()
    if target_rows is None:
        # More rows/step where VMEM is plentiful (v5e/v6e), fewer on v7x (64 MiB).
        target_rows = 512 if capacity >= 100 * 1024 * 1024 else 256
    budget = int(0.75 * capacity)
    step_fn = lambda bt: _step_vmem_bytes(bt, Sq, Sk, E, F, heads, act_bytes, weight_bytes)
    b_tile = _pick_b_tile(N, Sq, target_rows, budget, step_fn)
    grid = (N // b_tile,)
    vmem_limit = int(min(int(0.9 * capacity),
                         max(32 * 1024 * 1024, 2 * step_fn(b_tile))))

    flatten_out = E < 128
    if flatten_out:
        out_shape = jax.ShapeDtypeStruct((grid[0], b_tile, Sq * E), jnp.float32)
        out_spec = pl.BlockSpec((1, b_tile, Sq * E), lambda n: (n, 0, 0))
    else:
        out_shape = jax.ShapeDtypeStruct((N, Sq, E), jnp.float32)
        out_spec = pl.BlockSpec((b_tile, Sq, E), lambda n: (n, 0, 0))

    kernel = functools.partial(
        decoder_block_kernel, heads=heads, head_dim=head_dim,
        compute_dtype=compute_dtype, flatten_out=flatten_out)

    act_specs = [
        pl.BlockSpec((b_tile, Sq, E), lambda n: (n, 0, 0)),   # x
        pl.BlockSpec((b_tile, Sk, E), lambda n: (n, 0, 0)),   # value
        pl.BlockSpec((b_tile, Sk, E), lambda n: (n, 0, 0)),   # key
        pl.BlockSpec((b_tile, Sq, Sq), lambda n: (n, 0, 0)),  # trg mask (int8)
        pl.BlockSpec((b_tile, Sq, Sk), lambda n: (n, 0, 0)),  # src mask (int8)
    ]

    def run(single_buffer_weights):
        def wspec(shape):
            nd = len(shape)
            if single_buffer_weights:
                # Grid-invariant weights (constant index map) are fetched once;
                # Buffered(1) halves their VMEM footprint at zero DMA cost.
                return pl.BlockSpec(shape, lambda n, _nd=nd: (0,) * _nd,
                                    pipeline_mode=pl.Buffered(1))
            return pl.BlockSpec(shape, lambda n, _nd=nd: (0,) * _nd)

        return pl.pallas_call(
            kernel,
            out_shape=out_shape,
            grid_spec=pltpu.PrefetchScalarGridSpec(
                num_scalar_prefetch=0,
                grid=grid,
                in_specs=act_specs + [wspec(w.shape) for w in weights],
                out_specs=out_spec,
            ),
            compiler_params=pltpu.CompilerParams(
                dimension_semantics=("parallel",),
                vmem_limit_bytes=vmem_limit,
            ),
        )(x_p, value_p, key_p, trg_m, src_m, *weights)

    try:
        out = run(single_buffer_weights=True)
    except Exception:
        # pipeline_mode=pl.Buffered(1) unsupported on this jax/libtpu combo:
        # fall back to default double-buffered weights (correctness unchanged).
        out = run(single_buffer_weights=False)

    return out.reshape(N, Sq, E)[:, :Sq0, :]


# ----------------------------- reference (plain JAX) --------------------------
def decoder_block_ref(x, value, key, src_mask, trg_mask, params, heads):
    E = x.shape[-1]
    hd = E // heads

    def mhsa(v, k, q, mask, wv, wk, wq, wo, bo):
        N, Sk, _ = v.shape
        Sq = q.shape[1]
        V = (v @ wv).reshape(N, Sk, heads, hd)
        K = (k @ wk).reshape(N, Sk, heads, hd)
        Q = (q @ wq).reshape(N, Sq, heads, hd)
        energy = jnp.einsum('nqhd,nkhd->nhqk', Q, K)
        energy = jnp.where(mask[:, None, :, :] == 0, -jnp.inf, energy)
        attn = jax.nn.softmax(energy / (E ** 0.5), axis=-1)
        out = jnp.einsum('nhqk,nkhd->nqhd', attn, V).reshape(N, Sq, E)
        return out @ wo + bo

    def ln(v, g, b):
        mu = v.mean(-1, keepdims=True)
        var = ((v - mu) ** 2).mean(-1, keepdims=True)
        return (v - mu) / jnp.sqrt(var + EPS) * g + b

    attn = mhsa(x, x, x, trg_mask, params["wv1"], params["wk1"], params["wq1"],
                params["wo1"], params["bo1"][0])
    query = ln(attn + x, params["g0"][0], params["b0"][0])
    attn2 = mhsa(value, key, query, src_mask, params["wv2"], params["wk2"],
                 params["wq2"], params["wo2"], params["bo2"][0])
    h = ln(attn2 + query, params["g1"][0], params["b1"][0])
    ff = jnp.maximum(h @ params["wff1"] + params["bff1"][0], 0.0)
    ff = ff @ params["wff2"] + params["bff2"][0]
    return ln(ff + h, params["g2"][0], params["b2"][0])


# ---------------------------------- main --------------------------------------
if __name__ == "__main__":
    N, S_trg, S_src = 2, 8, 8
    embed_size, heads, forward_expansion = 32, 4, 4
    F = forward_expansion * embed_size

    key0 = jax.random.PRNGKey(0)
    ks = jax.random.split(key0, 16)

    def w(k, shape, scale=0.02):
        return (scale * jax.random.normal(k, shape)).astype(jnp.float32)

    params = {
        # decoder self-attention
        "wq1": w(ks[0], (embed_size, embed_size)),
        "wk1": w(ks[1], (embed_size, embed_size)),
        "wv1": w(ks[2], (embed_size, embed_size)),
        "wo1": w(ks[3], (embed_size, embed_size)),
        "bo1": jnp.zeros((1, embed_size), jnp.float32),
        # decoder norm
        "g0": jnp.ones((1, embed_size), jnp.float32),
        "b0": jnp.zeros((1, embed_size), jnp.float32),
        # transformer-block cross attention
        "wq2": w(ks[4], (embed_size, embed_size)),
        "wk2": w(ks[5], (embed_size, embed_size)),
        "wv2": w(ks[6], (embed_size, embed_size)),
        "wo2": w(ks[7], (embed_size, embed_size)),
        "bo2": jnp.zeros((1, embed_size), jnp.float32),
        # transformer-block norm1
        "g1": jnp.ones((1, embed_size), jnp.float32),
        "b1": jnp.zeros((1, embed_size), jnp.float32),
        # feed-forward
        "wff1": w(ks[8], (embed_size, F)),
        "bff1": w(ks[9], (1, F)),
        "wff2": w(ks[10], (F, embed_size)),
        "bff2": w(ks[11], (1, embed_size)),
        # transformer-block norm2
        "g2": jnp.ones((1, embed_size), jnp.float32),
        "b2": jnp.zeros((1, embed_size), jnp.float32),
    }

    x = jax.random.normal(ks[12], (N, S_trg, embed_size), jnp.float32)
    value = jax.random.normal(ks[13], (N, S_src, embed_size), jnp.float32)
    key_in = jax.random.normal(ks[14], (N, S_src, embed_size), jnp.float32)

    # trg mask: causal lower-triangular; src mask: all ones
    trg_mask = jnp.broadcast_to(
        jnp.tril(jnp.ones((S_trg, S_trg), jnp.float32)), (N, S_trg, S_trg)
    )
    src_mask = jnp.ones((N, S_trg, S_src), jnp.float32)

    ref = decoder_block_ref(x, value, key_in, src_mask, trg_mask, params, heads)

    # f32 matmul path (exact semantics; approx reciprocal only deviation).
    out_f32 = decoder_block(x, value, key_in, src_mask, trg_mask, params, heads,
                            compute_dtype=jnp.float32)
    out_f32 = jax.block_until_ready(out_f32)
    assert out_f32.shape == (N, S_trg, embed_size)
    assert jnp.allclose(out_f32, ref, atol=1e-3, rtol=1e-3), "f32 kernel mismatch vs reference"

    # default: bf16 MXU operands (v5e/v6e/v7x native), f32 accumulation & f32 softmax/LN.
    out_bf16 = decoder_block(x, value, key_in, src_mask, trg_mask, params, heads)
    out_bf16 = jax.block_until_ready(out_bf16)
    assert out_bf16.shape == (N, S_trg, embed_size)
    assert bool(jnp.all(jnp.isfinite(out_bf16)))
    assert float(jnp.max(jnp.abs(out_bf16 - ref))) < 5e-2, "bf16 kernel deviates too much"

    print("KERNEL_OK")
</pallas_src>

<mosaic_0001>
module attributes {stable_mosaic.version = 11 : i64} {
  func.func @decoder_block_kernel(%arg0: i32, %arg1: memref<1x8x32xf32, #tpu.memory_space<vmem>>, %arg2: memref<1x8x32xf32, #tpu.memory_space<vmem>>, %arg3: memref<1x8x32xf32, #tpu.memory_space<vmem>>, %arg4: memref<1x8x8xi8, #tpu.memory_space<vmem>>, %arg5: memref<1x8x8xi8, #tpu.memory_space<vmem>>, %arg6: memref<32x32xf32, #tpu.memory_space<vmem>>, %arg7: memref<32x32xf32, #tpu.memory_space<vmem>>, %arg8: memref<32x32xf32, #tpu.memory_space<vmem>>, %arg9: memref<32x32xf32, #tpu.memory_space<vmem>>, %arg10: memref<1x32xf32, #tpu.memory_space<vmem>>, %arg11: memref<1x32xf32, #tpu.memory_space<vmem>>, %arg12: memref<1x32xf32, #tpu.memory_space<vmem>>, %arg13: memref<32x32xf32, #tpu.memory_space<vmem>>, %arg14: memref<32x32xf32, #tpu.memory_space<vmem>>, %arg15: memref<32x32xf32, #tpu.memory_space<vmem>>, %arg16: memref<32x32xf32, #tpu.memory_space<vmem>>, %arg17: memref<1x32xf32, #tpu.memory_space<vmem>>, %arg18: memref<1x32xf32, #tpu.memory_space<vmem>>, %arg19: memref<1x32xf32, #tpu.memory_space<vmem>>, %arg20: memref<32x128xf32, #tpu.memory_space<vmem>>, %arg21: memref<1x128xf32, #tpu.memory_space<vmem>>, %arg22: memref<128x32xf32, #tpu.memory_space<vmem>>, %arg23: memref<1x32xf32, #tpu.memory_space<vmem>>, %arg24: memref<1x32xf32, #tpu.memory_space<vmem>>, %arg25: memref<1x32xf32, #tpu.memory_space<vmem>>, %arg26: memref<1x1x256xf32, #tpu.memory_space<vmem>>) attributes {dimension_semantics = [#tpu.dimension_semantics<parallel>], iteration_bounds = array<i64: 2>, scalar_prefetch = 0 : i64, scratch_operands = 0 : i64, tpu.core_type = #tpu.core_type<tc>, window_params = [{transform_indices = @transform_0, window_bounds = array<i64: 1, 8, 32>}, {transform_indices = @transform_1, window_bounds = array<i64: 1, 8, 32>}, {transform_indices = @transform_2, window_bounds = array<i64: 1, 8, 32>}, {transform_indices = @transform_3, window_bounds = array<i64: 1, 8, 8>}, {transform_indices = @transform_4, window_bounds = array<i64: 1, 8, 8>}, {pipeline_mode = #tpu.pipeline_mode<synchronous>, transform_indices = @transform_5, window_bounds = array<i64: 32, 32>}, {pipeline_mode = #tpu.pipeline_mode<synchronous>, transform_indices = @transform_6, window_bounds = array<i64: 32, 32>}, {pipeline_mode = #tpu.pipeline_mode<synchronous>, transform_indices = @transform_7, window_bounds = array<i64: 32, 32>}, {pipeline_mode = #tpu.pipeline_mode<synchronous>, transform_indices = @transform_8, window_bounds = array<i64: 32, 32>}, {pipeline_mode = #tpu.pipeline_mode<synchronous>, transform_indices = @transform_9, window_bounds = array<i64: 1, 32>}, {pipeline_mode = #tpu.pipeline_mode<synchronous>, transform_indices = @transform_10, window_bounds = array<i64: 1, 32>}, {pipeline_mode = #tpu.pipeline_mode<synchronous>, transform_indices = @transform_11, window_bounds = array<i64: 1, 32>}, {pipeline_mode = #tpu.pipeline_mode<synchronous>, transform_indices = @transform_12, window_bounds = array<i64: 32, 32>}, {pipeline_mode = #tpu.pipeline_mode<synchronous>, transform_indices = @transform_13, window_bounds = array<i64: 32, 32>}, {pipeline_mode = #tpu.pipeline_mode<synchronous>, transform_indices = @transform_14, window_bounds = array<i64: 32, 32>}, {pipeline_mode = #tpu.pipeline_mode<synchronous>, transform_indices = @transform_15, window_bounds = array<i64: 32, 32>}, {pipeline_mode = #tpu.pipeline_mode<synchronous>, transform_indices = @transform_16, window_bounds = array<i64: 1, 32>}, {pipeline_mode = #tpu.pipeline_mode<synchronous>, transform_indices = @transform_17, window_bounds = array<i64: 1, 32>}, {pipeline_mode = #tpu.pipeline_mode<synchronous>, transform_indices = @transform_18, window_bounds = array<i64: 1, 32>}, {pipeline_mode = #tpu.pipeline_mode<synchronous>, transform_indices = @transform_19, window_bounds = array<i64: 32, 128>}, {pipeline_mode = #tpu.pipeline_mode<synchronous>, transform_indices = @transform_20, window_bounds = array<i64: 1, 128>}, {pipeline_mode = #tpu.pipeline_mode<synchronous>, transform_indices = @transform_21, window_bounds = array<i64: 128, 32>}, {pipeline_mode = #tpu.pipeline_mode<synchronous>, transform_indices = @transform_22, window_bounds = array<i64: 1, 32>}, {pipeline_mode = #tpu.pipeline_mode<synchronous>, transform_indices = @transform_23, window_bounds = array<i64: 1, 32>}, {pipeline_mode = #tpu.pipeline_mode<synchronous>, transform_indices = @transform_24, window_bounds = array<i64: 1, 32>}, {transform_indices = @transform_25, window_bounds = array<i64: 1, 1, 256>}]} {
    %c0 = arith.constant 0 : index
    %c0_0 = arith.constant 0 : index
    %c0_1 = arith.constant 0 : index
    %0 = vector.load %arg1[%c0, %c0_0, %c0_1] : memref<1x8x32xf32, #tpu.memory_space<vmem>>, vector<1x8x32xf32>
    %c0_2 = arith.constant 0 : index
    %c0_3 = arith.constant 0 : index
    %c0_4 = arith.constant 0 : index
    %1 = vector.load %arg2[%c0_2, %c0_3, %c0_4] : memref<1x8x32xf32, #tpu.memory_space<vmem>>, vector<1x8x32xf32>
    %c0_5 = arith.constant 0 : index
    %c0_6 = arith.constant 0 : index
    %c0_7 = arith.constant 0 : index
    %2 = vector.load %arg3[%c0_5, %c0_6, %c0_7] : memref<1x8x32xf32, #tpu.memory_space<vmem>>, vector<1x8x32xf32>
    %c0_8 = arith.constant 0 : index
    %c0_9 = arith.constant 0 : index
    %c0_10 = arith.constant 0 : index
    %3 = vector.load %arg4[%c0_8, %c0_9, %c0_10] : memref<1x8x8xi8, #tpu.memory_space<vmem>>, vector<1x8x8xi8>
    %4 = arith.sitofp %3 : vector<1x8x8xi8> to vector<1x8x8xf32>
    %cst = arith.constant 1.000000e+00 : f32
    %5 = vector.broadcast %cst : f32 to vector<1x8x8xf32>
    %6 = arith.subf %5, %4 : vector<1x8x8xf32>
    %cst_11 = arith.constant -1.000000e+30 : f32
    %7 = vector.broadcast %cst_11 : f32 to vector<1x8x8xf32>
    %8 = arith.mulf %6, %7 : vector<1x8x8xf32>
    %c0_12 = arith.constant 0 : index
    %c0_13 = arith.constant 0 : index
    %c0_14 = arith.constant 0 : index
    %9 = vector.load %arg5[%c0_12, %c0_13, %c0_14] : memref<1x8x8xi8, #tpu.memory_space<vmem>>, vector<1x8x8xi8>
    %10 = arith.sitofp %9 : vector<1x8x8xi8> to vector<1x8x8xf32>
    %cst_15 = arith.constant 1.000000e+00 : f32
    %11 = vector.broadcast %cst_15 : f32 to vector<1x8x8xf32>
    %12 = arith.subf %11, %10 : vector<1x8x8xf32>
    %cst_16 = arith.constant -1.000000e+30 : f32
    %13 = vector.broadcast %cst_16 : f32 to vector<1x8x8xf32>
    %14 = arith.mulf %12, %13 : vector<1x8x8xf32>
    %c0_17 = arith.constant 0 : index
    %c0_18 = arith.constant 0 : index
    %15 = vector.load %arg8[%c0_17, %c0_18] : memref<32x32xf32, #tpu.memory_space<vmem>>, vector<32x32xf32>
    %c0_19 = arith.constant 0 : index
    %c0_20 = arith.constant 0 : index
    %16 = vector.load %arg7[%c0_19, %c0_20] : memref<32x32xf32, #tpu.memory_space<vmem>>, vector<32x32xf32>
    %c0_21 = arith.constant 0 : index
    %c0_22 = arith.constant 0 : index
    %17 = vector.load %arg6[%c0_21, %c0_22] : memref<32x32xf32, #tpu.memory_space<vmem>>, vector<32x32xf32>
    %c0_23 = arith.constant 0 : index
    %c0_24 = arith.constant 0 : index
    %18 = vector.load %arg9[%c0_23, %c0_24] : memref<32x32xf32, #tpu.memory_space<vmem>>, vector<32x32xf32>
    %c0_25 = arith.constant 0 : index
    %c0_26 = arith.constant 0 : index
    %19 = vector.load %arg10[%c0_25, %c0_26] : memref<1x32xf32, #tpu.memory_space<vmem>>, vector<1x32xf32>
    %20 = vector.shape_cast %19 : vector<1x32xf32> to vector<32xf32>
    %21 = vector.shape_cast %0 : vector<1x8x32xf32> to vector<8x32xf32>
    %cst_27 = arith.constant dense<0.000000e+00> : vector<8x32xf32>
    %22 = tpu.matmul %21, %15, %cst_27 {dimension_numbers = #tpu.dot_dimension_numbers<[1], [0], [0], [1], [0, 0, 1, 1], [], []>} : vector<8x32xf32>, vector<32x32xf32>, vector<8x32xf32> -> vector<8x32xf32>
    %23 = vector.shape_cast %0 : vector<1x8x32xf32> to vector<8x32xf32>
    %cst_28 = arith.constant dense<0.000000e+00> : vector<8x32xf32>
    %24 = tpu.matmul %23, %16, %cst_28 {dimension_numbers = #tpu.dot_dimension_numbers<[1], [0], [0], [1], [0, 0, 1, 1], [], []>} : vector<8x32xf32>, vector<32x32xf32>, vector<8x32xf32> -> vector<8x32xf32>
    %25 = vector.shape_cast %0 : vector<1x8x32xf32> to vector<8x32xf32>
    %cst_29 = arith.constant dense<0.000000e+00> : vector<8x32xf32>
    %26 = tpu.matmul %25, %17, %cst_29 {dimension_numbers = #tpu.dot_dimension_numbers<[1], [0], [0], [1], [0, 0, 1, 1], [], []>} : vector<8x32xf32>, vector<32x32xf32>, vector<8x32xf32> -> vector<8x32xf32>
    %27 = vector.shape_cast %22 : vector<8x32xf32> to vector<8x4x8xf32>
    %28 = tpu.transpose %27, [1, 0, 2] : vector<8x4x8xf32> -> vector<4x8x8xf32>
    %29 = vector.shape_cast %24 : vector<8x32xf32> to vector<8x4x8xf32>
    %30 = tpu.transpose %29, [1, 0, 2] : vector<8x4x8xf32> -> vector<4x8x8xf32>
    %31 = vector.shape_cast %26 : vector<8x32xf32> to vector<8x4x8xf32>
    %32 = tpu.transpose %31, [1, 0, 2] : vector<8x4x8xf32> -> vector<4x8x8xf32>
    "tpu.trace_start"() <{level = 10 : i32, message = "zqd,zkd->zqk"}> : () -> ()
    %cst_30 = arith.constant dense<0.000000e+00> : vector<4x8x8xf32>
    %33 = tpu.matmul %32, %30, %cst_30 {dimension_numbers = #tpu.dot_dimension_numbers<[2], [2], [1], [1], [0, 0, 0, 1, 1, 1], [0], [0]>} : vector<4x8x8xf32>, vector<4x8x8xf32>, vector<4x8x8xf32> -> vector<4x8x8xf32>
    "tpu.trace_stop"() : () -> ()
    %34 = vector.shape_cast %33 : vector<4x8x8xf32> to vector<1x4x8x8xf32>
    %35 = vector.shape_cast %8 : vector<1x8x8xf32> to vector<1x1x8x8xf32>
    %36 = vector.broadcast %35 : vector<1x1x8x8xf32> to vector<1x4x8x8xf32>
    %37 = arith.addf %34, %36 : vector<1x4x8x8xf32>
    %38 = vector.shape_cast %37 : vector<1x4x8x8xf32> to vector<4x8x8xf32>
    %cst_31 = arith.constant dense<0xFF800000> : vector<4x8xf32>
    %39 = vector.multi_reduction <maximumf>, %38, %cst_31 [2] : vector<4x8x8xf32> to vector<4x8xf32>
    %40 = vector.shape_cast %39 : vector<4x8xf32> to vector<4x8x1xf32>
    %41 = vector.broadcast %40 : vector<4x8x1xf32> to vector<4x8x8xf32>
    %42 = arith.subf %38, %41 : vector<4x8x8xf32>
    %43 = math.exp %42 : vector<4x8x8xf32>
    %cst_32 = arith.constant dense<0.000000e+00> : vector<4x8xf32>
    %44 = vector.multi_reduction <add>, %43, %cst_32 [2] : vector<4x8x8xf32> to vector<4x8xf32>
    %45 = vector.shape_cast %44 : vector<4x8xf32> to vector<4x8x1xf32>
    %46 = tpu.reciprocal %45 {approx = true} : vector<4x8x1xf32> -> vector<4x8x1xf32>
    %47 = vector.broadcast %46 : vector<4x8x1xf32> to vector<4x8x8xf32>
    %48 = arith.mulf %43, %47 : vector<4x8x8xf32>
    "tpu.trace_start"() <{level = 10 : i32, message = "zqk,zkd->zqd"}> : () -> ()
    %cst_33 = arith.constant dense<0.000000e+00> : vector<4x8x8xf32>
    %49 = tpu.matmul %48, %28, %cst_33 {dimension_numbers = #tpu.dot_dimension_numbers<[2], [1], [1], [2], [0, 0, 0, 1, 1, 2], [0], [0]>} : vector<4x8x8xf32>, vector<4x8x8xf32>, vector<4x8x8xf32> -> vector<4x8x8xf32>
    "tpu.trace_stop"() : () -> ()
    %50 = tpu.transpose %49, [1, 0, 2] : vector<4x8x8xf32> -> vector<8x4x8xf32>
    %51 = vector.shape_cast %50 : vector<8x4x8xf32> to vector<8x32xf32>
    %cst_34 = arith.constant dense<0.000000e+00> : vector<8x32xf32>
    %52 = tpu.matmul %51, %18, %cst_34 {dimension_numbers = #tpu.dot_dimension_numbers<[1], [0], [0], [1], [0, 0, 1, 1], [], []>} : vector<8x32xf32>, vector<32x32xf32>, vector<8x32xf32> -> vector<8x32xf32>
    %53 = vector.shape_cast %20 : vector<32xf32> to vector<1x32xf32>
    %54 = vector.broadcast %53 : vector<1x32xf32> to vector<8x32xf32>
    %55 = arith.addf %52, %54 : vector<8x32xf32>
    %56 = vector.shape_cast %55 : vector<8x32xf32> to vector<1x8x32xf32>
    %57 = arith.addf %56, %0 : vector<1x8x32xf32>
    %c0_35 = arith.constant 0 : index
    %c0_36 = arith.constant 0 : index
    %58 = vector.load %arg11[%c0_35, %c0_36] : memref<1x32xf32, #tpu.memory_space<vmem>>, vector<1x32xf32>
    %59 = vector.shape_cast %58 : vector<1x32xf32> to vector<32xf32>
    %c0_37 = arith.constant 0 : index
    %c0_38 = arith.constant 0 : index
    %60 = vector.load %arg12[%c0_37, %c0_38] : memref<1x32xf32, #tpu.memory_space<vmem>>, vector<1x32xf32>
    %61 = vector.shape_cast %60 : vector<1x32xf32> to vector<32xf32>
    %cst_39 = arith.constant dense<0.000000e+00> : vector<1x8xf32>
    %62 = vector.multi_reduction <add>, %57, %cst_39 [2] : vector<1x8x32xf32> to vector<1x8xf32>
    %63 = vector.shape_cast %62 : vector<1x8xf32> to vector<1x8x1xf32>
    %cst_40 = arith.constant 3.200000e+01 : f32
    %64 = vector.broadcast %cst_40 : f32 to vector<1x8x1xf32>
    %65 = arith.divf %63, %64 : vector<1x8x1xf32>
    %66 = vector.broadcast %65 : vector<1x8x1xf32> to vector<1x8x32xf32>
    %67 = arith.subf %57, %66 : vector<1x8x32xf32>
    %68 = arith.mulf %67, %67 : vector<1x8x32xf32>
    %cst_41 = arith.constant dense<0.000000e+00> : vector<1x8xf32>
    %69 = vector.multi_reduction <add>, %68, %cst_41 [2] : vector<1x8x32xf32> to vector<1x8xf32>
    %70 = vector.shape_cast %69 : vector<1x8xf32> to vector<1x8x1xf32>
    %cst_42 = arith.constant 3.200000e+01 : f32
    %71 = vector.broadcast %cst_42 : f32 to vector<1x8x1xf32>
    %72 = arith.divf %70, %71 : vector<1x8x1xf32>
    %73 = vector.broadcast %65 : vector<1x8x1xf32> to vector<1x8x32xf32>
    %74 = arith.subf %57, %73 : vector<1x8x32xf32>
    %cst_43 = arith.constant 9.99999974E-6 : f32
    %75 = vector.broadcast %cst_43 : f32 to vector<1x8x1xf32>
    %76 = arith.addf %72, %75 : vector<1x8x1xf32>
    %77 = math.rsqrt %76 : vector<1x8x1xf32>
    %78 = vector.broadcast %77 : vector<1x8x1xf32> to vector<1x8x32xf32>
    %79 = arith.mulf %74, %78 : vector<1x8x32xf32>
    %80 = vector.shape_cast %59 : vector<32xf32> to vector<1x1x32xf32>
    %81 = vector.broadcast %80 : vector<1x1x32xf32> to vector<1x8x32xf32>
    %82 = arith.mulf %79, %81 : vector<1x8x32xf32>
    %83 = vector.shape_cast %61 : vector<32xf32> to vector<1x1x32xf32>
    %84 = vector.broadcast %83 : vector<1x1x32xf32> to vector<1x8x32xf32>
    %85 = arith.addf %82, %84 : vector<1x8x32xf32>
    %c0_44 = arith.constant 0 : index
    %c0_45 = arith.constant 0 : index
    %86 = vector.load %arg15[%c0_44, %c0_45] : memref<32x32xf32, #tpu.memory_space<vmem>>, vector<32x32xf32>
    %c0_46 = arith.constant 0 : index
    %c0_47 = arith.constant 0 : index
    %87 = vector.load %arg14[%c0_46, %c0_47] : memref<32x32xf32, #tpu.memory_space<vmem>>, vector<32x32xf32>
    %c0_48 = arith.constant 0 : index
    %c0_49 = arith.constant 0 : index
    %88 = vector.load %arg13[%c0_48, %c0_49] : memref<32x32xf32, #tpu.memory_space<vmem>>, vector<32x32xf32>
    %c0_50 = arith.constant 0 : index
    %c0_51 = arith.constant 0 : index
    %89 = vector.load %arg16[%c0_50, %c0_51] : memref<32x32xf32, #tpu.memory_space<vmem>>, vector<32x32xf32>
    %c0_52 = arith.constant 0 : index
    %c0_53 = arith.constant 0 : index
    %90 = vector.load %arg17[%c0_52, %c0_53] : memref<1x32xf32, #tpu.memory_space<vmem>>, vector<1x32xf32>
    %91 = vector.shape_cast %90 : vector<1x32xf32> to vector<32xf32>
    %92 = vector.shape_cast %1 : vector<1x8x32xf32> to vector<8x32xf32>
    %cst_54 = arith.constant dense<0.000000e+00> : vector<8x32xf32>
    %93 = tpu.matmul %92, %86, %cst_54 {dimension_numbers = #tpu.dot_dimension_numbers<[1], [0], [0], [1], [0, 0, 1, 1], [], []>} : vector<8x32xf32>, vector<32x32xf32>, vector<8x32xf32> -> vector<8x32xf32>
    %94 = vector.shape_cast %2 : vector<1x8x32xf32> to vector<8x32xf32>
    %cst_55 = arith.constant dense<0.000000e+00> : vector<8x32xf32>
    %95 = tpu.matmul %94, %87, %cst_55 {dimension_numbers = #tpu.dot_dimension_numbers<[1], [0], [0], [1], [0, 0, 1, 1], [], []>} : vector<8x32xf32>, vector<32x32xf32>, vector<8x32xf32> -> vector<8x32xf32>
    %96 = vector.shape_cast %85 : vector<1x8x32xf32> to vector<8x32xf32>
    %cst_56 = arith.constant dense<0.000000e+00> : vector<8x32xf32>
    %97 = tpu.matmul %96, %88, %cst_56 {dimension_numbers = #tpu.dot_dimension_numbers<[1], [0], [0], [1], [0, 0, 1, 1], [], []>} : vector<8x32xf32>, vector<32x32xf32>, vector<8x32xf32> -> vector<8x32xf32>
    %98 = vector.shape_cast %93 : vector<8x32xf32> to vector<8x4x8xf32>
    %99 = tpu.transpose %98, [1, 0, 2] : vector<8x4x8xf32> -> vector<4x8x8xf32>
    %100 = vector.shape_cast %95 : vector<8x32xf32> to vector<8x4x8xf32>
    %101 = tpu.transpose %100, [1, 0, 2] : vector<8x4x8xf32> -> vector<4x8x8xf32>
    %102 = vector.shape_cast %97 : vector<8x32xf32> to vector<8x4x8xf32>
    %103 = tpu.transpose %102, [1, 0, 2] : vector<8x4x8xf32> -> vector<4x8x8xf32>
    "tpu.trace_start"() <{level = 10 : i32, message = "zqd,zkd->zqk"}> : () -> ()
    %cst_57 = arith.constant dense<0.000000e+00> : vector<4x8x8xf32>
    %104 = tpu.matmul %103, %101, %cst_57 {dimension_numbers = #tpu.dot_dimension_numbers<[2], [2], [1], [1], [0, 0, 0, 1, 1, 1], [0], [0]>} : vector<4x8x8xf32>, vector<4x8x8xf32>, vector<4x8x8xf32> -> vector<4x8x8xf32>
    "tpu.trace_stop"() : () -> ()
    %105 = vector.shape_cast %104 : vector<4x8x8xf32> to vector<1x4x8x8xf32>
    %106 = vector.shape_cast %14 : vector<1x8x8xf32> to vector<1x1x8x8xf32>
    %107 = vector.broadcast %106 : vector<1x1x8x8xf32> to vector<1x4x8x8xf32>
    %108 = arith.addf %105, %107 : vector<1x4x8x8xf32>
    %109 = vector.shape_cast %108 : vector<1x4x8x8xf32> to vector<4x8x8xf32>
    %cst_58 = arith.constant dense<0xFF800000> : vector<4x8xf32>
    %110 = vector.multi_reduction <maximumf>, %109, %cst_58 [2] : vector<4x8x8xf32> to vector<4x8xf32>
    %111 = vector.shape_cast %110 : vector<4x8xf32> to vector<4x8x1xf32>
    %112 = vector.broadcast %111 : vector<4x8x1xf32> to vector<4x8x8xf32>
    %113 = arith.subf %109, %112 : vector<4x8x8xf32>
    %114 = math.exp %113 : vector<4x8x8xf32>
    %cst_59 = arith.constant dense<0.000000e+00> : vector<4x8xf32>
    %115 = vector.multi_reduction <add>, %114, %cst_59 [2] : vector<4x8x8xf32> to vector<4x8xf32>
    %116 = vector.shape_cast %115 : vector<4x8xf32> to vector<4x8x1xf32>
    %117 = tpu.reciprocal %116 {approx = true} : vector<4x8x1xf32> -> vector<4x8x1xf32>
    %118 = vector.broadcast %117 : vector<4x8x1xf32> to vector<4x8x8xf32>
    %119 = arith.mulf %114, %118 : vector<4x8x8xf32>
    "tpu.trace_start"() <{level = 10 : i32, message = "zqk,zkd->zqd"}> : () -> ()
    %cst_60 = arith.constant dense<0.000000e+00> : vector<4x8x8xf32>
    %120 = tpu.matmul %119, %99, %cst_60 {dimension_numbers = #tpu.dot_dimension_numbers<[2], [1], [1], [2], [0, 0, 0, 1, 1, 2], [0], [0]>} : vector<4x8x8xf32>, vector<4x8x8xf32>, vector<4x8x8xf32> -> vector<4x8x8xf32>
    "tpu.trace_stop"() : () -> ()
    %121 = tpu.transpose %120, [1, 0, 2] : vector<4x8x8xf32> -> vector<8x4x8xf32>
    %122 = vector.shape_cast %121 : vector<8x4x8xf32> to vector<8x32xf32>
    %cst_61 = arith.constant dense<0.000000e+00> : vector<8x32xf32>
    %123 = tpu.matmul %122, %89, %cst_61 {dimension_numbers = #tpu.dot_dimension_numbers<[1], [0], [0], [1], [0, 0, 1, 1], [], []>} : vector<8x32xf32>, vector<32x32xf32>, vector<8x32xf32> -> vector<8x32xf32>
    %124 = vector.shape_cast %91 : vector<32xf32> to vector<1x32xf32>
    %125 = vector.broadcast %124 : vector<1x32xf32> to vector<8x32xf32>
    %126 = arith.addf %123, %125 : vector<8x32xf32>
    %127 = vector.shape_cast %126 : vector<8x32xf32> to vector<1x8x32xf32>
    %128 = arith.addf %127, %85 : vector<1x8x32xf32>
    %c0_62 = arith.constant 0 : index
    %c0_63 = arith.constant 0 : index
    %129 = vector.load %arg18[%c0_62, %c0_63] : memref<1x32xf32, #tpu.memory_space<vmem>>, vector<1x32xf32>
    %130 = vector.shape_cast %129 : vector<1x32xf32> to vector<32xf32>
    %c0_64 = arith.constant 0 : index
    %c0_65 = arith.constant 0 : index
    %131 = vector.load %arg19[%c0_64, %c0_65] : memref<1x32xf32, #tpu.memory_space<vmem>>, vector<1x32xf32>
    %132 = vector.shape_cast %131 : vector<1x32xf32> to vector<32xf32>
    %cst_66 = arith.constant dense<0.000000e+00> : vector<1x8xf32>
    %133 = vector.multi_reduction <add>, %128, %cst_66 [2] : vector<1x8x32xf32> to vector<1x8xf32>
    %134 = vector.shape_cast %133 : vector<1x8xf32> to vector<1x8x1xf32>
    %cst_67 = arith.constant 3.200000e+01 : f32
    %135 = vector.broadcast %cst_67 : f32 to vector<1x8x1xf32>
    %136 = arith.divf %134, %135 : vector<1x8x1xf32>
    %137 = vector.broadcast %136 : vector<1x8x1xf32> to vector<1x8x32xf32>
    %138 = arith.subf %128, %137 : vector<1x8x32xf32>
    %139 = arith.mulf %138, %138 : vector<1x8x32xf32>
    %cst_68 = arith.constant dense<0.000000e+00> : vector<1x8xf32>
    %140 = vector.multi_reduction <add>, %139, %cst_68 [2] : vector<1x8x32xf32> to vector<1x8xf32>
    %141 = vector.shape_cast %140 : vector<1x8xf32> to vector<1x8x1xf32>
    %cst_69 = arith.constant 3.200000e+01 : f32
    %142 = vector.broadcast %cst_69 : f32 to vector<1x8x1xf32>
    %143 = arith.divf %141, %142 : vector<1x8x1xf32>
    %144 = vector.broadcast %136 : vector<1x8x1xf32> to vector<1x8x32xf32>
    %145 = arith.subf %128, %144 : vector<1x8x32xf32>
    %cst_70 = arith.constant 9.99999974E-6 : f32
    %146 = vector.broadcast %cst_70 : f32 to vector<1x8x1xf32>
    %147 = arith.addf %143, %146 : vector<1x8x1xf32>
    %148 = math.rsqrt %147 : vector<1x8x1xf32>
    %149 = vector.broadcast %148 : vector<1x8x1xf32> to vector<1x8x32xf32>
    %150 = arith.mulf %145, %149 : vector<1x8x32xf32>
    %151 = vector.shape_cast %130 : vector<32xf32> to vector<1x1x32xf32>
    %152 = vector.broadcast %151 : vector<1x1x32xf32> to vector<1x8x32xf32>
    %153 = arith.mulf %150, %152 : vector<1x8x32xf32>
    %154 = vector.shape_cast %132 : vector<32xf32> to vector<1x1x32xf32>
    %155 = vector.broadcast %154 : vector<1x1x32xf32> to vector<1x8x32xf32>
    %156 = arith.addf %153, %155 : vector<1x8x32xf32>
    %157 = vector.shape_cast %156 : vector<1x8x32xf32> to vector<8x32xf32>
    %c0_71 = arith.constant 0 : index
    %c0_72 = arith.constant 0 : index
    %158 = vector.load %arg20[%c0_71, %c0_72] : memref<32x128xf32, #tpu.memory_space<vmem>>, vector<32x128xf32>
    %cst_73 = arith.constant dense<0.000000e+00> : vector<8x128xf32>
    %159 = tpu.matmul %157, %158, %cst_73 {dimension_numbers = #tpu.dot_dimension_numbers<[1], [0], [0], [1], [0, 0, 1, 1], [], []>} : vector<8x32xf32>, vector<32x128xf32>, vector<8x128xf32> -> vector<8x128xf32>
    %c0_74 = arith.constant 0 : index
    %c0_75 = arith.constant 0 : index
    %160 = vector.load %arg21[%c0_74, %c0_75] : memref<1x128xf32, #tpu.memory_space<vmem>>, vector<1x128xf32>
    %161 = vector.shape_cast %160 : vector<1x128xf32> to vector<128xf32>
    %162 = vector.shape_cast %161 : vector<128xf32> to vector<1x128xf32>
    %163 = vector.broadcast %162 : vector<1x128xf32> to vector<8x128xf32>
    %164 = arith.addf %159, %163 : vector<8x128xf32>
    %cst_76 = arith.constant 0.000000e+00 : f32
    %165 = vector.broadcast %cst_76 : f32 to vector<8x128xf32>
    %166 = arith.maximumf %164, %165 : vector<8x128xf32>
    %c0_77 = arith.constant 0 : index
    %c0_78 = arith.constant 0 : index
    %167 = vector.load %arg22[%c0_77, %c0_78] : memref<128x32xf32, #tpu.memory_space<vmem>>, vector<128x32xf32>
    %cst_79 = arith.constant dense<0.000000e+00> : vector<8x32xf32>
    %168 = tpu.matmul %166, %167, %cst_79 {dimension_numbers = #tpu.dot_dimension_numbers<[1], [0], [0], [1], [0, 0, 1, 1], [], []>} : vector<8x128xf32>, vector<128x32xf32>, vector<8x32xf32> -> vector<8x32xf32>
    %c0_80 = arith.constant 0 : index
    %c0_81 = arith.constant 0 : index
    %169 = vector.load %arg23[%c0_80, %c0_81] : memref<1x32xf32, #tpu.memory_space<vmem>>, vector<1x32xf32>
    %170 = vector.shape_cast %169 : vector<1x32xf32> to vector<32xf32>
    %171 = vector.shape_cast %170 : vector<32xf32> to vector<1x32xf32>
    %172 = vector.broadcast %171 : vector<1x32xf32> to vector<8x32xf32>
    %173 = arith.addf %168, %172 : vector<8x32xf32>
    %174 = vector.shape_cast %173 : vector<8x32xf32> to vector<1x8x32xf32>
    %175 = arith.addf %174, %156 : vector<1x8x32xf32>
    %c0_82 = arith.constant 0 : index
    %c0_83 = arith.constant 0 : index
    %176 = vector.load %arg24[%c0_82, %c0_83] : memref<1x32xf32, #tpu.memory_space<vmem>>, vector<1x32xf32>
    %177 = vector.shape_cast %176 : vector<1x32xf32> to vector<32xf32>
    %c0_84 = arith.constant 0 : index
    %c0_85 = arith.constant 0 : index
    %178 = vector.load %arg25[%c0_84, %c0_85] : memref<1x32xf32, #tpu.memory_space<vmem>>, vector<1x32xf32>
    %179 = vector.shape_cast %178 : vector<1x32xf32> to vector<32xf32>
    %cst_86 = arith.constant dense<0.000000e+00> : vector<1x8xf32>
    %180 = vector.multi_reduction <add>, %175, %cst_86 [2] : vector<1x8x32xf32> to vector<1x8xf32>
    %181 = vector.shape_cast %180 : vector<1x8xf32> to vector<1x8x1xf32>
    %cst_87 = arith.constant 3.200000e+01 : f32
    %182 = vector.broadcast %cst_87 : f32 to vector<1x8x1xf32>
    %183 = arith.divf %181, %182 : vector<1x8x1xf32>
    %184 = vector.broadcast %183 : vector<1x8x1xf32> to vector<1x8x32xf32>
    %185 = arith.subf %175, %184 : vector<1x8x32xf32>
    %186 = arith.mulf %185, %185 : vector<1x8x32xf32>
    %cst_88 = arith.constant dense<0.000000e+00> : vector<1x8xf32>
    %187 = vector.multi_reduction <add>, %186, %cst_88 [2] : vector<1x8x32xf32> to vector<1x8xf32>
    %188 = vector.shape_cast %187 : vector<1x8xf32> to vector<1x8x1xf32>
    %cst_89 = arith.constant 3.200000e+01 : f32
    %189 = vector.broadcast %cst_89 : f32 to vector<1x8x1xf32>
    %190 = arith.divf %188, %189 : vector<1x8x1xf32>
    %191 = vector.broadcast %183 : vector<1x8x1xf32> to vector<1x8x32xf32>
    %192 = arith.subf %175, %191 : vector<1x8x32xf32>
    %cst_90 = arith.constant 9.99999974E-6 : f32
    %193 = vector.broadcast %cst_90 : f32 to vector<1x8x1xf32>
    %194 = arith.addf %190, %193 : vector<1x8x1xf32>
    %195 = math.rsqrt %194 : vector<1x8x1xf32>
    %196 = vector.broadcast %195 : vector<1x8x1xf32> to vector<1x8x32xf32>
    %197 = arith.mulf %192, %196 : vector<1x8x32xf32>
    %198 = vector.shape_cast %177 : vector<32xf32> to vector<1x1x32xf32>
    %199 = vector.broadcast %198 : vector<1x1x32xf32> to vector<1x8x32xf32>
    %200 = arith.mulf %197, %199 : vector<1x8x32xf32>
    %201 = vector.shape_cast %179 : vector<32xf32> to vector<1x1x32xf32>
    %202 = vector.broadcast %201 : vector<1x1x32xf32> to vector<1x8x32xf32>
    %203 = arith.addf %200, %202 : vector<1x8x32xf32>
    %204 = vector.shape_cast %203 : vector<1x8x32xf32> to vector<1x256xf32>
    %c0_91 = arith.constant 0 : index
    %c0_92 = arith.constant 0 : index
    %c0_93 = arith.constant 0 : index
    %205 = vector.load %arg26[%c0_91, %c0_92, %c0_93] : memref<1x1x256xf32, #tpu.memory_space<vmem>>, vector<1x1x256xf32>
    %206 = vector.shape_cast %205 : vector<1x1x256xf32> to vector<1x256xf32>
    %207 = vector.shape_cast %204 : vector<1x256xf32> to vector<1x1x256xf32>
    tpu.vector_store %arg26[%c0_91, %c0_92, %c0_93], %207 {strides = array<i32>} : memref<1x1x256xf32, #tpu.memory_space<vmem>>, vector<1x1x256xf32>,
    return
  }
  func.func @transform_0(%arg0: i32) -> (i32, i32, i32) {
    %c0_i32 = arith.constant 0 : i32
    %c0_i32_0 = arith.constant 0 : i32
    %c0_i32_1 = arith.constant 0 : i32
    return %arg0, %c0_i32, %c0_i32_0 : i32, i32, i32
  }
  func.func @transform_1(%arg0: i32) -> (i32, i32, i32) {
    %c0_i32 = arith.constant 0 : i32
    %c0_i32_0 = arith.constant 0 : i32
    %c0_i32_1 = arith.constant 0 : i32
    return %arg0, %c0_i32, %c0_i32_0 : i32, i32, i32
  }
  func.func @transform_2(%arg0: i32) -> (i32, i32, i32) {
    %c0_i32 = arith.constant 0 : i32
    %c0_i32_0 = arith.constant 0 : i32
    %c0_i32_1 = arith.constant 0 : i32
    return %arg0, %c0_i32, %c0_i32_0 : i32, i32, i32
  }
  func.func @transform_3(%arg0: i32) -> (i32, i32, i32) {
    %c0_i32 = arith.constant 0 : i32
    %c0_i32_0 = arith.constant 0 : i32
    %c0_i32_1 = arith.constant 0 : i32
    return %arg0, %c0_i32, %c0_i32_0 : i32, i32, i32
  }
  func.func @transform_4(%arg0: i32) -> (i32, i32, i32) {
    %c0_i32 = arith.constant 0 : i32
    %c0_i32_0 = arith.constant 0 : i32
    %c0_i32_1 = arith.constant 0 : i32
    return %arg0, %c0_i32, %c0_i32_0 : i32, i32, i32
  }
  func.func @transform_5(%arg0: i32) -> (i32, i32) {
    %c0_i32 = arith.constant 0 : i32
    %c0_i32_0 = arith.constant 0 : i32
    %c0_i32_1 = arith.constant 0 : i32
    return %c0_i32, %c0_i32_0 : i32, i32
  }
  func.func @transform_6(%arg0: i32) -> (i32, i32) {
    %c0_i32 = arith.constant 0 : i32
    %c0_i32_0 = arith.constant 0 : i32
    %c0_i32_1 = arith.constant 0 : i32
    return %c0_i32, %c0_i32_0 : i32, i32
  }
  func.func @transform_7(%arg0: i32) -> (i32, i32) {
    %c0_i32 = arith.constant 0 : i32
    %c0_i32_0 = arith.constant 0 : i32
    %c0_i32_1 = arith.constant 0 : i32
    return %c0_i32, %c0_i32_0 : i32, i32
  }
  func.func @transform_8(%arg0: i32) -> (i32, i32) {
    %c0_i32 = arith.constant 0 : i32
    %c0_i32_0 = arith.constant 0 : i32
    %c0_i32_1 = arith.constant 0 : i32
    return %c0_i32, %c0_i32_0 : i32, i32
  }
  func.func @transform_9(%arg0: i32) -> (i32, i32) {
    %c0_i32 = arith.constant 0 : i32
    %c0_i32_0 = arith.constant 0 : i32
    %c0_i32_1 = arith.constant 0 : i32
    return %c0_i32, %c0_i32_0 : i32, i32
  }
  func.func @transform_10(%arg0: i32) -> (i32, i32) {
    %c0_i32 = arith.constant 0 : i32
    %c0_i32_0 = arith.constant 0 : i32
    %c0_i32_1 = arith.constant 0 : i32
    return %c0_i32, %c0_i32_0 : i32, i32
  }
  func.func @transform_11(%arg0: i32) -> (i32, i32) {
    %c0_i32 = arith.constant 0 : i32
    %c0_i32_0 = arith.constant 0 : i32
    %c0_i32_1 = arith.constant 0 : i32
    return %c0_i32, %c0_i32_0 : i32, i32
  }
  func.func @transform_12(%arg0: i32) -> (i32, i32) {
    %c0_i32 = arith.constant 0 : i32
    %c0_i32_0 = arith.constant 0 : i32
    %c0_i32_1 = arith.constant 0 : i32
    return %c0_i32, %c0_i32_0 : i32, i32
  }
  func.func @transform_13(%arg0: i32) -> (i32, i32) {
    %c0_i32 = arith.constant 0 : i32
    %c0_i32_0 = arith.constant 0 : i32
    %c0_i32_1 = arith.constant 0 : i32
    return %c0_i32, %c0_i32_0 : i32, i32
  }
  func.func @transform_14(%arg0: i32) -> (i32, i32) {
    %c0_i32 = arith.constant 0 : i32
    %c0_i32_0 = arith.constant 0 : i32
    %c0_i32_1 = arith.constant 0 : i32
    return %c0_i32, %c0_i32_0 : i32, i32
  }
  func.func @transform_15(%arg0: i32) -> (i32, i32) {
    %c0_i32 = arith.constant 0 : i32
    %c0_i32_0 = arith.constant 0 : i32
    %c0_i32_1 = arith.constant 0 : i32
    return %c0_i32, %c0_i32_0 : i32, i32
  }
  func.func @transform_16(%arg0: i32) -> (i32, i32) {
    %c0_i32 = arith.constant 0 : i32
    %c0_i32_0 = arith.constant 0 : i32
    %c0_i32_1 = arith.constant 0 : i32
    return %c0_i32, %c0_i32_0 : i32, i32
  }
  func.func @transform_17(%arg0: i32) -> (i32, i32) {
    %c0_i32 = arith.constant 0 : i32
    %c0_i32_0 = arith.constant 0 : i32
    %c0_i32_1 = arith.constant 0 : i32
    return %c0_i32, %c0_i32_0 : i32, i32
  }
  func.func @transform_18(%arg0: i32) -> (i32, i32) {
    %c0_i32 = arith.constant 0 : i32
    %c0_i32_0 = arith.constant 0 : i32
    %c0_i32_1 = arith.constant 0 : i32
    return %c0_i32, %c0_i32_0 : i32, i32
  }
  func.func @transform_19(%arg0: i32) -> (i32, i32) {
    %c0_i32 = arith.constant 0 : i32
    %c0_i32_0 = arith.constant 0 : i32
    %c0_i32_1 = arith.constant 0 : i32
    return %c0_i32, %c0_i32_0 : i32, i32
  }
  func.func @transform_20(%arg0: i32) -> (i32, i32) {
    %c0_i32 = arith.constant 0 : i32
    %c0_i32_0 = arith.constant 0 : i32
    %c0_i32_1 = arith.constant 0 : i32
    return %c0_i32, %c0_i32_0 : i32, i32
  }
  func.func @transform_21(%arg0: i32) -> (i32, i32) {
    %c0_i32 = arith.constant 0 : i32
    %c0_i32_0 = arith.constant 0 : i32
    %c0_i32_1 = arith.constant 0 : i32
    return %c0_i32, %c0_i32_0 : i32, i32
  }
  func.func @transform_22(%arg0: i32) -> (i32, i32) {
    %c0_i32 = arith.constant 0 : i32
    %c0_i32_0 = arith.constant 0 : i32
    %c0_i32_1 = arith.constant 0 : i32
    return %c0_i32, %c0_i32_0 : i32, i32
  }
  func.func @transform_23(%arg0: i32) -> (i32, i32) {
    %c0_i32 = arith.constant 0 : i32
    %c0_i32_0 = arith.constant 0 : i32
    %c0_i32_1 = arith.constant 0 : i32
    return %c0_i32, %c0_i32_0 : i32, i32
  }
  func.func @transform_24(%arg0: i32) -> (i32, i32) {
    %c0_i32 = arith.constant 0 : i32
    %c0_i32_0 = arith.constant 0 : i32
    %c0_i32_1 = arith.constant 0 : i32
    return %c0_i32, %c0_i32_0 : i32, i32
  }
  func.func @transform_25(%arg0: i32) -> (i32, i32, i32) {
    %c0_i32 = arith.constant 0 : i32
    %c0_i32_0 = arith.constant 0 : i32
    %c0_i32_1 = arith.constant 0 : i32
    return %arg0, %c0_i32, %c0_i32_0 : i32, i32, i32
  }
}

module attributes {stable_mosaic.version = 11 : i64} {
  func.func @decoder_block_kernel(%arg0: i32, %arg1: memref<1x8x32xf32, #tpu.memory_space<vmem>>, %arg2: memref<1x8x32xf32, #tpu.memory_space<vmem>>, %arg3: memref<1x8x32xf32, #tpu.memory_space<vmem>>, %arg4: memref<1x8x8xi8, #tpu.memory_space<vmem>>, %arg5: memref<1x8x8xi8, #tpu.memory_space<vmem>>, %arg6: memref<32x32xf32, #tpu.memory_space<vmem>>, %arg7: memref<32x32xf32, #tpu.memory_space<vmem>>, %arg8: memref<32x32xf32, #tpu.memory_space<vmem>>, %arg9: memref<32x32xf32, #tpu.memory_space<vmem>>, %arg10: memref<1x32xf32, #tpu.memory_space<vmem>>, %arg11: memref<1x32xf32, #tpu.memory_space<vmem>>, %arg12: memref<1x32xf32, #tpu.memory_space<vmem>>, %arg13: memref<32x32xf32, #tpu.memory_space<vmem>>, %arg14: memref<32x32xf32, #tpu.memory_space<vmem>>, %arg15: memref<32x32xf32, #tpu.memory_space<vmem>>, %arg16: memref<32x32xf32, #tpu.memory_space<vmem>>, %arg17: memref<1x32xf32, #tpu.memory_space<vmem>>, %arg18: memref<1x32xf32, #tpu.memory_space<vmem>>, %arg19: memref<1x32xf32, #tpu.memory_space<vmem>>, %arg20: memref<32x128xf32, #tpu.memory_space<vmem>>, %arg21: memref<1x128xf32, #tpu.memory_space<vmem>>, %arg22: memref<128x32xf32, #tpu.memory_space<vmem>>, %arg23: memref<1x32xf32, #tpu.memory_space<vmem>>, %arg24: memref<1x32xf32, #tpu.memory_space<vmem>>, %arg25: memref<1x32xf32, #tpu.memory_space<vmem>>, %arg26: memref<1x1x256xf32, #tpu.memory_space<vmem>>) attributes {dimension_semantics = [#tpu.dimension_semantics<parallel>], iteration_bounds = array<i64: 2>, scalar_prefetch = 0 : i64, scratch_operands = 0 : i64, tpu.core_type = #tpu.core_type<tc>, window_params = [{transform_indices = @transform_0, window_bounds = array<i64: 1, 8, 32>}, {transform_indices = @transform_1, window_bounds = array<i64: 1, 8, 32>}, {transform_indices = @transform_2, window_bounds = array<i64: 1, 8, 32>}, {transform_indices = @transform_3, window_bounds = array<i64: 1, 8, 8>}, {transform_indices = @transform_4, window_bounds = array<i64: 1, 8, 8>}, {pipeline_mode = #tpu.pipeline_mode<synchronous>, transform_indices = @transform_5, window_bounds = array<i64: 32, 32>}, {pipeline_mode = #tpu.pipeline_mode<synchronous>, transform_indices = @transform_6, window_bounds = array<i64: 32, 32>}, {pipeline_mode = #tpu.pipeline_mode<synchronous>, transform_indices = @transform_7, window_bounds = array<i64: 32, 32>}, {pipeline_mode = #tpu.pipeline_mode<synchronous>, transform_indices = @transform_8, window_bounds = array<i64: 32, 32>}, {pipeline_mode = #tpu.pipeline_mode<synchronous>, transform_indices = @transform_9, window_bounds = array<i64: 1, 32>}, {pipeline_mode = #tpu.pipeline_mode<synchronous>, transform_indices = @transform_10, window_bounds = array<i64: 1, 32>}, {pipeline_mode = #tpu.pipeline_mode<synchronous>, transform_indices = @transform_11, window_bounds = array<i64: 1, 32>}, {pipeline_mode = #tpu.pipeline_mode<synchronous>, transform_indices = @transform_12, window_bounds = array<i64: 32, 32>}, {pipeline_mode = #tpu.pipeline_mode<synchronous>, transform_indices = @transform_13, window_bounds = array<i64: 32, 32>}, {pipeline_mode = #tpu.pipeline_mode<synchronous>, transform_indices = @transform_14, window_bounds = array<i64: 32, 32>}, {pipeline_mode = #tpu.pipeline_mode<synchronous>, transform_indices = @transform_15, window_bounds = array<i64: 32, 32>}, {pipeline_mode = #tpu.pipeline_mode<synchronous>, transform_indices = @transform_16, window_bounds = array<i64: 1, 32>}, {pipeline_mode = #tpu.pipeline_mode<synchronous>, transform_indices = @transform_17, window_bounds = array<i64: 1, 32>}, {pipeline_mode = #tpu.pipeline_mode<synchronous>, transform_indices = @transform_18, window_bounds = array<i64: 1, 32>}, {pipeline_mode = #tpu.pipeline_mode<synchronous>, transform_indices = @transform_19, window_bounds = array<i64: 32, 128>}, {pipeline_mode = #tpu.pipeline_mode<synchronous>, transform_indices = @transform_20, window_bounds = array<i64: 1, 128>}, {pipeline_mode = #tpu.pipeline_mode<synchronous>, transform_indices = @transform_21, window_bounds = array<i64: 128, 32>}, {pipeline_mode = #tpu.pipeline_mode<synchronous>, transform_indices = @transform_22, window_bounds = array<i64: 1, 32>}, {pipeline_mode = #tpu.pipeline_mode<synchronous>, transform_indices = @transform_23, window_bounds = array<i64: 1, 32>}, {pipeline_mode = #tpu.pipeline_mode<synchronous>, transform_indices = @transform_24, window_bounds = array<i64: 1, 32>}, {transform_indices = @transform_25, window_bounds = array<i64: 1, 1, 256>}]} {
    %c0 = arith.constant 0 : index
    %c0_0 = arith.constant 0 : index
    %c0_1 = arith.constant 0 : index
    %0 = vector.load %arg1[%c0, %c0_0, %c0_1] : memref<1x8x32xf32, #tpu.memory_space<vmem>>, vector<1x8x32xf32>
    %c0_2 = arith.constant 0 : index
    %c0_3 = arith.constant 0 : index
    %c0_4 = arith.constant 0 : index
    %1 = vector.load %arg2[%c0_2, %c0_3, %c0_4] : memref<1x8x32xf32, #tpu.memory_space<vmem>>, vector<1x8x32xf32>
    %c0_5 = arith.constant 0 : index
    %c0_6 = arith.constant 0 : index
    %c0_7 = arith.constant 0 : index
    %2 = vector.load %arg3[%c0_5, %c0_6, %c0_7] : memref<1x8x32xf32, #tpu.memory_space<vmem>>, vector<1x8x32xf32>
    %c0_8 = arith.constant 0 : index
    %c0_9 = arith.constant 0 : index
    %c0_10 = arith.constant 0 : index
    %3 = vector.load %arg4[%c0_8, %c0_9, %c0_10] : memref<1x8x8xi8, #tpu.memory_space<vmem>>, vector<1x8x8xi8>
    %4 = arith.sitofp %3 : vector<1x8x8xi8> to vector<1x8x8xf32>
    %cst = arith.constant 1.000000e+00 : f32
    %5 = vector.broadcast %cst : f32 to vector<1x8x8xf32>
    %6 = arith.subf %5, %4 : vector<1x8x8xf32>
    %cst_11 = arith.constant -1.000000e+30 : f32
    %7 = vector.broadcast %cst_11 : f32 to vector<1x8x8xf32>
    %8 = arith.mulf %6, %7 : vector<1x8x8xf32>
    %c0_12 = arith.constant 0 : index
    %c0_13 = arith.constant 0 : index
    %c0_14 = arith.constant 0 : index
    %9 = vector.load %arg5[%c0_12, %c0_13, %c0_14] : memref<1x8x8xi8, #tpu.memory_space<vmem>>, vector<1x8x8xi8>
    %10 = arith.sitofp %9 : vector<1x8x8xi8> to vector<1x8x8xf32>
    %cst_15 = arith.constant 1.000000e+00 : f32
    %11 = vector.broadcast %cst_15 : f32 to vector<1x8x8xf32>
    %12 = arith.subf %11, %10 : vector<1x8x8xf32>
    %cst_16 = arith.constant -1.000000e+30 : f32
    %13 = vector.broadcast %cst_16 : f32 to vector<1x8x8xf32>
    %14 = arith.mulf %12, %13 : vector<1x8x8xf32>
    %c0_17 = arith.constant 0 : index
    %c0_18 = arith.constant 0 : index
    %15 = vector.load %arg8[%c0_17, %c0_18] : memref<32x32xf32, #tpu.memory_space<vmem>>, vector<32x32xf32>
    %c0_19 = arith.constant 0 : index
    %c0_20 = arith.constant 0 : index
    %16 = vector.load %arg7[%c0_19, %c0_20] : memref<32x32xf32, #tpu.memory_space<vmem>>, vector<32x32xf32>
    %c0_21 = arith.constant 0 : index
    %c0_22 = arith.constant 0 : index
    %17 = vector.load %arg6[%c0_21, %c0_22] : memref<32x32xf32, #tpu.memory_space<vmem>>, vector<32x32xf32>
    %c0_23 = arith.constant 0 : index
    %c0_24 = arith.constant 0 : index
    %18 = vector.load %arg9[%c0_23, %c0_24] : memref<32x32xf32, #tpu.memory_space<vmem>>, vector<32x32xf32>
    %c0_25 = arith.constant 0 : index
    %c0_26 = arith.constant 0 : index
    %19 = vector.load %arg10[%c0_25, %c0_26] : memref<1x32xf32, #tpu.memory_space<vmem>>, vector<1x32xf32>
    %20 = vector.shape_cast %19 : vector<1x32xf32> to vector<32xf32>
    %21 = vector.shape_cast %0 : vector<1x8x32xf32> to vector<8x32xf32>
    %cst_27 = arith.constant dense<0.000000e+00> : vector<8x32xf32>
    %22 = tpu.matmul %21, %15, %cst_27 {dimension_numbers = #tpu.dot_dimension_numbers<[1], [0], [0], [1], [0, 0, 1, 1], [], []>} : vector<8x32xf32>, vector<32x32xf32>, vector<8x32xf32> -> vector<8x32xf32>
    %23 = vector.shape_cast %0 : vector<1x8x32xf32> to vector<8x32xf32>
    %cst_28 = arith.constant dense<0.000000e+00> : vector<8x32xf32>
    %24 = tpu.matmul %23, %16, %cst_28 {dimension_numbers = #tpu.dot_dimension_numbers<[1], [0], [0], [1], [0, 0, 1, 1], [], []>} : vector<8x32xf32>, vector<32x32xf32>, vector<8x32xf32> -> vector<8x32xf32>
    %25 = vector.shape_cast %0 : vector<1x8x32xf32> to vector<8x32xf32>
    %cst_29 = arith.constant dense<0.000000e+00> : vector<8x32xf32>
    %26 = tpu.matmul %25, %17, %cst_29 {dimension_numbers = #tpu.dot_dimension_numbers<[1], [0], [0], [1], [0, 0, 1, 1], [], []>} : vector<8x32xf32>, vector<32x32xf32>, vector<8x32xf32> -> vector<8x32xf32>
    %27 = vector.shape_cast %22 : vector<8x32xf32> to vector<8x4x8xf32>
    %28 = tpu.transpose %27, [1, 0, 2] : vector<8x4x8xf32> -> vector<4x8x8xf32>
    %29 = vector.shape_cast %24 : vector<8x32xf32> to vector<8x4x8xf32>
    %30 = tpu.transpose %29, [1, 0, 2] : vector<8x4x8xf32> -> vector<4x8x8xf32>
    %31 = vector.shape_cast %26 : vector<8x32xf32> to vector<8x4x8xf32>
    %32 = tpu.transpose %31, [1, 0, 2] : vector<8x4x8xf32> -> vector<4x8x8xf32>
    "tpu.trace_start"() <{level = 10 : i32, message = "zqd,zkd->zqk"}> : () -> ()
    %cst_30 = arith.constant dense<0.000000e+00> : vector<4x8x8xf32>
    %33 = tpu.matmul %32, %30, %cst_30 {dimension_numbers = #tpu.dot_dimension_numbers<[2], [2], [1], [1], [0, 0, 0, 1, 1, 1], [0], [0]>} : vector<4x8x8xf32>, vector<4x8x8xf32>, vector<4x8x8xf32> -> vector<4x8x8xf32>
    "tpu.trace_stop"() : () -> ()
    %34 = vector.shape_cast %33 : vector<4x8x8xf32> to vector<1x4x8x8xf32>
    %35 = vector.shape_cast %8 : vector<1x8x8xf32> to vector<1x1x8x8xf32>
    %36 = vector.broadcast %35 : vector<1x1x8x8xf32> to vector<1x4x8x8xf32>
    %37 = arith.addf %34, %36 : vector<1x4x8x8xf32>
    %38 = vector.shape_cast %37 : vector<1x4x8x8xf32> to vector<4x8x8xf32>
    %cst_31 = arith.constant dense<0xFF800000> : vector<4x8xf32>
    %39 = vector.multi_reduction <maximumf>, %38, %cst_31 [2] : vector<4x8x8xf32> to vector<4x8xf32>
    %40 = vector.shape_cast %39 : vector<4x8xf32> to vector<4x8x1xf32>
    %41 = vector.broadcast %40 : vector<4x8x1xf32> to vector<4x8x8xf32>
    %42 = arith.subf %38, %41 : vector<4x8x8xf32>
    %43 = math.exp %42 : vector<4x8x8xf32>
    %cst_32 = arith.constant dense<0.000000e+00> : vector<4x8xf32>
    %44 = vector.multi_reduction <add>, %43, %cst_32 [2] : vector<4x8x8xf32> to vector<4x8xf32>
    %45 = vector.shape_cast %44 : vector<4x8xf32> to vector<4x8x1xf32>
    %46 = tpu.reciprocal %45 {approx = true} : vector<4x8x1xf32> -> vector<4x8x1xf32>
    %47 = vector.broadcast %46 : vector<4x8x1xf32> to vector<4x8x8xf32>
    %48 = arith.mulf %43, %47 : vector<4x8x8xf32>
    "tpu.trace_start"() <{level = 10 : i32, message = "zqk,zkd->zqd"}> : () -> ()
    %cst_33 = arith.constant dense<0.000000e+00> : vector<4x8x8xf32>
    %49 = tpu.matmul %48, %28, %cst_33 {dimension_numbers = #tpu.dot_dimension_numbers<[2], [1], [1], [2], [0, 0, 0, 1, 1, 2], [0], [0]>} : vector<4x8x8xf32>, vector<4x8x8xf32>, vector<4x8x8xf32> -> vector<4x8x8xf32>
    "tpu.trace_stop"() : () -> ()
    %50 = tpu.transpose %49, [1, 0, 2] : vector<4x8x8xf32> -> vector<8x4x8xf32>
    %51 = vector.shape_cast %50 : vector<8x4x8xf32> to vector<8x32xf32>
    %cst_34 = arith.constant dense<0.000000e+00> : vector<8x32xf32>
    %52 = tpu.matmul %51, %18, %cst_34 {dimension_numbers = #tpu.dot_dimension_numbers<[1], [0], [0], [1], [0, 0, 1, 1], [], []>} : vector<8x32xf32>, vector<32x32xf32>, vector<8x32xf32> -> vector<8x32xf32>
    %53 = vector.shape_cast %20 : vector<32xf32> to vector<1x32xf32>
    %54 = vector.broadcast %53 : vector<1x32xf32> to vector<8x32xf32>
    %55 = arith.addf %52, %54 : vector<8x32xf32>
    %56 = vector.shape_cast %55 : vector<8x32xf32> to vector<1x8x32xf32>
    %57 = arith.addf %56, %0 : vector<1x8x32xf32>
    %c0_35 = arith.constant 0 : index
    %c0_36 = arith.constant 0 : index
    %58 = vector.load %arg11[%c0_35, %c0_36] : memref<1x32xf32, #tpu.memory_space<vmem>>, vector<1x32xf32>
    %59 = vector.shape_cast %58 : vector<1x32xf32> to vector<32xf32>
    %c0_37 = arith.constant 0 : index
    %c0_38 = arith.constant 0 : index
    %60 = vector.load %arg12[%c0_37, %c0_38] : memref<1x32xf32, #tpu.memory_space<vmem>>, vector<1x32xf32>
    %61 = vector.shape_cast %60 : vector<1x32xf32> to vector<32xf32>
    %cst_39 = arith.constant dense<0.000000e+00> : vector<1x8xf32>
    %62 = vector.multi_reduction <add>, %57, %cst_39 [2] : vector<1x8x32xf32> to vector<1x8xf32>
    %63 = vector.shape_cast %62 : vector<1x8xf32> to vector<1x8x1xf32>
    %cst_40 = arith.constant 3.200000e+01 : f32
    %64 = vector.broadcast %cst_40 : f32 to vector<1x8x1xf32>
    %65 = arith.divf %63, %64 : vector<1x8x1xf32>
    %66 = vector.broadcast %65 : vector<1x8x1xf32> to vector<1x8x32xf32>
    %67 = arith.subf %57, %66 : vector<1x8x32xf32>
    %68 = arith.mulf %67, %67 : vector<1x8x32xf32>
    %cst_41 = arith.constant dense<0.000000e+00> : vector<1x8xf32>
    %69 = vector.multi_reduction <add>, %68, %cst_41 [2] : vector<1x8x32xf32> to vector<1x8xf32>
    %70 = vector.shape_cast %69 : vector<1x8xf32> to vector<1x8x1xf32>
    %cst_42 = arith.constant 3.200000e+01 : f32
    %71 = vector.broadcast %cst_42 : f32 to vector<1x8x1xf32>
    %72 = arith.divf %70, %71 : vector<1x8x1xf32>
    %73 = vector.broadcast %65 : vector<1x8x1xf32> to vector<1x8x32xf32>
    %74 = arith.subf %57, %73 : vector<1x8x32xf32>
    %cst_43 = arith.constant 9.99999974E-6 : f32
    %75 = vector.broadcast %cst_43 : f32 to vector<1x8x1xf32>
    %76 = arith.addf %72, %75 : vector<1x8x1xf32>
    %77 = math.rsqrt %76 : vector<1x8x1xf32>
    %78 = vector.broadcast %77 : vector<1x8x1xf32> to vector<1x8x32xf32>
    %79 = arith.mulf %74, %78 : vector<1x8x32xf32>
    %80 = vector.shape_cast %59 : vector<32xf32> to vector<1x1x32xf32>
    %81 = vector.broadcast %80 : vector<1x1x32xf32> to vector<1x8x32xf32>
    %82 = arith.mulf %79, %81 : vector<1x8x32xf32>
    %83 = vector.shape_cast %61 : vector<32xf32> to vector<1x1x32xf32>
    %84 = vector.broadcast %83 : vector<1x1x32xf32> to vector<1x8x32xf32>
    %85 = arith.addf %82, %84 : vector<1x8x32xf32>
    %c0_44 = arith.constant 0 : index
    %c0_45 = arith.constant 0 : index
    %86 = vector.load %arg15[%c0_44, %c0_45] : memref<32x32xf32, #tpu.memory_space<vmem>>, vector<32x32xf32>
    %c0_46 = arith.constant 0 : index
    %c0_47 = arith.constant 0 : index
    %87 = vector.load %arg14[%c0_46, %c0_47] : memref<32x32xf32, #tpu.memory_space<vmem>>, vector<32x32xf32>
    %c0_48 = arith.constant 0 : index
    %c0_49 = arith.constant 0 : index
    %88 = vector.load %arg13[%c0_48, %c0_49] : memref<32x32xf32, #tpu.memory_space<vmem>>, vector<32x32xf32>
    %c0_50 = arith.constant 0 : index
    %c0_51 = arith.constant 0 : index
    %89 = vector.load %arg16[%c0_50, %c0_51] : memref<32x32xf32, #tpu.memory_space<vmem>>, vector<32x32xf32>
    %c0_52 = arith.constant 0 : index
    %c0_53 = arith.constant 0 : index
    %90 = vector.load %arg17[%c0_52, %c0_53] : memref<1x32xf32, #tpu.memory_space<vmem>>, vector<1x32xf32>
    %91 = vector.shape_cast %90 : vector<1x32xf32> to vector<32xf32>
    %92 = vector.shape_cast %1 : vector<1x8x32xf32> to vector<8x32xf32>
    %cst_54 = arith.constant dense<0.000000e+00> : vector<8x32xf32>
    %93 = tpu.matmul %92, %86, %cst_54 {dimension_numbers = #tpu.dot_dimension_numbers<[1], [0], [0], [1], [0, 0, 1, 1], [], []>} : vector<8x32xf32>, vector<32x32xf32>, vector<8x32xf32> -> vector<8x32xf32>
    %94 = vector.shape_cast %2 : vector<1x8x32xf32> to vector<8x32xf32>
    %cst_55 = arith.constant dense<0.000000e+00> : vector<8x32xf32>
    %95 = tpu.matmul %94, %87, %cst_55 {dimension_numbers = #tpu.dot_dimension_numbers<[1], [0], [0], [1], [0, 0, 1, 1], [], []>} : vector<8x32xf32>, vector<32x32xf32>, vector<8x32xf32> -> vector<8x32xf32>
    %96 = vector.shape_cast %85 : vector<1x8x32xf32> to vector<8x32xf32>
    %cst_56 = arith.constant dense<0.000000e+00> : vector<8x32xf32>
    %97 = tpu.matmul %96, %88, %cst_56 {dimension_numbers = #tpu.dot_dimension_numbers<[1], [0], [0], [1], [0, 0, 1, 1], [], []>} : vector<8x32xf32>, vector<32x32xf32>, vector<8x32xf32> -> vector<8x32xf32>
    %98 = vector.shape_cast %93 : vector<8x32xf32> to vector<8x4x8xf32>
    %99 = tpu.transpose %98, [1, 0, 2] : vector<8x4x8xf32> -> vector<4x8x8xf32>
    %100 = vector.shape_cast %95 : vector<8x32xf32> to vector<8x4x8xf32>
    %101 = tpu.transpose %100, [1, 0, 2] : vector<8x4x8xf32> -> vector<4x8x8xf32>
    %102 = vector.shape_cast %97 : vector<8x32xf32> to vector<8x4x8xf32>
    %103 = tpu.transpose %102, [1, 0, 2] : vector<8x4x8xf32> -> vector<4x8x8xf32>
    "tpu.trace_start"() <{level = 10 : i32, message = "zqd,zkd->zqk"}> : () -> ()
    %cst_57 = arith.constant dense<0.000000e+00> : vector<4x8x8xf32>
    %104 = tpu.matmul %103, %101, %cst_57 {dimension_numbers = #tpu.dot_dimension_numbers<[2], [2], [1], [1], [0, 0, 0, 1, 1, 1], [0], [0]>} : vector<4x8x8xf32>, vector<4x8x8xf32>, vector<4x8x8xf32> -> vector<4x8x8xf32>
    "tpu.trace_stop"() : () -> ()
    %105 = vector.shape_cast %104 : vector<4x8x8xf32> to vector<1x4x8x8xf32>
    %106 = vector.shape_cast %14 : vector<1x8x8xf32> to vector<1x1x8x8xf32>
    %107 = vector.broadcast %106 : vector<1x1x8x8xf32> to vector<1x4x8x8xf32>
    %108 = arith.addf %105, %107 : vector<1x4x8x8xf32>
    %109 = vector.shape_cast %108 : vector<1x4x8x8xf32> to vector<4x8x8xf32>
    %cst_58 = arith.constant dense<0xFF800000> : vector<4x8xf32>
    %110 = vector.multi_reduction <maximumf>, %109, %cst_58 [2] : vector<4x8x8xf32> to vector<4x8xf32>
    %111 = vector.shape_cast %110 : vector<4x8xf32> to vector<4x8x1xf32>
    %112 = vector.broadcast %111 : vector<4x8x1xf32> to vector<4x8x8xf32>
    %113 = arith.subf %109, %112 : vector<4x8x8xf32>
    %114 = math.exp %113 : vector<4x8x8xf32>
    %cst_59 = arith.constant dense<0.000000e+00> : vector<4x8xf32>
    %115 = vector.multi_reduction <add>, %114, %cst_59 [2] : vector<4x8x8xf32> to vector<4x8xf32>
    %116 = vector.shape_cast %115 : vector<4x8xf32> to vector<4x8x1xf32>
    %117 = tpu.reciprocal %116 {approx = true} : vector<4x8x1xf32> -> vector<4x8x1xf32>
    %118 = vector.broadcast %117 : vector<4x8x1xf32> to vector<4x8x8xf32>
    %119 = arith.mulf %114, %118 : vector<4x8x8xf32>
    "tpu.trace_start"() <{level = 10 : i32, message = "zqk,zkd->zqd"}> : () -> ()
    %cst_60 = arith.constant dense<0.000000e+00> : vector<4x8x8xf32>
    %120 = tpu.matmul %119, %99, %cst_60 {dimension_numbers = #tpu.dot_dimension_numbers<[2], [1], [1], [2], [0, 0, 0, 1, 1, 2], [0], [0]>} : vector<4x8x8xf32>, vector<4x8x8xf32>, vector<4x8x8xf32> -> vector<4x8x8xf32>
    "tpu.trace_stop"() : () -> ()
    %121 = tpu.transpose %120, [1, 0, 2] : vector<4x8x8xf32> -> vector<8x4x8xf32>
    %122 = vector.shape_cast %121 : vector<8x4x8xf32> to vector<8x32xf32>
    %cst_61 = arith.constant dense<0.000000e+00> : vector<8x32xf32>
    %123 = tpu.matmul %122, %89, %cst_61 {dimension_numbers = #tpu.dot_dimension_numbers<[1], [0], [0], [1], [0, 0, 1, 1], [], []>} : vector<8x32xf32>, vector<32x32xf32>, vector<8x32xf32> -> vector<8x32xf32>
    %124 = vector.shape_cast %91 : vector<32xf32> to vector<1x32xf32>
    %125 = vector.broadcast %124 : vector<1x32xf32> to vector<8x32xf32>
    %126 = arith.addf %123, %125 : vector<8x32xf32>
    %127 = vector.shape_cast %126 : vector<8x32xf32> to vector<1x8x32xf32>
    %128 = arith.addf %127, %85 : vector<1x8x32xf32>
    %c0_62 = arith.constant 0 : index
    %c0_63 = arith.constant 0 : index
    %129 = vector.load %arg18[%c0_62, %c0_63] : memref<1x32xf32, #tpu.memory_space<vmem>>, vector<1x32xf32>
    %130 = vector.shape_cast %129 : vector<1x32xf32> to vector<32xf32>
    %c0_64 = arith.constant 0 : index
    %c0_65 = arith.constant 0 : index
    %131 = vector.load %arg19[%c0_64, %c0_65] : memref<1x32xf32, #tpu.memory_space<vmem>>, vector<1x32xf32>
    %132 = vector.shape_cast %131 : vector<1x32xf32> to vector<32xf32>
    %cst_66 = arith.constant dense<0.000000e+00> : vector<1x8xf32>
    %133 = vector.multi_reduction <add>, %128, %cst_66 [2] : vector<1x8x32xf32> to vector<1x8xf32>
    %134 = vector.shape_cast %133 : vector<1x8xf32> to vector<1x8x1xf32>
    %cst_67 = arith.constant 3.200000e+01 : f32
    %135 = vector.broadcast %cst_67 : f32 to vector<1x8x1xf32>
    %136 = arith.divf %134, %135 : vector<1x8x1xf32>
    %137 = vector.broadcast %136 : vector<1x8x1xf32> to vector<1x8x32xf32>
    %138 = arith.subf %128, %137 : vector<1x8x32xf32>
    %139 = arith.mulf %138, %138 : vector<1x8x32xf32>
    %cst_68 = arith.constant dense<0.000000e+00> : vector<1x8xf32>
    %140 = vector.multi_reduction <add>, %139, %cst_68 [2] : vector<1x8x32xf32> to vector<1x8xf32>
    %141 = vector.shape_cast %140 : vector<1x8xf32> to vector<1x8x1xf32>
    %cst_69 = arith.constant 3.200000e+01 : f32
    %142 = vector.broadcast %cst_69 : f32 to vector<1x8x1xf32>
    %143 = arith.divf %141, %142 : vector<1x8x1xf32>
    %144 = vector.broadcast %136 : vector<1x8x1xf32> to vector<1x8x32xf32>
    %145 = arith.subf %128, %144 : vector<1x8x32xf32>
    %cst_70 = arith.constant 9.99999974E-6 : f32
    %146 = vector.broadcast %cst_70 : f32 to vector<1x8x1xf32>
    %147 = arith.addf %143, %146 : vector<1x8x1xf32>
    %148 = math.rsqrt %147 : vector<1x8x1xf32>
    %149 = vector.broadcast %148 : vector<1x8x1xf32> to vector<1x8x32xf32>
    %150 = arith.mulf %145, %149 : vector<1x8x32xf32>
    %151 = vector.shape_cast %130 : vector<32xf32> to vector<1x1x32xf32>
    %152 = vector.broadcast %151 : vector<1x1x32xf32> to vector<1x8x32xf32>
    %153 = arith.mulf %150, %152 : vector<1x8x32xf32>
    %154 = vector.shape_cast %132 : vector<32xf32> to vector<1x1x32xf32>
    %155 = vector.broadcast %154 : vector<1x1x32xf32> to vector<1x8x32xf32>
    %156 = arith.addf %153, %155 : vector<1x8x32xf32>
    %157 = vector.shape_cast %156 : vector<1x8x32xf32> to vector<8x32xf32>
    %c0_71 = arith.constant 0 : index
    %c0_72 = arith.constant 0 : index
    %158 = vector.load %arg20[%c0_71, %c0_72] : memref<32x128xf32, #tpu.memory_space<vmem>>, vector<32x128xf32>
    %cst_73 = arith.constant dense<0.000000e+00> : vector<8x128xf32>
    %159 = tpu.matmul %157, %158, %cst_73 {dimension_numbers = #tpu.dot_dimension_numbers<[1], [0], [0], [1], [0, 0, 1, 1], [], []>} : vector<8x32xf32>, vector<32x128xf32>, vector<8x128xf32> -> vector<8x128xf32>
    %c0_74 = arith.constant 0 : index
    %c0_75 = arith.constant 0 : index
    %160 = vector.load %arg21[%c0_74, %c0_75] : memref<1x128xf32, #tpu.memory_space<vmem>>, vector<1x128xf32>
    %161 = vector.shape_cast %160 : vector<1x128xf32> to vector<128xf32>
    %162 = vector.shape_cast %161 : vector<128xf32> to vector<1x128xf32>
    %163 = vector.broadcast %162 : vector<1x128xf32> to vector<8x128xf32>
    %164 = arith.addf %159, %163 : vector<8x128xf32>
    %cst_76 = arith.constant 0.000000e+00 : f32
    %165 = vector.broadcast %cst_76 : f32 to vector<8x128xf32>
    %166 = arith.maximumf %164, %165 : vector<8x128xf32>
    %c0_77 = arith.constant 0 : index
    %c0_78 = arith.constant 0 : index
    %167 = vector.load %arg22[%c0_77, %c0_78] : memref<128x32xf32, #tpu.memory_space<vmem>>, vector<128x32xf32>
    %cst_79 = arith.constant dense<0.000000e+00> : vector<8x32xf32>
    %168 = tpu.matmul %166, %167, %cst_79 {dimension_numbers = #tpu.dot_dimension_numbers<[1], [0], [0], [1], [0, 0, 1, 1], [], []>} : vector<8x128xf32>, vector<128x32xf32>, vector<8x32xf32> -> vector<8x32xf32>
    %c0_80 = arith.constant 0 : index
    %c0_81 = arith.constant 0 : index
    %169 = vector.load %arg23[%c0_80, %c0_81] : memref<1x32xf32, #tpu.memory_space<vmem>>, vector<1x32xf32>
    %170 = vector.shape_cast %169 : vector<1x32xf32> to vector<32xf32>
    %171 = vector.shape_cast %170 : vector<32xf32> to vector<1x32xf32>
    %172 = vector.broadcast %171 : vector<1x32xf32> to vector<8x32xf32>
    %173 = arith.addf %168, %172 : vector<8x32xf32>
    %174 = vector.shape_cast %173 : vector<8x32xf32> to vector<1x8x32xf32>
    %175 = arith.addf %174, %156 : vector<1x8x32xf32>
    %c0_82 = arith.constant 0 : index
    %c0_83 = arith.constant 0 : index
    %176 = vector.load %arg24[%c0_82, %c0_83] : memref<1x32xf32, #tpu.memory_space<vmem>>, vector<1x32xf32>
    %177 = vector.shape_cast %176 : vector<1x32xf32> to vector<32xf32>
    %c0_84 = arith.constant 0 : index
    %c0_85 = arith.constant 0 : index
    %178 = vector.load %arg25[%c0_84, %c0_85] : memref<1x32xf32, #tpu.memory_space<vmem>>, vector<1x32xf32>
    %179 = vector.shape_cast %178 : vector<1x32xf32> to vector<32xf32>
    %cst_86 = arith.constant dense<0.000000e+00> : vector<1x8xf32>
    %180 = vector.multi_reduction <add>, %175, %cst_86 [2] : vector<1x8x32xf32> to vector<1x8xf32>
    %181 = vector.shape_cast %180 : vector<1x8xf32> to vector<1x8x1xf32>
    %cst_87 = arith.constant 3.200000e+01 : f32
    %182 = vector.broadcast %cst_87 : f32 to vector<1x8x1xf32>
    %183 = arith.divf %181, %182 : vector<1x8x1xf32>
    %184 = vector.broadcast %183 : vector<1x8x1xf32> to vector<1x8x32xf32>
    %185 = arith.subf %175, %184 : vector<1x8x32xf32>
    %186 = arith.mulf %185, %185 : vector<1x8x32xf32>
    %cst_88 = arith.constant dense<0.000000e+00> : vector<1x8xf32>
    %187 = vector.multi_reduction <add>, %186, %cst_88 [2] : vector<1x8x32xf32> to vector<1x8xf32>
    %188 = vector.shape_cast %187 : vector<1x8xf32> to vector<1x8x1xf32>
    %cst_89 = arith.constant 3.200000e+01 : f32
    %189 = vector.broadcast %cst_89 : f32 to vector<1x8x1xf32>
    %190 = arith.divf %188, %189 : vector<1x8x1xf32>
    %191 = vector.broadcast %183 : vector<1x8x1xf32> to vector<1x8x32xf32>
    %192 = arith.subf %175, %191 : vector<1x8x32xf32>
    %cst_90 = arith.constant 9.99999974E-6 : f32
    %193 = vector.broadcast %cst_90 : f32 to vector<1x8x1xf32>
    %194 = arith.addf %190, %193 : vector<1x8x1xf32>
    %195 = math.rsqrt %194 : vector<1x8x1xf32>
    %196 = vector.broadcast %195 : vector<1x8x1xf32> to vector<1x8x32xf32>
    %197 = arith.mulf %192, %196 : vector<1x8x32xf32>
    %198 = vector.shape_cast %177 : vector<32xf32> to vector<1x1x32xf32>
    %199 = vector.broadcast %198 : vector<1x1x32xf32> to vector<1x8x32xf32>
    %200 = arith.mulf %197, %199 : vector<1x8x32xf32>
    %201 = vector.shape_cast %179 : vector<32xf32> to vector<1x1x32xf32>
    %202 = vector.broadcast %201 : vector<1x1x32xf32> to vector<1x8x32xf32>
    %203 = arith.addf %200, %202 : vector<1x8x32xf32>
    %204 = vector.shape_cast %203 : vector<1x8x32xf32> to vector<1x256xf32>
    %c0_91 = arith.constant 0 : index
    %c0_92 = arith.constant 0 : index
    %c0_93 = arith.constant 0 : index
    %205 = vector.load %arg26[%c0_91, %c0_92, %c0_93] : memref<1x1x256xf32, #tpu.memory_space<vmem>>, vector<1x1x256xf32>
    %206 = vector.shape_cast %205 : vector<1x1x256xf32> to vector<1x256xf32>
    %207 = vector.shape_cast %204 : vector<1x256xf32> to vector<1x1x256xf32>
    tpu.vector_store %arg26[%c0_91, %c0_92, %c0_93], %207 {strides = array<i32>} : memref<1x1x256xf32, #tpu.memory_space<vmem>>, vector<1x1x256xf32>,
    return
  }
  func.func @transform_0(%arg0: i32) -> (i32, i32, i32) {
    %c0_i32 = arith.constant 0 : i32
    %c0_i32_0 = arith.constant 0 : i32
    %c0_i32_1 = arith.constant 0 : i32
    return %arg0, %c0_i32, %c0_i32_0 : i32, i32, i32
  }
  func.func @transform_1(%arg0: i32) -> (i32, i32, i32) {
    %c0_i32 = arith.constant 0 : i32
    %c0_i32_0 = arith.constant 0 : i32
    %c0_i32_1 = arith.constant 0 : i32
    return %arg0, %c0_i32, %c0_i32_0 : i32, i32, i32
  }
  func.func @transform_2(%arg0: i32) -> (i32, i32, i32) {
    %c0_i32 = arith.constant 0 : i32
    %c0_i32_0 = arith.constant 0 : i32
    %c0_i32_1 = arith.constant 0 : i32
    return %arg0, %c0_i32, %c0_i32_0 : i32, i32, i32
  }
  func.func @transform_3(%arg0: i32) -> (i32, i32, i32) {
    %c0_i32 = arith.constant 0 : i32
    %c0_i32_0 = arith.constant 0 : i32
    %c0_i32_1 = arith.constant 0 : i32
    return %arg0, %c0_i32, %c0_i32_0 : i32, i32, i32
  }
  func.func @transform_4(%arg0: i32) -> (i32, i32, i32) {
    %c0_i32 = arith.constant 0 : i32
    %c0_i32_0 = arith.constant 0 : i32
    %c0_i32_1 = arith.constant 0 : i32
    return %arg0, %c0_i32, %c0_i32_0 : i32, i32, i32
  }
  func.func @transform_5(%arg0: i32) -> (i32, i32) {
    %c0_i32 = arith.constant 0 : i32
    %c0_i32_0 = arith.constant 0 : i32
    %c0_i32_1 = arith.constant 0 : i32
    return %c0_i32, %c0_i32_0 : i32, i32
  }
  func.func @transform_6(%arg0: i32) -> (i32, i32) {
    %c0_i32 = arith.constant 0 : i32
    %c0_i32_0 = arith.constant 0 : i32
    %c0_i32_1 = arith.constant 0 : i32
    return %c0_i32, %c0_i32_0 : i32, i32
  }
  func.func @transform_7(%arg0: i32) -> (i32, i32) {
    %c0_i32 = arith.constant 0 : i32
    %c0_i32_0 = arith.constant 0 : i32
    %c0_i32_1 = arith.constant 0 : i32
    return %c0_i32, %c0_i32_0 : i32, i32
  }
  func.func @transform_8(%arg0: i32) -> (i32, i32) {
    %c0_i32 = arith.constant 0 : i32
    %c0_i32_0 = arith.constant 0 : i32
    %c0_i32_1 = arith.constant 0 : i32
    return %c0_i32, %c0_i32_0 : i32, i32
  }
  func.func @transform_9(%arg0: i32) -> (i32, i32) {
    %c0_i32 = arith.constant 0 : i32
    %c0_i32_0 = arith.constant 0 : i32
    %c0_i32_1 = arith.constant 0 : i32
    return %c0_i32, %c0_i32_0 : i32, i32
  }
  func.func @transform_10(%arg0: i32) -> (i32, i32) {
    %c0_i32 = arith.constant 0 : i32
    %c0_i32_0 = arith.constant 0 : i32
    %c0_i32_1 = arith.constant 0 : i32
    return %c0_i32, %c0_i32_0 : i32, i32
  }
  func.func @transform_11(%arg0: i32) -> (i32, i32) {
    %c0_i32 = arith.constant 0 : i32
    %c0_i32_0 = arith.constant 0 : i32
    %c0_i32_1 = arith.constant 0 : i32
    return %c0_i32, %c0_i32_0 : i32, i32
  }
  func.func @transform_12(%arg0: i32) -> (i32, i32) {
    %c0_i32 = arith.constant 0 : i32
    %c0_i32_0 = arith.constant 0 : i32
    %c0_i32_1 = arith.constant 0 : i32
    return %c0_i32, %c0_i32_0 : i32, i32
  }
  func.func @transform_13(%arg0: i32) -> (i32, i32) {
    %c0_i32 = arith.constant 0 : i32
    %c0_i32_0 = arith.constant 0 : i32
    %c0_i32_1 = arith.constant 0 : i32
    return %c0_i32, %c0_i32_0 : i32, i32
  }
  func.func @transform_14(%arg0: i32) -> (i32, i32) {
    %c0_i32 = arith.constant 0 : i32
    %c0_i32_0 = arith.constant 0 : i32
    %c0_i32_1 = arith.constant 0 : i32
    return %c0_i32, %c0_i32_0 : i32, i32
  }
  func.func @transform_15(%arg0: i32) -> (i32, i32) {
    %c0_i32 = arith.constant 0 : i32
    %c0_i32_0 = arith.constant 0 : i32
    %c0_i32_1 = arith.constant 0 : i32
    return %c0_i32, %c0_i32_0 : i32, i32
  }
  func.func @transform_16(%arg0: i32) -> (i32, i32) {
    %c0_i32 = arith.constant 0 : i32
    %c0_i32_0 = arith.constant 0 : i32
    %c0_i32_1 = arith.constant 0 : i32
    return %c0_i32, %c0_i32_0 : i32, i32
  }
  func.func @transform_17(%arg0: i32) -> (i32, i32) {
    %c0_i32 = arith.constant 0 : i32
    %c0_i32_0 = arith.constant 0 : i32
    %c0_i32_1 = arith.constant 0 : i32
    return %c0_i32, %c0_i32_0 : i32, i32
  }
  func.func @transform_18(%arg0: i32) -> (i32, i32) {
    %c0_i32 = arith.constant 0 : i32
    %c0_i32_0 = arith.constant 0 : i32
    %c0_i32_1 = arith.constant 0 : i32
    return %c0_i32, %c0_i32_0 : i32, i32
  }
  func.func @transform_19(%arg0: i32) -> (i32, i32) {
    %c0_i32 = arith.constant 0 : i32
    %c0_i32_0 = arith.constant 0 : i32
    %c0_i32_1 = arith.constant 0 : i32
    return %c0_i32, %c0_i32_0 : i32, i32
  }
  func.func @transform_20(%arg0: i32) -> (i32, i32) {
    %c0_i32 = arith.constant 0 : i32
    %c0_i32_0 = arith.constant 0 : i32
    %c0_i32_1 = arith.constant 0 : i32
    return %c0_i32, %c0_i32_0 : i32, i32
  }
  func.func @transform_21(%arg0: i32) -> (i32, i32) {
    %c0_i32 = arith.constant 0 : i32
    %c0_i32_0 = arith.constant 0 : i32
    %c0_i32_1 = arith.constant 0 : i32
    return %c0_i32, %c0_i32_0 : i32, i32
  }
  func.func @transform_22(%arg0: i32) -> (i32, i32) {
    %c0_i32 = arith.constant 0 : i32
    %c0_i32_0 = arith.constant 0 : i32
    %c0_i32_1 = arith.constant 0 : i32
    return %c0_i32, %c0_i32_0 : i32, i32
  }
  func.func @transform_23(%arg0: i32) -> (i32, i32) {
    %c0_i32 = arith.constant 0 : i32
    %c0_i32_0 = arith.constant 0 : i32
    %c0_i32_1 = arith.constant 0 : i32
    return %c0_i32, %c0_i32_0 : i32, i32
  }
  func.func @transform_24(%arg0: i32) -> (i32, i32) {
    %c0_i32 = arith.constant 0 : i32
    %c0_i32_0 = arith.constant 0 : i32
    %c0_i32_1 = arith.constant 0 : i32
    return %c0_i32, %c0_i32_0 : i32, i32
  }
  func.func @transform_25(%arg0: i32) -> (i32, i32, i32) {
    %c0_i32 = arith.constant 0 : i32
    %c0_i32_0 = arith.constant 0 : i32
    %c0_i32_1 = arith.constant 0 : i32
    return %arg0, %c0_i32, %c0_i32_0 : i32, i32, i32
  }
}

</mosaic_0001>

<llo_original>
// kernel: tpu_custom_call.1
$region0: #{tpu_custom_call.1}
  #allocation0 [shape = 'u32[]', space=smem, size = 0x4, offset = 0x4, fixed_abs, tag = 'smem constant byte address 0x4 - core index']
  #allocation1 [shape = 'u32[144,128]{1,0:T(1,128)}', space=vmem, size = 0x12000, scoped, tag = 'internal scratch']
  %s0 = inlined_call_operand.hbm [shape: f32[2,8,32], index: 0, kind: input, shape index: {}]
  %s1 = inlined_call_operand.hbm [shape: f32[2,8,32], index: 1, kind: input, shape index: {}]
  %s2 = inlined_call_operand.hbm [shape: f32[2,8,32], index: 2, kind: input, shape index: {}]
  %s3 = inlined_call_operand.hbm [shape: s8[2,8,8], index: 3, kind: input, shape index: {}]
  %s4 = inlined_call_operand.hbm [shape: s8[2,8,8], index: 4, kind: input, shape index: {}]
  %s5 = inlined_call_operand.vmem [shape: f32[32,32], index: 5, kind: input, shape index: {}]
  %s6 = inlined_call_operand.vmem [shape: f32[32,32], index: 6, kind: input, shape index: {}]
  %s7 = inlined_call_operand.vmem [shape: f32[32,32], index: 7, kind: input, shape index: {}]
  %s8 = inlined_call_operand.vmem [shape: f32[32,32], index: 8, kind: input, shape index: {}]
  %s9 = inlined_call_operand.hbm [shape: f32[1,32], index: 9, kind: input, shape index: {}]
  %s10 = inlined_call_operand.hbm [shape: f32[1,32], index: 10, kind: input, shape index: {}]
  %s11 = inlined_call_operand.hbm [shape: f32[1,32], index: 11, kind: input, shape index: {}]
  %s12 = inlined_call_operand.vmem [shape: f32[32,32], index: 12, kind: input, shape index: {}]
  %s13 = inlined_call_operand.vmem [shape: f32[32,32], index: 13, kind: input, shape index: {}]
  %s14 = inlined_call_operand.hbm [shape: f32[32,32], index: 14, kind: input, shape index: {}]
  %s15 = inlined_call_operand.hbm [shape: f32[32,32], index: 15, kind: input, shape index: {}]
  %s16 = inlined_call_operand.hbm [shape: f32[1,32], index: 16, kind: input, shape index: {}]
  %s17 = inlined_call_operand.hbm [shape: f32[1,32], index: 17, kind: input, shape index: {}]
  %s18 = inlined_call_operand.vmem [shape: f32[1,32], index: 18, kind: input, shape index: {}]
  %s19 = inlined_call_operand.hbm [shape: f32[32,128], index: 19, kind: input, shape index: {}]
  %s20 = inlined_call_operand.vmem [shape: f32[1,128], index: 20, kind: input, shape index: {}]
  %s21 = inlined_call_operand.vmem [shape: f32[128,32], index: 21, kind: input, shape index: {}]
  %s22 = inlined_call_operand.vmem [shape: f32[1,32], index: 22, kind: input, shape index: {}]
  %s23 = inlined_call_operand.vmem [shape: f32[1,32], index: 23, kind: input, shape index: {}]
  %s24 = inlined_call_operand.vmem [shape: f32[1,32], index: 24, kind: input, shape index: {}]
  %s25 = inlined_call_operand.hbm [shape: f32[2,1,256], index: 25, kind: output, shape index: {}]
  %s26 = sld [smem:[#allocation0]]
  $region185: #{tpu_custom_call.1} parent=0
    _
  %s28 = ssub.s32 1, %s26
  %s29 = scalar_select 0, %s28, %s26
  $region1: #{tpu_custom_call.1} parent=0
    #allocation2 [shape = 'u8[8192]{0}', space=vmem, size = 0x2000, scoped, tag = 'input window, operand 0']
    #allocation3 [shape = 's32[2]{0}', space=sflag, size = 0x8, scoped, tag = 'scoped memory for tpu_custom_call.1']
    #allocation4 [shape = 's32[2]{0}', space=sflag, size = 0x8, scoped, tag = 'scoped memory for tpu_custom_call.1']
    #allocation5 [shape = 'u8[8192]{0}', space=vmem, size = 0x2000, scoped, tag = 'input window, operand 1']
    #allocation6 [shape = 's32[2]{0}', space=sflag, size = 0x8, scoped, tag = 'scoped memory for tpu_custom_call.1']
    #allocation7 [shape = 'u8[8192]{0}', space=vmem, size = 0x2000, scoped, tag = 'input window, operand 2']
    #allocation8 [shape = 'u8[2048]{0}', space=vmem, size = 0x800, scoped, tag = 'input window, operand 3']
    #allocation9 [shape = 's32[2]{0}', space=sflag, size = 0x8, scoped, tag = 'scoped memory for tpu_custom_call.1']
    #allocation10 [shape = 'u8[2048]{0}', space=vmem, size = 0x800, scoped, tag = 'input window, operand 4']
    #allocation11 [shape = 'u8[512]{0}', space=vmem, size = 0x400, scoped, tag = 'input window, operand 9, single buffered']
    #allocation12 [shape = 's32[1]{0}', space=sflag, size = 0x4, scoped, tag = 'scoped memory for tpu_custom_call.1']
    #allocation13 [shape = 'u8[512]{0}', space=vmem, size = 0x400, scoped, tag = 'input window, operand 10, single buffered']
    #allocation14 [shape = 'u8[512]{0}', space=vmem, size = 0x400, scoped, tag = 'input window, operand 11, single buffered']
    #allocation15 [shape = 's32[1]{0}', space=sflag, size = 0x4, scoped, tag = 'scoped memory for tpu_custom_call.1']
    #allocation16 [shape = 'u8[16384]{0}', space=vmem, size = 0x4000, scoped, tag = 'input window, operand 14, single buffered']
    #allocation17 [shape = 'u8[16384]{0}', space=vmem, size = 0x4000, scoped, tag = 'input window, operand 15, single buffered']
    #allocation18 [shape = 's32[1]{0}', space=sflag, size = 0x4, scoped, tag = 'scoped memory for tpu_custom_call.1']
    #allocation19 [shape = 'u8[512]{0}', space=vmem, size = 0x400, scoped, tag = 'input window, operand 16, single buffered']
    #allocation20 [shape = 'u8[512]{0}', space=vmem, size = 0x400, scoped, tag = 'input window, operand 17, single buffered']
    #allocation21 [shape = 's32[1]{0}', space=sflag, size = 0x4, scoped, tag = 'scoped memory for tpu_custom_call.1']
    #allocation22 [shape = 'u8[16384]{0}', space=vmem, size = 0x4000, scoped, tag = 'input window, operand 19, single buffered']
    #allocation23 [shape = 'u8[2048]{0}', space=vmem, size = 0x800, scoped, tag = 'output window, operand 0']
    %30 = vsyncpa [#allocation3], 0
    %s31 = scalar_lea.sflag [#allocation3], 1
    %32 = vsyncpa %s31, 0
    %33 = vsyncpa [#allocation6], 0
    %s34 = scalar_lea.sflag [#allocation6], 1
    %35 = vsyncpa %s34, 0
    %36 = vsyncpa [#allocation9], 0
    %s37 = scalar_lea.sflag [#allocation9], 1
    %38 = vsyncpa %s37, 0
    %39 = vsyncpa [#allocation12], 0
    %40 = vsyncpa [#allocation15], 0
    %41 = vsyncpa [#allocation18], 0
    %42 = vsyncpa [#allocation21], 0
    %43 = vsyncpa [#allocation4], 0
    %s44 = scalar_lea.sflag [#allocation4], 1
    %45 = vsyncpa %s44, 0
    loop: start=0, step=1, limit=4
    $region2: #{tpu_custom_call.1} parent=1 // loop_pre_header
      _
    $region3: #{tpu_custom_call.1} parent=1 // loop_header
      %s47 = sphi 0, %s51
      %p48 = scmp.ge.s32.totalorder %s47, 4
      %s57 = sphi 0, %s59
      %s60 = sphi 0, %s57
      %s61 = sphi 0, %s60
      %s77 = sphi 0, %s61
      %s83 = sphi 0, %s85
      %s86 = sphi 0, %s83
      %s87 = sphi 0, %s86
      %s103 = sphi 0, %s87
      %s109 = sphi 0, %s111
      %s112 = sphi 0, %s109
      %s113 = sphi 0, %s112
      %s129 = sphi 0, %s113
      %s135 = sphi 0, %s137
      %s138 = sphi 0, %s135
      %s139 = sphi 0, %s138
      %s155 = sphi 0, %s139
      %s161 = sphi 0, %s163
      %s164 = sphi 0, %s161
      %s165 = sphi 0, %s164
      %s181 = sphi 0, %s165
      %s185 = sphi 0, %s185
      %s187 = sphi 0, %s185
      %s188 = sphi 0, %s187
      %s202 = sphi 0, %s188
      %s206 = sphi 0, %s206
      %s208 = sphi 0, %s206
      %s209 = sphi 0, %s208
      %s223 = sphi 0, %s209
      %s227 = sphi 0, %s227
      %s229 = sphi 0, %s227
      %s230 = sphi 0, %s229
      %s244 = sphi 0, %s230
      %s248 = sphi 0, %s248
      %s250 = sphi 0, %s248
      %s251 = sphi 0, %s250
      %s265 = sphi 0, %s251
      %s269 = sphi 0, %s269
      %s271 = sphi 0, %s269
      %s272 = sphi 0, %s271
      %s286 = sphi 0, %s272
      %s290 = sphi 0, %s290
      %s292 = sphi 0, %s290
      %s293 = sphi 0, %s292
      %s307 = sphi 0, %s293
      %s311 = sphi 0, %s311
      %s313 = sphi 0, %s311
      %s314 = sphi 0, %s313
      %s328 = sphi 0, %s314
      %s332 = sphi 0, %s332
      %s334 = sphi 0, %s332
      %s335 = sphi 0, %s334
      %s349 = sphi 0, %s335
      %s353 = sphi 0, %s353
      %s355 = sphi 0, %s353
      %s356 = sphi 0, %s355
      %s370 = sphi 0, %s356
      %s374 = sphi 0, %s374
      %s376 = sphi 0, %s374
      %s377 = sphi 0, %s376
      %s391 = sphi 0, %s377
      %s395 = sphi 0, %s395
      %s397 = sphi 0, %s395
      %s398 = sphi 0, %s397
      %s412 = sphi 0, %s398
      %s416 = sphi 0, %s416
      %s418 = sphi 0, %s416
      %s419 = sphi 0, %s418
      %s433 = sphi 0, %s419
      %s437 = sphi 0, %s437
      %s439 = sphi 0, %s437
      %s440 = sphi 0, %s439
      %s454 = sphi 0, %s440
      %s458 = sphi 0, %s458
      %s460 = sphi 0, %s458
      %s461 = sphi 0, %s460
      %s475 = sphi 0, %s461
      %s479 = sphi 0, %s479
      %s481 = sphi 0, %s479
      %s482 = sphi 0, %s481
      %s496 = sphi 0, %s482
      %s500 = sphi 0, %s500
      %s502 = sphi 0, %s500
      %s503 = sphi 0, %s502
      %s517 = sphi 0, %s503
      %s521 = sphi 0, %s521
      %s523 = sphi 0, %s521
      %s524 = sphi 0, %s523
      %s538 = sphi 0, %s524
      %s542 = sphi 0, %s542
      %s544 = sphi 0, %s542
      %s545 = sphi 0, %s544
      %s559 = sphi 0, %s545
      %s563 = sphi 0, %s563
      %s565 = sphi 0, %s563
      %s566 = sphi 0, %s565
      %s580 = sphi 0, %s566
      %s584 = sphi 0, %s584
      %s586 = sphi 0, %s584
      %s587 = sphi 0, %s586
      %s601 = sphi 0, %s587
      %s607 = sphi 0, %s609
      %s610 = sphi 0, %s607
      %s611 = sphi 0, %s610
      %s627 = sphi 0, %s611
    $region4: #{tpu_custom_call.1} parent=1 // loop_header_branch
      %50 = sbr.rel (%p48) target = $region8
    $region5: #{tpu_custom_call.1} parent=1 // loop_body
      %s52 = ssub.s32 %s47, 1
      %s53 = ssub.s32 %s47, 2
      %s54 = sadd.s32 %s47, 1
      %s55 = ssub.s32 %s47, %s54
      %p56 = scmp.eq.s32.totalorder %s55, 0
      %s58 = sadd.s32 %s57, 1
      %s59 = scalar_select %p56, %s57, %s58
      %p62 = pneg %p56
      %p63 = scmp.eq.s32.totalorder %s47, 1
      %p64 = por %p62, %p63
      %p65 = scmp.ne.s32.totalorder %s57, %s60
      %p66 = scmp.eq.s32.totalorder %s47, 0
      %p67 = por %p65, %p66
      %p68 = scmp.ne.s32.totalorder %s57, %s60
      %p69 = scmp.eq.s32.totalorder %s52, 1
      %p70 = por %p68, %p69
      %p71 = scmp.ne.s32.totalorder %s60, %s61
      %p72 = scmp.eq.s32.totalorder %s52, 0
      %p73 = por %p71, %p72
      %p74 = scmp.ne.s32.totalorder %s60, %s61
      %p75 = scmp.eq.s32.totalorder %s53, 1
      %p76 = por %p74, %p75
      %p78 = scmp.ne.s32.totalorder %s61, %s77
      %p79 = scmp.eq.s32.totalorder %s53, 0
      %p80 = por %p78, %p79
      %s81 = ssub.s32 %s47, %s54
      %p82 = scmp.eq.s32.totalorder %s81, 0
      %s84 = sadd.s32 %s83, 1
      %s85 = scalar_select %p82, %s83, %s84
      %p88 = pneg %p82
      %p89 = scmp.eq.s32.totalorder %s47, 1
      %p90 = por %p88, %p89
      %p91 = scmp.ne.s32.totalorder %s83, %s86
      %p92 = scmp.eq.s32.totalorder %s47, 0
      %p93 = por %p91, %p92
      %p94 = scmp.ne.s32.totalorder %s83, %s86
      %p95 = scmp.eq.s32.totalorder %s52, 1
      %p96 = por %p94, %p95
      %p97 = scmp.ne.s32.totalorder %s86, %s87
      %p98 = scmp.eq.s32.totalorder %s52, 0
      %p99 = por %p97, %p98
      %p100 = scmp.ne.s32.totalorder %s86, %s87
      %p101 = scmp.eq.s32.totalorder %s53, 1
      %p102 = por %p100, %p101
      %p104 = scmp.ne.s32.totalorder %s87, %s103
      %p105 = scmp.eq.s32.totalorder %s53, 0
      %p106 = por %p104, %p105
      %s107 = ssub.s32 %s47, %s54
      %p108 = scmp.eq.s32.totalorder %s107, 0
      %s110 = sadd.s32 %s109, 1
      %s111 = scalar_select %p108, %s109, %s110
      %p114 = pneg %p108
      %p115 = scmp.eq.s32.totalorder %s47, 1
      %p116 = por %p114, %p115
      %p117 = scmp.ne.s32.totalorder %s109, %s112
      %p118 = scmp.eq.s32.totalorder %s47, 0
      %p119 = por %p117, %p118
      %p120 = scmp.ne.s32.totalorder %s109, %s112
      %p121 = scmp.eq.s32.totalorder %s52, 1
      %p122 = por %p120, %p121
      %p123 = scmp.ne.s32.totalorder %s112, %s113
      %p124 = scmp.eq.s32.totalorder %s52, 0
      %p125 = por %p123, %p124
      %p126 = scmp.ne.s32.totalorder %s112, %s113
      %p127 = scmp.eq.s32.totalorder %s53, 1
      %p128 = por %p126, %p127
      %p130 = scmp.ne.s32.totalorder %s113, %s129
      %p131 = scmp.eq.s32.totalorder %s53, 0
      %p132 = por %p130, %p131
      %s133 = ssub.s32 %s47, %s54
      %p134 = scmp.eq.s32.totalorder %s133, 0
      %s136 = sadd.s32 %s135, 1
      %s137 = scalar_select %p134, %s135, %s136
      %p140 = pneg %p134
      %p141 = scmp.eq.s32.totalorder %s47, 1
      %p142 = por %p140, %p141
      %p143 = scmp.ne.s32.totalorder %s135, %s138
      %p144 = scmp.eq.s32.totalorder %s47, 0
      %p145 = por %p143, %p144
      %p146 = scmp.ne.s32.totalorder %s135, %s138
      %p147 = scmp.eq.s32.totalorder %s52, 1
      %p148 = por %p146, %p147
      %p149 = scmp.ne.s32.totalorder %s138, %s139
      %p150 = scmp.eq.s32.totalorder %s52, 0
      %p151 = por %p149, %p150
      %p152 = scmp.ne.s32.totalorder %s138, %s139
      %p153 = scmp.eq.s32.totalorder %s53, 1
      %p154 = por %p152, %p153
      %p156 = scmp.ne.s32.totalorder %s139, %s155
      %p157 = scmp.eq.s32.totalorder %s53, 0
      %p158 = por %p156, %p157
      %s159 = ssub.s32 %s47, %s54
      %p160 = scmp.eq.s32.totalorder %s159, 0
      %s162 = sadd.s32 %s161, 1
      %s163 = scalar_select %p160, %s161, %s162
      %p166 = pneg %p160
      %p167 = scmp.eq.s32.totalorder %s47, 1
      %p168 = por %p166, %p167
      %p169 = scmp.ne.s32.totalorder %s161, %s164
      %p170 = scmp.eq.s32.totalorder %s47, 0
      %p171 = por %p169, %p170
      %p172 = scmp.ne.s32.totalorder %s161, %s164
      %p173 = scmp.eq.s32.totalorder %s52, 1
      %p174 = por %p172, %p173
      %p175 = scmp.ne.s32.totalorder %s164, %s165
      %p176 = scmp.eq.s32.totalorder %s52, 0
      %p177 = por %p175, %p176
      %p178 = scmp.ne.s32.totalorder %s164, %s165
      %p179 = scmp.eq.s32.totalorder %s53, 1
      %p180 = por %p178, %p179
      %p182 = scmp.ne.s32.totalorder %s165, %s181
      %p183 = scmp.eq.s32.totalorder %s53, 0
      %p184 = por %p182, %p183
      %s186 = sadd.s32 %s185, 1
      %p189 = scmp.eq.s32.totalorder %s47, 1
      %p190 = scmp.ne.s32.totalorder %s185, %s187
      %p191 = scmp.eq.s32.totalorder %s47, 0
      %p192 = por %p190, %p191
      %p193 = scmp.ne.s32.totalorder %s185, %s187
      %p194 = scmp.eq.s32.totalorder %s52, 1
      %p195 = por %p193, %p194
      %p196 = scmp.ne.s32.totalorder %s187, %s188
      %p197 = scmp.eq.s32.totalorder %s52, 0
      %p198 = por %p196, %p197
      %p199 = scmp.ne.s32.totalorder %s187, %s188
      %p200 = scmp.eq.s32.totalorder %s53, 1
      %p201 = por %p199, %p200
      %p203 = scmp.ne.s32.totalorder %s188, %s202
      %p204 = scmp.eq.s32.totalorder %s53, 0
      %p205 = por %p203, %p204
      %s207 = sadd.s32 %s206, 1
      %p210 = scmp.eq.s32.totalorder %s47, 1
      %p211 = scmp.ne.s32.totalorder %s206, %s208
      %p212 = scmp.eq.s32.totalorder %s47, 0
      %p213 = por %p211, %p212
      %p214 = scmp.ne.s32.totalorder %s206, %s208
      %p215 = scmp.eq.s32.totalorder %s52, 1
      %p216 = por %p214, %p215
      %p217 = scmp.ne.s32.totalorder %s208, %s209
      %p218 = scmp.eq.s32.totalorder %s52, 0
      %p219 = por %p217, %p218
      %p220 = scmp.ne.s32.totalorder %s208, %s209
      %p221 = scmp.eq.s32.totalorder %s53, 1
      %p222 = por %p220, %p221
      %p224 = scmp.ne.s32.totalorder %s209, %s223
      %p225 = scmp.eq.s32.totalorder %s53, 0
      %p226 = por %p224, %p225
      %s228 = sadd.s32 %s227, 1
      %p231 = scmp.eq.s32.totalorder %s47, 1
      %p232 = scmp.ne.s32.totalorder %s227, %s229
      %p233 = scmp.eq.s32.totalorder %s47, 0
      %p234 = por %p232, %p233
      %p235 = scmp.ne.s32.totalorder %s227, %s229
      %p236 = scmp.eq.s32.totalorder %s52, 1
      %p237 = por %p235, %p236
      %p238 = scmp.ne.s32.totalorder %s229, %s230
      %p239 = scmp.eq.s32.totalorder %s52, 0
      %p240 = por %p238, %p239
      %p241 = scmp.ne.s32.totalorder %s229, %s230
      %p242 = scmp.eq.s32.totalorder %s53, 1
      %p243 = por %p241, %p242
      %p245 = scmp.ne.s32.totalorder %s230, %s244
      %p246 = scmp.eq.s32.totalorder %s53, 0
      %p247 = por %p245, %p246
      %s249 = sadd.s32 %s248, 1
      %p252 = scmp.eq.s32.totalorder %s47, 1
      %p253 = scmp.ne.s32.totalorder %s248, %s250
      %p254 = scmp.eq.s32.totalorder %s47, 0
      %p255 = por %p253, %p254
      %p256 = scmp.ne.s32.totalorder %s248, %s250
      %p257 = scmp.eq.s32.totalorder %s52, 1
      %p258 = por %p256, %p257
      %p259 = scmp.ne.s32.totalorder %s250, %s251
      %p260 = scmp.eq.s32.totalorder %s52, 0
      %p261 = por %p259, %p260
      %p262 = scmp.ne.s32.totalorder %s250, %s251
      %p263 = scmp.eq.s32.totalorder %s53, 1
      %p264 = por %p262, %p263
      %p266 = scmp.ne.s32.totalorder %s251, %s265
      %p267 = scmp.eq.s32.totalorder %s53, 0
      %p268 = por %p266, %p267
      %s270 = sadd.s32 %s269, 1
      %p273 = scmp.eq.s32.totalorder %s47, 1
      %p274 = scmp.ne.s32.totalorder %s269, %s271
      %p275 = scmp.eq.s32.totalorder %s47, 0
      %p276 = por %p274, %p275
      %p277 = scmp.ne.s32.totalorder %s269, %s271
      %p278 = scmp.eq.s32.totalorder %s52, 1
      %p279 = por %p277, %p278
      %p280 = scmp.ne.s32.totalorder %s271, %s272
      %p281 = scmp.eq.s32.totalorder %s52, 0
      %p282 = por %p280, %p281
      %p283 = scmp.ne.s32.totalorder %s271, %s272
      %p284 = scmp.eq.s32.totalorder %s53, 1
      %p285 = por %p283, %p284
      %p287 = scmp.ne.s32.totalorder %s272, %s286
      %p288 = scmp.eq.s32.totalorder %s53, 0
      %p289 = por %p287, %p288
      %s291 = sadd.s32 %s290, 1
      %p294 = scmp.eq.s32.totalorder %s47, 1
      %p295 = scmp.ne.s32.totalorder %s290, %s292
      %p296 = scmp.eq.s32.totalorder %s47, 0
      %p297 = por %p295, %p296
      %p298 = scmp.ne.s32.totalorder %s290, %s292
      %p299 = scmp.eq.s32.totalorder %s52, 1
      %p300 = por %p298, %p299
      %p301 = scmp.ne.s32.totalorder %s292, %s293
      %p302 = scmp.eq.s32.totalorder %s52, 0
      %p303 = por %p301, %p302
      %p304 = scmp.ne.s32.totalorder %s292, %s293
      %p305 = scmp.eq.s32.totalorder %s53, 1
      %p306 = por %p304, %p305
      %p308 = scmp.ne.s32.totalorder %s293, %s307
      %p309 = scmp.eq.s32.totalorder %s53, 0
      %p310 = por %p308, %p309
      %s312 = sadd.s32 %s311, 1
      %p315 = scmp.eq.s32.totalorder %s47, 1
      %p316 = scmp.ne.s32.totalorder %s311, %s313
      %p317 = scmp.eq.s32.totalorder %s47, 0
      %p318 = por %p316, %p317
      %p319 = scmp.ne.s32.totalorder %s311, %s313
      %p320 = scmp.eq.s32.totalorder %s52, 1
      %p321 = por %p319, %p320
      %p322 = scmp.ne.s32.totalorder %s313, %s314
      %p323 = scmp.eq.s32.totalorder %s52, 0
      %p324 = por %p322, %p323
      %p325 = scmp.ne.s32.totalorder %s313, %s314
      %p326 = scmp.eq.s32.totalorder %s53, 1
      %p327 = por %p325, %p326
      %p329 = scmp.ne.s32.totalorder %s314, %s328
      %p330 = scmp.eq.s32.totalorder %s53, 0
      %p331 = por %p329, %p330
      %s333 = sadd.s32 %s332, 1
      %p336 = scmp.eq.s32.totalorder %s47, 1
      %p337 = scmp.ne.s32.totalorder %s332, %s334
      %p338 = scmp.eq.s32.totalorder %s47, 0
      %p339 = por %p337, %p338
      %p340 = scmp.ne.s32.totalorder %s332, %s334
      %p341 = scmp.eq.s32.totalorder %s52, 1
      %p342 = por %p340, %p341
      %p343 = scmp.ne.s32.totalorder %s334, %s335
      %p344 = scmp.eq.s32.totalorder %s52, 0
      %p345 = por %p343, %p344
      %p346 = scmp.ne.s32.totalorder %s334, %s335
      %p347 = scmp.eq.s32.totalorder %s53, 1
      %p348 = por %p346, %p347
      %p350 = scmp.ne.s32.totalorder %s335, %s349
      %p351 = scmp.eq.s32.totalorder %s53, 0
      %p352 = por %p350, %p351
      %s354 = sadd.s32 %s353, 1
      %p357 = scmp.eq.s32.totalorder %s47, 1
      %p358 = scmp.ne.s32.totalorder %s353, %s355
      %p359 = scmp.eq.s32.totalorder %s47, 0
      %p360 = por %p358, %p359
      %p361 = scmp.ne.s32.totalorder %s353, %s355
      %p362 = scmp.eq.s32.totalorder %s52, 1
      %p363 = por %p361, %p362
      %p364 = scmp.ne.s32.totalorder %s355, %s356
      %p365 = scmp.eq.s32.totalorder %s52, 0
      %p366 = por %p364, %p365
      %p367 = scmp.ne.s32.totalorder %s355, %s356
      %p368 = scmp.eq.s32.totalorder %s53, 1
      %p369 = por %p367, %p368
      %p371 = scmp.ne.s32.totalorder %s356, %s370
      %p372 = scmp.eq.s32.totalorder %s53, 0
      %p373 = por %p371, %p372
      %s375 = sadd.s32 %s374, 1
      %p378 = scmp.eq.s32.totalorder %s47, 1
      %p379 = scmp.ne.s32.totalorder %s374, %s376
      %p380 = scmp.eq.s32.totalorder %s47, 0
      %p381 = por %p379, %p380
      %p382 = scmp.ne.s32.totalorder %s374, %s376
      %p383 = scmp.eq.s32.totalorder %s52, 1
      %p384 = por %p382, %p383
      %p385 = scmp.ne.s32.totalorder %s376, %s377
      %p386 = scmp.eq.s32.totalorder %s52, 0
      %p387 = por %p385, %p386
      %p388 = scmp.ne.s32.totalorder %s376, %s377
      %p389 = scmp.eq.s32.totalorder %s53, 1
      %p390 = por %p388, %p389
      %p392 = scmp.ne.s32.totalorder %s377, %s391
      %p393 = scmp.eq.s32.totalorder %s53, 0
      %p394 = por %p392, %p393
      %s396 = sadd.s32 %s395, 1
      %p399 = scmp.eq.s32.totalorder %s47, 1
      %p400 = scmp.ne.s32.totalorder %s395, %s397
      %p401 = scmp.eq.s32.totalorder %s47, 0
      %p402 = por %p400, %p401
      %p403 = scmp.ne.s32.totalorder %s395, %s397
      %p404 = scmp.eq.s32.totalorder %s52, 1
      %p405 = por %p403, %p404
      %p406 = scmp.ne.s32.totalorder %s397, %s398
      %p407 = scmp.eq.s32.totalorder %s52, 0
      %p408 = por %p406, %p407
      %p409 = scmp.ne.s32.totalorder %s397, %s398
      %p410 = scmp.eq.s32.totalorder %s53, 1
      %p411 = por %p409, %p410
      %p413 = scmp.ne.s32.totalorder %s398, %s412
      %p414 = scmp.eq.s32.totalorder %s53, 0
      %p415 = por %p413, %p414
      %s417 = sadd.s32 %s416, 1
      %p420 = scmp.eq.s32.totalorder %s47, 1
      %p421 = scmp.ne.s32.totalorder %s416, %s418
      %p422 = scmp.eq.s32.totalorder %s47, 0
      %p423 = por %p421, %p422
      %p424 = scmp.ne.s32.totalorder %s416, %s418
      %p425 = scmp.eq.s32.totalorder %s52, 1
      %p426 = por %p424, %p425
      %p427 = scmp.ne.s32.totalorder %s418, %s419
      %p428 = scmp.eq.s32.totalorder %s52, 0
      %p429 = por %p427, %p428
      %p430 = scmp.ne.s32.totalorder %s418, %s419
      %p431 = scmp.eq.s32.totalorder %s53, 1
      %p432 = por %p430, %p431
      %p434 = scmp.ne.s32.totalorder %s419, %s433
      %p435 = scmp.eq.s32.totalorder %s53, 0
      %p436 = por %p434, %p435
      %s438 = sadd.s32 %s437, 1
      %p441 = scmp.eq.s32.totalorder %s47, 1
      %p442 = scmp.ne.s32.totalorder %s437, %s439
      %p443 = scmp.eq.s32.totalorder %s47, 0
      %p444 = por %p442, %p443
      %p445 = scmp.ne.s32.totalorder %s437, %s439
      %p446 = scmp.eq.s32.totalorder %s52, 1
      %p447 = por %p445, %p446
      %p448 = scmp.ne.s32.totalorder %s439, %s440
      %p449 = scmp.eq.s32.totalorder %s52, 0
      %p450 = por %p448, %p449
      %p451 = scmp.ne.s32.totalorder %s439, %s440
      %p452 = scmp.eq.s32.totalorder %s53, 1
      %p453 = por %p451, %p452
      %p455 = scmp.ne.s32.totalorder %s440, %s454
      %p456 = scmp.eq.s32.totalorder %s53, 0
      %p457 = por %p455, %p456
      %s459 = sadd.s32 %s458, 1
      %p462 = scmp.eq.s32.totalorder %s47, 1
      %p463 = scmp.ne.s32.totalorder %s458, %s460
      %p464 = scmp.eq.s32.totalorder %s47, 0
      %p465 = por %p463, %p464
      %p466 = scmp.ne.s32.totalorder %s458, %s460
      %p467 = scmp.eq.s32.totalorder %s52, 1
      %p468 = por %p466, %p467
      %p469 = scmp.ne.s32.totalorder %s460, %s461
      %p470 = scmp.eq.s32.totalorder %s52, 0
      %p471 = por %p469, %p470
      %p472 = scmp.ne.s32.totalorder %s460, %s461
      %p473 = scmp.eq.s32.totalorder %s53, 1
      %p474 = por %p472, %p473
      %p476 = scmp.ne.s32.totalorder %s461, %s475
      %p477 = scmp.eq.s32.totalorder %s53, 0
      %p478 = por %p476, %p477
      %s480 = sadd.s32 %s479, 1
      %p483 = scmp.eq.s32.totalorder %s47, 1
      %p484 = scmp.ne.s32.totalorder %s479, %s481
      %p485 = scmp.eq.s32.totalorder %s47, 0
      %p486 = por %p484, %p485
      %p487 = scmp.ne.s32.totalorder %s479, %s481
      %p488 = scmp.eq.s32.totalorder %s52, 1
      %p489 = por %p487, %p488
      %p490 = scmp.ne.s32.totalorder %s481, %s482
      %p491 = scmp.eq.s32.totalorder %s52, 0
      %p492 = por %p490, %p491
      %p493 = scmp.ne.s32.totalorder %s481, %s482
      %p494 = scmp.eq.s32.totalorder %s53, 1
      %p495 = por %p493, %p494
      %p497 = scmp.ne.s32.totalorder %s482, %s496
      %p498 = scmp.eq.s32.totalorder %s53, 0
      %p499 = por %p497, %p498
      %s501 = sadd.s32 %s500, 1
      %p504 = scmp.eq.s32.totalorder %s47, 1
      %p505 = scmp.ne.s32.totalorder %s500, %s502
      %p506 = scmp.eq.s32.totalorder %s47, 0
      %p507 = por %p505, %p506
      %p508 = scmp.ne.s32.totalorder %s500, %s502
      %p509 = scmp.eq.s32.totalorder %s52, 1
      %p510 = por %p508, %p509
      %p511 = scmp.ne.s32.totalorder %s502, %s503
      %p512 = scmp.eq.s32.totalorder %s52, 0
      %p513 = por %p511, %p512
      %p514 = scmp.ne.s32.totalorder %s502, %s503
      %p515 = scmp.eq.s32.totalorder %s53, 1
      %p516 = por %p514, %p515
      %p518 = scmp.ne.s32.totalorder %s503, %s517
      %p519 = scmp.eq.s32.totalorder %s53, 0
      %p520 = por %p518, %p519
      %s522 = sadd.s32 %s521, 1
      %p525 = scmp.eq.s32.totalorder %s47, 1
      %p526 = scmp.ne.s32.totalorder %s521, %s523
      %p527 = scmp.eq.s32.totalorder %s47, 0
      %p528 = por %p526, %p527
      %p529 = scmp.ne.s32.totalorder %s521, %s523
      %p530 = scmp.eq.s32.totalorder %s52, 1
      %p531 = por %p529, %p530
      %p532 = scmp.ne.s32.totalorder %s523, %s524
      %p533 = scmp.eq.s32.totalorder %s52, 0
      %p534 = por %p532, %p533
      %p535 = scmp.ne.s32.totalorder %s523, %s524
      %p536 = scmp.eq.s32.totalorder %s53, 1
      %p537 = por %p535, %p536
      %p539 = scmp.ne.s32.totalorder %s524, %s538
      %p540 = scmp.eq.s32.totalorder %s53, 0
      %p541 = por %p539, %p540
      %s543 = sadd.s32 %s542, 1
      %p546 = scmp.eq.s32.totalorder %s47, 1
      %p547 = scmp.ne.s32.totalorder %s542, %s544
      %p548 = scmp.eq.s32.totalorder %s47, 0
      %p549 = por %p547, %p548
      %p550 = scmp.ne.s32.totalorder %s542, %s544
      %p551 = scmp.eq.s32.totalorder %s52, 1
      %p552 = por %p550, %p551
      %p553 = scmp.ne.s32.totalorder %s544, %s545
      %p554 = scmp.eq.s32.totalorder %s52, 0
      %p555 = por %p553, %p554
      %p556 = scmp.ne.s32.totalorder %s544, %s545
      %p557 = scmp.eq.s32.totalorder %s53, 1
      %p558 = por %p556, %p557
      %p560 = scmp.ne.s32.totalorder %s545, %s559
      %p561 = scmp.eq.s32.totalorder %s53, 0
      %p562 = por %p560, %p561
      %s564 = sadd.s32 %s563, 1
      %p567 = scmp.eq.s32.totalorder %s47, 1
      %p568 = scmp.ne.s32.totalorder %s563, %s565
      %p569 = scmp.eq.s32.totalorder %s47, 0
      %p570 = por %p568, %p569
      %p571 = scmp.ne.s32.totalorder %s563, %s565
      %p572 = scmp.eq.s32.totalorder %s52, 1
      %p573 = por %p571, %p572
      %p574 = scmp.ne.s32.totalorder %s565, %s566
      %p575 = scmp.eq.s32.totalorder %s52, 0
      %p576 = por %p574, %p575
      %p577 = scmp.ne.s32.totalorder %s565, %s566
      %p578 = scmp.eq.s32.totalorder %s53, 1
      %p579 = por %p577, %p578
      %p581 = scmp.ne.s32.totalorder %s566, %s580
      %p582 = scmp.eq.s32.totalorder %s53, 0
      %p583 = por %p581, %p582
      %s585 = sadd.s32 %s584, 1
      %p588 = scmp.eq.s32.totalorder %s47, 1
      %p589 = scmp.ne.s32.totalorder %s584, %s586
      %p590 = scmp.eq.s32.totalorder %s47, 0
      %p591 = por %p589, %p590
      %p592 = scmp.ne.s32.totalorder %s584, %s586
      %p593 = scmp.eq.s32.totalorder %s52, 1
      %p594 = por %p592, %p593
      %p595 = scmp.ne.s32.totalorder %s586, %s587
      %p596 = scmp.eq.s32.totalorder %s52, 0
      %p597 = por %p595, %p596
      %p598 = scmp.ne.s32.totalorder %s586, %s587
      %p599 = scmp.eq.s32.totalorder %s53, 1
      %p600 = por %p598, %p599
      %p602 = scmp.ne.s32.totalorder %s587, %s601
      %p603 = scmp.eq.s32.totalorder %s53, 0
      %p604 = por %p602, %p603
      %s605 = ssub.s32 %s47, %s54
      %p606 = scmp.eq.s32.totalorder %s605, 0
      %s608 = sadd.s32 %s607, 1
      %s609 = scalar_select %p606, %s607, %s608
      %p612 = pneg %p606
      %p613 = scmp.eq.s32.totalorder %s47, 1
      %p614 = por %p612, %p613
      %p615 = scmp.ne.s32.totalorder %s607, %s610
      %p616 = scmp.eq.s32.totalorder %s47, 0
      %p617 = por %p615, %p616
      %p618 = scmp.ne.s32.totalorder %s607, %s610
      %p619 = scmp.eq.s32.totalorder %s52, 1
      %p620 = por %p618, %p619
      %p621 = scmp.ne.s32.totalorder %s610, %s611
      %p622 = scmp.eq.s32.totalorder %s52, 0
      %p623 = por %p621, %p622
      %p624 = scmp.ne.s32.totalorder %s610, %s611
      %p625 = scmp.eq.s32.totalorder %s53, 1
      %p626 = por %p624, %p625
      %p628 = scmp.ne.s32.totalorder %s611, %s627
      %p629 = scmp.eq.s32.totalorder %s53, 0
      %p630 = por %p628, %p629
      %p631 = scmp.le.s32.totalorder 1, %s47
      %p632 = scmp.lt.s32.totalorder %s47, 3
      %p633 = pnand %p631, %p632
      %p634 = pneg %p633
      // Predicated region
      $region9: #{tpu_custom_call.1} parent=5 // pred_check
        _
      $region10: #{tpu_custom_call.1} parent=5 // pred_check_branch
        %636 = sbr.rel (%p633) target = $region12
      $region11: #{tpu_custom_call.1} parent=5 // pred_region
        %s637 = ssub.s32 %s47, 1
        // Predicated region
        $region13: #{tpu_custom_call.1} parent=11 // pred_check
          %p638 = pneg %p198
        $region14: #{tpu_custom_call.1} parent=11 // pred_check_branch
          %640 = sbr.rel (%p638) target = $region16
        $region15: #{tpu_custom_call.1} parent=11 // pred_region
          _
        $region16: #{tpu_custom_call.1} parent=11 // pred_fallthru
          _
        // Predicated region
        $region17: #{tpu_custom_call.1} parent=11 // pred_check
          %p641 = pneg %p219
        $region18: #{tpu_custom_call.1} parent=11 // pred_check_branch
          %643 = sbr.rel (%p641) target = $region20
        $region19: #{tpu_custom_call.1} parent=11 // pred_region
          _
        $region20: #{tpu_custom_call.1} parent=11 // pred_fallthru
          _
        // Predicated region
        $region21: #{tpu_custom_call.1} parent=11 // pred_check
          %p644 = pneg %p240
        $region22: #{tpu_custom_call.1} parent=11 // pred_check_branch
          %646 = sbr.rel (%p644) target = $region24
        $region23: #{tpu_custom_call.1} parent=11 // pred_region
          _
        $region24: #{tpu_custom_call.1} parent=11 // pred_fallthru
          _
        // Predicated region
        $region25: #{tpu_custom_call.1} parent=11 // pred_check
          %p647 = pneg %p261
        $region26: #{tpu_custom_call.1} parent=11 // pred_check_branch
          %649 = sbr.rel (%p647) target = $region28
        $region27: #{tpu_custom_call.1} parent=11 // pred_region
          _
        $region28: #{tpu_custom_call.1} parent=11 // pred_fallthru
          _
        // Predicated region
        $region29: #{tpu_custom_call.1} parent=11 // pred_check
          %p650 = pneg %p282
        $region30: #{tpu_custom_call.1} parent=11 // pred_check_branch
          %652 = sbr.rel (%p650) target = $region32
        $region31: #{tpu_custom_call.1} parent=11 // pred_region
          %s654 = ssub.s32 16, 16
          %655 = vsyncadd [#allocation12], %s654
          %s657 = sshll.u32 [#allocation11], 4
          %s658 = int_to_ptr.vmem [resolvable:$true] %s657
          %660 = dma.hbm_to_vmem [thread:$0]  %s9, 16, %s658, [#allocation12]
        $region32: #{tpu_custom_call.1} parent=11 // pred_fallthru
          _
        // Predicated region
        $region33: #{tpu_custom_call.1} parent=11 // pred_check
          %p661 = pneg %p303
        $region34: #{tpu_custom_call.1} parent=11 // pred_check_branch
          %663 = sbr.rel (%p661) target = $region36
        $region35: #{tpu_custom_call.1} parent=11 // pred_region
          %s665 = ssub.s32 16, 16
          %666 = vsyncadd [#allocation12], %s665
          %s668 = sshll.u32 [#allocation13], 4
          %s669 = int_to_ptr.vmem [resolvable:$true] %s668
          %671 = dma.hbm_to_vmem [thread:$0]  %s10, 16, %s669, [#allocation12]
        $region36: #{tpu_custom_call.1} parent=11 // pred_fallthru
          _
        // Predicated region
        $region37: #{tpu_custom_call.1} parent=11 // pred_check
          %p672 = pneg %p324
        $region38: #{tpu_custom_call.1} parent=11 // pred_check_branch
          %674 = sbr.rel (%p672) target = $region40
        $region39: #{tpu_custom_call.1} parent=11 // pred_region
          %s676 = ssub.s32 16, 16
          %677 = vsyncadd [#allocation15], %s676
          %s679 = sshll.u32 [#allocation14], 4
          %s680 = int_to_ptr.vmem [resolvable:$true] %s679
          %682 = dma.hbm_to_vmem [thread:$0]  %s11, 16, %s680, [#allocation15]
        $region40: #{tpu_custom_call.1} parent=11 // pred_fallthru
          _
        // Predicated region
        $region41: #{tpu_custom_call.1} parent=11 // pred_check
          %p683 = pneg %p345
        $region42: #{tpu_custom_call.1} parent=11 // pred_check_branch
          %685 = sbr.rel (%p683) target = $region44
        $region43: #{tpu_custom_call.1} parent=11 // pred_region
          _
        $region44: #{tpu_custom_call.1} parent=11 // pred_fallthru
          _
        // Predicated region
        $region45: #{tpu_custom_call.1} parent=11 // pred_check
          %p686 = pneg %p366
        $region46: #{tpu_custom_call.1} parent=11 // pred_check_branch
          %688 = sbr.rel (%p686) target = $region48
        $region47: #{tpu_custom_call.1} parent=11 // pred_region
          _
        $region48: #{tpu_custom_call.1} parent=11 // pred_fallthru
          _
        // Predicated region
        $region49: #{tpu_custom_call.1} parent=11 // pred_check
          %p689 = pneg %p387
        $region50: #{tpu_custom_call.1} parent=11 // pred_check_branch
          %691 = sbr.rel (%p689) target = $region52
        $region51: #{tpu_custom_call.1} parent=11 // pred_region
          %s693 = ssub.s32 512, 512
          %694 = vsyncadd [#allocation15], %s693
          %s695 = sshll.u32 [#allocation16], 4
          %s696 = int_to_ptr.vmem [resolvable:$true] %s695
          %701 = dma.hbm_to_vmem [thread:$0]  %s14, 512, %s696, [#allocation15], 128, 128, 8
        $region52: #{tpu_custom_call.1} parent=11 // pred_fallthru
          _
        // Predicated region
        $region53: #{tpu_custom_call.1} parent=11 // pred_check
          %p702 = pneg %p408
        $region54: #{tpu_custom_call.1} parent=11 // pred_check_branch
          %704 = sbr.rel (%p702) target = $region56
        $region55: #{tpu_custom_call.1} parent=11 // pred_region
          %s706 = ssub.s32 512, 512
          %707 = vsyncadd [#allocation18], %s706
          %s708 = sshll.u32 [#allocation17], 4
          %s709 = int_to_ptr.vmem [resolvable:$true] %s708
          %714 = dma.hbm_to_vmem [thread:$0]  %s15, 512, %s709, [#allocation18], 128, 128, 8
        $region56: #{tpu_custom_call.1} parent=11 // pred_fallthru
          _
        // Predicated region
        $region57: #{tpu_custom_call.1} parent=11 // pred_check
          %p715 = pneg %p429
        $region58: #{tpu_custom_call.1} parent=11 // pred_check_branch
          %717 = sbr.rel (%p715) target = $region60
        $region59: #{tpu_custom_call.1} parent=11 // pred_region
          %s719 = ssub.s32 16, 16
          %720 = vsyncadd [#allocation18], %s719
          %s722 = sshll.u32 [#allocation19], 4
          %s723 = int_to_ptr.vmem [resolvable:$true] %s722
          %725 = dma.hbm_to_vmem [thread:$0]  %s16, 16, %s723, [#allocation18]
        $region60: #{tpu_custom_call.1} parent=11 // pred_fallthru
          _
        // Predicated region
        $region61: #{tpu_custom_call.1} parent=11 // pred_check
          %p726 = pneg %p450
        $region62: #{tpu_custom_call.1} parent=11 // pred_check_branch
          %728 = sbr.rel (%p726) target = $region64
        $region63: #{tpu_custom_call.1} parent=11 // pred_region
          %s730 = ssub.s32 16, 16
          %731 = vsyncadd [#allocation21], %s730
          %s733 = sshll.u32 [#allocation20], 4
          %s734 = int_to_ptr.vmem [resolvable:$true] %s733
          %736 = dma.hbm_to_vmem [thread:$0]  %s17, 16, %s734, [#allocation21]
        $region64: #{tpu_custom_call.1} parent=11 // pred_fallthru
          _
        // Predicated region
        $region65: #{tpu_custom_call.1} parent=11 // pred_check
          %p737 = pneg %p471
        $region66: #{tpu_custom_call.1} parent=11 // pred_check_branch
          %739 = sbr.rel (%p737) target = $region68
        $region67: #{tpu_custom_call.1} parent=11 // pred_region
          _
        $region68: #{tpu_custom_call.1} parent=11 // pred_fallthru
          _
        // Predicated region
        $region69: #{tpu_custom_call.1} parent=11 // pred_check
          %p740 = pneg %p492
        $region70: #{tpu_custom_call.1} parent=11 // pred_check_branch
          %742 = sbr.rel (%p740) target = $region72
        $region71: #{tpu_custom_call.1} parent=11 // pred_region
          %s744 = ssub.s32 512, 512
          %745 = vsyncadd [#allocation21], %s744
          %s746 = sshll.u32 [#allocation22], 4
          %s747 = int_to_ptr.vmem [resolvable:$true] %s746
          %752 = dma.hbm_to_vmem [thread:$0]  %s19, 512, %s747, [#allocation21], 128, 128, 8
        $region72: #{tpu_custom_call.1} parent=11 // pred_fallthru
          _
        // Predicated region
        $region73: #{tpu_custom_call.1} parent=11 // pred_check
          %p753 = pneg %p513
        $region74: #{tpu_custom_call.1} parent=11 // pred_check_branch
          %755 = sbr.rel (%p753) target = $region76
        $region75: #{tpu_custom_call.1} parent=11 // pred_region
          _
        $region76: #{tpu_custom_call.1} parent=11 // pred_fallthru
          _
        // Predicated region
        $region77: #{tpu_custom_call.1} parent=11 // pred_check
          %p756 = pneg %p534
        $region78: #{tpu_custom_call.1} parent=11 // pred_check_branch
          %758 = sbr.rel (%p756) target = $region80
        $region79: #{tpu_custom_call.1} parent=11 // pred_region
          _
        $region80: #{tpu_custom_call.1} parent=11 // pred_fallthru
          _
        // Predicated region
        $region81: #{tpu_custom_call.1} parent=11 // pred_check
          %p759 = pneg %p555
        $region82: #{tpu_custom_call.1} parent=11 // pred_check_branch
          %761 = sbr.rel (%p759) target = $region84
        $region83: #{tpu_custom_call.1} parent=11 // pred_region
          _
        $region84: #{tpu_custom_call.1} parent=11 // pred_fallthru
          _
        // Predicated region
        $region85: #{tpu_custom_call.1} parent=11 // pred_check
          %p762 = pneg %p576
        $region86: #{tpu_custom_call.1} parent=11 // pred_check_branch
          %764 = sbr.rel (%p762) target = $region88
        $region87: #{tpu_custom_call.1} parent=11 // pred_region
          _
        $region88: #{tpu_custom_call.1} parent=11 // pred_fallthru
          _
        // Predicated region
        $region89: #{tpu_custom_call.1} parent=11 // pred_check
          %p765 = pneg %p597
        $region90: #{tpu_custom_call.1} parent=11 // pred_check_branch
          %767 = sbr.rel (%p765) target = $region92
        $region91: #{tpu_custom_call.1} parent=11 // pred_region
          _
        $region92: #{tpu_custom_call.1} parent=11 // pred_fallthru
          _
      $region12: #{tpu_custom_call.1} parent=5 // pred_fallthru
        _
      %p768 = scmp.lt.s32.totalorder %s47, 2
      // Predicated region
      $region93: #{tpu_custom_call.1} parent=5 // pred_check
        %p769 = pneg %p768
      $region94: #{tpu_custom_call.1} parent=5 // pred_check_branch
        %771 = sbr.rel (%p769) target = $region96
      $region95: #{tpu_custom_call.1} parent=5 // pred_region
        // Predicated region
        $region97: #{tpu_custom_call.1} parent=95 // pred_check
          %p772 = pneg %p67
        $region98: #{tpu_custom_call.1} parent=95 // pred_check_branch
          %774 = sbr.rel (%p772) target = $region100
        $region99: #{tpu_custom_call.1} parent=95 // pred_region
          %s775 = sand.u32 %s57, 1
          %s776 = scalar_lea.sflag [#allocation3], %s775
          %s777 = sand.u32 %s57, 1
          %s778 = smul.addr %s777, 8
          %s779 = scalar_lea.vmem [#allocation2], %s778
          %s781 = ssub.s32 128, 128
          %782 = vsyncadd %s776, %s781
          %s783 = smul.addr %s47, 128
          %s784 = scalar_lea.hbm %s0, %s783
          %s786 = sshll.u32 %s779, 4
          %s787 = int_to_ptr.vmem [resolvable:$true] %s786
          %789 = dma.hbm_to_vmem [thread:$0]  %s784, 128, %s787, %s776
        $region100: #{tpu_custom_call.1} parent=95 // pred_fallthru
          _
        // Predicated region
        $region101: #{tpu_custom_call.1} parent=95 // pred_check
          %p790 = pneg %p93
        $region102: #{tpu_custom_call.1} parent=95 // pred_check_branch
          %792 = sbr.rel (%p790) target = $region104
        $region103: #{tpu_custom_call.1} parent=95 // pred_region
          %s793 = sand.u32 %s47, 1
          %s794 = scalar_lea.sflag [#allocation6], %s793
          %s795 = sand.u32 %s83, 1
          %s796 = smul.addr %s795, 8
          %s797 = scalar_lea.vmem [#allocation5], %s796
          %s799 = ssub.s32 128, 128
          %800 = vsyncadd %s794, %s799
          %s801 = smul.addr %s47, 128
          %s802 = scalar_lea.hbm %s1, %s801
          %s804 = sshll.u32 %s797, 4
          %s805 = int_to_ptr.vmem [resolvable:$true] %s804
          %807 = dma.hbm_to_vmem [thread:$0]  %s802, 128, %s805, %s794
        $region104: #{tpu_custom_call.1} parent=95 // pred_fallthru
          _
        // Predicated region
        $region105: #{tpu_custom_call.1} parent=95 // pred_check
          %p808 = pneg %p119
        $region106: #{tpu_custom_call.1} parent=95 // pred_check_branch
          %810 = sbr.rel (%p808) target = $region108
        $region107: #{tpu_custom_call.1} parent=95 // pred_region
          %s811 = sand.u32 %s47, 1
          %s812 = scalar_lea.sflag [#allocation6], %s811
          %s813 = sand.u32 %s109, 1
          %s814 = smul.addr %s813, 8
          %s815 = scalar_lea.vmem [#allocation7], %s814
          %s817 = ssub.s32 128, 128
          %818 = vsyncadd %s812, %s817
          %s819 = smul.addr %s47, 128
          %s820 = scalar_lea.hbm %s2, %s819
          %s822 = sshll.u32 %s815, 4
          %s823 = int_to_ptr.vmem [resolvable:$true] %s822
          %825 = dma.hbm_to_vmem [thread:$0]  %s820, 128, %s823, %s812
        $region108: #{tpu_custom_call.1} parent=95 // pred_fallthru
          _
        // Predicated region
        $region109: #{tpu_custom_call.1} parent=95 // pred_check
          %p826 = pneg %p145
        $region110: #{tpu_custom_call.1} parent=95 // pred_check_branch
          %828 = sbr.rel (%p826) target = $region112
        $region111: #{tpu_custom_call.1} parent=95 // pred_region
          %s829 = sand.u32 %s47, 1
          %s830 = scalar_lea.sflag [#allocation9], %s829
          %s831 = sand.u32 %s135, 1
          %s832 = smul.addr %s831, 2
          %s833 = scalar_lea.vmem [#allocation8], %s832
          %s835 = ssub.s32 32, 32
          %836 = vsyncadd %s830, %s835
          %s837 = smul.addr %s47, 32
          %s838 = scalar_lea.hbm %s3, %s837
          %s840 = sshll.u32 %s833, 4
          %s841 = int_to_ptr.vmem [resolvable:$true] %s840
          %843 = dma.hbm_to_vmem [thread:$0]  %s838, 32, %s841, %s830
        $region112: #{tpu_custom_call.1} parent=95 // pred_fallthru
          _
        // Predicated region
        $region113: #{tpu_custom_call.1} parent=95 // pred_check
          %p844 = pneg %p171
        $region114: #{tpu_custom_call.1} parent=95 // pred_check_branch
          %846 = sbr.rel (%p844) target = $region116
        $region115: #{tpu_custom_call.1} parent=95 // pred_region
          %s847 = sand.u32 %s47, 1
          %s848 = scalar_lea.sflag [#allocation9], %s847
          %s849 = sand.u32 %s161, 1
          %s850 = smul.addr %s849, 2
          %s851 = scalar_lea.vmem [#allocation10], %s850
          %s853 = ssub.s32 32, 32
          %854 = vsyncadd %s848, %s853
          %s855 = smul.addr %s47, 32
          %s856 = scalar_lea.hbm %s4, %s855
          %s858 = sshll.u32 %s851, 4
          %s859 = int_to_ptr.vmem [resolvable:$true] %s858
          %861 = dma.hbm_to_vmem [thread:$0]  %s856, 32, %s859, %s848
        $region116: #{tpu_custom_call.1} parent=95 // pred_fallthru
          _
      $region96: #{tpu_custom_call.1} parent=5 // pred_fallthru
        _
      %p862 = scmp.le.s32.totalorder 1, %s47
      %p863 = scmp.lt.s32.totalorder %s47, 3
      %p864 = pnand %p862, %p863
      %p865 = pneg %p864
      // Predicated region
      $region117: #{tpu_custom_call.1} parent=5 // pred_check
        _
      $region118: #{tpu_custom_call.1} parent=5 // pred_check_branch
        %867 = sbr.rel (%p864) target = $region120
      $region119: #{tpu_custom_call.1} parent=5 // pred_region
        %s868 = ssub.s32 %s47, 1
        %s869 = sand.u32 %s60, 1
        %s870 = scalar_lea.sflag [#allocation3], %s869
        %s871 = sand.u32 %s60, 1
        %s872 = smul.addr %s871, 8
        %s873 = scalar_lea.vmem [#allocation2], %s872
        // Predicated region
        $region121: #{tpu_custom_call.1} parent=119 // pred_check
          %p874 = pneg %p73
        $region122: #{tpu_custom_call.1} parent=119 // pred_check_branch
          %876 = sbr.rel (%p874) target = $region124
        $region123: #{tpu_custom_call.1} parent=119 // pred_region
          %877 = dma.done %s870, 128
        $region124: #{tpu_custom_call.1} parent=119 // pred_fallthru
          _
        %s878 = sand.u32 %s52, 1
        %s879 = scalar_lea.sflag [#allocation6], %s878
        %s880 = sand.u32 %s86, 1
        %s881 = smul.addr %s880, 8
        %s882 = scalar_lea.vmem [#allocation5], %s881
        // Predicated region
        $region125: #{tpu_custom_call.1} parent=119 // pred_check
          %p883 = pneg %p99
        $region126: #{tpu_custom_call.1} parent=119 // pred_check_branch
          %885 = sbr.rel (%p883) target = $region128
        $region127: #{tpu_custom_call.1} parent=119 // pred_region
          %886 = dma.done %s879, 128
        $region128: #{tpu_custom_call.1} parent=119 // pred_fallthru
          _
        %s887 = sand.u32 %s52, 1
        %s888 = scalar_lea.sflag [#allocation6], %s887
        %s889 = sand.u32 %s112, 1
        %s890 = smul.addr %s889, 8
        %s891 = scalar_lea.vmem [#allocation7], %s890
        // Predicated region
        $region129: #{tpu_custom_call.1} parent=119 // pred_check
          %p892 = pneg %p125
        $region130: #{tpu_custom_call.1} parent=119 // pred_check_branch
          %894 = sbr.rel (%p892) target = $region132
        $region131: #{tpu_custom_call.1} parent=119 // pred_region
          %895 = dma.done %s888, 128
        $region132: #{tpu_custom_call.1} parent=119 // pred_fallthru
          _
        %s896 = sand.u32 %s52, 1
        %s897 = scalar_lea.sflag [#allocation9], %s896
        %s898 = sand.u32 %s138, 1
        %s899 = smul.addr %s898, 2
        %s900 = scalar_lea.vmem [#allocation8], %s899
        // Predicated region
        $region133: #{tpu_custom_call.1} parent=119 // pred_check
          %p901 = pneg %p151
        $region134: #{tpu_custom_call.1} parent=119 // pred_check_branch
          %903 = sbr.rel (%p901) target = $region136
        $region135: #{tpu_custom_call.1} parent=119 // pred_region
          %904 = dma.done %s897, 32
        $region136: #{tpu_custom_call.1} parent=119 // pred_fallthru
          _
        %s905 = sand.u32 %s52, 1
        %s906 = scalar_lea.sflag [#allocation9], %s905
        %s907 = sand.u32 %s164, 1
        %s908 = smul.addr %s907, 2
        %s909 = scalar_lea.vmem [#allocation10], %s908
        // Predicated region
        $region137: #{tpu_custom_call.1} parent=119 // pred_check
          %p910 = pneg %p177
        $region138: #{tpu_custom_call.1} parent=119 // pred_check_branch
          %912 = sbr.rel (%p910) target = $region140
        $region139: #{tpu_custom_call.1} parent=119 // pred_region
          %913 = dma.done %s906, 32
        $region140: #{tpu_custom_call.1} parent=119 // pred_fallthru
          _
        // Predicated region
        $region141: #{tpu_custom_call.1} parent=119 // pred_check
          %p914 = pneg %p282
        $region142: #{tpu_custom_call.1} parent=119 // pred_check_branch
          %916 = sbr.rel (%p914) target = $region144
        $region143: #{tpu_custom_call.1} parent=119 // pred_region
          %917 = dma.done [#allocation12], 16
        $region144: #{tpu_custom_call.1} parent=119 // pred_fallthru
          _
        // Predicated region
        $region145: #{tpu_custom_call.1} parent=119 // pred_check
          %p918 = pneg %p303
        $region146: #{tpu_custom_call.1} parent=119 // pred_check_branch
          %920 = sbr.rel (%p918) target = $region148
        $region147: #{tpu_custom_call.1} parent=119 // pred_region
          %921 = dma.done [#allocation12], 16
        $region148: #{tpu_custom_call.1} parent=119 // pred_fallthru
          _
        // Predicated region
        $region149: #{tpu_custom_call.1} parent=119 // pred_check
          %p922 = pneg %p324
        $region150: #{tpu_custom_call.1} parent=119 // pred_check_branch
          %924 = sbr.rel (%p922) target = $region152
        $region151: #{tpu_custom_call.1} parent=119 // pred_region
          %925 = dma.done [#allocation15], 16
        $region152: #{tpu_custom_call.1} parent=119 // pred_fallthru
          _
        // Predicated region
        $region153: #{tpu_custom_call.1} parent=119 // pred_check
          %p926 = pneg %p387
        $region154: #{tpu_custom_call.1} parent=119 // pred_check_branch
          %928 = sbr.rel (%p926) target = $region156
        $region155: #{tpu_custom_call.1} parent=119 // pred_region
          %929 = dma.done [#allocation15], 512
        $region156: #{tpu_custom_call.1} parent=119 // pred_fallthru
          _
        // Predicated region
        $region157: #{tpu_custom_call.1} parent=119 // pred_check
          %p930 = pneg %p408
        $region158: #{tpu_custom_call.1} parent=119 // pred_check_branch
          %932 = sbr.rel (%p930) target = $region160
        $region159: #{tpu_custom_call.1} parent=119 // pred_region
          %933 = dma.done [#allocation18], 512
        $region160: #{tpu_custom_call.1} parent=119 // pred_fallthru
          _
        // Predicated region
        $region161: #{tpu_custom_call.1} parent=119 // pred_check
          %p934 = pneg %p429
        $region162: #{tpu_custom_call.1} parent=119 // pred_check_branch
          %936 = sbr.rel (%p934) target = $region164
        $region163: #{tpu_custom_call.1} parent=119 // pred_region
          %937 = dma.done [#allocation18], 16
        $region164: #{tpu_custom_call.1} parent=119 // pred_fallthru
          _
        // Predicated region
        $region165: #{tpu_custom_call.1} parent=119 // pred_check
          %p938 = pneg %p450
        $region166: #{tpu_custom_call.1} parent=119 // pred_check_branch
          %940 = sbr.rel (%p938) target = $region168
        $region167: #{tpu_custom_call.1} parent=119 // pred_region
          %941 = dma.done [#allocation21], 16
        $region168: #{tpu_custom_call.1} parent=119 // pred_fallthru
          _
        // Predicated region
        $region169: #{tpu_custom_call.1} parent=119 // pred_check
          %p942 = pneg %p492
        $region170: #{tpu_custom_call.1} parent=119 // pred_check_branch
          %944 = sbr.rel (%p942) target = $region172
        $region171: #{tpu_custom_call.1} parent=119 // pred_region
          %945 = dma.done [#allocation21], 512
        $region172: #{tpu_custom_call.1} parent=119 // pred_fallthru
          _
        %s946 = sand.u32 %s60, 1
        %s947 = scalar_lea.sflag [#allocation3], %s946
        %s948 = sand.u32 %s60, 1
        %s949 = smul.addr %s948, 8
        %s950 = scalar_lea.vmem [#allocation2], %s949
        %p951 = pneg %p73
        %p952 = pneg %p70
        %s953 = sand.u32 %s52, 1
        %s954 = scalar_lea.sflag [#allocation6], %s953
        %s955 = sand.u32 %s86, 1
        %s956 = smul.addr %s955, 8
        %s957 = scalar_lea.vmem [#allocation5], %s956
        %p958 = pneg %p99
        %p959 = pneg %p96
        %s960 = sand.u32 %s52, 1
        %s961 = scalar_lea.sflag [#allocation6], %s960
        %s962 = sand.u32 %s112, 1
        %s963 = smul.addr %s962, 8
        %s964 = scalar_lea.vmem [#allocation7], %s963
        %p965 = pneg %p125
        %p966 = pneg %p122
        %s967 = sand.u32 %s52, 1
        %s968 = scalar_lea.sflag [#allocation9], %s967
        %s969 = sand.u32 %s138, 1
        %s970 = smul.addr %s969, 2
        %s971 = scalar_lea.vmem [#allocation8], %s970
        %p972 = pneg %p151
        %p973 = pneg %p148
        %s974 = sand.u32 %s52, 1
        %s975 = scalar_lea.sflag [#allocation9], %s974
        %s976 = sand.u32 %s164, 1
        %s977 = smul.addr %s976, 2
        %s978 = scalar_lea.vmem [#allocation10], %s977
        %p979 = pneg %p177
        %p980 = pneg %p174
        %p981 = pneg %p198
        %p982 = pneg %p195
        %p983 = pneg %p219
        %p984 = pneg %p216
        %p985 = pneg %p240
        %p986 = pneg %p237
        %p987 = pneg %p261
        %p988 = pneg %p258
        %p989 = pneg %p282
        %p990 = pneg %p279
        %p991 = pneg %p303
        %p992 = pneg %p300
        %p993 = pneg %p324
        %p994 = pneg %p321
        %p995 = pneg %p345
        %p996 = pneg %p342
        %p997 = pneg %p366
        %p998 = pneg %p363
        %p999 = pneg %p387
        %p1000 = pneg %p384
        %p1001 = pneg %p408
        %p1002 = pneg %p405
        %p1003 = pneg %p429
        %p1004 = pneg %p426
        %p1005 = pneg %p450
        %p1006 = pneg %p447
        %p1007 = pneg %p471
        %p1008 = pneg %p468
        %p1009 = pneg %p492
        %p1010 = pneg %p489
        %p1011 = pneg %p513
        %p1012 = pneg %p510
        %p1013 = pneg %p534
        %p1014 = pneg %p531
        %p1015 = pneg %p555
        %p1016 = pneg %p552
        %p1017 = pneg %p576
        %p1018 = pneg %p573
        %p1019 = pneg %p597
        %p1020 = pneg %p594
        %p1021 = pneg %p623
        %p1022 = pneg %p620
        %s1023 = sand.u32 %s610, 1
        %s1024 = scalar_lea.sflag [#allocation4], %s1023
        %s1025 = sand.u32 %s610, 1
        %s1026 = smul.addr %s1025, 2
        %s1027 = scalar_lea.vmem [#allocation23], %s1026
        %v1028 = vld [vmem:[%s873] sm:$0xff]
        %v1029 = vld [vmem:[%s882] sm:$0xff]
        %v1030 = vld [vmem:[%s891] sm:$0xff]
        %v1031 = vld [vmem:[%s900] sm:$0x3]
        %v1032 = vunpack.c.0.s8 %v1031
        %v1033 = vcvt.s32.f32 %v1032
        %v1034 = vsub.f32 1.0, %v1033
        %v1035 = vmul.f32 %v1034, -1e+30
        %v1036 = vld [vmem:[%s909] sm:$0x3]
        %v1037 = vunpack.c.0.s8 %v1036
        %v1038 = vcvt.s32.f32 %v1037
        %v1039 = vsub.f32 1.0, %v1038
        %v1040 = vmul.f32 %v1039, -1e+30
        %v1041 = vld [vmem:[%s7] sm:$0xff]
        %v1042 = vld [vmem:[%s7 + $0x8] sm:$0xff]
        %v1043 = vld [vmem:[%s7 + $0x10] sm:$0xff]
        %v1044 = vld [vmem:[%s7 + $0x18] sm:$0xff]
        %v1045 = vld [vmem:[%s6] sm:$0xff]
        %v1046 = vld [vmem:[%s6 + $0x8] sm:$0xff]
        %v1047 = vld [vmem:[%s6 + $0x10] sm:$0xff]
        %v1048 = vld [vmem:[%s6 + $0x18] sm:$0xff]
        %v1049 = vld [vmem:[%s5] sm:$0xff]
        %v1050 = vld [vmem:[%s5 + $0x8] sm:$0xff]
        %v1051 = vld [vmem:[%s5 + $0x10] sm:$0xff]
        %v1052 = vld [vmem:[%s5 + $0x18] sm:$0xff]
        %v1053 = vld [vmem:[%s8] sm:$0xff]
        %v1054 = vld [vmem:[%s8 + $0x8] sm:$0xff]
        %v1055 = vld [vmem:[%s8 + $0x10] sm:$0xff]
        %v1056 = vld [vmem:[%s8 + $0x18] sm:$0xff]
        %v1057 = vld [vmem:[#allocation11] sm:$0x1]
        %vm1058 = vcmask 261120
        %v1060 = vsel %vm1058, %v1028, 0
        %1062 = vmatprep.subr.mxu0 0.0
        %1063 = vmatpush1.msra.mxu0 %v1041
        %1064 = vmatprep.subr.mxu0 0.0
        %1065 = vmatpush1.msra.mxu0 %v1042
        %1066 = vmatprep.subr.mxu0 0.0
        %1067 = vmatpush1.msra.mxu0 %v1043
        %1068 = vmatprep.subr.mxu0 0.0
        %1069 = vmatpush1.msra.mxu0 %v1044
        %1070 = vmatprep.subr.mxu0 0.0
        %1071 = vmatpush1.msra.mxu0 0.0
        %1072 = vmatprep.subr.mxu0 0.0
        %1073 = vmatpush1.msra.mxu0 0.0
        %1074 = vmatprep.subr.mxu0 0.0
        %1075 = vmatpush1.msra.mxu0 0.0
        %1076 = vmatprep.subr.mxu0 0.0
        %1077 = vmatpush1.msra.mxu0 0.0
        %1078 = vmatprep.subr.mxu0 0.0
        %1079 = vmatpush1.msra.mxu0 0.0
        %1080 = vmatprep.subr.mxu0 0.0
        %1081 = vmatpush1.msra.mxu0 0.0
        %1082 = vmatprep.subr.mxu0 0.0
        %1083 = vmatpush1.msra.mxu0 0.0
        %1084 = vmatprep.subr.mxu0 0.0
        %1085 = vmatpush1.msra.mxu0 0.0
        %1086 = vmatprep.subr.mxu0 0.0
        %1087 = vmatpush1.msra.mxu0 0.0
        %1088 = vmatprep.subr.mxu0 0.0
        %1089 = vmatpush1.msra.mxu0 0.0
        %1090 = vmatprep.subr.mxu0 0.0
        %1091 = vmatpush1.msra.mxu0 0.0
        %1092 = vmatprep.subr.mxu0 0.0
        %1093 = vmatpush1.msra.mxu0 0.0
        %1094 = vmatprep.subr.mxu0 0.0
        %1095 = vmatpush1.msra.mxu0 0.0
        %1096 = vmatprep.subr.mxu0 0.0
        %1097 = vmatpush1.msra.mxu0 0.0
        %1098 = vmatprep.subr.mxu0 0.0
        %1099 = vmatpush1.msra.mxu0 0.0
        %1100 = vmatprep.subr.mxu0 0.0
        %1101 = vmatpush1.msra.mxu0 0.0
        %1102 = vmatprep.subr.mxu0 0.0
        %1103 = vmatpush1.msra.mxu0 0.0
        %1104 = vmatprep.subr.mxu0 0.0
        %1105 = vmatpush1.msra.mxu0 0.0
        %1106 = vmatprep.subr.mxu0 0.0
        %1107 = vmatpush1.msra.mxu0 0.0
        %1108 = vmatprep.subr.mxu0 0.0
        %1109 = vmatpush1.msra.mxu0 0.0
        %1110 = vmatprep.subr.mxu0 0.0
        %1111 = vmatpush1.msra.mxu0 0.0
        %1112 = vmatprep.subr.mxu0 0.0
        %1113 = vmatpush1.msra.mxu0 0.0
        %1114 = vmatprep.subr.mxu0 0.0
        %1115 = vmatpush1.msra.mxu0 0.0
        %1116 = vmatprep.subr.mxu0 0.0
        %1117 = vmatpush1.msra.mxu0 0.0
        %1118 = vmatprep.subr.mxu0 0.0
        %1119 = vmatpush1.msra.mxu0 0.0
        %1120 = vmatprep.subr.mxu0 0.0
        %1121 = vmatpush1.msra.mxu0 0.0
        %1122 = vmatprep.subr.mxu0 0.0
        %1123 = vmatpush1.msra.mxu0 0.0
        %1124 = vmatprep.subr.mxu0 0.0
        %1125 = vmatpush1.msra.mxu0 0.0
        %1126 = vmatprep.mubr.f32.mxu0 0.0
        %1127 = vmatmul.mubr.f32.gmra.mrb[0].mxu0 %v1060
        %v1128 = vpop.f32.mrb[0].mxu0
        %v1129 = vadd.f32 0.0, %v1128
        %v1130 = vpop.f32.mrb[0].mxu0
        %1131 = vdwg.mxu0
        %1132 = vmatprep.subr.mxu0 0.0
        %1133 = vmatpush1.msra.mxu0 %v1045
        %1134 = vmatprep.subr.mxu0 0.0
        %1135 = vmatpush1.msra.mxu0 %v1046
        %1136 = vmatprep.subr.mxu0 0.0
        %1137 = vmatpush1.msra.mxu0 %v1047
        %1138 = vmatprep.subr.mxu0 0.0
        %1139 = vmatpush1.msra.mxu0 %v1048
        %1140 = vmatprep.subr.mxu0 0.0
        %1141 = vmatpush1.msra.mxu0 0.0
        %1142 = vmatprep.subr.mxu0 0.0
        %1143 = vmatpush1.msra.mxu0 0.0
        %1144 = vmatprep.subr.mxu0 0.0
        %1145 = vmatpush1.msra.mxu0 0.0
        %1146 = vmatprep.subr.mxu0 0.0
        %1147 = vmatpush1.msra.mxu0 0.0
        %1148 = vmatprep.subr.mxu0 0.0
        %1149 = vmatpush1.msra.mxu0 0.0
        %1150 = vmatprep.subr.mxu0 0.0
        %1151 = vmatpush1.msra.mxu0 0.0
        %1152 = vmatprep.subr.mxu0 0.0
        %1153 = vmatpush1.msra.mxu0 0.0
        %1154 = vmatprep.subr.mxu0 0.0
        %1155 = vmatpush1.msra.mxu0 0.0
        %1156 = vmatprep.subr.mxu0 0.0
        %1157 = vmatpush1.msra.mxu0 0.0
        %1158 = vmatprep.subr.mxu0 0.0
        %1159 = vmatpush1.msra.mxu0 0.0
        %1160 = vmatprep.subr.mxu0 0.0
        %1161 = vmatpush1.msra.mxu0 0.0
        %1162 = vmatprep.subr.mxu0 0.0
        %1163 = vmatpush1.msra.mxu0 0.0
        %1164 = vmatprep.subr.mxu0 0.0
        %1165 = vmatpush1.msra.mxu0 0.0
        %1166 = vmatprep.subr.mxu0 0.0
        %1167 = vmatpush1.msra.mxu0 0.0
        %1168 = vmatprep.subr.mxu0 0.0
        %1169 = vmatpush1.msra.mxu0 0.0
        %1170 = vmatprep.subr.mxu0 0.0
        %1171 = vmatpush1.msra.mxu0 0.0
        %1172 = vmatprep.subr.mxu0 0.0
        %1173 = vmatpush1.msra.mxu0 0.0
        %1174 = vmatprep.subr.mxu0 0.0
        %1175 = vmatpush1.msra.mxu0 0.0
        %1176 = vmatprep.subr.mxu0 0.0
        %1177 = vmatpush1.msra.mxu0 0.0
        %1178 = vmatprep.subr.mxu0 0.0
        %1179 = vmatpush1.msra.mxu0 0.0
        %1180 = vmatprep.subr.mxu0 0.0
        %1181 = vmatpush1.msra.mxu0 0.0
        %1182 = vmatprep.subr.mxu0 0.0
        %1183 = vmatpush1.msra.mxu0 0.0
        %1184 = vmatprep.subr.mxu0 0.0
        %1185 = vmatpush1.msra.mxu0 0.0
        %1186 = vmatprep.subr.mxu0 0.0
        %1187 = vmatpush1.msra.mxu0 0.0
        %1188 = vmatprep.subr.mxu0 0.0
        %1189 = vmatpush1.msra.mxu0 0.0
        %1190 = vmatprep.subr.mxu0 0.0
        %1191 = vmatpush1.msra.mxu0 0.0
        %1192 = vmatprep.subr.mxu0 0.0
        %1193 = vmatpush1.msra.mxu0 0.0
        %1194 = vmatprep.subr.mxu0 0.0
        %1195 = vmatpush1.msra.mxu0 0.0
        %1196 = vmatprep.mubr.f32.mxu0 0.0
        %1197 = vmatmul.mubr.f32.gmra.mrb[0].mxu0 %v1060
        %v1198 = vpop.f32.mrb[0].mxu0
        %v1199 = vadd.f32 0.0, %v1198
        %v1200 = vpop.f32.mrb[0].mxu0
        %1201 = vdwg.mxu0
        %1202 = vmatprep.subr.mxu0 0.0
        %1203 = vmatpush1.msra.mxu0 %v1049
        %1204 = vmatprep.subr.mxu0 0.0
        %1205 = vmatpush1.msra.mxu0 %v1050
        %1206 = vmatprep.subr.mxu0 0.0
        %1207 = vmatpush1.msra.mxu0 %v1051
        %1208 = vmatprep.subr.mxu0 0.0
        %1209 = vmatpush1.msra.mxu0 %v1052
        %1210 = vmatprep.subr.mxu0 0.0
        %1211 = vmatpush1.msra.mxu0 0.0
        %1212 = vmatprep.subr.mxu0 0.0
        %1213 = vmatpush1.msra.mxu0 0.0
        %1214 = vmatprep.subr.mxu0 0.0
        %1215 = vmatpush1.msra.mxu0 0.0
        %1216 = vmatprep.subr.mxu0 0.0
        %1217 = vmatpush1.msra.mxu0 0.0
        %1218 = vmatprep.subr.mxu0 0.0
        %1219 = vmatpush1.msra.mxu0 0.0
        %1220 = vmatprep.subr.mxu0 0.0
        %1221 = vmatpush1.msra.mxu0 0.0
        %1222 = vmatprep.subr.mxu0 0.0
        %1223 = vmatpush1.msra.mxu0 0.0
        %1224 = vmatprep.subr.mxu0 0.0
        %1225 = vmatpush1.msra.mxu0 0.0
        %1226 = vmatprep.subr.mxu0 0.0
        %1227 = vmatpush1.msra.mxu0 0.0
        %1228 = vmatprep.subr.mxu0 0.0
        %1229 = vmatpush1.msra.mxu0 0.0
        %1230 = vmatprep.subr.mxu0 0.0
        %1231 = vmatpush1.msra.mxu0 0.0
        %1232 = vmatprep.subr.mxu0 0.0
        %1233 = vmatpush1.msra.mxu0 0.0
        %1234 = vmatprep.subr.mxu0 0.0
        %1235 = vmatpush1.msra.mxu0 0.0
        %1236 = vmatprep.subr.mxu0 0.0
        %1237 = vmatpush1.msra.mxu0 0.0
        %1238 = vmatprep.subr.mxu0 0.0
        %1239 = vmatpush1.msra.mxu0 0.0
        %1240 = vmatprep.subr.mxu0 0.0
        %1241 = vmatpush1.msra.mxu0 0.0
        %1242 = vmatprep.subr.mxu0 0.0
        %1243 = vmatpush1.msra.mxu0 0.0
        %1244 = vmatprep.subr.mxu0 0.0
        %1245 = vmatpush1.msra.mxu0 0.0
        %1246 = vmatprep.subr.mxu0 0.0
        %1247 = vmatpush1.msra.mxu0 0.0
        %1248 = vmatprep.subr.mxu0 0.0
        %1249 = vmatpush1.msra.mxu0 0.0
        %1250 = vmatprep.subr.mxu0 0.0
        %1251 = vmatpush1.msra.mxu0 0.0
        %1252 = vmatprep.subr.mxu0 0.0
        %1253 = vmatpush1.msra.mxu0 0.0
        %1254 = vmatprep.subr.mxu0 0.0
        %1255 = vmatpush1.msra.mxu0 0.0
        %1256 = vmatprep.subr.mxu0 0.0
        %1257 = vmatpush1.msra.mxu0 0.0
        %1258 = vmatprep.subr.mxu0 0.0
        %1259 = vmatpush1.msra.mxu0 0.0
        %1260 = vmatprep.subr.mxu0 0.0
        %1261 = vmatpush1.msra.mxu0 0.0
        %1262 = vmatprep.subr.mxu0 0.0
        %1263 = vmatpush1.msra.mxu0 0.0
        %1264 = vmatprep.subr.mxu0 0.0
        %1265 = vmatpush1.msra.mxu0 0.0
        %1266 = vmatprep.mubr.f32.mxu0 0.0
        %1267 = vmatmul.mubr.f32.gmra.mrb[0].mxu0 %v1060
        %v1268 = vpop.f32.mrb[0].mxu0
        %v1269 = vadd.f32 0.0, %v1268
        %v1270 = vpop.f32.mrb[0].mxu0
        %1271 = vdwg.mxu0
        %1273 = vrot.lane.b32.xlu0 %v1129, 120
        %v1274 = vpop.permute.xlu0 %1273
        %1276 = vrot.lane.b32.xlu0 %v1129, 112
        %v1277 = vpop.permute.xlu0 %1276
        %1279 = vrot.lane.b32.xlu0 %v1129, 104
        %v1280 = vpop.permute.xlu0 %1279
        %v1282 = vcombine.low %v1129, %v1277
        %v1283 = vcombine.high %v1129, %v1277
        %v1285 = vunpack.c.l.s4 1983009808
        %v1286 = vunpack.c.0.s8 %v1285
        %v1287 = vlaneseq
        %v1288 = vshrl.u32 %v1287, 7
        %v1289 = vsub.s32 %v1286, %v1288
        %v1290 = vrot.slane %v1282, %v1289
        %v1292 = vunpack.c.l.s4 1983009808
        %v1293 = vunpack.c.0.s8 %v1292
        %v1294 = vlaneseq
        %v1295 = vshrl.u32 %v1294, 7
        %v1296 = vsub.s32 %v1293, %v1295
        %v1297 = vrot.slane %v1283, %v1296
        %v1298 = vcombine.low %v1274, %v1280
        %v1299 = vcombine.high %v1274, %v1280
        %v1301 = vunpack.c.l.s4 1983009808
        %v1302 = vunpack.c.0.s8 %v1301
        %v1303 = vlaneseq
        %v1304 = vshrl.u32 %v1303, 7
        %v1305 = vsub.s32 %v1302, %v1304
        %v1306 = vrot.slane %v1298, %v1305
        %v1308 = vunpack.c.l.s4 1983009808
        %v1309 = vunpack.c.0.s8 %v1308
        %v1310 = vlaneseq
        %v1311 = vshrl.u32 %v1310, 7
        %v1312 = vsub.s32 %v1309, %v1311
        %v1313 = vrot.slane %v1299, %v1312
        %v1314 = vcombine.low %v1290, %v1306
        %v1315 = vcombine.high %v1290, %v1306
        %v1317 = vunpack.c.l.s4 1934713408
        %v1318 = vunpack.c.0.s8 %v1317
        %v1319 = vlaneseq
        %v1320 = vshrl.u32 %v1319, 7
        %v1321 = vsub.s32 %v1318, %v1320
        %v1322 = vrot.slane %v1314, %v1321
        %v1324 = vunpack.c.l.s4 1934713408
        %v1325 = vunpack.c.0.s8 %v1324
        %v1326 = vlaneseq
        %v1327 = vshrl.u32 %v1326, 7
        %v1328 = vsub.s32 %v1325, %v1327
        %v1329 = vrot.slane %v1315, %v1328
        %v1330 = vcombine.low %v1297, %v1313
        %v1331 = vcombine.high %v1297, %v1313
        %v1333 = vunpack.c.l.s4 1934713408
        %v1334 = vunpack.c.0.s8 %v1333
        %v1335 = vlaneseq
        %v1336 = vshrl.u32 %v1335, 7
        %v1337 = vsub.s32 %v1334, %v1336
        %v1338 = vrot.slane %v1330, %v1337
        %v1340 = vunpack.c.l.s4 1934713408
        %v1341 = vunpack.c.0.s8 %v1340
        %v1342 = vlaneseq
        %v1343 = vshrl.u32 %v1342, 7
        %v1344 = vsub.s32 %v1341, %v1343
        %v1345 = vrot.slane %v1331, %v1344
        %v1346 = vcombine.high %v1322, 0.0
        %v1347 = vcombine.high %v1329, 0.0
        %v1348 = vcombine.high %v1338, 0.0
        %v1349 = vcombine.high %v1345, 0.0
        %v1350 = vcombine.low %v1322, %v1329
        %v1352 = vunpack.c.l.s4 1983009808
        %v1353 = vunpack.c.0.s8 %v1352
        %v1354 = vlaneseq
        %v1355 = vshrl.u32 %v1354, 7
        %v1356 = vsub.s32 %v1353, %v1355
        %v1357 = vrot.slane %v1350, %v1356
        %v1358 = vcombine.low %v1346, %v1347
        %v1360 = vunpack.c.l.s4 1983009808
        %v1361 = vunpack.c.0.s8 %v1360
        %v1362 = vlaneseq
        %v1363 = vshrl.u32 %v1362, 7
        %v1364 = vsub.s32 %v1361, %v1363
        %v1365 = vrot.slane %v1358, %v1364
        %v1366 = vcombine.low %v1338, %v1345
        %v1368 = vunpack.c.l.s4 1983009808
        %v1369 = vunpack.c.0.s8 %v1368
        %v1370 = vlaneseq
        %v1371 = vshrl.u32 %v1370, 7
        %v1372 = vsub.s32 %v1369, %v1371
        %v1373 = vrot.slane %v1366, %v1372
        %v1374 = vcombine.low %v1348, %v1349
        %v1376 = vunpack.c.l.s4 1983009808
        %v1377 = vunpack.c.0.s8 %v1376
        %v1378 = vlaneseq
        %v1379 = vshrl.u32 %v1378, 7
        %v1380 = vsub.s32 %v1377, %v1379
        %v1381 = vrot.slane %v1374, %v1380
        %v1382 = vcombine.low %v1357, %v1365
        %v1383 = vcombine.high %v1357, %v1365
        %v1385 = vunpack.c.l.s4 1934713408
        %v1386 = vunpack.c.0.s8 %v1385
        %v1387 = vlaneseq
        %v1388 = vshrl.u32 %v1387, 7
        %v1389 = vsub.s32 %v1386, %v1388
        %v1390 = vrot.slane %v1382, %v1389
        %v1392 = vunpack.c.l.s4 1934713408
        %v1393 = vunpack.c.0.s8 %v1392
        %v1394 = vlaneseq
        %v1395 = vshrl.u32 %v1394, 7
        %v1396 = vsub.s32 %v1393, %v1395
        %v1397 = vrot.slane %v1383, %v1396
        %v1398 = vcombine.low %v1373, %v1381
        %v1399 = vcombine.high %v1373, %v1381
        %v1401 = vunpack.c.l.s4 1934713408
        %v1402 = vunpack.c.0.s8 %v1401
        %v1403 = vlaneseq
        %v1404 = vshrl.u32 %v1403, 7
        %v1405 = vsub.s32 %v1402, %v1404
        %v1406 = vrot.slane %v1398, %v1405
        %v1408 = vunpack.c.l.s4 1934713408
        %v1409 = vunpack.c.0.s8 %v1408
        %v1410 = vlaneseq
        %v1411 = vshrl.u32 %v1410, 7
        %v1412 = vsub.s32 %v1409, %v1411
        %v1413 = vrot.slane %v1399, %v1412
        %v1414 = vcombine.low %v1390, %v1406
        %v1415 = vcombine.high %v1390, %v1406
        %v1416 = vcombine.low %v1397, %v1413
        %v1417 = vcombine.high %v1397, %v1413
        %1419 = vrot.lane.b32.xlu0 %v1199, 120
        %v1420 = vpop.permute.xlu0 %1419
        %1422 = vrot.lane.b32.xlu0 %v1199, 112
        %v1423 = vpop.permute.xlu0 %1422
        %1425 = vrot.lane.b32.xlu0 %v1199, 104
        %v1426 = vpop.permute.xlu0 %1425
        %v1428 = vcombine.low %v1199, %v1423
        %v1429 = vcombine.high %v1199, %v1423
        %v1431 = vunpack.c.l.s4 1983009808
        %v1432 = vunpack.c.0.s8 %v1431
        %v1433 = vlaneseq
        %v1434 = vshrl.u32 %v1433, 7
        %v1435 = vsub.s32 %v1432, %v1434
        %v1436 = vrot.slane %v1428, %v1435
        %v1438 = vunpack.c.l.s4 1983009808
        %v1439 = vunpack.c.0.s8 %v1438
        %v1440 = vlaneseq
        %v1441 = vshrl.u32 %v1440, 7
        %v1442 = vsub.s32 %v1439, %v1441
        %v1443 = vrot.slane %v1429, %v1442
        %v1444 = vcombine.low %v1420, %v1426
        %v1445 = vcombine.high %v1420, %v1426
        %v1447 = vunpack.c.l.s4 1983009808
        %v1448 = vunpack.c.0.s8 %v1447
        %v1449 = vlaneseq
        %v1450 = vshrl.u32 %v1449, 7
        %v1451 = vsub.s32 %v1448, %v1450
        %v1452 = vrot.slane %v1444, %v1451
        %v1454 = vunpack.c.l.s4 1983009808
        %v1455 = vunpack.c.0.s8 %v1454
        %v1456 = vlaneseq
        %v1457 = vshrl.u32 %v1456, 7
        %v1458 = vsub.s32 %v1455, %v1457
        %v1459 = vrot.slane %v1445, %v1458
        %v1460 = vcombine.low %v1436, %v1452
        %v1461 = vcombine.high %v1436, %v1452
        %v1463 = vunpack.c.l.s4 1934713408
        %v1464 = vunpack.c.0.s8 %v1463
        %v1465 = vlaneseq
        %v1466 = vshrl.u32 %v1465, 7
        %v1467 = vsub.s32 %v1464, %v1466
        %v1468 = vrot.slane %v1460, %v1467
        %v1470 = vunpack.c.l.s4 1934713408
        %v1471 = vunpack.c.0.s8 %v1470
        %v1472 = vlaneseq
        %v1473 = vshrl.u32 %v1472, 7
        %v1474 = vsub.s32 %v1471, %v1473
        %v1475 = vrot.slane %v1461, %v1474
        %v1476 = vcombine.low %v1443, %v1459
        %v1477 = vcombine.high %v1443, %v1459
        %v1479 = vunpack.c.l.s4 1934713408
        %v1480 = vunpack.c.0.s8 %v1479
        %v1481 = vlaneseq
        %v1482 = vshrl.u32 %v1481, 7
        %v1483 = vsub.s32 %v1480, %v1482
        %v1484 = vrot.slane %v1476, %v1483
        %v1486 = vunpack.c.l.s4 1934713408
        %v1487 = vunpack.c.0.s8 %v1486
        %v1488 = vlaneseq
        %v1489 = vshrl.u32 %v1488, 7
        %v1490 = vsub.s32 %v1487, %v1489
        %v1491 = vrot.slane %v1477, %v1490
        %v1492 = vcombine.high %v1468, 0.0
        %v1493 = vcombine.high %v1475, 0.0
        %v1494 = vcombine.high %v1484, 0.0
        %v1495 = vcombine.high %v1491, 0.0
        %v1496 = vcombine.low %v1468, %v1475
        %v1498 = vunpack.c.l.s4 1983009808
        %v1499 = vunpack.c.0.s8 %v1498
        %v1500 = vlaneseq
        %v1501 = vshrl.u32 %v1500, 7
        %v1502 = vsub.s32 %v1499, %v1501
        %v1503 = vrot.slane %v1496, %v1502
        %v1504 = vcombine.low %v1492, %v1493
        %v1506 = vunpack.c.l.s4 1983009808
        %v1507 = vunpack.c.0.s8 %v1506
        %v1508 = vlaneseq
        %v1509 = vshrl.u32 %v1508, 7
        %v1510 = vsub.s32 %v1507, %v1509
        %v1511 = vrot.slane %v1504, %v1510
        %v1512 = vcombine.low %v1484, %v1491
        %v1514 = vunpack.c.l.s4 1983009808
        %v1515 = vunpack.c.0.s8 %v1514
        %v1516 = vlaneseq
        %v1517 = vshrl.u32 %v1516, 7
        %v1518 = vsub.s32 %v1515, %v1517
        %v1519 = vrot.slane %v1512, %v1518
        %v1520 = vcombine.low %v1494, %v1495
        %v1522 = vunpack.c.l.s4 1983009808
        %v1523 = vunpack.c.0.s8 %v1522
        %v1524 = vlaneseq
        %v1525 = vshrl.u32 %v1524, 7
        %v1526 = vsub.s32 %v1523, %v1525
        %v1527 = vrot.slane %v1520, %v1526
        %v1528 = vcombine.low %v1503, %v1511
        %v1529 = vcombine.high %v1503, %v1511
        %v1531 = vunpack.c.l.s4 1934713408
        %v1532 = vunpack.c.0.s8 %v1531
        %v1533 = vlaneseq
        %v1534 = vshrl.u32 %v1533, 7
        %v1535 = vsub.s32 %v1532, %v1534
        %v1536 = vrot.slane %v1528, %v1535
        %v1538 = vunpack.c.l.s4 1934713408
        %v1539 = vunpack.c.0.s8 %v1538
        %v1540 = vlaneseq
        %v1541 = vshrl.u32 %v1540, 7
        %v1542 = vsub.s32 %v1539, %v1541
        %v1543 = vrot.slane %v1529, %v1542
        %v1544 = vcombine.low %v1519, %v1527
        %v1545 = vcombine.high %v1519, %v1527
        %v1547 = vunpack.c.l.s4 1934713408
        %v1548 = vunpack.c.0.s8 %v1547
        %v1549 = vlaneseq
        %v1550 = vshrl.u32 %v1549, 7
        %v1551 = vsub.s32 %v1548, %v1550
        %v1552 = vrot.slane %v1544, %v1551
        %v1554 = vunpack.c.l.s4 1934713408
        %v1555 = vunpack.c.0.s8 %v1554
        %v1556 = vlaneseq
        %v1557 = vshrl.u32 %v1556, 7
        %v1558 = vsub.s32 %v1555, %v1557
        %v1559 = vrot.slane %v1545, %v1558
        %v1560 = vcombine.low %v1536, %v1552
        %v1561 = vcombine.high %v1536, %v1552
        %v1562 = vcombine.low %v1543, %v1559
        %v1563 = vcombine.high %v1543, %v1559
        %1565 = vrot.lane.b32.xlu0 %v1269, 120
        %v1566 = vpop.permute.xlu0 %1565
        %1568 = vrot.lane.b32.xlu0 %v1269, 112
        %v1569 = vpop.permute.xlu0 %1568
        %1571 = vrot.lane.b32.xlu0 %v1269, 104
        %v1572 = vpop.permute.xlu0 %1571
        %v1574 = vcombine.low %v1269, %v1569
        %v1575 = vcombine.high %v1269, %v1569
        %v1577 = vunpack.c.l.s4 1983009808
        %v1578 = vunpack.c.0.s8 %v1577
        %v1579 = vlaneseq
        %v1580 = vshrl.u32 %v1579, 7
        %v1581 = vsub.s32 %v1578, %v1580
        %v1582 = vrot.slane %v1574, %v1581
        %v1584 = vunpack.c.l.s4 1983009808
        %v1585 = vunpack.c.0.s8 %v1584
        %v1586 = vlaneseq
        %v1587 = vshrl.u32 %v1586, 7
        %v1588 = vsub.s32 %v1585, %v1587
        %v1589 = vrot.slane %v1575, %v1588
        %v1590 = vcombine.low %v1566, %v1572
        %v1591 = vcombine.high %v1566, %v1572
        %v1593 = vunpack.c.l.s4 1983009808
        %v1594 = vunpack.c.0.s8 %v1593
        %v1595 = vlaneseq
        %v1596 = vshrl.u32 %v1595, 7
        %v1597 = vsub.s32 %v1594, %v1596
        %v1598 = vrot.slane %v1590, %v1597
        %v1600 = vunpack.c.l.s4 1983009808
        %v1601 = vunpack.c.0.s8 %v1600
        %v1602 = vlaneseq
        %v1603 = vshrl.u32 %v1602, 7
        %v1604 = vsub.s32 %v1601, %v1603
        %v1605 = vrot.slane %v1591, %v1604
        %v1606 = vcombine.low %v1582, %v1598
        %v1607 = vcombine.high %v1582, %v1598
        %v1609 = vunpack.c.l.s4 1934713408
        %v1610 = vunpack.c.0.s8 %v1609
        %v1611 = vlaneseq
        %v1612 = vshrl.u32 %v1611, 7
        %v1613 = vsub.s32 %v1610, %v1612
        %v1614 = vrot.slane %v1606, %v1613
        %v1616 = vunpack.c.l.s4 1934713408
        %v1617 = vunpack.c.0.s8 %v1616
        %v1618 = vlaneseq
        %v1619 = vshrl.u32 %v1618, 7
        %v1620 = vsub.s32 %v1617, %v1619
        %v1621 = vrot.slane %v1607, %v1620
        %v1622 = vcombine.low %v1589, %v1605
        %v1623 = vcombine.high %v1589, %v1605
        %v1625 = vunpack.c.l.s4 1934713408
        %v1626 = vunpack.c.0.s8 %v1625
        %v1627 = vlaneseq
        %v1628 = vshrl.u32 %v1627, 7
        %v1629 = vsub.s32 %v1626, %v1628
        %v1630 = vrot.slane %v1622, %v1629
        %v1632 = vunpack.c.l.s4 1934713408
        %v1633 = vunpack.c.0.s8 %v1632
        %v1634 = vlaneseq
        %v1635 = vshrl.u32 %v1634, 7
        %v1636 = vsub.s32 %v1633, %v1635
        %v1637 = vrot.slane %v1623, %v1636
        %v1638 = vcombine.high %v1614, 0.0
        %v1639 = vcombine.high %v1621, 0.0
        %v1640 = vcombine.high %v1630, 0.0
        %v1641 = vcombine.high %v1637, 0.0
        %v1642 = vcombine.low %v1614, %v1621
        %v1644 = vunpack.c.l.s4 1983009808
        %v1645 = vunpack.c.0.s8 %v1644
        %v1646 = vlaneseq
        %v1647 = vshrl.u32 %v1646, 7
        %v1648 = vsub.s32 %v1645, %v1647
        %v1649 = vrot.slane %v1642, %v1648
        %v1650 = vcombine.low %v1638, %v1639
        %v1652 = vunpack.c.l.s4 1983009808
        %v1653 = vunpack.c.0.s8 %v1652
        %v1654 = vlaneseq
        %v1655 = vshrl.u32 %v1654, 7
        %v1656 = vsub.s32 %v1653, %v1655
        %v1657 = vrot.slane %v1650, %v1656
        %v1658 = vcombine.low %v1630, %v1637
        %v1660 = vunpack.c.l.s4 1983009808
        %v1661 = vunpack.c.0.s8 %v1660
        %v1662 = vlaneseq
        %v1663 = vshrl.u32 %v1662, 7
        %v1664 = vsub.s32 %v1661, %v1663
        %v1665 = vrot.slane %v1658, %v1664
        %v1666 = vcombine.low %v1640, %v1641
        %v1668 = vunpack.c.l.s4 1983009808
        %v1669 = vunpack.c.0.s8 %v1668
        %v1670 = vlaneseq
        %v1671 = vshrl.u32 %v1670, 7
        %v1672 = vsub.s32 %v1669, %v1671
        %v1673 = vrot.slane %v1666, %v1672
        %v1674 = vcombine.low %v1649, %v1657
        %v1675 = vcombine.high %v1649, %v1657
        %v1677 = vunpack.c.l.s4 1934713408
        %v1678 = vunpack.c.0.s8 %v1677
        %v1679 = vlaneseq
        %v1680 = vshrl.u32 %v1679, 7
        %v1681 = vsub.s32 %v1678, %v1680
        %v1682 = vrot.slane %v1674, %v1681
        %v1684 = vunpack.c.l.s4 1934713408
        %v1685 = vunpack.c.0.s8 %v1684
        %v1686 = vlaneseq
        %v1687 = vshrl.u32 %v1686, 7
        %v1688 = vsub.s32 %v1685, %v1687
        %v1689 = vrot.slane %v1675, %v1688
        %v1690 = vcombine.low %v1665, %v1673
        %v1691 = vcombine.high %v1665, %v1673
        %v1693 = vunpack.c.l.s4 1934713408
        %v1694 = vunpack.c.0.s8 %v1693
        %v1695 = vlaneseq
        %v1696 = vshrl.u32 %v1695, 7
        %v1697 = vsub.s32 %v1694, %v1696
        %v1698 = vrot.slane %v1690, %v1697
        %v1700 = vunpack.c.l.s4 1934713408
        %v1701 = vunpack.c.0.s8 %v1700
        %v1702 = vlaneseq
        %v1703 = vshrl.u32 %v1702, 7
        %v1704 = vsub.s32 %v1701, %v1703
        %v1705 = vrot.slane %v1691, %v1704
        %v1706 = vcombine.low %v1682, %v1698
        %v1707 = vcombine.high %v1682, %v1698
        %v1708 = vcombine.low %v1689, %v1705
        %v1709 = vcombine.high %v1689, %v1705
        %vm1710 = vcmask 64512
        %v1712 = vsel %vm1710, %v1706, 0
        %v1715 = vsel %vm1710, %v1560, 0
        %1717 = vmatprep.subr.mxu0 0.0
        %1718 = vmatpush1.xpose.msra.mxu0 %v1715
        %1719 = vmatprep.subr.mxu0 0.0
        %1720 = vmatpush1.xpose.msra.mxu0 0.0
        %1721 = vmatprep.subr.mxu0 0.0
        %1722 = vmatpush1.xpose.msra.mxu0 0.0
        %1723 = vmatprep.subr.mxu0 0.0
        %1724 = vmatpush1.xpose.msra.mxu0 0.0
        %1725 = vmatprep.subr.mxu0 0.0
        %1726 = vmatpush1.xpose.msra.mxu0 0.0
        %1727 = vmatprep.subr.mxu0 0.0
        %1728 = vmatpush1.xpose.msra.mxu0 0.0
        %1729 = vmatprep.subr.mxu0 0.0
        %1730 = vmatpush1.xpose.msra.mxu0 0.0
        %1731 = vmatprep.subr.mxu0 0.0
        %1732 = vmatpush1.xpose.msra.mxu0 0.0
        %1733 = vmatprep.subr.mxu0 0.0
        %1734 = vmatpush1.xpose.msra.mxu0 0.0
        %1735 = vmatprep.subr.mxu0 0.0
        %1736 = vmatpush1.xpose.msra.mxu0 0.0
        %1737 = vmatprep.subr.mxu0 0.0
        %1738 = vmatpush1.xpose.msra.mxu0 0.0
        %1739 = vmatprep.subr.mxu0 0.0
        %1740 = vmatpush1.xpose.msra.mxu0 0.0
        %1741 = vmatprep.subr.mxu0 0.0
        %1742 = vmatpush1.xpose.msra.mxu0 0.0
        %1743 = vmatprep.subr.mxu0 0.0
        %1744 = vmatpush1.xpose.msra.mxu0 0.0
        %1745 = vmatprep.subr.mxu0 0.0
        %1746 = vmatpush1.xpose.msra.mxu0 0.0
        %1747 = vmatprep.subr.mxu0 0.0
        %1748 = vmatpush1.xpose.msra.mxu0 0.0
        %1749 = vmatprep.subr.mxu0 0.0
        %1750 = vmatpush1.xpose.msra.mxu0 0.0
        %1751 = vmatprep.subr.mxu0 0.0
        %1752 = vmatpush1.xpose.msra.mxu0 0.0
        %1753 = vmatprep.subr.mxu0 0.0
        %1754 = vmatpush1.xpose.msra.mxu0 0.0
        %1755 = vmatprep.subr.mxu0 0.0
        %1756 = vmatpush1.xpose.msra.mxu0 0.0
        %1757 = vmatprep.subr.mxu0 0.0
        %1758 = vmatpush1.xpose.msra.mxu0 0.0
        %1759 = vmatprep.subr.mxu0 0.0
        %1760 = vmatpush1.xpose.msra.mxu0 0.0
        %1761 = vmatprep.subr.mxu0 0.0
        %1762 = vmatpush1.xpose.msra.mxu0 0.0
        %1763 = vmatprep.subr.mxu0 0.0
        %1764 = vmatpush1.xpose.msra.mxu0 0.0
        %1765 = vmatprep.subr.mxu0 0.0
        %1766 = vmatpush1.xpose.msra.mxu0 0.0
        %1767 = vmatprep.subr.mxu0 0.0
        %1768 = vmatpush1.xpose.msra.mxu0 0.0
        %1769 = vmatprep.subr.mxu0 0.0
        %1770 = vmatpush1.xpose.msra.mxu0 0.0
        %1771 = vmatprep.subr.mxu0 0.0
        %1772 = vmatpush1.xpose.msra.mxu0 0.0
        %1773 = vmatprep.subr.mxu0 0.0
        %1774 = vmatpush1.xpose.msra.mxu0 0.0
        %1775 = vmatprep.subr.mxu0 0.0
        %1776 = vmatpush1.xpose.msra.mxu0 0.0
        %1777 = vmatprep.subr.mxu0 0.0
        %1778 = vmatpush1.xpose.msra.mxu0 0.0
        %1779 = vmatprep.subr.mxu0 0.0
        %1780 = vmatpush1.xpose.msra.mxu0 0.0
        %1781 = vmatprep.mubr.f32.mxu0 0.0
        %1782 = vmatmul.mubr.f32.gmra.mrb[0].mxu0 %v1712
        %v1783 = vpop.f32.mrb[0].mxu0
        %v1784 = vadd.f32 0.0, %v1783
        %v1785 = vpop.f32.mrb[0].mxu0
        %1786 = vdwg.mxu0
        %v1788 = vsel %vm1710, %v1707, 0
        %v1791 = vsel %vm1710, %v1561, 0
        %1793 = vmatprep.subr.mxu0 0.0
        %1794 = vmatpush1.xpose.msra.mxu0 %v1791
        %1795 = vmatprep.subr.mxu0 0.0
        %1796 = vmatpush1.xpose.msra.mxu0 0.0
        %1797 = vmatprep.subr.mxu0 0.0
        %1798 = vmatpush1.xpose.msra.mxu0 0.0
        %1799 = vmatprep.subr.mxu0 0.0
        %1800 = vmatpush1.xpose.msra.mxu0 0.0
        %1801 = vmatprep.subr.mxu0 0.0
        %1802 = vmatpush1.xpose.msra.mxu0 0.0
        %1803 = vmatprep.subr.mxu0 0.0
        %1804 = vmatpush1.xpose.msra.mxu0 0.0
        %1805 = vmatprep.subr.mxu0 0.0
        %1806 = vmatpush1.xpose.msra.mxu0 0.0
        %1807 = vmatprep.subr.mxu0 0.0
        %1808 = vmatpush1.xpose.msra.mxu0 0.0
        %1809 = vmatprep.subr.mxu0 0.0
        %1810 = vmatpush1.xpose.msra.mxu0 0.0
        %1811 = vmatprep.subr.mxu0 0.0
        %1812 = vmatpush1.xpose.msra.mxu0 0.0
        %1813 = vmatprep.subr.mxu0 0.0
        %1814 = vmatpush1.xpose.msra.mxu0 0.0
        %1815 = vmatprep.subr.mxu0 0.0
        %1816 = vmatpush1.xpose.msra.mxu0 0.0
        %1817 = vmatprep.subr.mxu0 0.0
        %1818 = vmatpush1.xpose.msra.mxu0 0.0
        %1819 = vmatprep.subr.mxu0 0.0
        %1820 = vmatpush1.xpose.msra.mxu0 0.0
        %1821 = vmatprep.subr.mxu0 0.0
        %1822 = vmatpush1.xpose.msra.mxu0 0.0
        %1823 = vmatprep.subr.mxu0 0.0
        %1824 = vmatpush1.xpose.msra.mxu0 0.0
        %1825 = vmatprep.subr.mxu0 0.0
        %1826 = vmatpush1.xpose.msra.mxu0 0.0
        %1827 = vmatprep.subr.mxu0 0.0
        %1828 = vmatpush1.xpose.msra.mxu0 0.0
        %1829 = vmatprep.subr.mxu0 0.0
        %1830 = vmatpush1.xpose.msra.mxu0 0.0
        %1831 = vmatprep.subr.mxu0 0.0
        %1832 = vmatpush1.xpose.msra.mxu0 0.0
        %1833 = vmatprep.subr.mxu0 0.0
        %1834 = vmatpush1.xpose.msra.mxu0 0.0
        %1835 = vmatprep.subr.mxu0 0.0
        %1836 = vmatpush1.xpose.msra.mxu0 0.0
        %1837 = vmatprep.subr.mxu0 0.0
        %1838 = vmatpush1.xpose.msra.mxu0 0.0
        %1839 = vmatprep.subr.mxu0 0.0
        %1840 = vmatpush1.xpose.msra.mxu0 0.0
        %1841 = vmatprep.subr.mxu0 0.0
        %1842 = vmatpush1.xpose.msra.mxu0 0.0
        %1843 = vmatprep.subr.mxu0 0.0
        %1844 = vmatpush1.xpose.msra.mxu0 0.0
        %1845 = vmatprep.subr.mxu0 0.0
        %1846 = vmatpush1.xpose.msra.mxu0 0.0
        %1847 = vmatprep.subr.mxu0 0.0
        %1848 = vmatpush1.xpose.msra.mxu0 0.0
        %1849 = vmatprep.subr.mxu0 0.0
        %1850 = vmatpush1.xpose.msra.mxu0 0.0
        %1851 = vmatprep.subr.mxu0 0.0
        %1852 = vmatpush1.xpose.msra.mxu0 0.0
        %1853 = vmatprep.subr.mxu0 0.0
        %1854 = vmatpush1.xpose.msra.mxu0 0.0
        %1855 = vmatprep.subr.mxu0 0.0
        %1856 = vmatpush1.xpose.msra.mxu0 0.0
        %1857 = vmatprep.mubr.f32.mxu0 0.0
        %1858 = vmatmul.mubr.f32.gmra.mrb[0].mxu0 %v1788
        %v1859 = vpop.f32.mrb[0].mxu0
        %v1860 = vadd.f32 0.0, %v1859
        %v1861 = vpop.f32.mrb[0].mxu0
        %1862 = vdwg.mxu0
        %v1864 = vsel %vm1710, %v1708, 0
        %v1867 = vsel %vm1710, %v1562, 0
        %1869 = vmatprep.subr.mxu0 0.0
        %1870 = vmatpush1.xpose.msra.mxu0 %v1867
        %1871 = vmatprep.subr.mxu0 0.0
        %1872 = vmatpush1.xpose.msra.mxu0 0.0
        %1873 = vmatprep.subr.mxu0 0.0
        %1874 = vmatpush1.xpose.msra.mxu0 0.0
        %1875 = vmatprep.subr.mxu0 0.0
        %1876 = vmatpush1.xpose.msra.mxu0 0.0
        %1877 = vmatprep.subr.mxu0 0.0
        %1878 = vmatpush1.xpose.msra.mxu0 0.0
        %1879 = vmatprep.subr.mxu0 0.0
        %1880 = vmatpush1.xpose.msra.mxu0 0.0
        %1881 = vmatprep.subr.mxu0 0.0
        %1882 = vmatpush1.xpose.msra.mxu0 0.0
        %1883 = vmatprep.subr.mxu0 0.0
        %1884 = vmatpush1.xpose.msra.mxu0 0.0
        %1885 = vmatprep.subr.mxu0 0.0
        %1886 = vmatpush1.xpose.msra.mxu0 0.0
        %1887 = vmatprep.subr.mxu0 0.0
        %1888 = vmatpush1.xpose.msra.mxu0 0.0
        %1889 = vmatprep.subr.mxu0 0.0
        %1890 = vmatpush1.xpose.msra.mxu0 0.0
        %1891 = vmatprep.subr.mxu0 0.0
        %1892 = vmatpush1.xpose.msra.mxu0 0.0
        %1893 = vmatprep.subr.mxu0 0.0
        %1894 = vmatpush1.xpose.msra.mxu0 0.0
        %1895 = vmatprep.subr.mxu0 0.0
        %1896 = vmatpush1.xpose.msra.mxu0 0.0
        %1897 = vmatprep.subr.mxu0 0.0
        %1898 = vmatpush1.xpose.msra.mxu0 0.0
        %1899 = vmatprep.subr.mxu0 0.0
        %1900 = vmatpush1.xpose.msra.mxu0 0.0
        %1901 = vmatprep.subr.mxu0 0.0
        %1902 = vmatpush1.xpose.msra.mxu0 0.0
        %1903 = vmatprep.subr.mxu0 0.0
        %1904 = vmatpush1.xpose.msra.mxu0 0.0
        %1905 = vmatprep.subr.mxu0 0.0
        %1906 = vmatpush1.xpose.msra.mxu0 0.0
        %1907 = vmatprep.subr.mxu0 0.0
        %1908 = vmatpush1.xpose.msra.mxu0 0.0
        %1909 = vmatprep.subr.mxu0 0.0
        %1910 = vmatpush1.xpose.msra.mxu0 0.0
        %1911 = vmatprep.subr.mxu0 0.0
        %1912 = vmatpush1.xpose.msra.mxu0 0.0
        %1913 = vmatprep.subr.mxu0 0.0
        %1914 = vmatpush1.xpose.msra.mxu0 0.0
        %1915 = vmatprep.subr.mxu0 0.0
        %1916 = vmatpush1.xpose.msra.mxu0 0.0
        %1917 = vmatprep.subr.mxu0 0.0
        %1918 = vmatpush1.xpose.msra.mxu0 0.0
        %1919 = vmatprep.subr.mxu0 0.0
        %1920 = vmatpush1.xpose.msra.mxu0 0.0
        %1921 = vmatprep.subr.mxu0 0.0
        %1922 = vmatpush1.xpose.msra.mxu0 0.0
        %1923 = vmatprep.subr.mxu0 0.0
        %1924 = vmatpush1.xpose.msra.mxu0 0.0
        %1925 = vmatprep.subr.mxu0 0.0
        %1926 = vmatpush1.xpose.msra.mxu0 0.0
        %1927 = vmatprep.subr.mxu0 0.0
        %1928 = vmatpush1.xpose.msra.mxu0 0.0
        %1929 = vmatprep.subr.mxu0 0.0
        %1930 = vmatpush1.xpose.msra.mxu0 0.0
        %1931 = vmatprep.subr.mxu0 0.0
        %1932 = vmatpush1.xpose.msra.mxu0 0.0
        %1933 = vmatprep.mubr.f32.mxu0 0.0
        %1934 = vmatmul.mubr.f32.gmra.mrb[0].mxu0 %v1864
        %v1935 = vpop.f32.mrb[0].mxu0
        %v1936 = vadd.f32 0.0, %v1935
        %v1937 = vpop.f32.mrb[0].mxu0
        %1938 = vdwg.mxu0
        %v1940 = vsel %vm1710, %v1709, 0
        %v1943 = vsel %vm1710, %v1563, 0
        %1945 = vmatprep.subr.mxu0 0.0
        %1946 = vmatpush1.xpose.msra.mxu0 %v1943
        %1947 = vmatprep.subr.mxu0 0.0
        %1948 = vmatpush1.xpose.msra.mxu0 0.0
        %1949 = vmatprep.subr.mxu0 0.0
        %1950 = vmatpush1.xpose.msra.mxu0 0.0
        %1951 = vmatprep.subr.mxu0 0.0
        %1952 = vmatpush1.xpose.msra.mxu0 0.0
        %1953 = vmatprep.subr.mxu0 0.0
        %1954 = vmatpush1.xpose.msra.mxu0 0.0
        %1955 = vmatprep.subr.mxu0 0.0
        %1956 = vmatpush1.xpose.msra.mxu0 0.0
        %1957 = vmatprep.subr.mxu0 0.0
        %1958 = vmatpush1.xpose.msra.mxu0 0.0
        %1959 = vmatprep.subr.mxu0 0.0
        %1960 = vmatpush1.xpose.msra.mxu0 0.0
        %1961 = vmatprep.subr.mxu0 0.0
        %1962 = vmatpush1.xpose.msra.mxu0 0.0
        %1963 = vmatprep.subr.mxu0 0.0
        %1964 = vmatpush1.xpose.msra.mxu0 0.0
        %1965 = vmatprep.subr.mxu0 0.0
        %1966 = vmatpush1.xpose.msra.mxu0 0.0
        %1967 = vmatprep.subr.mxu0 0.0
        %1968 = vmatpush1.xpose.msra.mxu0 0.0
        %1969 = vmatprep.subr.mxu0 0.0
        %1970 = vmatpush1.xpose.msra.mxu0 0.0
        %1971 = vmatprep.subr.mxu0 0.0
        %1972 = vmatpush1.xpose.msra.mxu0 0.0
        %1973 = vmatprep.subr.mxu0 0.0
        %1974 = vmatpush1.xpose.msra.mxu0 0.0
        %1975 = vmatprep.subr.mxu0 0.0
        %1976 = vmatpush1.xpose.msra.mxu0 0.0
        %1977 = vmatprep.subr.mxu0 0.0
        %1978 = vmatpush1.xpose.msra.mxu0 0.0
        %1979 = vmatprep.subr.mxu0 0.0
        %1980 = vmatpush1.xpose.msra.mxu0 0.0
        %1981 = vmatprep.subr.mxu0 0.0
        %1982 = vmatpush1.xpose.msra.mxu0 0.0
        %1983 = vmatprep.subr.mxu0 0.0
        %1984 = vmatpush1.xpose.msra.mxu0 0.0
        %1985 = vmatprep.subr.mxu0 0.0
        %1986 = vmatpush1.xpose.msra.mxu0 0.0
        %1987 = vmatprep.subr.mxu0 0.0
        %1988 = vmatpush1.xpose.msra.mxu0 0.0
        %1989 = vmatprep.subr.mxu0 0.0
        %1990 = vmatpush1.xpose.msra.mxu0 0.0
        %1991 = vmatprep.subr.mxu0 0.0
        %1992 = vmatpush1.xpose.msra.mxu0 0.0
        %1993 = vmatprep.subr.mxu0 0.0
        %1994 = vmatpush1.xpose.msra.mxu0 0.0
        %1995 = vmatprep.subr.mxu0 0.0
        %1996 = vmatpush1.xpose.msra.mxu0 0.0
        %1997 = vmatprep.subr.mxu0 0.0
        %1998 = vmatpush1.xpose.msra.mxu0 0.0
        %1999 = vmatprep.subr.mxu0 0.0
        %2000 = vmatpush1.xpose.msra.mxu0 0.0
        %2001 = vmatprep.subr.mxu0 0.0
        %2002 = vmatpush1.xpose.msra.mxu0 0.0
        %2003 = vmatprep.subr.mxu0 0.0
        %2004 = vmatpush1.xpose.msra.mxu0 0.0
        %2005 = vmatprep.subr.mxu0 0.0
        %2006 = vmatpush1.xpose.msra.mxu0 0.0
        %2007 = vmatprep.subr.mxu0 0.0
        %2008 = vmatpush1.xpose.msra.mxu0 0.0
        %2009 = vmatprep.mubr.f32.mxu0 0.0
        %2010 = vmatmul.mubr.f32.gmra.mrb[0].mxu0 %v1940
        %v2011 = vpop.f32.mrb[0].mxu0
        %v2012 = vadd.f32 0.0, %v2011
        %v2013 = vpop.f32.mrb[0].mxu0
        %2014 = vdwg.mxu0
        %v2015 = vadd.f32 %v1784, %v1035
        %v2016 = vadd.f32 %v1860, %v1035
        %v2017 = vadd.f32 %v1936, %v1035
        %v2018 = vadd.f32 %v2012, %v1035
        %v2019 = vsel %vm1710, %v2015, -inf
        %2020 = vmax.xlane.f32.xlu0 %v2019
        %v2021 = vpop.xlane.xlu0 %2020
        %v2022 = vsel %vm1710, %v2016, -inf
        %2023 = vmax.xlane.f32.xlu0 %v2022
        %v2024 = vpop.xlane.xlu0 %2023
        %v2025 = vsel %vm1710, %v2017, -inf
        %2026 = vmax.xlane.f32.xlu0 %v2025
        %v2027 = vpop.xlane.xlu0 %2026
        %v2028 = vsel %vm1710, %v2018, -inf
        %2029 = vmax.xlane.f32.xlu0 %v2028
        %v2030 = vpop.xlane.xlu0 %2029
        %v2031 = vsub.f32 %v2015, %v2021
        %v2032 = vsub.f32 %v2016, %v2024
        %v2033 = vsub.f32 %v2017, %v2027
        %v2034 = vsub.f32 %v2018, %v2030
        %v2035 = vmul.f32 %v2031, 1.442695
        %v2036 = vpow.pop %v2035
        %v2037 = vmul.f32 %v2032, 1.442695
        %v2038 = vpow.pop %v2037
        %v2039 = vmul.f32 %v2033, 1.442695
        %v2040 = vpow.pop %v2039
        %v2041 = vmul.f32 %v2034, 1.442695
        %v2042 = vpow.pop %v2041
        %v2043 = vsel %vm1710, %v2036, 0.0
        %2044 = vadd.xlane.f32.xlu0 %v2043
        %v2045 = vpop.xlane.xlu0 %2044
        %v2046 = vsel %vm1710, %v2038, 0.0
        %2047 = vadd.xlane.f32.xlu0 %v2046
        %v2048 = vpop.xlane.xlu0 %2047
        %v2049 = vsel %vm1710, %v2040, 0.0
        %2050 = vadd.xlane.f32.xlu0 %v2049
        %v2051 = vpop.xlane.xlu0 %2050
        %v2052 = vsel %vm1710, %v2042, 0.0
        %2053 = vadd.xlane.f32.xlu0 %v2052
        %v2054 = vpop.xlane.xlu0 %2053
        %v2055 = vrcp.pop %v2045
        %v2056 = vrcp.pop %v2048
        %v2057 = vrcp.pop %v2051
        %v2058 = vrcp.pop %v2054
        %v2059 = vmul.f32 %v2036, %v2055
        %v2060 = vmul.f32 %v2038, %v2056
        %v2061 = vmul.f32 %v2040, %v2057
        %v2062 = vmul.f32 %v2042, %v2058
        %v2064 = vsel %vm1710, %v2059, 0
        %2066 = vmatprep.subr.mxu0 0.0
        %2067 = vmatpush1.msra.mxu0 %v1414
        %2068 = vmatprep.subr.mxu0 0.0
        %2069 = vmatpush1.msra.mxu0 0.0
        %2070 = vmatprep.subr.mxu0 0.0
        %2071 = vmatpush1.msra.mxu0 0.0
        %2072 = vmatprep.subr.mxu0 0.0
        %2073 = vmatpush1.msra.mxu0 0.0
        %2074 = vmatprep.subr.mxu0 0.0
        %2075 = vmatpush1.msra.mxu0 0.0
        %2076 = vmatprep.subr.mxu0 0.0
        %2077 = vmatpush1.msra.mxu0 0.0
        %2078 = vmatprep.subr.mxu0 0.0
        %2079 = vmatpush1.msra.mxu0 0.0
        %2080 = vmatprep.subr.mxu0 0.0
        %2081 = vmatpush1.msra.mxu0 0.0
        %2082 = vmatprep.subr.mxu0 0.0
        %2083 = vmatpush1.msra.mxu0 0.0
        %2084 = vmatprep.subr.mxu0 0.0
        %2085 = vmatpush1.msra.mxu0 0.0
        %2086 = vmatprep.subr.mxu0 0.0
        %2087 = vmatpush1.msra.mxu0 0.0
        %2088 = vmatprep.subr.mxu0 0.0
        %2089 = vmatpush1.msra.mxu0 0.0
        %2090 = vmatprep.subr.mxu0 0.0
        %2091 = vmatpush1.msra.mxu0 0.0
        %2092 = vmatprep.subr.mxu0 0.0
        %2093 = vmatpush1.msra.mxu0 0.0
        %2094 = vmatprep.subr.mxu0 0.0
        %2095 = vmatpush1.msra.mxu0 0.0
        %2096 = vmatprep.subr.mxu0 0.0
        %2097 = vmatpush1.msra.mxu0 0.0
        %2098 = vmatprep.subr.mxu0 0.0
        %2099 = vmatpush1.msra.mxu0 0.0
        %2100 = vmatprep.subr.mxu0 0.0
        %2101 = vmatpush1.msra.mxu0 0.0
        %2102 = vmatprep.subr.mxu0 0.0
        %2103 = vmatpush1.msra.mxu0 0.0
        %2104 = vmatprep.subr.mxu0 0.0
        %2105 = vmatpush1.msra.mxu0 0.0
        %2106 = vmatprep.subr.mxu0 0.0
        %2107 = vmatpush1.msra.mxu0 0.0
        %2108 = vmatprep.subr.mxu0 0.0
        %2109 = vmatpush1.msra.mxu0 0.0
        %2110 = vmatprep.subr.mxu0 0.0
        %2111 = vmatpush1.msra.mxu0 0.0
        %2112 = vmatprep.subr.mxu0 0.0
        %2113 = vmatpush1.msra.mxu0 0.0
        %2114 = vmatprep.subr.mxu0 0.0
        %2115 = vmatpush1.msra.mxu0 0.0
        %2116 = vmatprep.subr.mxu0 0.0
        %2117 = vmatpush1.msra.mxu0 0.0
        %2118 = vmatprep.subr.mxu0 0.0
        %2119 = vmatpush1.msra.mxu0 0.0
        %2120 = vmatprep.subr.mxu0 0.0
        %2121 = vmatpush1.msra.mxu0 0.0
        %2122 = vmatprep.subr.mxu0 0.0
        %2123 = vmatpush1.msra.mxu0 0.0
        %2124 = vmatprep.subr.mxu0 0.0
        %2125 = vmatpush1.msra.mxu0 0.0
        %2126 = vmatprep.subr.mxu0 0.0
        %2127 = vmatpush1.msra.mxu0 0.0
        %2128 = vmatprep.subr.mxu0 0.0
        %2129 = vmatpush1.msra.mxu0 0.0
        %2130 = vmatprep.mubr.f32.mxu0 0.0
        %2131 = vmatmul.mubr.f32.gmra.mrb[0].mxu0 %v2064
        %v2132 = vpop.f32.mrb[0].mxu0
        %v2133 = vadd.f32 0.0, %v2132
        %v2134 = vpop.f32.mrb[0].mxu0
        %2135 = vdwg.mxu0
        %v2137 = vsel %vm1710, %v2060, 0
        %2139 = vmatprep.subr.mxu0 0.0
        %2140 = vmatpush1.msra.mxu0 %v1415
        %2141 = vmatprep.subr.mxu0 0.0
        %2142 = vmatpush1.msra.mxu0 0.0
        %2143 = vmatprep.subr.mxu0 0.0
        %2144 = vmatpush1.msra.mxu0 0.0
        %2145 = vmatprep.subr.mxu0 0.0
        %2146 = vmatpush1.msra.mxu0 0.0
        %2147 = vmatprep.subr.mxu0 0.0
        %2148 = vmatpush1.msra.mxu0 0.0
        %2149 = vmatprep.subr.mxu0 0.0
        %2150 = vmatpush1.msra.mxu0 0.0
        %2151 = vmatprep.subr.mxu0 0.0
        %2152 = vmatpush1.msra.mxu0 0.0
        %2153 = vmatprep.subr.mxu0 0.0
        %2154 = vmatpush1.msra.mxu0 0.0
        %2155 = vmatprep.subr.mxu0 0.0
        %2156 = vmatpush1.msra.mxu0 0.0
        %2157 = vmatprep.subr.mxu0 0.0
        %2158 = vmatpush1.msra.mxu0 0.0
        %2159 = vmatprep.subr.mxu0 0.0
        %2160 = vmatpush1.msra.mxu0 0.0
        %2161 = vmatprep.subr.mxu0 0.0
        %2162 = vmatpush1.msra.mxu0 0.0
        %2163 = vmatprep.subr.mxu0 0.0
        %2164 = vmatpush1.msra.mxu0 0.0
        %2165 = vmatprep.subr.mxu0 0.0
        %2166 = vmatpush1.msra.mxu0 0.0
        %2167 = vmatprep.subr.mxu0 0.0
        %2168 = vmatpush1.msra.mxu0 0.0
        %2169 = vmatprep.subr.mxu0 0.0
        %2170 = vmatpush1.msra.mxu0 0.0
        %2171 = vmatprep.subr.mxu0 0.0
        %2172 = vmatpush1.msra.mxu0 0.0
        %2173 = vmatprep.subr.mxu0 0.0
        %2174 = vmatpush1.msra.mxu0 0.0
        %2175 = vmatprep.subr.mxu0 0.0
        %2176 = vmatpush1.msra.mxu0 0.0
        %2177 = vmatprep.subr.mxu0 0.0
        %2178 = vmatpush1.msra.mxu0 0.0
        %2179 = vmatprep.subr.mxu0 0.0
        %2180 = vmatpush1.msra.mxu0 0.0
        %2181 = vmatprep.subr.mxu0 0.0
        %2182 = vmatpush1.msra.mxu0 0.0
        %2183 = vmatprep.subr.mxu0 0.0
        %2184 = vmatpush1.msra.mxu0 0.0
        %2185 = vmatprep.subr.mxu0 0.0
        %2186 = vmatpush1.msra.mxu0 0.0
        %2187 = vmatprep.subr.mxu0 0.0
        %2188 = vmatpush1.msra.mxu0 0.0
        %2189 = vmatprep.subr.mxu0 0.0
        %2190 = vmatpush1.msra.mxu0 0.0
        %2191 = vmatprep.subr.mxu0 0.0
        %2192 = vmatpush1.msra.mxu0 0.0
        %2193 = vmatprep.subr.mxu0 0.0
        %2194 = vmatpush1.msra.mxu0 0.0
        %2195 = vmatprep.subr.mxu0 0.0
        %2196 = vmatpush1.msra.mxu0 0.0
        %2197 = vmatprep.subr.mxu0 0.0
        %2198 = vmatpush1.msra.mxu0 0.0
        %2199 = vmatprep.subr.mxu0 0.0
        %2200 = vmatpush1.msra.mxu0 0.0
        %2201 = vmatprep.subr.mxu0 0.0
        %2202 = vmatpush1.msra.mxu0 0.0
        %2203 = vmatprep.mubr.f32.mxu0 0.0
        %2204 = vmatmul.mubr.f32.gmra.mrb[0].mxu0 %v2137
        %v2205 = vpop.f32.mrb[0].mxu0
        %v2206 = vadd.f32 0.0, %v2205
        %v2207 = vpop.f32.mrb[0].mxu0
        %2208 = vdwg.mxu0
        %v2210 = vsel %vm1710, %v2061, 0
        %2212 = vmatprep.subr.mxu0 0.0
        %2213 = vmatpush1.msra.mxu0 %v1416
        %2214 = vmatprep.subr.mxu0 0.0
        %2215 = vmatpush1.msra.mxu0 0.0
        %2216 = vmatprep.subr.mxu0 0.0
        %2217 = vmatpush1.msra.mxu0 0.0
        %2218 = vmatprep.subr.mxu0 0.0
        %2219 = vmatpush1.msra.mxu0 0.0
        %2220 = vmatprep.subr.mxu0 0.0
        %2221 = vmatpush1.msra.mxu0 0.0
        %2222 = vmatprep.subr.mxu0 0.0
        %2223 = vmatpush1.msra.mxu0 0.0
        %2224 = vmatprep.subr.mxu0 0.0
        %2225 = vmatpush1.msra.mxu0 0.0
        %2226 = vmatprep.subr.mxu0 0.0
        %2227 = vmatpush1.msra.mxu0 0.0
        %2228 = vmatprep.subr.mxu0 0.0
        %2229 = vmatpush1.msra.mxu0 0.0
        %2230 = vmatprep.subr.mxu0 0.0
        %2231 = vmatpush1.msra.mxu0 0.0
        %2232 = vmatprep.subr.mxu0 0.0
        %2233 = vmatpush1.msra.mxu0 0.0
        %2234 = vmatprep.subr.mxu0 0.0
        %2235 = vmatpush1.msra.mxu0 0.0
        %2236 = vmatprep.subr.mxu0 0.0
        %2237 = vmatpush1.msra.mxu0 0.0
        %2238 = vmatprep.subr.mxu0 0.0
        %2239 = vmatpush1.msra.mxu0 0.0
        %2240 = vmatprep.subr.mxu0 0.0
        %2241 = vmatpush1.msra.mxu0 0.0
        %2242 = vmatprep.subr.mxu0 0.0
        %2243 = vmatpush1.msra.mxu0 0.0
        %2244 = vmatprep.subr.mxu0 0.0
        %2245 = vmatpush1.msra.mxu0 0.0
        %2246 = vmatprep.subr.mxu0 0.0
        %2247 = vmatpush1.msra.mxu0 0.0
        %2248 = vmatprep.subr.mxu0 0.0
        %2249 = vmatpush1.msra.mxu0 0.0
        %2250 = vmatprep.subr.mxu0 0.0
        %2251 = vmatpush1.msra.mxu0 0.0
        %2252 = vmatprep.subr.mxu0 0.0
        %2253 = vmatpush1.msra.mxu0 0.0
        %2254 = vmatprep.subr.mxu0 0.0
        %2255 = vmatpush1.msra.mxu0 0.0
        %2256 = vmatprep.subr.mxu0 0.0
        %2257 = vmatpush1.msra.mxu0 0.0
        %2258 = vmatprep.subr.mxu0 0.0
        %2259 = vmatpush1.msra.mxu0 0.0
        %2260 = vmatprep.subr.mxu0 0.0
        %2261 = vmatpush1.msra.mxu0 0.0
        %2262 = vmatprep.subr.mxu0 0.0
        %2263 = vmatpush1.msra.mxu0 0.0
        %2264 = vmatprep.subr.mxu0 0.0
        %2265 = vmatpush1.msra.mxu0 0.0
        %2266 = vmatprep.subr.mxu0 0.0
        %2267 = vmatpush1.msra.mxu0 0.0
        %2268 = vmatprep.subr.mxu0 0.0
        %2269 = vmatpush1.msra.mxu0 0.0
        %2270 = vmatprep.subr.mxu0 0.0
        %2271 = vmatpush1.msra.mxu0 0.0
        %2272 = vmatprep.subr.mxu0 0.0
        %2273 = vmatpush1.msra.mxu0 0.0
        %2274 = vmatprep.subr.mxu0 0.0
        %2275 = vmatpush1.msra.mxu0 0.0
        %2276 = vmatprep.mubr.f32.mxu0 0.0
        %2277 = vmatmul.mubr.f32.gmra.mrb[0].mxu0 %v2210
        %v2278 = vpop.f32.mrb[0].mxu0
        %v2279 = vadd.f32 0.0, %v2278
        %v2280 = vpop.f32.mrb[0].mxu0
        %2281 = vdwg.mxu0
        %v2283 = vsel %vm1710, %v2062, 0
        %2285 = vmatprep.subr.mxu0 0.0
        %2286 = vmatpush1.msra.mxu0 %v1417
        %2287 = vmatprep.subr.mxu0 0.0
        %2288 = vmatpush1.msra.mxu0 0.0
        %2289 = vmatprep.subr.mxu0 0.0
        %2290 = vmatpush1.msra.mxu0 0.0
        %2291 = vmatprep.subr.mxu0 0.0
        %2292 = vmatpush1.msra.mxu0 0.0
        %2293 = vmatprep.subr.mxu0 0.0
        %2294 = vmatpush1.msra.mxu0 0.0
        %2295 = vmatprep.subr.mxu0 0.0
        %2296 = vmatpush1.msra.mxu0 0.0
        %2297 = vmatprep.subr.mxu0 0.0
        %2298 = vmatpush1.msra.mxu0 0.0
        %2299 = vmatprep.subr.mxu0 0.0
        %2300 = vmatpush1.msra.mxu0 0.0
        %2301 = vmatprep.subr.mxu0 0.0
        %2302 = vmatpush1.msra.mxu0 0.0
        %2303 = vmatprep.subr.mxu0 0.0
        %2304 = vmatpush1.msra.mxu0 0.0
        %2305 = vmatprep.subr.mxu0 0.0
        %2306 = vmatpush1.msra.mxu0 0.0
        %2307 = vmatprep.subr.mxu0 0.0
        %2308 = vmatpush1.msra.mxu0 0.0
        %2309 = vmatprep.subr.mxu0 0.0
        %2310 = vmatpush1.msra.mxu0 0.0
        %2311 = vmatprep.subr.mxu0 0.0
        %2312 = vmatpush1.msra.mxu0 0.0
        %2313 = vmatprep.subr.mxu0 0.0
        %2314 = vmatpush1.msra.mxu0 0.0
        %2315 = vmatprep.subr.mxu0 0.0
        %2316 = vmatpush1.msra.mxu0 0.0
        %2317 = vmatprep.subr.mxu0 0.0
        %2318 = vmatpush1.msra.mxu0 0.0
        %2319 = vmatprep.subr.mxu0 0.0
        %2320 = vmatpush1.msra.mxu0 0.0
        %2321 = vmatprep.subr.mxu0 0.0
        %2322 = vmatpush1.msra.mxu0 0.0
        %2323 = vmatprep.subr.mxu0 0.0
        %2324 = vmatpush1.msra.mxu0 0.0
        %2325 = vmatprep.subr.mxu0 0.0
        %2326 = vmatpush1.msra.mxu0 0.0
        %2327 = vmatprep.subr.mxu0 0.0
        %2328 = vmatpush1.msra.mxu0 0.0
        %2329 = vmatprep.subr.mxu0 0.0
        %2330 = vmatpush1.msra.mxu0 0.0
        %2331 = vmatprep.subr.mxu0 0.0
        %2332 = vmatpush1.msra.mxu0 0.0
        %2333 = vmatprep.subr.mxu0 0.0
        %2334 = vmatpush1.msra.mxu0 0.0
        %2335 = vmatprep.subr.mxu0 0.0
        %2336 = vmatpush1.msra.mxu0 0.0
        %2337 = vmatprep.subr.mxu0 0.0
        %2338 = vmatpush1.msra.mxu0 0.0
        %2339 = vmatprep.subr.mxu0 0.0
        %2340 = vmatpush1.msra.mxu0 0.0
        %2341 = vmatprep.subr.mxu0 0.0
        %2342 = vmatpush1.msra.mxu0 0.0
        %2343 = vmatprep.subr.mxu0 0.0
        %2344 = vmatpush1.msra.mxu0 0.0
        %2345 = vmatprep.subr.mxu0 0.0
        %2346 = vmatpush1.msra.mxu0 0.0
        %2347 = vmatprep.subr.mxu0 0.0
        %2348 = vmatpush1.msra.mxu0 0.0
        %2349 = vmatprep.mubr.f32.mxu0 0.0
        %2350 = vmatmul.mubr.f32.gmra.mrb[0].mxu0 %v2283
        %v2351 = vpop.f32.mrb[0].mxu0
        %v2352 = vadd.f32 0.0, %v2351
        %v2353 = vpop.f32.mrb[0].mxu0
        %2354 = vdwg.mxu0
        %v2355 = vcombine.low %v2133, %v2279
        %v2356 = vcombine.high %v2133, %v2279
        %v2358 = vunpack.c.l.s4 1983009808
        %v2359 = vunpack.c.0.s8 %v2358
        %v2360 = vlaneseq
        %v2361 = vshrl.u32 %v2360, 7
        %v2362 = vsub.s32 %v2359, %v2361
        %v2363 = vrot.slane %v2355, %v2362
        %v2365 = vunpack.c.l.s4 1983009808
        %v2366 = vunpack.c.0.s8 %v2365
        %v2367 = vlaneseq
        %v2368 = vshrl.u32 %v2367, 7
        %v2369 = vsub.s32 %v2366, %v2368
        %v2370 = vrot.slane %v2356, %v2369
        %v2371 = vcombine.low %v2206, %v2352
        %v2372 = vcombine.high %v2206, %v2352
        %v2374 = vunpack.c.l.s4 1983009808
        %v2375 = vunpack.c.0.s8 %v2374
        %v2376 = vlaneseq
        %v2377 = vshrl.u32 %v2376, 7
        %v2378 = vsub.s32 %v2375, %v2377
        %v2379 = vrot.slane %v2371, %v2378
        %v2381 = vunpack.c.l.s4 1983009808
        %v2382 = vunpack.c.0.s8 %v2381
        %v2383 = vlaneseq
        %v2384 = vshrl.u32 %v2383, 7
        %v2385 = vsub.s32 %v2382, %v2384
        %v2386 = vrot.slane %v2372, %v2385
        %v2387 = vcombine.low %v2363, %v2379
        %v2388 = vcombine.high %v2363, %v2379
        %v2390 = vunpack.c.l.s4 1934713408
        %v2391 = vunpack.c.0.s8 %v2390
        %v2392 = vlaneseq
        %v2393 = vshrl.u32 %v2392, 7
        %v2394 = vsub.s32 %v2391, %v2393
        %v2395 = vrot.slane %v2387, %v2394
        %v2397 = vunpack.c.l.s4 1934713408
        %v2398 = vunpack.c.0.s8 %v2397
        %v2399 = vlaneseq
        %v2400 = vshrl.u32 %v2399, 7
        %v2401 = vsub.s32 %v2398, %v2400
        %v2402 = vrot.slane %v2388, %v2401
        %v2403 = vcombine.low %v2370, %v2386
        %v2404 = vcombine.high %v2370, %v2386
        %v2406 = vunpack.c.l.s4 1934713408
        %v2407 = vunpack.c.0.s8 %v2406
        %v2408 = vlaneseq
        %v2409 = vshrl.u32 %v2408, 7
        %v2410 = vsub.s32 %v2407, %v2409
        %v2411 = vrot.slane %v2403, %v2410
        %v2413 = vunpack.c.l.s4 1934713408
        %v2414 = vunpack.c.0.s8 %v2413
        %v2415 = vlaneseq
        %v2416 = vshrl.u32 %v2415, 7
        %v2417 = vsub.s32 %v2414, %v2416
        %v2418 = vrot.slane %v2404, %v2417
        %v2419 = vcombine.high %v2395, 0.0
        %v2420 = vcombine.high %v2402, 0.0
        %v2421 = vcombine.high %v2411, 0.0
        %v2422 = vcombine.high %v2418, 0.0
        %v2423 = vcombine.low %v2395, %v2402
        %v2425 = vunpack.c.l.s4 1983009808
        %v2426 = vunpack.c.0.s8 %v2425
        %v2427 = vlaneseq
        %v2428 = vshrl.u32 %v2427, 7
        %v2429 = vsub.s32 %v2426, %v2428
        %v2430 = vrot.slane %v2423, %v2429
        %v2431 = vcombine.low %v2419, %v2420
        %v2433 = vunpack.c.l.s4 1983009808
        %v2434 = vunpack.c.0.s8 %v2433
        %v2435 = vlaneseq
        %v2436 = vshrl.u32 %v2435, 7
        %v2437 = vsub.s32 %v2434, %v2436
        %v2438 = vrot.slane %v2431, %v2437
        %v2439 = vcombine.low %v2411, %v2418
        %v2441 = vunpack.c.l.s4 1983009808
        %v2442 = vunpack.c.0.s8 %v2441
        %v2443 = vlaneseq
        %v2444 = vshrl.u32 %v2443, 7
        %v2445 = vsub.s32 %v2442, %v2444
        %v2446 = vrot.slane %v2439, %v2445
        %v2447 = vcombine.low %v2421, %v2422
        %v2449 = vunpack.c.l.s4 1983009808
        %v2450 = vunpack.c.0.s8 %v2449
        %v2451 = vlaneseq
        %v2452 = vshrl.u32 %v2451, 7
        %v2453 = vsub.s32 %v2450, %v2452
        %v2454 = vrot.slane %v2447, %v2453
        %v2455 = vcombine.low %v2430, %v2438
        %v2456 = vcombine.high %v2430, %v2438
        %v2458 = vunpack.c.l.s4 1934713408
        %v2459 = vunpack.c.0.s8 %v2458
        %v2460 = vlaneseq
        %v2461 = vshrl.u32 %v2460, 7
        %v2462 = vsub.s32 %v2459, %v2461
        %v2463 = vrot.slane %v2455, %v2462
        %v2465 = vunpack.c.l.s4 1934713408
        %v2466 = vunpack.c.0.s8 %v2465
        %v2467 = vlaneseq
        %v2468 = vshrl.u32 %v2467, 7
        %v2469 = vsub.s32 %v2466, %v2468
        %v2470 = vrot.slane %v2456, %v2469
        %v2471 = vcombine.low %v2446, %v2454
        %v2472 = vcombine.high %v2446, %v2454
        %v2474 = vunpack.c.l.s4 1934713408
        %v2475 = vunpack.c.0.s8 %v2474
        %v2476 = vlaneseq
        %v2477 = vshrl.u32 %v2476, 7
        %v2478 = vsub.s32 %v2475, %v2477
        %v2479 = vrot.slane %v2471, %v2478
        %v2481 = vunpack.c.l.s4 1934713408
        %v2482 = vunpack.c.0.s8 %v2481
        %v2483 = vlaneseq
        %v2484 = vshrl.u32 %v2483, 7
        %v2485 = vsub.s32 %v2482, %v2484
        %v2486 = vrot.slane %v2472, %v2485
        %v2487 = vcombine.low %v2463, %v2479
        %v2488 = vcombine.high %v2463, %v2479
        %v2489 = vcombine.low %v2470, %v2486
        %v2490 = vcombine.high %v2470, %v2486
        %2492 = vrot.lane.b32.xlu0 %v2488, 8
        %v2493 = vpop.permute.xlu0 %2492
        %2496 = vrot.lane.b32.xlu0 %v2489, 16
        %v2497 = vpop.permute.xlu0 %2496
        %2500 = vrot.lane.b32.xlu0 %v2490, 24
        %v2501 = vpop.permute.xlu0 %2500
        %v2503 = vsel %vm1710, %v2487, %v2493
        %vm2504 = vcmask 130048
        %v2505 = vsel %vm2504, %v2503, %v2497
        %vm2506 = vcmask 195584
        %v2507 = vsel %vm2506, %v2505, %v2501
        %v2509 = vlaneseq
        %v2510 = vshrl.u32 %v2509, 7
        %v2511 = vsub.s32 0, %v2510
        %v2512 = vrot.slane %v1057, %v2511
        %v2515 = vsel %vm1058, %v2507, 0
        %2517 = vmatprep.subr.mxu0 0.0
        %2518 = vmatpush1.msra.mxu0 %v1053
        %2519 = vmatprep.subr.mxu0 0.0
        %2520 = vmatpush1.msra.mxu0 %v1054
        %2521 = vmatprep.subr.mxu0 0.0
        %2522 = vmatpush1.msra.mxu0 %v1055
        %2523 = vmatprep.subr.mxu0 0.0
        %2524 = vmatpush1.msra.mxu0 %v1056
        %2525 = vmatprep.subr.mxu0 0.0
        %2526 = vmatpush1.msra.mxu0 0.0
        %2527 = vmatprep.subr.mxu0 0.0
        %2528 = vmatpush1.msra.mxu0 0.0
        %2529 = vmatprep.subr.mxu0 0.0
        %2530 = vmatpush1.msra.mxu0 0.0
        %2531 = vmatprep.subr.mxu0 0.0
        %2532 = vmatpush1.msra.mxu0 0.0
        %2533 = vmatprep.subr.mxu0 0.0
        %2534 = vmatpush1.msra.mxu0 0.0
        %2535 = vmatprep.subr.mxu0 0.0
        %2536 = vmatpush1.msra.mxu0 0.0
        %2537 = vmatprep.subr.mxu0 0.0
        %2538 = vmatpush1.msra.mxu0 0.0
        %2539 = vmatprep.subr.mxu0 0.0
        %2540 = vmatpush1.msra.mxu0 0.0
        %2541 = vmatprep.subr.mxu0 0.0
        %2542 = vmatpush1.msra.mxu0 0.0
        %2543 = vmatprep.subr.mxu0 0.0
        %2544 = vmatpush1.msra.mxu0 0.0
        %2545 = vmatprep.subr.mxu0 0.0
        %2546 = vmatpush1.msra.mxu0 0.0
        %2547 = vmatprep.subr.mxu0 0.0
        %2548 = vmatpush1.msra.mxu0 0.0
        %2549 = vmatprep.subr.mxu0 0.0
        %2550 = vmatpush1.msra.mxu0 0.0
        %2551 = vmatprep.subr.mxu0 0.0
        %2552 = vmatpush1.msra.mxu0 0.0
        %2553 = vmatprep.subr.mxu0 0.0
        %2554 = vmatpush1.msra.mxu0 0.0
        %2555 = vmatprep.subr.mxu0 0.0
        %2556 = vmatpush1.msra.mxu0 0.0
        %2557 = vmatprep.subr.mxu0 0.0
        %2558 = vmatpush1.msra.mxu0 0.0
        %2559 = vmatprep.subr.mxu0 0.0
        %2560 = vmatpush1.msra.mxu0 0.0
        %2561 = vmatprep.subr.mxu0 0.0
        %2562 = vmatpush1.msra.mxu0 0.0
        %2563 = vmatprep.subr.mxu0 0.0
        %2564 = vmatpush1.msra.mxu0 0.0
        %2565 = vmatprep.subr.mxu0 0.0
        %2566 = vmatpush1.msra.mxu0 0.0
        %2567 = vmatprep.subr.mxu0 0.0
        %2568 = vmatpush1.msra.mxu0 0.0
        %2569 = vmatprep.subr.mxu0 0.0
        %2570 = vmatpush1.msra.mxu0 0.0
        %2571 = vmatprep.subr.mxu0 0.0
        %2572 = vmatpush1.msra.mxu0 0.0
        %2573 = vmatprep.subr.mxu0 0.0
        %2574 = vmatpush1.msra.mxu0 0.0
        %2575 = vmatprep.subr.mxu0 0.0
        %2576 = vmatpush1.msra.mxu0 0.0
        %2577 = vmatprep.subr.mxu0 0.0
        %2578 = vmatpush1.msra.mxu0 0.0
        %2579 = vmatprep.subr.mxu0 0.0
        %2580 = vmatpush1.msra.mxu0 0.0
        %2581 = vmatprep.mubr.f32.mxu0 0.0
        %2582 = vmatmul.mubr.f32.gmra.mrb[0].mxu0 %v2515
        %v2583 = vpop.f32.mrb[0].mxu0
        %v2584 = vadd.f32 %v2512, %v2583
        %v2585 = vpop.f32.mrb[0].mxu0
        %2586 = vdwg.mxu0
        %v2587 = vadd.f32 %v2584, %v1028
        %v2588 = vld [vmem:[#allocation13] sm:$0x1]
        %v2589 = vld [vmem:[#allocation14] sm:$0x1]
        %v2590 = vsel %vm1058, %v2587, 0.0
        %2591 = vadd.xlane.f32.xlu0 %v2590
        %v2592 = vpop.xlane.xlu0 %2591
        %v2593 = vrcp.pop 32.0
        %v2594 = vmul.f32 %v2592, %v2593
        %v2595 = vsub.f32 %v2587, %v2594
        %v2596 = vmul.f32 %v2595, %v2595
        %v2597 = vsel %vm1058, %v2596, 0.0
        %2598 = vadd.xlane.f32.xlu0 %v2597
        %v2599 = vpop.xlane.xlu0 %2598
        %v2600 = vmul.f32 %v2599, %v2593
        %v2601 = vadd.f32 %v2600, 1e-05
        %v2602 = vrsqrt.pop %v2601
        %v2603 = vmul.f32 %v2595, %v2602
        %v2605 = vlaneseq
        %v2606 = vshrl.u32 %v2605, 7
        %v2607 = vsub.s32 0, %v2606
        %v2608 = vrot.slane %v2588, %v2607
        %v2610 = vmul.f32 %v2603, %v2608
        %v2612 = vlaneseq
        %v2613 = vshrl.u32 %v2612, 7
        %v2614 = vsub.s32 0, %v2613
        %v2615 = vrot.slane %v2589, %v2614
        %v2617 = vadd.f32 %v2610, %v2615
        %v2618 = vld [vmem:[#allocation16] sm:$0xff]
        %v2619 = vld [vmem:[#allocation16 + $0x8] sm:$0xff]
        %v2620 = vld [vmem:[#allocation16 + $0x10] sm:$0xff]
        %v2621 = vld [vmem:[#allocation16 + $0x18] sm:$0xff]
        %v2622 = vld [vmem:[%s13] sm:$0xff]
        %v2623 = vld [vmem:[%s13 + $0x8] sm:$0xff]
        %v2624 = vld [vmem:[%s13 + $0x10] sm:$0xff]
        %v2625 = vld [vmem:[%s13 + $0x18] sm:$0xff]
        %v2626 = vld [vmem:[%s12] sm:$0xff]
        %v2627 = vld [vmem:[%s12 + $0x8] sm:$0xff]
        %v2628 = vld [vmem:[%s12 + $0x10] sm:$0xff]
        %v2629 = vld [vmem:[%s12 + $0x18] sm:$0xff]
        %v2630 = vld [vmem:[#allocation17] sm:$0xff]
        %v2631 = vld [vmem:[#allocation17 + $0x8] sm:$0xff]
        %v2632 = vld [vmem:[#allocation17 + $0x10] sm:$0xff]
        %v2633 = vld [vmem:[#allocation17 + $0x18] sm:$0xff]
        %v2634 = vld [vmem:[#allocation19] sm:$0x1]
        %v2636 = vsel %vm1058, %v1029, 0
        %2638 = vmatprep.subr.mxu0 0.0
        %2639 = vmatpush1.msra.mxu0 %v2618
        %2640 = vmatprep.subr.mxu0 0.0
        %2641 = vmatpush1.msra.mxu0 %v2619
        %2642 = vmatprep.subr.mxu0 0.0
        %2643 = vmatpush1.msra.mxu0 %v2620
        %2644 = vmatprep.subr.mxu0 0.0
        %2645 = vmatpush1.msra.mxu0 %v2621
        %2646 = vmatprep.subr.mxu0 0.0
        %2647 = vmatpush1.msra.mxu0 0.0
        %2648 = vmatprep.subr.mxu0 0.0
        %2649 = vmatpush1.msra.mxu0 0.0
        %2650 = vmatprep.subr.mxu0 0.0
        %2651 = vmatpush1.msra.mxu0 0.0
        %2652 = vmatprep.subr.mxu0 0.0
        %2653 = vmatpush1.msra.mxu0 0.0
        %2654 = vmatprep.subr.mxu0 0.0
        %2655 = vmatpush1.msra.mxu0 0.0
        %2656 = vmatprep.subr.mxu0 0.0
        %2657 = vmatpush1.msra.mxu0 0.0
        %2658 = vmatprep.subr.mxu0 0.0
        %2659 = vmatpush1.msra.mxu0 0.0
        %2660 = vmatprep.subr.mxu0 0.0
        %2661 = vmatpush1.msra.mxu0 0.0
        %2662 = vmatprep.subr.mxu0 0.0
        %2663 = vmatpush1.msra.mxu0 0.0
        %2664 = vmatprep.subr.mxu0 0.0
        %2665 = vmatpush1.msra.mxu0 0.0
        %2666 = vmatprep.subr.mxu0 0.0
        %2667 = vmatpush1.msra.mxu0 0.0
        %2668 = vmatprep.subr.mxu0 0.0
        %2669 = vmatpush1.msra.mxu0 0.0
        %2670 = vmatprep.subr.mxu0 0.0
        %2671 = vmatpush1.msra.mxu0 0.0
        %2672 = vmatprep.subr.mxu0 0.0
        %2673 = vmatpush1.msra.mxu0 0.0
        %2674 = vmatprep.subr.mxu0 0.0
        %2675 = vmatpush1.msra.mxu0 0.0
        %2676 = vmatprep.subr.mxu0 0.0
        %2677 = vmatpush1.msra.mxu0 0.0
        %2678 = vmatprep.subr.mxu0 0.0
        %2679 = vmatpush1.msra.mxu0 0.0
        %2680 = vmatprep.subr.mxu0 0.0
        %2681 = vmatpush1.msra.mxu0 0.0
        %2682 = vmatprep.subr.mxu0 0.0
        %2683 = vmatpush1.msra.mxu0 0.0
        %2684 = vmatprep.subr.mxu0 0.0
        %2685 = vmatpush1.msra.mxu0 0.0
        %2686 = vmatprep.subr.mxu0 0.0
        %2687 = vmatpush1.msra.mxu0 0.0
        %2688 = vmatprep.subr.mxu0 0.0
        %2689 = vmatpush1.msra.mxu0 0.0
        %2690 = vmatprep.subr.mxu0 0.0
        %2691 = vmatpush1.msra.mxu0 0.0
        %2692 = vmatprep.subr.mxu0 0.0
        %2693 = vmatpush1.msra.mxu0 0.0
        %2694 = vmatprep.subr.mxu0 0.0
        %2695 = vmatpush1.msra.mxu0 0.0
        %2696 = vmatprep.subr.mxu0 0.0
        %2697 = vmatpush1.msra.mxu0 0.0
        %2698 = vmatprep.subr.mxu0 0.0
        %2699 = vmatpush1.msra.mxu0 0.0
        %2700 = vmatprep.subr.mxu0 0.0
        %2701 = vmatpush1.msra.mxu0 0.0
        %2702 = vmatprep.mubr.f32.mxu0 0.0
        %2703 = vmatmul.mubr.f32.gmra.mrb[0].mxu0 %v2636
        %v2704 = vpop.f32.mrb[0].mxu0
        %v2705 = vadd.f32 0.0, %v2704
        %v2706 = vpop.f32.mrb[0].mxu0
        %2707 = vdwg.mxu0
        %v2709 = vsel %vm1058, %v1030, 0
        %2711 = vmatprep.subr.mxu0 0.0
        %2712 = vmatpush1.msra.mxu0 %v2622
        %2713 = vmatprep.subr.mxu0 0.0
        %2714 = vmatpush1.msra.mxu0 %v2623
        %2715 = vmatprep.subr.mxu0 0.0
        %2716 = vmatpush1.msra.mxu0 %v2624
        %2717 = vmatprep.subr.mxu0 0.0
        %2718 = vmatpush1.msra.mxu0 %v2625
        %2719 = vmatprep.subr.mxu0 0.0
        %2720 = vmatpush1.msra.mxu0 0.0
        %2721 = vmatprep.subr.mxu0 0.0
        %2722 = vmatpush1.msra.mxu0 0.0
        %2723 = vmatprep.subr.mxu0 0.0
        %2724 = vmatpush1.msra.mxu0 0.0
        %2725 = vmatprep.subr.mxu0 0.0
        %2726 = vmatpush1.msra.mxu0 0.0
        %2727 = vmatprep.subr.mxu0 0.0
        %2728 = vmatpush1.msra.mxu0 0.0
        %2729 = vmatprep.subr.mxu0 0.0
        %2730 = vmatpush1.msra.mxu0 0.0
        %2731 = vmatprep.subr.mxu0 0.0
        %2732 = vmatpush1.msra.mxu0 0.0
        %2733 = vmatprep.subr.mxu0 0.0
        %2734 = vmatpush1.msra.mxu0 0.0
        %2735 = vmatprep.subr.mxu0 0.0
        %2736 = vmatpush1.msra.mxu0 0.0
        %2737 = vmatprep.subr.mxu0 0.0
        %2738 = vmatpush1.msra.mxu0 0.0
        %2739 = vmatprep.subr.mxu0 0.0
        %2740 = vmatpush1.msra.mxu0 0.0
        %2741 = vmatprep.subr.mxu0 0.0
        %2742 = vmatpush1.msra.mxu0 0.0
        %2743 = vmatprep.subr.mxu0 0.0
        %2744 = vmatpush1.msra.mxu0 0.0
        %2745 = vmatprep.subr.mxu0 0.0
        %2746 = vmatpush1.msra.mxu0 0.0
        %2747 = vmatprep.subr.mxu0 0.0
        %2748 = vmatpush1.msra.mxu0 0.0
        %2749 = vmatprep.subr.mxu0 0.0
        %2750 = vmatpush1.msra.mxu0 0.0
        %2751 = vmatprep.subr.mxu0 0.0
        %2752 = vmatpush1.msra.mxu0 0.0
        %2753 = vmatprep.subr.mxu0 0.0
        %2754 = vmatpush1.msra.mxu0 0.0
        %2755 = vmatprep.subr.mxu0 0.0
        %2756 = vmatpush1.msra.mxu0 0.0
        %2757 = vmatprep.subr.mxu0 0.0
        %2758 = vmatpush1.msra.mxu0 0.0
        %2759 = vmatprep.subr.mxu0 0.0
        %2760 = vmatpush1.msra.mxu0 0.0
        %2761 = vmatprep.subr.mxu0 0.0
        %2762 = vmatpush1.msra.mxu0 0.0
        %2763 = vmatprep.subr.mxu0 0.0
        %2764 = vmatpush1.msra.mxu0 0.0
        %2765 = vmatprep.subr.mxu0 0.0
        %2766 = vmatpush1.msra.mxu0 0.0
        %2767 = vmatprep.subr.mxu0 0.0
        %2768 = vmatpush1.msra.mxu0 0.0
        %2769 = vmatprep.subr.mxu0 0.0
        %2770 = vmatpush1.msra.mxu0 0.0
        %2771 = vmatprep.subr.mxu0 0.0
        %2772 = vmatpush1.msra.mxu0 0.0
        %2773 = vmatprep.subr.mxu0 0.0
        %2774 = vmatpush1.msra.mxu0 0.0
        %2775 = vmatprep.mubr.f32.mxu0 0.0
        %2776 = vmatmul.mubr.f32.gmra.mrb[0].mxu0 %v2709
        %v2777 = vpop.f32.mrb[0].mxu0
        %v2778 = vadd.f32 0.0, %v2777
        %v2779 = vpop.f32.mrb[0].mxu0
        %2780 = vdwg.mxu0
        %v2782 = vsel %vm1058, %v2617, 0
        %2784 = vmatprep.subr.mxu0 0.0
        %2785 = vmatpush1.msra.mxu0 %v2626
        %2786 = vmatprep.subr.mxu0 0.0
        %2787 = vmatpush1.msra.mxu0 %v2627
        %2788 = vmatprep.subr.mxu0 0.0
        %2789 = vmatpush1.msra.mxu0 %v2628
        %2790 = vmatprep.subr.mxu0 0.0
        %2791 = vmatpush1.msra.mxu0 %v2629
        %2792 = vmatprep.subr.mxu0 0.0
        %2793 = vmatpush1.msra.mxu0 0.0
        %2794 = vmatprep.subr.mxu0 0.0
        %2795 = vmatpush1.msra.mxu0 0.0
        %2796 = vmatprep.subr.mxu0 0.0
        %2797 = vmatpush1.msra.mxu0 0.0
        %2798 = vmatprep.subr.mxu0 0.0
        %2799 = vmatpush1.msra.mxu0 0.0
        %2800 = vmatprep.subr.mxu0 0.0
        %2801 = vmatpush1.msra.mxu0 0.0
        %2802 = vmatprep.subr.mxu0 0.0
        %2803 = vmatpush1.msra.mxu0 0.0
        %2804 = vmatprep.subr.mxu0 0.0
        %2805 = vmatpush1.msra.mxu0 0.0
        %2806 = vmatprep.subr.mxu0 0.0
        %2807 = vmatpush1.msra.mxu0 0.0
        %2808 = vmatprep.subr.mxu0 0.0
        %2809 = vmatpush1.msra.mxu0 0.0
        %2810 = vmatprep.subr.mxu0 0.0
        %2811 = vmatpush1.msra.mxu0 0.0
        %2812 = vmatprep.subr.mxu0 0.0
        %2813 = vmatpush1.msra.mxu0 0.0
        %2814 = vmatprep.subr.mxu0 0.0
        %2815 = vmatpush1.msra.mxu0 0.0
        %2816 = vmatprep.subr.mxu0 0.0
        %2817 = vmatpush1.msra.mxu0 0.0
        %2818 = vmatprep.subr.mxu0 0.0
        %2819 = vmatpush1.msra.mxu0 0.0
        %2820 = vmatprep.subr.mxu0 0.0
        %2821 = vmatpush1.msra.mxu0 0.0
        %2822 = vmatprep.subr.mxu0 0.0
        %2823 = vmatpush1.msra.mxu0 0.0
        %2824 = vmatprep.subr.mxu0 0.0
        %2825 = vmatpush1.msra.mxu0 0.0
        %2826 = vmatprep.subr.mxu0 0.0
        %2827 = vmatpush1.msra.mxu0 0.0
        %2828 = vmatprep.subr.mxu0 0.0
        %2829 = vmatpush1.msra.mxu0 0.0
        %2830 = vmatprep.subr.mxu0 0.0
        %2831 = vmatpush1.msra.mxu0 0.0
        %2832 = vmatprep.subr.mxu0 0.0
        %2833 = vmatpush1.msra.mxu0 0.0
        %2834 = vmatprep.subr.mxu0 0.0
        %2835 = vmatpush1.msra.mxu0 0.0
        %2836 = vmatprep.subr.mxu0 0.0
        %2837 = vmatpush1.msra.mxu0 0.0
        %2838 = vmatprep.subr.mxu0 0.0
        %2839 = vmatpush1.msra.mxu0 0.0
        %2840 = vmatprep.subr.mxu0 0.0
        %2841 = vmatpush1.msra.mxu0 0.0
        %2842 = vmatprep.subr.mxu0 0.0
        %2843 = vmatpush1.msra.mxu0 0.0
        %2844 = vmatprep.subr.mxu0 0.0
        %2845 = vmatpush1.msra.mxu0 0.0
        %2846 = vmatprep.subr.mxu0 0.0
        %2847 = vmatpush1.msra.mxu0 0.0
        %2848 = vmatprep.mubr.f32.mxu0 0.0
        %2849 = vmatmul.mubr.f32.gmra.mrb[0].mxu0 %v2782
        %v2850 = vpop.f32.mrb[0].mxu0
        %v2851 = vadd.f32 0.0, %v2850
        %v2852 = vpop.f32.mrb[0].mxu0
        %2853 = vdwg.mxu0
        %2855 = vrot.lane.b32.xlu0 %v2705, 120
        %v2856 = vpop.permute.xlu0 %2855
        %2858 = vrot.lane.b32.xlu0 %v2705, 112
        %v2859 = vpop.permute.xlu0 %2858
        %2861 = vrot.lane.b32.xlu0 %v2705, 104
        %v2862 = vpop.permute.xlu0 %2861
        %v2864 = vcombine.low %v2705, %v2859
        %v2865 = vcombine.high %v2705, %v2859
        %v2867 = vunpack.c.l.s4 1983009808
        %v2868 = vunpack.c.0.s8 %v2867
        %v2869 = vlaneseq
        %v2870 = vshrl.u32 %v2869, 7
        %v2871 = vsub.s32 %v2868, %v2870
        %v2872 = vrot.slane %v2864, %v2871
        %v2874 = vunpack.c.l.s4 1983009808
        %v2875 = vunpack.c.0.s8 %v2874
        %v2876 = vlaneseq
        %v2877 = vshrl.u32 %v2876, 7
        %v2878 = vsub.s32 %v2875, %v2877
        %v2879 = vrot.slane %v2865, %v2878
        %v2880 = vcombine.low %v2856, %v2862
        %v2881 = vcombine.high %v2856, %v2862
        %v2883 = vunpack.c.l.s4 1983009808
        %v2884 = vunpack.c.0.s8 %v2883
        %v2885 = vlaneseq
        %v2886 = vshrl.u32 %v2885, 7
        %v2887 = vsub.s32 %v2884, %v2886
        %v2888 = vrot.slane %v2880, %v2887
        %v2890 = vunpack.c.l.s4 1983009808
        %v2891 = vunpack.c.0.s8 %v2890
        %v2892 = vlaneseq
        %v2893 = vshrl.u32 %v2892, 7
        %v2894 = vsub.s32 %v2891, %v2893
        %v2895 = vrot.slane %v2881, %v2894
        %v2896 = vcombine.low %v2872, %v2888
        %v2897 = vcombine.high %v2872, %v2888
        %v2899 = vunpack.c.l.s4 1934713408
        %v2900 = vunpack.c.0.s8 %v2899
        %v2901 = vlaneseq
        %v2902 = vshrl.u32 %v2901, 7
        %v2903 = vsub.s32 %v2900, %v2902
        %v2904 = vrot.slane %v2896, %v2903
        %v2906 = vunpack.c.l.s4 1934713408
        %v2907 = vunpack.c.0.s8 %v2906
        %v2908 = vlaneseq
        %v2909 = vshrl.u32 %v2908, 7
        %v2910 = vsub.s32 %v2907, %v2909
        %v2911 = vrot.slane %v2897, %v2910
        %v2912 = vcombine.low %v2879, %v2895
        %v2913 = vcombine.high %v2879, %v2895
        %v2915 = vunpack.c.l.s4 1934713408
        %v2916 = vunpack.c.0.s8 %v2915
        %v2917 = vlaneseq
        %v2918 = vshrl.u32 %v2917, 7
        %v2919 = vsub.s32 %v2916, %v2918
        %v2920 = vrot.slane %v2912, %v2919
        %v2922 = vunpack.c.l.s4 1934713408
        %v2923 = vunpack.c.0.s8 %v2922
        %v2924 = vlaneseq
        %v2925 = vshrl.u32 %v2924, 7
        %v2926 = vsub.s32 %v2923, %v2925
        %v2927 = vrot.slane %v2913, %v2926
        %v2928 = vcombine.high %v2904, 0.0
        %v2929 = vcombine.high %v2911, 0.0
        %v2930 = vcombine.high %v2920, 0.0
        %v2931 = vcombine.high %v2927, 0.0
        %v2932 = vcombine.low %v2904, %v2911
        %v2934 = vunpack.c.l.s4 1983009808
        %v2935 = vunpack.c.0.s8 %v2934
        %v2936 = vlaneseq
        %v2937 = vshrl.u32 %v2936, 7
        %v2938 = vsub.s32 %v2935, %v2937
        %v2939 = vrot.slane %v2932, %v2938
        %v2940 = vcombine.low %v2928, %v2929
        %v2942 = vunpack.c.l.s4 1983009808
        %v2943 = vunpack.c.0.s8 %v2942
        %v2944 = vlaneseq
        %v2945 = vshrl.u32 %v2944, 7
        %v2946 = vsub.s32 %v2943, %v2945
        %v2947 = vrot.slane %v2940, %v2946
        %v2948 = vcombine.low %v2920, %v2927
        %v2950 = vunpack.c.l.s4 1983009808
        %v2951 = vunpack.c.0.s8 %v2950
        %v2952 = vlaneseq
        %v2953 = vshrl.u32 %v2952, 7
        %v2954 = vsub.s32 %v2951, %v2953
        %v2955 = vrot.slane %v2948, %v2954
        %v2956 = vcombine.low %v2930, %v2931
        %v2958 = vunpack.c.l.s4 1983009808
        %v2959 = vunpack.c.0.s8 %v2958
        %v2960 = vlaneseq
        %v2961 = vshrl.u32 %v2960, 7
        %v2962 = vsub.s32 %v2959, %v2961
        %v2963 = vrot.slane %v2956, %v2962
        %v2964 = vcombine.low %v2939, %v2947
        %v2965 = vcombine.high %v2939, %v2947
        %v2967 = vunpack.c.l.s4 1934713408
        %v2968 = vunpack.c.0.s8 %v2967
        %v2969 = vlaneseq
        %v2970 = vshrl.u32 %v2969, 7
        %v2971 = vsub.s32 %v2968, %v2970
        %v2972 = vrot.slane %v2964, %v2971
        %v2974 = vunpack.c.l.s4 1934713408
        %v2975 = vunpack.c.0.s8 %v2974
        %v2976 = vlaneseq
        %v2977 = vshrl.u32 %v2976, 7
        %v2978 = vsub.s32 %v2975, %v2977
        %v2979 = vrot.slane %v2965, %v2978
        %v2980 = vcombine.low %v2955, %v2963
        %v2981 = vcombine.high %v2955, %v2963
        %v2983 = vunpack.c.l.s4 1934713408
        %v2984 = vunpack.c.0.s8 %v2983
        %v2985 = vlaneseq
        %v2986 = vshrl.u32 %v2985, 7
        %v2987 = vsub.s32 %v2984, %v2986
        %v2988 = vrot.slane %v2980, %v2987
        %v2990 = vunpack.c.l.s4 1934713408
        %v2991 = vunpack.c.0.s8 %v2990
        %v2992 = vlaneseq
        %v2993 = vshrl.u32 %v2992, 7
        %v2994 = vsub.s32 %v2991, %v2993
        %v2995 = vrot.slane %v2981, %v2994
        %v2996 = vcombine.low %v2972, %v2988
        %v2997 = vcombine.high %v2972, %v2988
        %v2998 = vcombine.low %v2979, %v2995
        %v2999 = vcombine.high %v2979, %v2995
        %3001 = vrot.lane.b32.xlu0 %v2778, 120
        %v3002 = vpop.permute.xlu0 %3001
        %3004 = vrot.lane.b32.xlu0 %v2778, 112
        %v3005 = vpop.permute.xlu0 %3004
        %3007 = vrot.lane.b32.xlu0 %v2778, 104
        %v3008 = vpop.permute.xlu0 %3007
        %v3010 = vcombine.low %v2778, %v3005
        %v3011 = vcombine.high %v2778, %v3005
        %v3013 = vunpack.c.l.s4 1983009808
        %v3014 = vunpack.c.0.s8 %v3013
        %v3015 = vlaneseq
        %v3016 = vshrl.u32 %v3015, 7
        %v3017 = vsub.s32 %v3014, %v3016
        %v3018 = vrot.slane %v3010, %v3017
        %v3020 = vunpack.c.l.s4 1983009808
        %v3021 = vunpack.c.0.s8 %v3020
        %v3022 = vlaneseq
        %v3023 = vshrl.u32 %v3022, 7
        %v3024 = vsub.s32 %v3021, %v3023
        %v3025 = vrot.slane %v3011, %v3024
        %v3026 = vcombine.low %v3002, %v3008
        %v3027 = vcombine.high %v3002, %v3008
        %v3029 = vunpack.c.l.s4 1983009808
        %v3030 = vunpack.c.0.s8 %v3029
        %v3031 = vlaneseq
        %v3032 = vshrl.u32 %v3031, 7
        %v3033 = vsub.s32 %v3030, %v3032
        %v3034 = vrot.slane %v3026, %v3033
        %v3036 = vunpack.c.l.s4 1983009808
        %v3037 = vunpack.c.0.s8 %v3036
        %v3038 = vlaneseq
        %v3039 = vshrl.u32 %v3038, 7
        %v3040 = vsub.s32 %v3037, %v3039
        %v3041 = vrot.slane %v3027, %v3040
        %v3042 = vcombine.low %v3018, %v3034
        %v3043 = vcombine.high %v3018, %v3034
        %v3045 = vunpack.c.l.s4 1934713408
        %v3046 = vunpack.c.0.s8 %v3045
        %v3047 = vlaneseq
        %v3048 = vshrl.u32 %v3047, 7
        %v3049 = vsub.s32 %v3046, %v3048
        %v3050 = vrot.slane %v3042, %v3049
        %v3052 = vunpack.c.l.s4 1934713408
        %v3053 = vunpack.c.0.s8 %v3052
        %v3054 = vlaneseq
        %v3055 = vshrl.u32 %v3054, 7
        %v3056 = vsub.s32 %v3053, %v3055
        %v3057 = vrot.slane %v3043, %v3056
        %v3058 = vcombine.low %v3025, %v3041
        %v3059 = vcombine.high %v3025, %v3041
        %v3061 = vunpack.c.l.s4 1934713408
        %v3062 = vunpack.c.0.s8 %v3061
        %v3063 = vlaneseq
        %v3064 = vshrl.u32 %v3063, 7
        %v3065 = vsub.s32 %v3062, %v3064
        %v3066 = vrot.slane %v3058, %v3065
        %v3068 = vunpack.c.l.s4 1934713408
        %v3069 = vunpack.c.0.s8 %v3068
        %v3070 = vlaneseq
        %v3071 = vshrl.u32 %v3070, 7
        %v3072 = vsub.s32 %v3069, %v3071
        %v3073 = vrot.slane %v3059, %v3072
        %v3074 = vcombine.high %v3050, 0.0
        %v3075 = vcombine.high %v3057, 0.0
        %v3076 = vcombine.high %v3066, 0.0
        %v3077 = vcombine.high %v3073, 0.0
        %v3078 = vcombine.low %v3050, %v3057
        %v3080 = vunpack.c.l.s4 1983009808
        %v3081 = vunpack.c.0.s8 %v3080
        %v3082 = vlaneseq
        %v3083 = vshrl.u32 %v3082, 7
        %v3084 = vsub.s32 %v3081, %v3083
        %v3085 = vrot.slane %v3078, %v3084
        %v3086 = vcombine.low %v3074, %v3075
        %v3088 = vunpack.c.l.s4 1983009808
        %v3089 = vunpack.c.0.s8 %v3088
        %v3090 = vlaneseq
        %v3091 = vshrl.u32 %v3090, 7
        %v3092 = vsub.s32 %v3089, %v3091
        %v3093 = vrot.slane %v3086, %v3092
        %v3094 = vcombine.low %v3066, %v3073
        %v3096 = vunpack.c.l.s4 1983009808
        %v3097 = vunpack.c.0.s8 %v3096
        %v3098 = vlaneseq
        %v3099 = vshrl.u32 %v3098, 7
        %v3100 = vsub.s32 %v3097, %v3099
        %v3101 = vrot.slane %v3094, %v3100
        %v3102 = vcombine.low %v3076, %v3077
        %v3104 = vunpack.c.l.s4 1983009808
        %v3105 = vunpack.c.0.s8 %v3104
        %v3106 = vlaneseq
        %v3107 = vshrl.u32 %v3106, 7
        %v3108 = vsub.s32 %v3105, %v3107
        %v3109 = vrot.slane %v3102, %v3108
        %v3110 = vcombine.low %v3085, %v3093
        %v3111 = vcombine.high %v3085, %v3093
        %v3113 = vunpack.c.l.s4 1934713408
        %v3114 = vunpack.c.0.s8 %v3113
        %v3115 = vlaneseq
        %v3116 = vshrl.u32 %v3115, 7
        %v3117 = vsub.s32 %v3114, %v3116
        %v3118 = vrot.slane %v3110, %v3117
        %v3120 = vunpack.c.l.s4 1934713408
        %v3121 = vunpack.c.0.s8 %v3120
        %v3122 = vlaneseq
        %v3123 = vshrl.u32 %v3122, 7
        %v3124 = vsub.s32 %v3121, %v3123
        %v3125 = vrot.slane %v3111, %v3124
        %v3126 = vcombine.low %v3101, %v3109
        %v3127 = vcombine.high %v3101, %v3109
        %v3129 = vunpack.c.l.s4 1934713408
        %v3130 = vunpack.c.0.s8 %v3129
        %v3131 = vlaneseq
        %v3132 = vshrl.u32 %v3131, 7
        %v3133 = vsub.s32 %v3130, %v3132
        %v3134 = vrot.slane %v3126, %v3133
        %v3136 = vunpack.c.l.s4 1934713408
        %v3137 = vunpack.c.0.s8 %v3136
        %v3138 = vlaneseq
        %v3139 = vshrl.u32 %v3138, 7
        %v3140 = vsub.s32 %v3137, %v3139
        %v3141 = vrot.slane %v3127, %v3140
        %v3142 = vcombine.low %v3118, %v3134
        %v3143 = vcombine.high %v3118, %v3134
        %v3144 = vcombine.low %v3125, %v3141
        %v3145 = vcombine.high %v3125, %v3141
        %3147 = vrot.lane.b32.xlu0 %v2851, 120
        %v3148 = vpop.permute.xlu0 %3147
        %3150 = vrot.lane.b32.xlu0 %v2851, 112
        %v3151 = vpop.permute.xlu0 %3150
        %3153 = vrot.lane.b32.xlu0 %v2851, 104
        %v3154 = vpop.permute.xlu0 %3153
        %v3156 = vcombine.low %v2851, %v3151
        %v3157 = vcombine.high %v2851, %v3151
        %v3159 = vunpack.c.l.s4 1983009808
        %v3160 = vunpack.c.0.s8 %v3159
        %v3161 = vlaneseq
        %v3162 = vshrl.u32 %v3161, 7
        %v3163 = vsub.s32 %v3160, %v3162
        %v3164 = vrot.slane %v3156, %v3163
        %v3166 = vunpack.c.l.s4 1983009808
        %v3167 = vunpack.c.0.s8 %v3166
        %v3168 = vlaneseq
        %v3169 = vshrl.u32 %v3168, 7
        %v3170 = vsub.s32 %v3167, %v3169
        %v3171 = vrot.slane %v3157, %v3170
        %v3172 = vcombine.low %v3148, %v3154
        %v3173 = vcombine.high %v3148, %v3154
        %v3175 = vunpack.c.l.s4 1983009808
        %v3176 = vunpack.c.0.s8 %v3175
        %v3177 = vlaneseq
        %v3178 = vshrl.u32 %v3177, 7
        %v3179 = vsub.s32 %v3176, %v3178
        %v3180 = vrot.slane %v3172, %v3179
        %v3182 = vunpack.c.l.s4 1983009808
        %v3183 = vunpack.c.0.s8 %v3182
        %v3184 = vlaneseq
        %v3185 = vshrl.u32 %v3184, 7
        %v3186 = vsub.s32 %v3183, %v3185
        %v3187 = vrot.slane %v3173, %v3186
        %v3188 = vcombine.low %v3164, %v3180
        %v3189 = vcombine.high %v3164, %v3180
        %v3191 = vunpack.c.l.s4 1934713408
        %v3192 = vunpack.c.0.s8 %v3191
        %v3193 = vlaneseq
        %v3194 = vshrl.u32 %v3193, 7
        %v3195 = vsub.s32 %v3192, %v3194
        %v3196 = vrot.slane %v3188, %v3195
        %v3198 = vunpack.c.l.s4 1934713408
        %v3199 = vunpack.c.0.s8 %v3198
        %v3200 = vlaneseq
        %v3201 = vshrl.u32 %v3200, 7
        %v3202 = vsub.s32 %v3199, %v3201
        %v3203 = vrot.slane %v3189, %v3202
        %v3204 = vcombine.low %v3171, %v3187
        %v3205 = vcombine.high %v3171, %v3187
        %v3207 = vunpack.c.l.s4 1934713408
        %v3208 = vunpack.c.0.s8 %v3207
        %v3209 = vlaneseq
        %v3210 = vshrl.u32 %v3209, 7
        %v3211 = vsub.s32 %v3208, %v3210
        %v3212 = vrot.slane %v3204, %v3211
        %v3214 = vunpack.c.l.s4 1934713408
        %v3215 = vunpack.c.0.s8 %v3214
        %v3216 = vlaneseq
        %v3217 = vshrl.u32 %v3216, 7
        %v3218 = vsub.s32 %v3215, %v3217
        %v3219 = vrot.slane %v3205, %v3218
        %v3220 = vcombine.high %v3196, 0.0
        %v3221 = vcombine.high %v3203, 0.0
        %v3222 = vcombine.high %v3212, 0.0
        %v3223 = vcombine.high %v3219, 0.0
        %v3224 = vcombine.low %v3196, %v3203
        %v3226 = vunpack.c.l.s4 1983009808
        %v3227 = vunpack.c.0.s8 %v3226
        %v3228 = vlaneseq
        %v3229 = vshrl.u32 %v3228, 7
        %v3230 = vsub.s32 %v3227, %v3229
        %v3231 = vrot.slane %v3224, %v3230
        %v3232 = vcombine.low %v3220, %v3221
        %v3234 = vunpack.c.l.s4 1983009808
        %v3235 = vunpack.c.0.s8 %v3234
        %v3236 = vlaneseq
        %v3237 = vshrl.u32 %v3236, 7
        %v3238 = vsub.s32 %v3235, %v3237
        %v3239 = vrot.slane %v3232, %v3238
        %v3240 = vcombine.low %v3212, %v3219
        %v3242 = vunpack.c.l.s4 1983009808
        %v3243 = vunpack.c.0.s8 %v3242
        %v3244 = vlaneseq
        %v3245 = vshrl.u32 %v3244, 7
        %v3246 = vsub.s32 %v3243, %v3245
        %v3247 = vrot.slane %v3240, %v3246
        %v3248 = vcombine.low %v3222, %v3223
        %v3250 = vunpack.c.l.s4 1983009808
        %v3251 = vunpack.c.0.s8 %v3250
        %v3252 = vlaneseq
        %v3253 = vshrl.u32 %v3252, 7
        %v3254 = vsub.s32 %v3251, %v3253
        %v3255 = vrot.slane %v3248, %v3254
        %v3256 = vcombine.low %v3231, %v3239
        %v3257 = vcombine.high %v3231, %v3239
        %v3259 = vunpack.c.l.s4 1934713408
        %v3260 = vunpack.c.0.s8 %v3259
        %v3261 = vlaneseq
        %v3262 = vshrl.u32 %v3261, 7
        %v3263 = vsub.s32 %v3260, %v3262
        %v3264 = vrot.slane %v3256, %v3263
        %v3266 = vunpack.c.l.s4 1934713408
        %v3267 = vunpack.c.0.s8 %v3266
        %v3268 = vlaneseq
        %v3269 = vshrl.u32 %v3268, 7
        %v3270 = vsub.s32 %v3267, %v3269
        %v3271 = vrot.slane %v3257, %v3270
        %v3272 = vcombine.low %v3247, %v3255
        %v3273 = vcombine.high %v3247, %v3255
        %v3275 = vunpack.c.l.s4 1934713408
        %v3276 = vunpack.c.0.s8 %v3275
        %v3277 = vlaneseq
        %v3278 = vshrl.u32 %v3277, 7
        %v3279 = vsub.s32 %v3276, %v3278
        %v3280 = vrot.slane %v3272, %v3279
        %v3282 = vunpack.c.l.s4 1934713408
        %v3283 = vunpack.c.0.s8 %v3282
        %v3284 = vlaneseq
        %v3285 = vshrl.u32 %v3284, 7
        %v3286 = vsub.s32 %v3283, %v3285
        %v3287 = vrot.slane %v3273, %v3286
        %v3288 = vcombine.low %v3264, %v3280
        %v3289 = vcombine.high %v3264, %v3280
        %v3290 = vcombine.low %v3271, %v3287
        %v3291 = vcombine.high %v3271, %v3287
        %v3293 = vsel %vm1710, %v3288, 0
        %v3296 = vsel %vm1710, %v3142, 0
        %3298 = vmatprep.subr.mxu0 0.0
        %3299 = vmatpush1.xpose.msra.mxu0 %v3296
        %3300 = vmatprep.subr.mxu0 0.0
        %3301 = vmatpush1.xpose.msra.mxu0 0.0
        %3302 = vmatprep.subr.mxu0 0.0
        %3303 = vmatpush1.xpose.msra.mxu0 0.0
        %3304 = vmatprep.subr.mxu0 0.0
        %3305 = vmatpush1.xpose.msra.mxu0 0.0
        %3306 = vmatprep.subr.mxu0 0.0
        %3307 = vmatpush1.xpose.msra.mxu0 0.0
        %3308 = vmatprep.subr.mxu0 0.0
        %3309 = vmatpush1.xpose.msra.mxu0 0.0
        %3310 = vmatprep.subr.mxu0 0.0
        %3311 = vmatpush1.xpose.msra.mxu0 0.0
        %3312 = vmatprep.subr.mxu0 0.0
        %3313 = vmatpush1.xpose.msra.mxu0 0.0
        %3314 = vmatprep.subr.mxu0 0.0
        %3315 = vmatpush1.xpose.msra.mxu0 0.0
        %3316 = vmatprep.subr.mxu0 0.0
        %3317 = vmatpush1.xpose.msra.mxu0 0.0
        %3318 = vmatprep.subr.mxu0 0.0
        %3319 = vmatpush1.xpose.msra.mxu0 0.0
        %3320 = vmatprep.subr.mxu0 0.0
        %3321 = vmatpush1.xpose.msra.mxu0 0.0
        %3322 = vmatprep.subr.mxu0 0.0
        %3323 = vmatpush1.xpose.msra.mxu0 0.0
        %3324 = vmatprep.subr.mxu0 0.0
        %3325 = vmatpush1.xpose.msra.mxu0 0.0
        %3326 = vmatprep.subr.mxu0 0.0
        %3327 = vmatpush1.xpose.msra.mxu0 0.0
        %3328 = vmatprep.subr.mxu0 0.0
        %3329 = vmatpush1.xpose.msra.mxu0 0.0
        %3330 = vmatprep.subr.mxu0 0.0
        %3331 = vmatpush1.xpose.msra.mxu0 0.0
        %3332 = vmatprep.subr.mxu0 0.0
        %3333 = vmatpush1.xpose.msra.mxu0 0.0
        %3334 = vmatprep.subr.mxu0 0.0
        %3335 = vmatpush1.xpose.msra.mxu0 0.0
        %3336 = vmatprep.subr.mxu0 0.0
        %3337 = vmatpush1.xpose.msra.mxu0 0.0
        %3338 = vmatprep.subr.mxu0 0.0
        %3339 = vmatpush1.xpose.msra.mxu0 0.0
        %3340 = vmatprep.subr.mxu0 0.0
        %3341 = vmatpush1.xpose.msra.mxu0 0.0
        %3342 = vmatprep.subr.mxu0 0.0
        %3343 = vmatpush1.xpose.msra.mxu0 0.0
        %3344 = vmatprep.subr.mxu0 0.0
        %3345 = vmatpush1.xpose.msra.mxu0 0.0
        %3346 = vmatprep.subr.mxu0 0.0
        %3347 = vmatpush1.xpose.msra.mxu0 0.0
        %3348 = vmatprep.subr.mxu0 0.0
        %3349 = vmatpush1.xpose.msra.mxu0 0.0
        %3350 = vmatprep.subr.mxu0 0.0
        %3351 = vmatpush1.xpose.msra.mxu0 0.0
        %3352 = vmatprep.subr.mxu0 0.0
        %3353 = vmatpush1.xpose.msra.mxu0 0.0
        %3354 = vmatprep.subr.mxu0 0.0
        %3355 = vmatpush1.xpose.msra.mxu0 0.0
        %3356 = vmatprep.subr.mxu0 0.0
        %3357 = vmatpush1.xpose.msra.mxu0 0.0
        %3358 = vmatprep.subr.mxu0 0.0
        %3359 = vmatpush1.xpose.msra.mxu0 0.0
        %3360 = vmatprep.subr.mxu0 0.0
        %3361 = vmatpush1.xpose.msra.mxu0 0.0
        %3362 = vmatprep.mubr.f32.mxu0 0.0
        %3363 = vmatmul.mubr.f32.gmra.mrb[0].mxu0 %v3293
        %v3364 = vpop.f32.mrb[0].mxu0
        %v3365 = vadd.f32 0.0, %v3364
        %v3366 = vpop.f32.mrb[0].mxu0
        %3367 = vdwg.mxu0
        %v3369 = vsel %vm1710, %v3289, 0
        %v3372 = vsel %vm1710, %v3143, 0
        %3374 = vmatprep.subr.mxu0 0.0
        %3375 = vmatpush1.xpose.msra.mxu0 %v3372
        %3376 = vmatprep.subr.mxu0 0.0
        %3377 = vmatpush1.xpose.msra.mxu0 0.0
        %3378 = vmatprep.subr.mxu0 0.0
        %3379 = vmatpush1.xpose.msra.mxu0 0.0
        %3380 = vmatprep.subr.mxu0 0.0
        %3381 = vmatpush1.xpose.msra.mxu0 0.0
        %3382 = vmatprep.subr.mxu0 0.0
        %3383 = vmatpush1.xpose.msra.mxu0 0.0
        %3384 = vmatprep.subr.mxu0 0.0
        %3385 = vmatpush1.xpose.msra.mxu0 0.0
        %3386 = vmatprep.subr.mxu0 0.0
        %3387 = vmatpush1.xpose.msra.mxu0 0.0
        %3388 = vmatprep.subr.mxu0 0.0
        %3389 = vmatpush1.xpose.msra.mxu0 0.0
        %3390 = vmatprep.subr.mxu0 0.0
        %3391 = vmatpush1.xpose.msra.mxu0 0.0
        %3392 = vmatprep.subr.mxu0 0.0
        %3393 = vmatpush1.xpose.msra.mxu0 0.0
        %3394 = vmatprep.subr.mxu0 0.0
        %3395 = vmatpush1.xpose.msra.mxu0 0.0
        %3396 = vmatprep.subr.mxu0 0.0
        %3397 = vmatpush1.xpose.msra.mxu0 0.0
        %3398 = vmatprep.subr.mxu0 0.0
        %3399 = vmatpush1.xpose.msra.mxu0 0.0
        %3400 = vmatprep.subr.mxu0 0.0
        %3401 = vmatpush1.xpose.msra.mxu0 0.0
        %3402 = vmatprep.subr.mxu0 0.0
        %3403 = vmatpush1.xpose.msra.mxu0 0.0
        %3404 = vmatprep.subr.mxu0 0.0
        %3405 = vmatpush1.xpose.msra.mxu0 0.0
        %3406 = vmatprep.subr.mxu0 0.0
        %3407 = vmatpush1.xpose.msra.mxu0 0.0
        %3408 = vmatprep.subr.mxu0 0.0
        %3409 = vmatpush1.xpose.msra.mxu0 0.0
        %3410 = vmatprep.subr.mxu0 0.0
        %3411 = vmatpush1.xpose.msra.mxu0 0.0
        %3412 = vmatprep.subr.mxu0 0.0
        %3413 = vmatpush1.xpose.msra.mxu0 0.0
        %3414 = vmatprep.subr.mxu0 0.0
        %3415 = vmatpush1.xpose.msra.mxu0 0.0
        %3416 = vmatprep.subr.mxu0 0.0
        %3417 = vmatpush1.xpose.msra.mxu0 0.0
        %3418 = vmatprep.subr.mxu0 0.0
        %3419 = vmatpush1.xpose.msra.mxu0 0.0
        %3420 = vmatprep.subr.mxu0 0.0
        %3421 = vmatpush1.xpose.msra.mxu0 0.0
        %3422 = vmatprep.subr.mxu0 0.0
        %3423 = vmatpush1.xpose.msra.mxu0 0.0
        %3424 = vmatprep.subr.mxu0 0.0
        %3425 = vmatpush1.xpose.msra.mxu0 0.0
        %3426 = vmatprep.subr.mxu0 0.0
        %3427 = vmatpush1.xpose.msra.mxu0 0.0
        %3428 = vmatprep.subr.mxu0 0.0
        %3429 = vmatpush1.xpose.msra.mxu0 0.0
        %3430 = vmatprep.subr.mxu0 0.0
        %3431 = vmatpush1.xpose.msra.mxu0 0.0
        %3432 = vmatprep.subr.mxu0 0.0
        %3433 = vmatpush1.xpose.msra.mxu0 0.0
        %3434 = vmatprep.subr.mxu0 0.0
        %3435 = vmatpush1.xpose.msra.mxu0 0.0
        %3436 = vmatprep.subr.mxu0 0.0
        %3437 = vmatpush1.xpose.msra.mxu0 0.0
        %3438 = vmatprep.mubr.f32.mxu0 0.0
        %3439 = vmatmul.mubr.f32.gmra.mrb[0].mxu0 %v3369
        %v3440 = vpop.f32.mrb[0].mxu0
        %v3441 = vadd.f32 0.0, %v3440
        %v3442 = vpop.f32.mrb[0].mxu0
        %3443 = vdwg.mxu0
        %v3445 = vsel %vm1710, %v3290, 0
        %v3448 = vsel %vm1710, %v3144, 0
        %3450 = vmatprep.subr.mxu0 0.0
        %3451 = vmatpush1.xpose.msra.mxu0 %v3448
        %3452 = vmatprep.subr.mxu0 0.0
        %3453 = vmatpush1.xpose.msra.mxu0 0.0
        %3454 = vmatprep.subr.mxu0 0.0
        %3455 = vmatpush1.xpose.msra.mxu0 0.0
        %3456 = vmatprep.subr.mxu0 0.0
        %3457 = vmatpush1.xpose.msra.mxu0 0.0
        %3458 = vmatprep.subr.mxu0 0.0
        %3459 = vmatpush1.xpose.msra.mxu0 0.0
        %3460 = vmatprep.subr.mxu0 0.0
        %3461 = vmatpush1.xpose.msra.mxu0 0.0
        %3462 = vmatprep.subr.mxu0 0.0
        %3463 = vmatpush1.xpose.msra.mxu0 0.0
        %3464 = vmatprep.subr.mxu0 0.0
        %3465 = vmatpush1.xpose.msra.mxu0 0.0
        %3466 = vmatprep.subr.mxu0 0.0
        %3467 = vmatpush1.xpose.msra.mxu0 0.0
        %3468 = vmatprep.subr.mxu0 0.0
        %3469 = vmatpush1.xpose.msra.mxu0 0.0
        %3470 = vmatprep.subr.mxu0 0.0
        %3471 = vmatpush1.xpose.msra.mxu0 0.0
        %3472 = vmatprep.subr.mxu0 0.0
        %3473 = vmatpush1.xpose.msra.mxu0 0.0
        %3474 = vmatprep.subr.mxu0 0.0
        %3475 = vmatpush1.xpose.msra.mxu0 0.0
        %3476 = vmatprep.subr.mxu0 0.0
        %3477 = vmatpush1.xpose.msra.mxu0 0.0
        %3478 = vmatprep.subr.mxu0 0.0
        %3479 = vmatpush1.xpose.msra.mxu0 0.0
        %3480 = vmatprep.subr.mxu0 0.0
        %3481 = vmatpush1.xpose.msra.mxu0 0.0
        %3482 = vmatprep.subr.mxu0 0.0
        %3483 = vmatpush1.xpose.msra.mxu0 0.0
        %3484 = vmatprep.subr.mxu0 0.0
        %3485 = vmatpush1.xpose.msra.mxu0 0.0
        %3486 = vmatprep.subr.mxu0 0.0
        %3487 = vmatpush1.xpose.msra.mxu0 0.0
        %3488 = vmatprep.subr.mxu0 0.0
        %3489 = vmatpush1.xpose.msra.mxu0 0.0
        %3490 = vmatprep.subr.mxu0 0.0
        %3491 = vmatpush1.xpose.msra.mxu0 0.0
        %3492 = vmatprep.subr.mxu0 0.0
        %3493 = vmatpush1.xpose.msra.mxu0 0.0
        %3494 = vmatprep.subr.mxu0 0.0
        %3495 = vmatpush1.xpose.msra.mxu0 0.0
        %3496 = vmatprep.subr.mxu0 0.0
        %3497 = vmatpush1.xpose.msra.mxu0 0.0
        %3498 = vmatprep.subr.mxu0 0.0
        %3499 = vmatpush1.xpose.msra.mxu0 0.0
        %3500 = vmatprep.subr.mxu0 0.0
        %3501 = vmatpush1.xpose.msra.mxu0 0.0
        %3502 = vmatprep.subr.mxu0 0.0
        %3503 = vmatpush1.xpose.msra.mxu0 0.0
        %3504 = vmatprep.subr.mxu0 0.0
        %3505 = vmatpush1.xpose.msra.mxu0 0.0
        %3506 = vmatprep.subr.mxu0 0.0
        %3507 = vmatpush1.xpose.msra.mxu0 0.0
        %3508 = vmatprep.subr.mxu0 0.0
        %3509 = vmatpush1.xpose.msra.mxu0 0.0
        %3510 = vmatprep.subr.mxu0 0.0
        %3511 = vmatpush1.xpose.msra.mxu0 0.0
        %3512 = vmatprep.subr.mxu0 0.0
        %3513 = vmatpush1.xpose.msra.mxu0 0.0
        %3514 = vmatprep.mubr.f32.mxu0 0.0
        %3515 = vmatmul.mubr.f32.gmra.mrb[0].mxu0 %v3445
        %v3516 = vpop.f32.mrb[0].mxu0
        %v3517 = vadd.f32 0.0, %v3516
        %v3518 = vpop.f32.mrb[0].mxu0
        %3519 = vdwg.mxu0
        %v3521 = vsel %vm1710, %v3291, 0
        %v3524 = vsel %vm1710, %v3145, 0
        %3526 = vmatprep.subr.mxu0 0.0
        %3527 = vmatpush1.xpose.msra.mxu0 %v3524
        %3528 = vmatprep.subr.mxu0 0.0
        %3529 = vmatpush1.xpose.msra.mxu0 0.0
        %3530 = vmatprep.subr.mxu0 0.0
        %3531 = vmatpush1.xpose.msra.mxu0 0.0
        %3532 = vmatprep.subr.mxu0 0.0
        %3533 = vmatpush1.xpose.msra.mxu0 0.0
        %3534 = vmatprep.subr.mxu0 0.0
        %3535 = vmatpush1.xpose.msra.mxu0 0.0
        %3536 = vmatprep.subr.mxu0 0.0
        %3537 = vmatpush1.xpose.msra.mxu0 0.0
        %3538 = vmatprep.subr.mxu0 0.0
        %3539 = vmatpush1.xpose.msra.mxu0 0.0
        %3540 = vmatprep.subr.mxu0 0.0
        %3541 = vmatpush1.xpose.msra.mxu0 0.0
        %3542 = vmatprep.subr.mxu0 0.0
        %3543 = vmatpush1.xpose.msra.mxu0 0.0
        %3544 = vmatprep.subr.mxu0 0.0
        %3545 = vmatpush1.xpose.msra.mxu0 0.0
        %3546 = vmatprep.subr.mxu0 0.0
        %3547 = vmatpush1.xpose.msra.mxu0 0.0
        %3548 = vmatprep.subr.mxu0 0.0
        %3549 = vmatpush1.xpose.msra.mxu0 0.0
        %3550 = vmatprep.subr.mxu0 0.0
        %3551 = vmatpush1.xpose.msra.mxu0 0.0
        %3552 = vmatprep.subr.mxu0 0.0
        %3553 = vmatpush1.xpose.msra.mxu0 0.0
        %3554 = vmatprep.subr.mxu0 0.0
        %3555 = vmatpush1.xpose.msra.mxu0 0.0
        %3556 = vmatprep.subr.mxu0 0.0
        %3557 = vmatpush1.xpose.msra.mxu0 0.0
        %3558 = vmatprep.subr.mxu0 0.0
        %3559 = vmatpush1.xpose.msra.mxu0 0.0
        %3560 = vmatprep.subr.mxu0 0.0
        %3561 = vmatpush1.xpose.msra.mxu0 0.0
        %3562 = vmatprep.subr.mxu0 0.0
        %3563 = vmatpush1.xpose.msra.mxu0 0.0
        %3564 = vmatprep.subr.mxu0 0.0
        %3565 = vmatpush1.xpose.msra.mxu0 0.0
        %3566 = vmatprep.subr.mxu0 0.0
        %3567 = vmatpush1.xpose.msra.mxu0 0.0
        %3568 = vmatprep.subr.mxu0 0.0
        %3569 = vmatpush1.xpose.msra.mxu0 0.0
        %3570 = vmatprep.subr.mxu0 0.0
        %3571 = vmatpush1.xpose.msra.mxu0 0.0
        %3572 = vmatprep.subr.mxu0 0.0
        %3573 = vmatpush1.xpose.msra.mxu0 0.0
        %3574 = vmatprep.subr.mxu0 0.0
        %3575 = vmatpush1.xpose.msra.mxu0 0.0
        %3576 = vmatprep.subr.mxu0 0.0
        %3577 = vmatpush1.xpose.msra.mxu0 0.0
        %3578 = vmatprep.subr.mxu0 0.0
        %3579 = vmatpush1.xpose.msra.mxu0 0.0
        %3580 = vmatprep.subr.mxu0 0.0
        %3581 = vmatpush1.xpose.msra.mxu0 0.0
        %3582 = vmatprep.subr.mxu0 0.0
        %3583 = vmatpush1.xpose.msra.mxu0 0.0
        %3584 = vmatprep.subr.mxu0 0.0
        %3585 = vmatpush1.xpose.msra.mxu0 0.0
        %3586 = vmatprep.subr.mxu0 0.0
        %3587 = vmatpush1.xpose.msra.mxu0 0.0
        %3588 = vmatprep.subr.mxu0 0.0
        %3589 = vmatpush1.xpose.msra.mxu0 0.0
        %3590 = vmatprep.mubr.f32.mxu0 0.0
        %3591 = vmatmul.mubr.f32.gmra.mrb[0].mxu0 %v3521
        %v3592 = vpop.f32.mrb[0].mxu0
        %v3593 = vadd.f32 0.0, %v3592
        %v3594 = vpop.f32.mrb[0].mxu0
        %3595 = vdwg.mxu0
        %v3596 = vadd.f32 %v3365, %v1040
        %v3597 = vadd.f32 %v3441, %v1040
        %v3598 = vadd.f32 %v3517, %v1040
        %v3599 = vadd.f32 %v3593, %v1040
        %v3600 = vsel %vm1710, %v3596, -inf
        %3601 = vmax.xlane.f32.xlu0 %v3600
        %v3602 = vpop.xlane.xlu0 %3601
        %v3603 = vsel %vm1710, %v3597, -inf
        %3604 = vmax.xlane.f32.xlu0 %v3603
        %v3605 = vpop.xlane.xlu0 %3604
        %v3606 = vsel %vm1710, %v3598, -inf
        %3607 = vmax.xlane.f32.xlu0 %v3606
        %v3608 = vpop.xlane.xlu0 %3607
        %v3609 = vsel %vm1710, %v3599, -inf
        %3610 = vmax.xlane.f32.xlu0 %v3609
        %v3611 = vpop.xlane.xlu0 %3610
        %v3612 = vsub.f32 %v3596, %v3602
        %v3613 = vsub.f32 %v3597, %v3605
        %v3614 = vsub.f32 %v3598, %v3608
        %v3615 = vsub.f32 %v3599, %v3611
        %v3616 = vmul.f32 %v3612, 1.442695
        %v3617 = vpow.pop %v3616
        %v3618 = vmul.f32 %v3613, 1.442695
        %v3619 = vpow.pop %v3618
        %v3620 = vmul.f32 %v3614, 1.442695
        %v3621 = vpow.pop %v3620
        %v3622 = vmul.f32 %v3615, 1.442695
        %v3623 = vpow.pop %v3622
        %v3624 = vsel %vm1710, %v3617, 0.0
        %3625 = vadd.xlane.f32.xlu0 %v3624
        %v3626 = vpop.xlane.xlu0 %3625
        %v3627 = vsel %vm1710, %v3619, 0.0
        %3628 = vadd.xlane.f32.xlu0 %v3627
        %v3629 = vpop.xlane.xlu0 %3628
        %v3630 = vsel %vm1710, %v3621, 0.0
        %3631 = vadd.xlane.f32.xlu0 %v3630
        %v3632 = vpop.xlane.xlu0 %3631
        %v3633 = vsel %vm1710, %v3623, 0.0
        %3634 = vadd.xlane.f32.xlu0 %v3633
        %v3635 = vpop.xlane.xlu0 %3634
        %v3636 = vrcp.pop %v3626
        %v3637 = vrcp.pop %v3629
        %v3638 = vrcp.pop %v3632
        %v3639 = vrcp.pop %v3635
        %v3640 = vmul.f32 %v3617, %v3636
        %v3641 = vmul.f32 %v3619, %v3637
        %v3642 = vmul.f32 %v3621, %v3638
        %v3643 = vmul.f32 %v3623, %v3639
        %v3645 = vsel %vm1710, %v3640, 0
        %3647 = vmatprep.subr.mxu0 0.0
        %3648 = vmatpush1.msra.mxu0 %v2996
        %3649 = vmatprep.subr.mxu0 0.0
        %3650 = vmatpush1.msra.mxu0 0.0
        %3651 = vmatprep.subr.mxu0 0.0
        %3652 = vmatpush1.msra.mxu0 0.0
        %3653 = vmatprep.subr.mxu0 0.0
        %3654 = vmatpush1.msra.mxu0 0.0
        %3655 = vmatprep.subr.mxu0 0.0
        %3656 = vmatpush1.msra.mxu0 0.0
        %3657 = vmatprep.subr.mxu0 0.0
        %3658 = vmatpush1.msra.mxu0 0.0
        %3659 = vmatprep.subr.mxu0 0.0
        %3660 = vmatpush1.msra.mxu0 0.0
        %3661 = vmatprep.subr.mxu0 0.0
        %3662 = vmatpush1.msra.mxu0 0.0
        %3663 = vmatprep.subr.mxu0 0.0
        %3664 = vmatpush1.msra.mxu0 0.0
        %3665 = vmatprep.subr.mxu0 0.0
        %3666 = vmatpush1.msra.mxu0 0.0
        %3667 = vmatprep.subr.mxu0 0.0
        %3668 = vmatpush1.msra.mxu0 0.0
        %3669 = vmatprep.subr.mxu0 0.0
        %3670 = vmatpush1.msra.mxu0 0.0
        %3671 = vmatprep.subr.mxu0 0.0
        %3672 = vmatpush1.msra.mxu0 0.0
        %3673 = vmatprep.subr.mxu0 0.0
        %3674 = vmatpush1.msra.mxu0 0.0
        %3675 = vmatprep.subr.mxu0 0.0
        %3676 = vmatpush1.msra.mxu0 0.0
        %3677 = vmatprep.subr.mxu0 0.0
        %3678 = vmatpush1.msra.mxu0 0.0
        %3679 = vmatprep.subr.mxu0 0.0
        %3680 = vmatpush1.msra.mxu0 0.0
        %3681 = vmatprep.subr.mxu0 0.0
        %3682 = vmatpush1.msra.mxu0 0.0
        %3683 = vmatprep.subr.mxu0 0.0
        %3684 = vmatpush1.msra.mxu0 0.0
        %3685 = vmatprep.subr.mxu0 0.0
        %3686 = vmatpush1.msra.mxu0 0.0
        %3687 = vmatprep.subr.mxu0 0.0
        %3688 = vmatpush1.msra.mxu0 0.0
        %3689 = vmatprep.subr.mxu0 0.0
        %3690 = vmatpush1.msra.mxu0 0.0
        %3691 = vmatprep.subr.mxu0 0.0
        %3692 = vmatpush1.msra.mxu0 0.0
        %3693 = vmatprep.subr.mxu0 0.0
        %3694 = vmatpush1.msra.mxu0 0.0
        %3695 = vmatprep.subr.mxu0 0.0
        %3696 = vmatpush1.msra.mxu0 0.0
        %3697 = vmatprep.subr.mxu0 0.0
        %3698 = vmatpush1.msra.mxu0 0.0
        %3699 = vmatprep.subr.mxu0 0.0
        %3700 = vmatpush1.msra.mxu0 0.0
        %3701 = vmatprep.subr.mxu0 0.0
        %3702 = vmatpush1.msra.mxu0 0.0
        %3703 = vmatprep.subr.mxu0 0.0
        %3704 = vmatpush1.msra.mxu0 0.0
        %3705 = vmatprep.subr.mxu0 0.0
        %3706 = vmatpush1.msra.mxu0 0.0
        %3707 = vmatprep.subr.mxu0 0.0
        %3708 = vmatpush1.msra.mxu0 0.0
        %3709 = vmatprep.subr.mxu0 0.0
        %3710 = vmatpush1.msra.mxu0 0.0
        %3711 = vmatprep.mubr.f32.mxu0 0.0
        %3712 = vmatmul.mubr.f32.gmra.mrb[0].mxu0 %v3645
        %v3713 = vpop.f32.mrb[0].mxu0
        %v3714 = vadd.f32 0.0, %v3713
        %v3715 = vpop.f32.mrb[0].mxu0
        %3716 = vdwg.mxu0
        %v3718 = vsel %vm1710, %v3641, 0
        %3720 = vmatprep.subr.mxu0 0.0
        %3721 = vmatpush1.msra.mxu0 %v2997
        %3722 = vmatprep.subr.mxu0 0.0
        %3723 = vmatpush1.msra.mxu0 0.0
        %3724 = vmatprep.subr.mxu0 0.0
        %3725 = vmatpush1.msra.mxu0 0.0
        %3726 = vmatprep.subr.mxu0 0.0
        %3727 = vmatpush1.msra.mxu0 0.0
        %3728 = vmatprep.subr.mxu0 0.0
        %3729 = vmatpush1.msra.mxu0 0.0
        %3730 = vmatprep.subr.mxu0 0.0
        %3731 = vmatpush1.msra.mxu0 0.0
        %3732 = vmatprep.subr.mxu0 0.0
        %3733 = vmatpush1.msra.mxu0 0.0
        %3734 = vmatprep.subr.mxu0 0.0
        %3735 = vmatpush1.msra.mxu0 0.0
        %3736 = vmatprep.subr.mxu0 0.0
        %3737 = vmatpush1.msra.mxu0 0.0
        %3738 = vmatprep.subr.mxu0 0.0
        %3739 = vmatpush1.msra.mxu0 0.0
        %3740 = vmatprep.subr.mxu0 0.0
        %3741 = vmatpush1.msra.mxu0 0.0
        %3742 = vmatprep.subr.mxu0 0.0
        %3743 = vmatpush1.msra.mxu0 0.0
        %3744 = vmatprep.subr.mxu0 0.0
        %3745 = vmatpush1.msra.mxu0 0.0
        %3746 = vmatprep.subr.mxu0 0.0
        %3747 = vmatpush1.msra.mxu0 0.0
        %3748 = vmatprep.subr.mxu0 0.0
        %3749 = vmatpush1.msra.mxu0 0.0
        %3750 = vmatprep.subr.mxu0 0.0
        %3751 = vmatpush1.msra.mxu0 0.0
        %3752 = vmatprep.subr.mxu0 0.0
        %3753 = vmatpush1.msra.mxu0 0.0
        %3754 = vmatprep.subr.mxu0 0.0
        %3755 = vmatpush1.msra.mxu0 0.0
        %3756 = vmatprep.subr.mxu0 0.0
        %3757 = vmatpush1.msra.mxu0 0.0
        %3758 = vmatprep.subr.mxu0 0.0
        %3759 = vmatpush1.msra.mxu0 0.0
        %3760 = vmatprep.subr.mxu0 0.0
        %3761 = vmatpush1.msra.mxu0 0.0
        %3762 = vmatprep.subr.mxu0 0.0
        %3763 = vmatpush1.msra.mxu0 0.0
        %3764 = vmatprep.subr.mxu0 0.0
        %3765 = vmatpush1.msra.mxu0 0.0
        %3766 = vmatprep.subr.mxu0 0.0
        %3767 = vmatpush1.msra.mxu0 0.0
        %3768 = vmatprep.subr.mxu0 0.0
        %3769 = vmatpush1.msra.mxu0 0.0
        %3770 = vmatprep.subr.mxu0 0.0
        %3771 = vmatpush1.msra.mxu0 0.0
        %3772 = vmatprep.subr.mxu0 0.0
        %3773 = vmatpush1.msra.mxu0 0.0
        %3774 = vmatprep.subr.mxu0 0.0
        %3775 = vmatpush1.msra.mxu0 0.0
        %3776 = vmatprep.subr.mxu0 0.0
        %3777 = vmatpush1.msra.mxu0 0.0
        %3778 = vmatprep.subr.mxu0 0.0
        %3779 = vmatpush1.msra.mxu0 0.0
        %3780 = vmatprep.subr.mxu0 0.0
        %3781 = vmatpush1.msra.mxu0 0.0
        %3782 = vmatprep.subr.mxu0 0.0
        %3783 = vmatpush1.msra.mxu0 0.0
        %3784 = vmatprep.mubr.f32.mxu0 0.0
        %3785 = vmatmul.mubr.f32.gmra.mrb[0].mxu0 %v3718
        %v3786 = vpop.f32.mrb[0].mxu0
        %v3787 = vadd.f32 0.0, %v3786
        %v3788 = vpop.f32.mrb[0].mxu0
        %3789 = vdwg.mxu0
        %v3791 = vsel %vm1710, %v3642, 0
        %3793 = vmatprep.subr.mxu0 0.0
        %3794 = vmatpush1.msra.mxu0 %v2998
        %3795 = vmatprep.subr.mxu0 0.0
        %3796 = vmatpush1.msra.mxu0 0.0
        %3797 = vmatprep.subr.mxu0 0.0
        %3798 = vmatpush1.msra.mxu0 0.0
        %3799 = vmatprep.subr.mxu0 0.0
        %3800 = vmatpush1.msra.mxu0 0.0
        %3801 = vmatprep.subr.mxu0 0.0
        %3802 = vmatpush1.msra.mxu0 0.0
        %3803 = vmatprep.subr.mxu0 0.0
        %3804 = vmatpush1.msra.mxu0 0.0
        %3805 = vmatprep.subr.mxu0 0.0
        %3806 = vmatpush1.msra.mxu0 0.0
        %3807 = vmatprep.subr.mxu0 0.0
        %3808 = vmatpush1.msra.mxu0 0.0
        %3809 = vmatprep.subr.mxu0 0.0
        %3810 = vmatpush1.msra.mxu0 0.0
        %3811 = vmatprep.subr.mxu0 0.0
        %3812 = vmatpush1.msra.mxu0 0.0
        %3813 = vmatprep.subr.mxu0 0.0
        %3814 = vmatpush1.msra.mxu0 0.0
        %3815 = vmatprep.subr.mxu0 0.0
        %3816 = vmatpush1.msra.mxu0 0.0
        %3817 = vmatprep.subr.mxu0 0.0
        %3818 = vmatpush1.msra.mxu0 0.0
        %3819 = vmatprep.subr.mxu0 0.0
        %3820 = vmatpush1.msra.mxu0 0.0
        %3821 = vmatprep.subr.mxu0 0.0
        %3822 = vmatpush1.msra.mxu0 0.0
        %3823 = vmatprep.subr.mxu0 0.0
        %3824 = vmatpush1.msra.mxu0 0.0
        %3825 = vmatprep.subr.mxu0 0.0
        %3826 = vmatpush1.msra.mxu0 0.0
        %3827 = vmatprep.subr.mxu0 0.0
        %3828 = vmatpush1.msra.mxu0 0.0
        %3829 = vmatprep.subr.mxu0 0.0
        %3830 = vmatpush1.msra.mxu0 0.0
        %3831 = vmatprep.subr.mxu0 0.0
        %3832 = vmatpush1.msra.mxu0 0.0
        %3833 = vmatprep.subr.mxu0 0.0
        %3834 = vmatpush1.msra.mxu0 0.0
        %3835 = vmatprep.subr.mxu0 0.0
        %3836 = vmatpush1.msra.mxu0 0.0
        %3837 = vmatprep.subr.mxu0 0.0
        %3838 = vmatpush1.msra.mxu0 0.0
        %3839 = vmatprep.subr.mxu0 0.0
        %3840 = vmatpush1.msra.mxu0 0.0
        %3841 = vmatprep.subr.mxu0 0.0
        %3842 = vmatpush1.msra.mxu0 0.0
        %3843 = vmatprep.subr.mxu0 0.0
        %3844 = vmatpush1.msra.mxu0 0.0
        %3845 = vmatprep.subr.mxu0 0.0
        %3846 = vmatpush1.msra.mxu0 0.0
        %3847 = vmatprep.subr.mxu0 0.0
        %3848 = vmatpush1.msra.mxu0 0.0
        %3849 = vmatprep.subr.mxu0 0.0
        %3850 = vmatpush1.msra.mxu0 0.0
        %3851 = vmatprep.subr.mxu0 0.0
        %3852 = vmatpush1.msra.mxu0 0.0
        %3853 = vmatprep.subr.mxu0 0.0
        %3854 = vmatpush1.msra.mxu0 0.0
        %3855 = vmatprep.subr.mxu0 0.0
        %3856 = vmatpush1.msra.mxu0 0.0
        %3857 = vmatprep.mubr.f32.mxu0 0.0
        %3858 = vmatmul.mubr.f32.gmra.mrb[0].mxu0 %v3791
        %v3859 = vpop.f32.mrb[0].mxu0
        %v3860 = vadd.f32 0.0, %v3859
        %v3861 = vpop.f32.mrb[0].mxu0
        %3862 = vdwg.mxu0
        %v3864 = vsel %vm1710, %v3643, 0
        %3866 = vmatprep.subr.mxu0 0.0
        %3867 = vmatpush1.msra.mxu0 %v2999
        %3868 = vmatprep.subr.mxu0 0.0
        %3869 = vmatpush1.msra.mxu0 0.0
        %3870 = vmatprep.subr.mxu0 0.0
        %3871 = vmatpush1.msra.mxu0 0.0
        %3872 = vmatprep.subr.mxu0 0.0
        %3873 = vmatpush1.msra.mxu0 0.0
        %3874 = vmatprep.subr.mxu0 0.0
        %3875 = vmatpush1.msra.mxu0 0.0
        %3876 = vmatprep.subr.mxu0 0.0
        %3877 = vmatpush1.msra.mxu0 0.0
        %3878 = vmatprep.subr.mxu0 0.0
        %3879 = vmatpush1.msra.mxu0 0.0
        %3880 = vmatprep.subr.mxu0 0.0
        %3881 = vmatpush1.msra.mxu0 0.0
        %3882 = vmatprep.subr.mxu0 0.0
        %3883 = vmatpush1.msra.mxu0 0.0
        %3884 = vmatprep.subr.mxu0 0.0
        %3885 = vmatpush1.msra.mxu0 0.0
        %3886 = vmatprep.subr.mxu0 0.0
        %3887 = vmatpush1.msra.mxu0 0.0
        %3888 = vmatprep.subr.mxu0 0.0
        %3889 = vmatpush1.msra.mxu0 0.0
        %3890 = vmatprep.subr.mxu0 0.0
        %3891 = vmatpush1.msra.mxu0 0.0
        %3892 = vmatprep.subr.mxu0 0.0
        %3893 = vmatpush1.msra.mxu0 0.0
        %3894 = vmatprep.subr.mxu0 0.0
        %3895 = vmatpush1.msra.mxu0 0.0
        %3896 = vmatprep.subr.mxu0 0.0
        %3897 = vmatpush1.msra.mxu0 0.0
        %3898 = vmatprep.subr.mxu0 0.0
        %3899 = vmatpush1.msra.mxu0 0.0
        %3900 = vmatprep.subr.mxu0 0.0
        %3901 = vmatpush1.msra.mxu0 0.0
        %3902 = vmatprep.subr.mxu0 0.0
        %3903 = vmatpush1.msra.mxu0 0.0
        %3904 = vmatprep.subr.mxu0 0.0
        %3905 = vmatpush1.msra.mxu0 0.0
        %3906 = vmatprep.subr.mxu0 0.0
        %3907 = vmatpush1.msra.mxu0 0.0
        %3908 = vmatprep.subr.mxu0 0.0
        %3909 = vmatpush1.msra.mxu0 0.0
        %3910 = vmatprep.subr.mxu0 0.0
        %3911 = vmatpush1.msra.mxu0 0.0
        %3912 = vmatprep.subr.mxu0 0.0
        %3913 = vmatpush1.msra.mxu0 0.0
        %3914 = vmatprep.subr.mxu0 0.0
        %3915 = vmatpush1.msra.mxu0 0.0
        %3916 = vmatprep.subr.mxu0 0.0
        %3917 = vmatpush1.msra.mxu0 0.0
        %3918 = vmatprep.subr.mxu0 0.0
        %3919 = vmatpush1.msra.mxu0 0.0
        %3920 = vmatprep.subr.mxu0 0.0
        %3921 = vmatpush1.msra.mxu0 0.0
        %3922 = vmatprep.subr.mxu0 0.0
        %3923 = vmatpush1.msra.mxu0 0.0
        %3924 = vmatprep.subr.mxu0 0.0
        %3925 = vmatpush1.msra.mxu0 0.0
        %3926 = vmatprep.subr.mxu0 0.0
        %3927 = vmatpush1.msra.mxu0 0.0
        %3928 = vmatprep.subr.mxu0 0.0
        %3929 = vmatpush1.msra.mxu0 0.0
        %3930 = vmatprep.mubr.f32.mxu0 0.0
        %3931 = vmatmul.mubr.f32.gmra.mrb[0].mxu0 %v3864
        %v3932 = vpop.f32.mrb[0].mxu0
        %v3933 = vadd.f32 0.0, %v3932
        %v3934 = vpop.f32.mrb[0].mxu0
        %3935 = vdwg.mxu0
        %v3936 = vcombine.low %v3714, %v3860
        %v3937 = vcombine.high %v3714, %v3860
        %v3939 = vunpack.c.l.s4 1983009808
        %v3940 = vunpack.c.0.s8 %v3939
        %v3941 = vlaneseq
        %v3942 = vshrl.u32 %v3941, 7
        %v3943 = vsub.s32 %v3940, %v3942
        %v3944 = vrot.slane %v3936, %v3943
        %v3946 = vunpack.c.l.s4 1983009808
        %v3947 = vunpack.c.0.s8 %v3946
        %v3948 = vlaneseq
        %v3949 = vshrl.u32 %v3948, 7
        %v3950 = vsub.s32 %v3947, %v3949
        %v3951 = vrot.slane %v3937, %v3950
        %v3952 = vcombine.low %v3787, %v3933
        %v3953 = vcombine.high %v3787, %v3933
        %v3955 = vunpack.c.l.s4 1983009808
        %v3956 = vunpack.c.0.s8 %v3955
        %v3957 = vlaneseq
        %v3958 = vshrl.u32 %v3957, 7
        %v3959 = vsub.s32 %v3956, %v3958
        %v3960 = vrot.slane %v3952, %v3959
        %v3962 = vunpack.c.l.s4 1983009808
        %v3963 = vunpack.c.0.s8 %v3962
        %v3964 = vlaneseq
        %v3965 = vshrl.u32 %v3964, 7
        %v3966 = vsub.s32 %v3963, %v3965
        %v3967 = vrot.slane %v3953, %v3966
        %v3968 = vcombine.low %v3944, %v3960
        %v3969 = vcombine.high %v3944, %v3960
        %v3971 = vunpack.c.l.s4 1934713408
        %v3972 = vunpack.c.0.s8 %v3971
        %v3973 = vlaneseq
        %v3974 = vshrl.u32 %v3973, 7
        %v3975 = vsub.s32 %v3972, %v3974
        %v3976 = vrot.slane %v3968, %v3975
        %v3978 = vunpack.c.l.s4 1934713408
        %v3979 = vunpack.c.0.s8 %v3978
        %v3980 = vlaneseq
        %v3981 = vshrl.u32 %v3980, 7
        %v3982 = vsub.s32 %v3979, %v3981
        %v3983 = vrot.slane %v3969, %v3982
        %v3984 = vcombine.low %v3951, %v3967
        %v3985 = vcombine.high %v3951, %v3967
        %v3987 = vunpack.c.l.s4 1934713408
        %v3988 = vunpack.c.0.s8 %v3987
        %v3989 = vlaneseq
        %v3990 = vshrl.u32 %v3989, 7
        %v3991 = vsub.s32 %v3988, %v3990
        %v3992 = vrot.slane %v3984, %v3991
        %v3994 = vunpack.c.l.s4 1934713408
        %v3995 = vunpack.c.0.s8 %v3994
        %v3996 = vlaneseq
        %v3997 = vshrl.u32 %v3996, 7
        %v3998 = vsub.s32 %v3995, %v3997
        %v3999 = vrot.slane %v3985, %v3998
        %v4000 = vcombine.high %v3976, 0.0
        %v4001 = vcombine.high %v3983, 0.0
        %v4002 = vcombine.high %v3992, 0.0
        %v4003 = vcombine.high %v3999, 0.0
        %v4004 = vcombine.low %v3976, %v3983
        %v4006 = vunpack.c.l.s4 1983009808
        %v4007 = vunpack.c.0.s8 %v4006
        %v4008 = vlaneseq
        %v4009 = vshrl.u32 %v4008, 7
        %v4010 = vsub.s32 %v4007, %v4009
        %v4011 = vrot.slane %v4004, %v4010
        %v4012 = vcombine.low %v4000, %v4001
        %v4014 = vunpack.c.l.s4 1983009808
        %v4015 = vunpack.c.0.s8 %v4014
        %v4016 = vlaneseq
        %v4017 = vshrl.u32 %v4016, 7
        %v4018 = vsub.s32 %v4015, %v4017
        %v4019 = vrot.slane %v4012, %v4018
        %v4020 = vcombine.low %v3992, %v3999
        %v4022 = vunpack.c.l.s4 1983009808
        %v4023 = vunpack.c.0.s8 %v4022
        %v4024 = vlaneseq
        %v4025 = vshrl.u32 %v4024, 7
        %v4026 = vsub.s32 %v4023, %v4025
        %v4027 = vrot.slane %v4020, %v4026
        %v4028 = vcombine.low %v4002, %v4003
        %v4030 = vunpack.c.l.s4 1983009808
        %v4031 = vunpack.c.0.s8 %v4030
        %v4032 = vlaneseq
        %v4033 = vshrl.u32 %v4032, 7
        %v4034 = vsub.s32 %v4031, %v4033
        %v4035 = vrot.slane %v4028, %v4034
        %v4036 = vcombine.low %v4011, %v4019
        %v4037 = vcombine.high %v4011, %v4019
        %v4039 = vunpack.c.l.s4 1934713408
        %v4040 = vunpack.c.0.s8 %v4039
        %v4041 = vlaneseq
        %v4042 = vshrl.u32 %v4041, 7
        %v4043 = vsub.s32 %v4040, %v4042
        %v4044 = vrot.slane %v4036, %v4043
        %v4046 = vunpack.c.l.s4 1934713408
        %v4047 = vunpack.c.0.s8 %v4046
        %v4048 = vlaneseq
        %v4049 = vshrl.u32 %v4048, 7
        %v4050 = vsub.s32 %v4047, %v4049
        %v4051 = vrot.slane %v4037, %v4050
        %v4052 = vcombine.low %v4027, %v4035
        %v4053 = vcombine.high %v4027, %v4035
        %v4055 = vunpack.c.l.s4 1934713408
        %v4056 = vunpack.c.0.s8 %v4055
        %v4057 = vlaneseq
        %v4058 = vshrl.u32 %v4057, 7
        %v4059 = vsub.s32 %v4056, %v4058
        %v4060 = vrot.slane %v4052, %v4059
        %v4062 = vunpack.c.l.s4 1934713408
        %v4063 = vunpack.c.0.s8 %v4062
        %v4064 = vlaneseq
        %v4065 = vshrl.u32 %v4064, 7
        %v4066 = vsub.s32 %v4063, %v4065
        %v4067 = vrot.slane %v4053, %v4066
        %v4068 = vcombine.low %v4044, %v4060
        %v4069 = vcombine.high %v4044, %v4060
        %v4070 = vcombine.low %v4051, %v4067
        %v4071 = vcombine.high %v4051, %v4067
        %4073 = vrot.lane.b32.xlu0 %v4069, 8
        %v4074 = vpop.permute.xlu0 %4073
        %4077 = vrot.lane.b32.xlu0 %v4070, 16
        %v4078 = vpop.permute.xlu0 %4077
        %4081 = vrot.lane.b32.xlu0 %v4071, 24
        %v4082 = vpop.permute.xlu0 %4081
        %v4084 = vsel %vm1710, %v4068, %v4074
        %v4085 = vsel %vm2504, %v4084, %v4078
        %v4086 = vsel %vm2506, %v4085, %v4082
        %v4088 = vlaneseq
        %v4089 = vshrl.u32 %v4088, 7
        %v4090 = vsub.s32 0, %v4089
        %v4091 = vrot.slane %v2634, %v4090
        %v4094 = vsel %vm1058, %v4086, 0
        %4096 = vmatprep.subr.mxu0 0.0
        %4097 = vmatpush1.msra.mxu0 %v2630
        %4098 = vmatprep.subr.mxu0 0.0
        %4099 = vmatpush1.msra.mxu0 %v2631
        %4100 = vmatprep.subr.mxu0 0.0
        %4101 = vmatpush1.msra.mxu0 %v2632
        %4102 = vmatprep.subr.mxu0 0.0
        %4103 = vmatpush1.msra.mxu0 %v2633
        %4104 = vmatprep.subr.mxu0 0.0
        %4105 = vmatpush1.msra.mxu0 0.0
        %4106 = vmatprep.subr.mxu0 0.0
        %4107 = vmatpush1.msra.mxu0 0.0
        %4108 = vmatprep.subr.mxu0 0.0
        %4109 = vmatpush1.msra.mxu0 0.0
        %4110 = vmatprep.subr.mxu0 0.0
        %4111 = vmatpush1.msra.mxu0 0.0
        %4112 = vmatprep.subr.mxu0 0.0
        %4113 = vmatpush1.msra.mxu0 0.0
        %4114 = vmatprep.subr.mxu0 0.0
        %4115 = vmatpush1.msra.mxu0 0.0
        %4116 = vmatprep.subr.mxu0 0.0
        %4117 = vmatpush1.msra.mxu0 0.0
        %4118 = vmatprep.subr.mxu0 0.0
        %4119 = vmatpush1.msra.mxu0 0.0
        %4120 = vmatprep.subr.mxu0 0.0
        %4121 = vmatpush1.msra.mxu0 0.0
        %4122 = vmatprep.subr.mxu0 0.0
        %4123 = vmatpush1.msra.mxu0 0.0
        %4124 = vmatprep.subr.mxu0 0.0
        %4125 = vmatpush1.msra.mxu0 0.0
        %4126 = vmatprep.subr.mxu0 0.0
        %4127 = vmatpush1.msra.mxu0 0.0
        %4128 = vmatprep.subr.mxu0 0.0
        %4129 = vmatpush1.msra.mxu0 0.0
        %4130 = vmatprep.subr.mxu0 0.0
        %4131 = vmatpush1.msra.mxu0 0.0
        %4132 = vmatprep.subr.mxu0 0.0
        %4133 = vmatpush1.msra.mxu0 0.0
        %4134 = vmatprep.subr.mxu0 0.0
        %4135 = vmatpush1.msra.mxu0 0.0
        %4136 = vmatprep.subr.mxu0 0.0
        %4137 = vmatpush1.msra.mxu0 0.0
        %4138 = vmatprep.subr.mxu0 0.0
        %4139 = vmatpush1.msra.mxu0 0.0
        %4140 = vmatprep.subr.mxu0 0.0
        %4141 = vmatpush1.msra.mxu0 0.0
        %4142 = vmatprep.subr.mxu0 0.0
        %4143 = vmatpush1.msra.mxu0 0.0
        %4144 = vmatprep.subr.mxu0 0.0
        %4145 = vmatpush1.msra.mxu0 0.0
        %4146 = vmatprep.subr.mxu0 0.0
        %4147 = vmatpush1.msra.mxu0 0.0
        %4148 = vmatprep.subr.mxu0 0.0
        %4149 = vmatpush1.msra.mxu0 0.0
        %4150 = vmatprep.subr.mxu0 0.0
        %4151 = vmatpush1.msra.mxu0 0.0
        %4152 = vmatprep.subr.mxu0 0.0
        %4153 = vmatpush1.msra.mxu0 0.0
        %4154 = vmatprep.subr.mxu0 0.0
        %4155 = vmatpush1.msra.mxu0 0.0
        %4156 = vmatprep.subr.mxu0 0.0
        %4157 = vmatpush1.msra.mxu0 0.0
        %4158 = vmatprep.subr.mxu0 0.0
        %4159 = vmatpush1.msra.mxu0 0.0
        %4160 = vmatprep.mubr.f32.mxu0 0.0
        %4161 = vmatmul.mubr.f32.gmra.mrb[0].mxu0 %v4094
        %v4162 = vpop.f32.mrb[0].mxu0
        %v4163 = vadd.f32 %v4091, %v4162
        %v4164 = vpop.f32.mrb[0].mxu0
        %4165 = vdwg.mxu0
        %v4166 = vadd.f32 %v4163, %v2617
        %v4167 = vld [vmem:[#allocation20] sm:$0x1]
        %v4168 = vld [vmem:[%s18] sm:$0x1]
        %v4169 = vsel %vm1058, %v4166, 0.0
        %4170 = vadd.xlane.f32.xlu0 %v4169
        %v4171 = vpop.xlane.xlu0 %4170
        %v4172 = vmul.f32 %v4171, %v2593
        %v4173 = vsub.f32 %v4166, %v4172
        %v4174 = vmul.f32 %v4173, %v4173
        %v4175 = vsel %vm1058, %v4174, 0.0
        %4176 = vadd.xlane.f32.xlu0 %v4175
        %v4177 = vpop.xlane.xlu0 %4176
        %v4178 = vmul.f32 %v4177, %v2593
        %v4179 = vadd.f32 %v4178, 1e-05
        %v4180 = vrsqrt.pop %v4179
        %v4181 = vmul.f32 %v4173, %v4180
        %v4183 = vlaneseq
        %v4184 = vshrl.u32 %v4183, 7
        %v4185 = vsub.s32 0, %v4184
        %v4186 = vrot.slane %v4167, %v4185
        %v4188 = vmul.f32 %v4181, %v4186
        %v4190 = vlaneseq
        %v4191 = vshrl.u32 %v4190, 7
        %v4192 = vsub.s32 0, %v4191
        %v4193 = vrot.slane %v4168, %v4192
        %v4195 = vadd.f32 %v4188, %v4193
        %v4196 = vld [vmem:[#allocation22] sm:$0xff]
        %v4197 = vld [vmem:[#allocation22 + $0x8] sm:$0xff]
        %v4198 = vld [vmem:[#allocation22 + $0x10] sm:$0xff]
        %v4199 = vld [vmem:[#allocation22 + $0x18] sm:$0xff]
        %v4200 = vld [vmem:[%s20] sm:$0x1]
        %v4202 = vlaneseq
        %v4203 = vshrl.u32 %v4202, 7
        %v4204 = vsub.s32 0, %v4203
        %v4205 = vrot.slane %v4200, %v4204
        %v4208 = vsel %vm1058, %v4195, 0
        %4210 = vmatprep.subr.mxu0 0.0
        %4211 = vmatpush1.msra.mxu0 %v4196
        %4212 = vmatprep.subr.mxu0 0.0
        %4213 = vmatpush1.msra.mxu0 %v4197
        %4214 = vmatprep.subr.mxu0 0.0
        %4215 = vmatpush1.msra.mxu0 %v4198
        %4216 = vmatprep.subr.mxu0 0.0
        %4217 = vmatpush1.msra.mxu0 %v4199
        %4218 = vmatprep.subr.mxu0 0.0
        %4219 = vmatpush1.msra.mxu0 0.0
        %4220 = vmatprep.subr.mxu0 0.0
        %4221 = vmatpush1.msra.mxu0 0.0
        %4222 = vmatprep.subr.mxu0 0.0
        %4223 = vmatpush1.msra.mxu0 0.0
        %4224 = vmatprep.subr.mxu0 0.0
        %4225 = vmatpush1.msra.mxu0 0.0
        %4226 = vmatprep.subr.mxu0 0.0
        %4227 = vmatpush1.msra.mxu0 0.0
        %4228 = vmatprep.subr.mxu0 0.0
        %4229 = vmatpush1.msra.mxu0 0.0
        %4230 = vmatprep.subr.mxu0 0.0
        %4231 = vmatpush1.msra.mxu0 0.0
        %4232 = vmatprep.subr.mxu0 0.0
        %4233 = vmatpush1.msra.mxu0 0.0
        %4234 = vmatprep.subr.mxu0 0.0
        %4235 = vmatpush1.msra.mxu0 0.0
        %4236 = vmatprep.subr.mxu0 0.0
        %4237 = vmatpush1.msra.mxu0 0.0
        %4238 = vmatprep.subr.mxu0 0.0
        %4239 = vmatpush1.msra.mxu0 0.0
        %4240 = vmatprep.subr.mxu0 0.0
        %4241 = vmatpush1.msra.mxu0 0.0
        %4242 = vmatprep.subr.mxu0 0.0
        %4243 = vmatpush1.msra.mxu0 0.0
        %4244 = vmatprep.subr.mxu0 0.0
        %4245 = vmatpush1.msra.mxu0 0.0
        %4246 = vmatprep.subr.mxu0 0.0
        %4247 = vmatpush1.msra.mxu0 0.0
        %4248 = vmatprep.subr.mxu0 0.0
        %4249 = vmatpush1.msra.mxu0 0.0
        %4250 = vmatprep.subr.mxu0 0.0
        %4251 = vmatpush1.msra.mxu0 0.0
        %4252 = vmatprep.subr.mxu0 0.0
        %4253 = vmatpush1.msra.mxu0 0.0
        %4254 = vmatprep.subr.mxu0 0.0
        %4255 = vmatpush1.msra.mxu0 0.0
        %4256 = vmatprep.subr.mxu0 0.0
        %4257 = vmatpush1.msra.mxu0 0.0
        %4258 = vmatprep.subr.mxu0 0.0
        %4259 = vmatpush1.msra.mxu0 0.0
        %4260 = vmatprep.subr.mxu0 0.0
        %4261 = vmatpush1.msra.mxu0 0.0
        %4262 = vmatprep.subr.mxu0 0.0
        %4263 = vmatpush1.msra.mxu0 0.0
        %4264 = vmatprep.subr.mxu0 0.0
        %4265 = vmatpush1.msra.mxu0 0.0
        %4266 = vmatprep.subr.mxu0 0.0
        %4267 = vmatpush1.msra.mxu0 0.0
        %4268 = vmatprep.subr.mxu0 0.0
        %4269 = vmatpush1.msra.mxu0 0.0
        %4270 = vmatprep.subr.mxu0 0.0
        %4271 = vmatpush1.msra.mxu0 0.0
        %4272 = vmatprep.subr.mxu0 0.0
        %4273 = vmatpush1.msra.mxu0 0.0
        %4274 = vmatprep.mubr.f32.mxu0 0.0
        %4275 = vmatmul.mubr.f32.gmra.mrb[0].mxu0 %v4208
        %v4276 = vpop.f32.mrb[0].mxu0
        %v4277 = vadd.f32 %v4205, %v4276
        %v4278 = vpop.f32.mrb[0].mxu0
        %4279 = vdwg.mxu0
        %v4280 = vmax.f32 %v4277, 0.0
        %v4281 = vld [vmem:[%s21] sm:$0xff]
        %v4282 = vld [vmem:[%s21 + $0x8] sm:$0xff]
        %v4283 = vld [vmem:[%s21 + $0x10] sm:$0xff]
        %v4284 = vld [vmem:[%s21 + $0x18] sm:$0xff]
        %v4285 = vld [vmem:[%s21 + $0x20] sm:$0xff]
        %v4286 = vld [vmem:[%s21 + $0x28] sm:$0xff]
        %v4287 = vld [vmem:[%s21 + $0x30] sm:$0xff]
        %v4288 = vld [vmem:[%s21 + $0x38] sm:$0xff]
        %v4289 = vld [vmem:[%s21 + $0x40] sm:$0xff]
        %v4290 = vld [vmem:[%s21 + $0x48] sm:$0xff]
        %v4291 = vld [vmem:[%s21 + $0x50] sm:$0xff]
        %v4292 = vld [vmem:[%s21 + $0x58] sm:$0xff]
        %v4293 = vld [vmem:[%s21 + $0x60] sm:$0xff]
        %v4294 = vld [vmem:[%s21 + $0x68] sm:$0xff]
        %v4295 = vld [vmem:[%s21 + $0x70] sm:$0xff]
        %v4296 = vld [vmem:[%s21 + $0x78] sm:$0xff]
        %v4297 = vld [vmem:[%s22] sm:$0x1]
        %v4299 = vlaneseq
        %v4300 = vshrl.u32 %v4299, 7
        %v4301 = vsub.s32 0, %v4300
        %v4302 = vrot.slane %v4297, %v4301
        %4304 = vmatprep.subr.mxu0 0.0
        %4305 = vmatpush1.msra.mxu0 %v4281
        %4306 = vmatprep.subr.mxu0 0.0
        %4307 = vmatpush1.msra.mxu0 %v4282
        %4308 = vmatprep.subr.mxu0 0.0
        %4309 = vmatpush1.msra.mxu0 %v4283
        %4310 = vmatprep.subr.mxu0 0.0
        %4311 = vmatpush1.msra.mxu0 %v4284
        %4312 = vmatprep.subr.mxu0 0.0
        %4313 = vmatpush1.msra.mxu0 %v4285
        %4314 = vmatprep.subr.mxu0 0.0
        %4315 = vmatpush1.msra.mxu0 %v4286
        %4316 = vmatprep.subr.mxu0 0.0
        %4317 = vmatpush1.msra.mxu0 %v4287
        %4318 = vmatprep.subr.mxu0 0.0
        %4319 = vmatpush1.msra.mxu0 %v4288
        %4320 = vmatprep.subr.mxu0 0.0
        %4321 = vmatpush1.msra.mxu0 %v4289
        %4322 = vmatprep.subr.mxu0 0.0
        %4323 = vmatpush1.msra.mxu0 %v4290
        %4324 = vmatprep.subr.mxu0 0.0
        %4325 = vmatpush1.msra.mxu0 %v4291
        %4326 = vmatprep.subr.mxu0 0.0
        %4327 = vmatpush1.msra.mxu0 %v4292
        %4328 = vmatprep.subr.mxu0 0.0
        %4329 = vmatpush1.msra.mxu0 %v4293
        %4330 = vmatprep.subr.mxu0 0.0
        %4331 = vmatpush1.msra.mxu0 %v4294
        %4332 = vmatprep.subr.mxu0 0.0
        %4333 = vmatpush1.msra.mxu0 %v4295
        %4334 = vmatprep.subr.mxu0 0.0
        %4335 = vmatpush1.msra.mxu0 %v4296
        %4336 = vmatprep.subr.mxu0 0.0
        %4337 = vmatpush1.msra.mxu0 0.0
        %4338 = vmatprep.subr.mxu0 0.0
        %4339 = vmatpush1.msra.mxu0 0.0
        %4340 = vmatprep.subr.mxu0 0.0
        %4341 = vmatpush1.msra.mxu0 0.0
        %4342 = vmatprep.subr.mxu0 0.0
        %4343 = vmatpush1.msra.mxu0 0.0
        %4344 = vmatprep.subr.mxu0 0.0
        %4345 = vmatpush1.msra.mxu0 0.0
        %4346 = vmatprep.subr.mxu0 0.0
        %4347 = vmatpush1.msra.mxu0 0.0
        %4348 = vmatprep.subr.mxu0 0.0
        %4349 = vmatpush1.msra.mxu0 0.0
        %4350 = vmatprep.subr.mxu0 0.0
        %4351 = vmatpush1.msra.mxu0 0.0
        %4352 = vmatprep.subr.mxu0 0.0
        %4353 = vmatpush1.msra.mxu0 0.0
        %4354 = vmatprep.subr.mxu0 0.0
        %4355 = vmatpush1.msra.mxu0 0.0
        %4356 = vmatprep.subr.mxu0 0.0
        %4357 = vmatpush1.msra.mxu0 0.0
        %4358 = vmatprep.subr.mxu0 0.0
        %4359 = vmatpush1.msra.mxu0 0.0
        %4360 = vmatprep.subr.mxu0 0.0
        %4361 = vmatpush1.msra.mxu0 0.0
        %4362 = vmatprep.subr.mxu0 0.0
        %4363 = vmatpush1.msra.mxu0 0.0
        %4364 = vmatprep.subr.mxu0 0.0
        %4365 = vmatpush1.msra.mxu0 0.0
        %4366 = vmatprep.subr.mxu0 0.0
        %4367 = vmatpush1.msra.mxu0 0.0
        %4368 = vmatprep.mubr.f32.mxu0 0.0
        %4369 = vmatmul.mubr.f32.gmra.mrb[0].mxu0 %v4280
        %v4370 = vpop.f32.mrb[0].mxu0
        %v4371 = vadd.f32 %v4302, %v4370
        %v4372 = vpop.f32.mrb[0].mxu0
        %4373 = vdwg.mxu0
        %v4374 = vadd.f32 %v4371, %v4195
        %v4375 = vld [vmem:[%s23] sm:$0x1]
        %v4376 = vld [vmem:[%s24] sm:$0x1]
        %v4377 = vsel %vm1058, %v4374, 0.0
        %4378 = vadd.xlane.f32.xlu0 %v4377
        %v4379 = vpop.xlane.xlu0 %4378
        %v4380 = vmul.f32 %v4379, %v2593
        %v4381 = vsub.f32 %v4374, %v4380
        %v4382 = vmul.f32 %v4381, %v4381
        %v4383 = vsel %vm1058, %v4382, 0.0
        %4384 = vadd.xlane.f32.xlu0 %v4383
        %v4385 = vpop.xlane.xlu0 %4384
        %v4386 = vmul.f32 %v4385, %v2593
        %v4387 = vadd.f32 %v4386, 1e-05
        %v4388 = vrsqrt.pop %v4387
        %v4389 = vmul.f32 %v4381, %v4388
        %v4391 = vlaneseq
        %v4392 = vshrl.u32 %v4391, 7
        %v4393 = vsub.s32 0, %v4392
        %v4394 = vrot.slane %v4375, %v4393
        %v4396 = vmul.f32 %v4389, %v4394
        %v4398 = vlaneseq
        %v4399 = vshrl.u32 %v4398, 7
        %v4400 = vsub.s32 0, %v4399
        %v4401 = vrot.slane %v4376, %v4400
        %v4403 = vadd.f32 %v4396, %v4401
        %v4404 = vcombine.high %v4403, 0.0
        %v4406 = vunpack.c.l.s4 1983009808
        %v4407 = vunpack.c.0.s8 %v4406
        %v4408 = vlaneseq
        %v4409 = vshrl.u32 %v4408, 7
        %v4410 = vsub.s32 %v4407, %v4409
        %v4411 = vrot.slane %v4403, %v4410
        %v4413 = vunpack.c.l.s4 1983009808
        %v4414 = vunpack.c.0.s8 %v4413
        %v4415 = vlaneseq
        %v4416 = vshrl.u32 %v4415, 7
        %v4417 = vsub.s32 %v4414, %v4416
        %v4418 = vrot.slane %v4404, %v4417
        %v4419 = vcombine.high %v4411, 0.0
        %v4421 = vunpack.c.l.s4 1934713408
        %v4422 = vunpack.c.0.s8 %v4421
        %v4423 = vlaneseq
        %v4424 = vshrl.u32 %v4423, 7
        %v4425 = vsub.s32 %v4422, %v4424
        %v4426 = vrot.slane %v4411, %v4425
        %v4428 = vunpack.c.l.s4 1934713408
        %v4429 = vunpack.c.0.s8 %v4428
        %v4430 = vlaneseq
        %v4431 = vshrl.u32 %v4430, 7
        %v4432 = vsub.s32 %v4429, %v4431
        %v4433 = vrot.slane %v4419, %v4432
        %v4434 = vcombine.high %v4418, 0.0
        %v4436 = vunpack.c.l.s4 1934713408
        %v4437 = vunpack.c.0.s8 %v4436
        %v4438 = vlaneseq
        %v4439 = vshrl.u32 %v4438, 7
        %v4440 = vsub.s32 %v4437, %v4439
        %v4441 = vrot.slane %v4418, %v4440
        %v4443 = vunpack.c.l.s4 1934713408
        %v4444 = vunpack.c.0.s8 %v4443
        %v4445 = vlaneseq
        %v4446 = vshrl.u32 %v4445, 7
        %v4447 = vsub.s32 %v4444, %v4446
        %v4448 = vrot.slane %v4434, %v4447
        %v4449 = vcombine.high %v4426, 0.0
        %v4450 = vcombine.high %v4433, 0.0
        %v4451 = vcombine.high %v4441, 0.0
        %v4452 = vcombine.high %v4448, 0.0
        %4454 = vrot.lane.b32.xlu0 %v4449, 32
        %v4455 = vpop.permute.xlu0 %4454
        %4458 = vrot.lane.b32.xlu0 %v4433, 64
        %v4459 = vpop.permute.xlu0 %4458
        %4462 = vrot.lane.b32.xlu0 %v4450, 96
        %v4463 = vpop.permute.xlu0 %4462
        %4466 = vrot.lane.b32.xlu0 %v4451, 32
        %v4467 = vpop.permute.xlu0 %4466
        %4470 = vrot.lane.b32.xlu0 %v4448, 64
        %v4471 = vpop.permute.xlu0 %4470
        %4474 = vrot.lane.b32.xlu0 %v4452, 96
        %v4475 = vpop.permute.xlu0 %4474
        %v4477 = vsel %vm1058, %v4426, %v4455
        %vm4478 = vcmask 523264
        %v4479 = vsel %vm4478, %v4477, %v4459
        %vm4480 = vcmask 785408
        %v4481 = vsel %vm4480, %v4479, %v4463
        %v4482 = vsel %vm1058, %v4441, %v4467
        %v4483 = vsel %vm4478, %v4482, %v4471
        %v4484 = vsel %vm4480, %v4483, %v4475
        %v4487 = vcombine.low %v4481, %v4484
        %v4489 = vunpack.c.l.s4 1966171168
        %v4490 = vunpack.c.0.s8 %v4489
        %v4491 = vlaneseq
        %v4492 = vshrl.u32 %v4491, 7
        %v4493 = vsub.s32 %v4490, %v4492
        %v4494 = vrot.slane %v4487, %v4493
        %v4496 = vunpack.c.l.s4 1966171168
        %v4497 = vunpack.c.0.s8 %v4496
        %v4498 = vlaneseq
        %v4499 = vshrl.u32 %v4498, 7
        %v4500 = vsub.s32 %v4497, %v4499
        %v4501 = vrot.slane %v4494, %v4500
        %v4503 = vlaneseq
        %vm4504 = vcmp.ge.s32.totalorder %v4503, 0
        %vm4505 = vcmp.lt.s32.totalorder %v4503, 256
        %vm4506 = vmand %vm4504, %vm4505
        %4507 = vst.msk [vmem:[%s1027] sm:$0x3] %vm4506, %v4501
        %s4508 = sand.u32 %s610, 1
        %s4509 = scalar_lea.sflag [#allocation4], %s4508
        %s4510 = sand.u32 %s610, 1
        %s4511 = smul.addr %s4510, 2
        %s4512 = scalar_lea.vmem [#allocation23], %s4511
        // Predicated region
        $region173: #{tpu_custom_call.1} parent=119 // pred_check
          %p4513 = pneg %p620
        $region174: #{tpu_custom_call.1} parent=119 // pred_check_branch
          %4515 = sbr.rel (%p4513) target = $region176
        $region175: #{tpu_custom_call.1} parent=119 // pred_region
          %s4517 = ssub.s32 32, 32
          %4518 = vsyncadd %s4509, %s4517
          %s4519 = smul.addr %s52, 2
          %s4520 = smul.addr %s4519, 16
          %s4521 = scalar_lea.hbm %s25, %s4520
          %s4523 = sshll.u32 %s4512, 4
          %s4524 = int_to_ptr.vmem [resolvable:$true] %s4523
          %4526 = dma.vmem_to_hbm [thread:$0]  %s4524, 32, %s4521, %s4509
        $region176: #{tpu_custom_call.1} parent=119 // pred_fallthru
          _
      $region120: #{tpu_custom_call.1} parent=5 // pred_fallthru
        _
      %p4527 = scmp.le.s32.totalorder 2, %s47
      // Predicated region
      $region177: #{tpu_custom_call.1} parent=5 // pred_check
        %p4528 = pneg %p4527
      $region178: #{tpu_custom_call.1} parent=5 // pred_check_branch
        %4530 = sbr.rel (%p4528) target = $region180
      $region179: #{tpu_custom_call.1} parent=5 // pred_region
        %s4531 = ssub.s32 %s47, 2
        // Predicated region
        $region181: #{tpu_custom_call.1} parent=179 // pred_check
          %p4532 = pneg %p626
        $region182: #{tpu_custom_call.1} parent=179 // pred_check_branch
          %4534 = sbr.rel (%p4532) target = $region184
        $region183: #{tpu_custom_call.1} parent=179 // pred_region
          %s4535 = sand.u32 %s611, 1
          %s4536 = scalar_lea.sflag [#allocation4], %s4535
          %s4537 = sand.u32 %s611, 1
          %s4538 = smul.addr %s4537, 2
          %s4539 = scalar_lea.vmem [#allocation23], %s4538
          %4540 = dma.done %s4536, 32
        $region184: #{tpu_custom_call.1} parent=179 // pred_fallthru
          _
      $region180: #{tpu_custom_call.1} parent=5 // pred_fallthru
        _
    $region6: #{tpu_custom_call.1} parent=1 // loop_footer
      %s51 = sadd.s32 1, %s47
    $region7: #{tpu_custom_call.1} parent=1 // loop_footer_branch
      %46 = sbr.rel target = $region3
    $region8: #{tpu_custom_call.1} parent=1 // loop_exit
      _
    %4541 = vsyncpa [#allocation3], 1
    %s4542 = scalar_lea.sflag [#allocation3], 1
    %4543 = vsyncpa %s4542, 1
    %4544 = vsyncpa [#allocation6], 1
    %s4545 = scalar_lea.sflag [#allocation6], 1
    %4546 = vsyncpa %s4545, 1
    %4547 = vsyncpa [#allocation9], 1
    %s4548 = scalar_lea.sflag [#allocation9], 1
    %4549 = vsyncpa %s4548, 1
    %4550 = vsyncpa [#allocation12], 1
    %4551 = vsyncpa [#allocation15], 1
    %4552 = vsyncpa [#allocation18], 1
    %4553 = vsyncpa [#allocation21], 1
    %4554 = vsyncpa [#allocation4], 1
    %s4555 = scalar_lea.sflag [#allocation4], 1
    %4556 = vsyncpa %s4555, 1

// kernel: tpu_custom_call.1
$region0: #{tpu_custom_call.1}
  #allocation0 [shape = 'u32[]', space=smem, size = 0x4, offset = 0x4, fixed_abs, tag = 'smem constant byte address 0x4 - core index']
  #allocation1 [shape = 'u32[144,128]{1,0:T(1,128)}', space=vmem, size = 0x12000, scoped, tag = 'internal scratch']
  %s0 = inlined_call_operand.hbm [shape: f32[2,8,32], index: 0, kind: input, shape index: {}]
  %s1 = inlined_call_operand.hbm [shape: f32[2,8,32], index: 1, kind: input, shape index: {}]
  %s2 = inlined_call_operand.hbm [shape: f32[2,8,32], index: 2, kind: input, shape index: {}]
  %s3 = inlined_call_operand.hbm [shape: s8[2,8,8], index: 3, kind: input, shape index: {}]
  %s4 = inlined_call_operand.hbm [shape: s8[2,8,8], index: 4, kind: input, shape index: {}]
  %s5 = inlined_call_operand.vmem [shape: f32[32,32], index: 5, kind: input, shape index: {}]
  %s6 = inlined_call_operand.vmem [shape: f32[32,32], index: 6, kind: input, shape index: {}]
  %s7 = inlined_call_operand.vmem [shape: f32[32,32], index: 7, kind: input, shape index: {}]
  %s8 = inlined_call_operand.vmem [shape: f32[32,32], index: 8, kind: input, shape index: {}]
  %s9 = inlined_call_operand.hbm [shape: f32[1,32], index: 9, kind: input, shape index: {}]
  %s10 = inlined_call_operand.hbm [shape: f32[1,32], index: 10, kind: input, shape index: {}]
  %s11 = inlined_call_operand.hbm [shape: f32[1,32], index: 11, kind: input, shape index: {}]
  %s12 = inlined_call_operand.vmem [shape: f32[32,32], index: 12, kind: input, shape index: {}]
  %s13 = inlined_call_operand.vmem [shape: f32[32,32], index: 13, kind: input, shape index: {}]
  %s14 = inlined_call_operand.hbm [shape: f32[32,32], index: 14, kind: input, shape index: {}]
  %s15 = inlined_call_operand.hbm [shape: f32[32,32], index: 15, kind: input, shape index: {}]
  %s16 = inlined_call_operand.hbm [shape: f32[1,32], index: 16, kind: input, shape index: {}]
  %s17 = inlined_call_operand.hbm [shape: f32[1,32], index: 17, kind: input, shape index: {}]
  %s18 = inlined_call_operand.vmem [shape: f32[1,32], index: 18, kind: input, shape index: {}]
  %s19 = inlined_call_operand.hbm [shape: f32[32,128], index: 19, kind: input, shape index: {}]
  %s20 = inlined_call_operand.vmem [shape: f32[1,128], index: 20, kind: input, shape index: {}]
  %s21 = inlined_call_operand.vmem [shape: f32[128,32], index: 21, kind: input, shape index: {}]
  %s22 = inlined_call_operand.vmem [shape: f32[1,32], index: 22, kind: input, shape index: {}]
  %s23 = inlined_call_operand.vmem [shape: f32[1,32], index: 23, kind: input, shape index: {}]
  %s24 = inlined_call_operand.vmem [shape: f32[1,32], index: 24, kind: input, shape index: {}]
  %s25 = inlined_call_operand.hbm [shape: f32[2,1,256], index: 25, kind: output, shape index: {}]
  %s26 = sld [smem:[#allocation0]]
  $region185: #{tpu_custom_call.1} parent=0
    _
  %s28 = ssub.s32 1, %s26
  %s29 = scalar_select 0, %s28, %s26
  $region1: #{tpu_custom_call.1} parent=0
    #allocation2 [shape = 'u8[8192]{0}', space=vmem, size = 0x2000, scoped, tag = 'input window, operand 0']
    #allocation3 [shape = 's32[2]{0}', space=sflag, size = 0x8, scoped, tag = 'scoped memory for tpu_custom_call.1']
    #allocation4 [shape = 's32[2]{0}', space=sflag, size = 0x8, scoped, tag = 'scoped memory for tpu_custom_call.1']
    #allocation5 [shape = 'u8[8192]{0}', space=vmem, size = 0x2000, scoped, tag = 'input window, operand 1']
    #allocation6 [shape = 's32[2]{0}', space=sflag, size = 0x8, scoped, tag = 'scoped memory for tpu_custom_call.1']
    #allocation7 [shape = 'u8[8192]{0}', space=vmem, size = 0x2000, scoped, tag = 'input window, operand 2']
    #allocation8 [shape = 'u8[2048]{0}', space=vmem, size = 0x800, scoped, tag = 'input window, operand 3']
    #allocation9 [shape = 's32[2]{0}', space=sflag, size = 0x8, scoped, tag = 'scoped memory for tpu_custom_call.1']
    #allocation10 [shape = 'u8[2048]{0}', space=vmem, size = 0x800, scoped, tag = 'input window, operand 4']
    #allocation11 [shape = 'u8[512]{0}', space=vmem, size = 0x400, scoped, tag = 'input window, operand 9, single buffered']
    #allocation12 [shape = 's32[1]{0}', space=sflag, size = 0x4, scoped, tag = 'scoped memory for tpu_custom_call.1']
    #allocation13 [shape = 'u8[512]{0}', space=vmem, size = 0x400, scoped, tag = 'input window, operand 10, single buffered']
    #allocation14 [shape = 'u8[512]{0}', space=vmem, size = 0x400, scoped, tag = 'input window, operand 11, single buffered']
    #allocation15 [shape = 's32[1]{0}', space=sflag, size = 0x4, scoped, tag = 'scoped memory for tpu_custom_call.1']
    #allocation16 [shape = 'u8[16384]{0}', space=vmem, size = 0x4000, scoped, tag = 'input window, operand 14, single buffered']
    #allocation17 [shape = 'u8[16384]{0}', space=vmem, size = 0x4000, scoped, tag = 'input window, operand 15, single buffered']
    #allocation18 [shape = 's32[1]{0}', space=sflag, size = 0x4, scoped, tag = 'scoped memory for tpu_custom_call.1']
    #allocation19 [shape = 'u8[512]{0}', space=vmem, size = 0x400, scoped, tag = 'input window, operand 16, single buffered']
    #allocation20 [shape = 'u8[512]{0}', space=vmem, size = 0x400, scoped, tag = 'input window, operand 17, single buffered']
    #allocation21 [shape = 's32[1]{0}', space=sflag, size = 0x4, scoped, tag = 'scoped memory for tpu_custom_call.1']
    #allocation22 [shape = 'u8[16384]{0}', space=vmem, size = 0x4000, scoped, tag = 'input window, operand 19, single buffered']
    #allocation23 [shape = 'u8[2048]{0}', space=vmem, size = 0x800, scoped, tag = 'output window, operand 0']
    %30 = vsyncpa [#allocation3], 0
    %s31 = scalar_lea.sflag [#allocation3], 1
    %32 = vsyncpa %s31, 0
    %33 = vsyncpa [#allocation6], 0
    %s34 = scalar_lea.sflag [#allocation6], 1
    %35 = vsyncpa %s34, 0
    %36 = vsyncpa [#allocation9], 0
    %s37 = scalar_lea.sflag [#allocation9], 1
    %38 = vsyncpa %s37, 0
    %39 = vsyncpa [#allocation12], 0
    %40 = vsyncpa [#allocation15], 0
    %41 = vsyncpa [#allocation18], 0
    %42 = vsyncpa [#allocation21], 0
    %43 = vsyncpa [#allocation4], 0
    %s44 = scalar_lea.sflag [#allocation4], 1
    %45 = vsyncpa %s44, 0
    loop: start=0, step=1, limit=4
    $region2: #{tpu_custom_call.1} parent=1 // loop_pre_header
      _
    $region3: #{tpu_custom_call.1} parent=1 // loop_header
      %s47 = sphi 0, %s51
      %p48 = scmp.ge.s32.totalorder %s47, 4
      %s57 = sphi 0, %s59
      %s60 = sphi 0, %s57
      %s61 = sphi 0, %s60
      %s77 = sphi 0, %s61
      %s83 = sphi 0, %s85
      %s86 = sphi 0, %s83
      %s87 = sphi 0, %s86
      %s103 = sphi 0, %s87
      %s109 = sphi 0, %s111
      %s112 = sphi 0, %s109
      %s113 = sphi 0, %s112
      %s129 = sphi 0, %s113
      %s135 = sphi 0, %s137
      %s138 = sphi 0, %s135
      %s139 = sphi 0, %s138
      %s155 = sphi 0, %s139
      %s161 = sphi 0, %s163
      %s164 = sphi 0, %s161
      %s165 = sphi 0, %s164
      %s181 = sphi 0, %s165
      %s185 = sphi 0, %s185
      %s187 = sphi 0, %s185
      %s188 = sphi 0, %s187
      %s202 = sphi 0, %s188
      %s206 = sphi 0, %s206
      %s208 = sphi 0, %s206
      %s209 = sphi 0, %s208
      %s223 = sphi 0, %s209
      %s227 = sphi 0, %s227
      %s229 = sphi 0, %s227
      %s230 = sphi 0, %s229
      %s244 = sphi 0, %s230
      %s248 = sphi 0, %s248
      %s250 = sphi 0, %s248
      %s251 = sphi 0, %s250
      %s265 = sphi 0, %s251
      %s269 = sphi 0, %s269
      %s271 = sphi 0, %s269
      %s272 = sphi 0, %s271
      %s286 = sphi 0, %s272
      %s290 = sphi 0, %s290
      %s292 = sphi 0, %s290
      %s293 = sphi 0, %s292
      %s307 = sphi 0, %s293
      %s311 = sphi 0, %s311
      %s313 = sphi 0, %s311
      %s314 = sphi 0, %s313
      %s328 = sphi 0, %s314
      %s332 = sphi 0, %s332
      %s334 = sphi 0, %s332
      %s335 = sphi 0, %s334
      %s349 = sphi 0, %s335
      %s353 = sphi 0, %s353
      %s355 = sphi 0, %s353
      %s356 = sphi 0, %s355
      %s370 = sphi 0, %s356
      %s374 = sphi 0, %s374
      %s376 = sphi 0, %s374
      %s377 = sphi 0, %s376
      %s391 = sphi 0, %s377
      %s395 = sphi 0, %s395
      %s397 = sphi 0, %s395
      %s398 = sphi 0, %s397
      %s412 = sphi 0, %s398
      %s416 = sphi 0, %s416
      %s418 = sphi 0, %s416
      %s419 = sphi 0, %s418
      %s433 = sphi 0, %s419
      %s437 = sphi 0, %s437
      %s439 = sphi 0, %s437
      %s440 = sphi 0, %s439
      %s454 = sphi 0, %s440
      %s458 = sphi 0, %s458
      %s460 = sphi 0, %s458
      %s461 = sphi 0, %s460
      %s475 = sphi 0, %s461
      %s479 = sphi 0, %s479
      %s481 = sphi 0, %s479
      %s482 = sphi 0, %s481
      %s496 = sphi 0, %s482
      %s500 = sphi 0, %s500
      %s502 = sphi 0, %s500
      %s503 = sphi 0, %s502
      %s517 = sphi 0, %s503
      %s521 = sphi 0, %s521
      %s523 = sphi 0, %s521
      %s524 = sphi 0, %s523
      %s538 = sphi 0, %s524
      %s542 = sphi 0, %s542
      %s544 = sphi 0, %s542
      %s545 = sphi 0, %s544
      %s559 = sphi 0, %s545
      %s563 = sphi 0, %s563
      %s565 = sphi 0, %s563
      %s566 = sphi 0, %s565
      %s580 = sphi 0, %s566
      %s584 = sphi 0, %s584
      %s586 = sphi 0, %s584
      %s587 = sphi 0, %s586
      %s601 = sphi 0, %s587
      %s607 = sphi 0, %s609
      %s610 = sphi 0, %s607
      %s611 = sphi 0, %s610
      %s627 = sphi 0, %s611
    $region4: #{tpu_custom_call.1} parent=1 // loop_header_branch
      %50 = sbr.rel (%p48) target = $region8
    $region5: #{tpu_custom_call.1} parent=1 // loop_body
      %s52 = ssub.s32 %s47, 1
      %s53 = ssub.s32 %s47, 2
      %s54 = sadd.s32 %s47, 1
      %s55 = ssub.s32 %s47, %s54
      %p56 = scmp.eq.s32.totalorder %s55, 0
      %s58 = sadd.s32 %s57, 1
      %s59 = scalar_select %p56, %s57, %s58
      %p62 = pneg %p56
      %p63 = scmp.eq.s32.totalorder %s47, 1
      %p64 = por %p62, %p63
      %p65 = scmp.ne.s32.totalorder %s57, %s60
      %p66 = scmp.eq.s32.totalorder %s47, 0
      %p67 = por %p65, %p66
      %p68 = scmp.ne.s32.totalorder %s57, %s60
      %p69 = scmp.eq.s32.totalorder %s52, 1
      %p70 = por %p68, %p69
      %p71 = scmp.ne.s32.totalorder %s60, %s61
      %p72 = scmp.eq.s32.totalorder %s52, 0
      %p73 = por %p71, %p72
      %p74 = scmp.ne.s32.totalorder %s60, %s61
      %p75 = scmp.eq.s32.totalorder %s53, 1
      %p76 = por %p74, %p75
      %p78 = scmp.ne.s32.totalorder %s61, %s77
      %p79 = scmp.eq.s32.totalorder %s53, 0
      %p80 = por %p78, %p79
      %s81 = ssub.s32 %s47, %s54
      %p82 = scmp.eq.s32.totalorder %s81, 0
      %s84 = sadd.s32 %s83, 1
      %s85 = scalar_select %p82, %s83, %s84
      %p88 = pneg %p82
      %p89 = scmp.eq.s32.totalorder %s47, 1
      %p90 = por %p88, %p89
      %p91 = scmp.ne.s32.totalorder %s83, %s86
      %p92 = scmp.eq.s32.totalorder %s47, 0
      %p93 = por %p91, %p92
      %p94 = scmp.ne.s32.totalorder %s83, %s86
      %p95 = scmp.eq.s32.totalorder %s52, 1
      %p96 = por %p94, %p95
      %p97 = scmp.ne.s32.totalorder %s86, %s87
      %p98 = scmp.eq.s32.totalorder %s52, 0
      %p99 = por %p97, %p98
      %p100 = scmp.ne.s32.totalorder %s86, %s87
      %p101 = scmp.eq.s32.totalorder %s53, 1
      %p102 = por %p100, %p101
      %p104 = scmp.ne.s32.totalorder %s87, %s103
      %p105 = scmp.eq.s32.totalorder %s53, 0
      %p106 = por %p104, %p105
      %s107 = ssub.s32 %s47, %s54
      %p108 = scmp.eq.s32.totalorder %s107, 0
      %s110 = sadd.s32 %s109, 1
      %s111 = scalar_select %p108, %s109, %s110
      %p114 = pneg %p108
      %p115 = scmp.eq.s32.totalorder %s47, 1
      %p116 = por %p114, %p115
      %p117 = scmp.ne.s32.totalorder %s109, %s112
      %p118 = scmp.eq.s32.totalorder %s47, 0
      %p119 = por %p117, %p118
      %p120 = scmp.ne.s32.totalorder %s109, %s112
      %p121 = scmp.eq.s32.totalorder %s52, 1
      %p122 = por %p120, %p121
      %p123 = scmp.ne.s32.totalorder %s112, %s113
      %p124 = scmp.eq.s32.totalorder %s52, 0
      %p125 = por %p123, %p124
      %p126 = scmp.ne.s32.totalorder %s112, %s113
      %p127 = scmp.eq.s32.totalorder %s53, 1
      %p128 = por %p126, %p127
      %p130 = scmp.ne.s32.totalorder %s113, %s129
      %p131 = scmp.eq.s32.totalorder %s53, 0
      %p132 = por %p130, %p131
      %s133 = ssub.s32 %s47, %s54
      %p134 = scmp.eq.s32.totalorder %s133, 0
      %s136 = sadd.s32 %s135, 1
      %s137 = scalar_select %p134, %s135, %s136
      %p140 = pneg %p134
      %p141 = scmp.eq.s32.totalorder %s47, 1
      %p142 = por %p140, %p141
      %p143 = scmp.ne.s32.totalorder %s135, %s138
      %p144 = scmp.eq.s32.totalorder %s47, 0
      %p145 = por %p143, %p144
      %p146 = scmp.ne.s32.totalorder %s135, %s138
      %p147 = scmp.eq.s32.totalorder %s52, 1
      %p148 = por %p146, %p147
      %p149 = scmp.ne.s32.totalorder %s138, %s139
      %p150 = scmp.eq.s32.totalorder %s52, 0
      %p151 = por %p149, %p150
      %p152 = scmp.ne.s32.totalorder %s138, %s139
      %p153 = scmp.eq.s32.totalorder %s53, 1
      %p154 = por %p152, %p153
      %p156 = scmp.ne.s32.totalorder %s139, %s155
      %p157 = scmp.eq.s32.totalorder %s53, 0
      %p158 = por %p156, %p157
      %s159 = ssub.s32 %s47, %s54
      %p160 = scmp.eq.s32.totalorder %s159, 0
      %s162 = sadd.s32 %s161, 1
      %s163 = scalar_select %p160, %s161, %s162
      %p166 = pneg %p160
      %p167 = scmp.eq.s32.totalorder %s47, 1
      %p168 = por %p166, %p167
      %p169 = scmp.ne.s32.totalorder %s161, %s164
      %p170 = scmp.eq.s32.totalorder %s47, 0
      %p171 = por %p169, %p170
      %p172 = scmp.ne.s32.totalorder %s161, %s164
      %p173 = scmp.eq.s32.totalorder %s52, 1
      %p174 = por %p172, %p173
      %p175 = scmp.ne.s32.totalorder %s164, %s165
      %p176 = scmp.eq.s32.totalorder %s52, 0
      %p177 = por %p175, %p176
      %p178 = scmp.ne.s32.totalorder %s164, %s165
      %p179 = scmp.eq.s32.totalorder %s53, 1
      %p180 = por %p178, %p179
      %p182 = scmp.ne.s32.totalorder %s165, %s181
      %p183 = scmp.eq.s32.totalorder %s53, 0
      %p184 = por %p182, %p183
      %s186 = sadd.s32 %s185, 1
      %p189 = scmp.eq.s32.totalorder %s47, 1
      %p190 = scmp.ne.s32.totalorder %s185, %s187
      %p191 = scmp.eq.s32.totalorder %s47, 0
      %p192 = por %p190, %p191
      %p193 = scmp.ne.s32.totalorder %s185, %s187
      %p194 = scmp.eq.s32.totalorder %s52, 1
      %p195 = por %p193, %p194
      %p196 = scmp.ne.s32.totalorder %s187, %s188
      %p197 = scmp.eq.s32.totalorder %s52, 0
      %p198 = por %p196, %p197
      %p199 = scmp.ne.s32.totalorder %s187, %s188
      %p200 = scmp.eq.s32.totalorder %s53, 1
      %p201 = por %p199, %p200
      %p203 = scmp.ne.s32.totalorder %s188, %s202
      %p204 = scmp.eq.s32.totalorder %s53, 0
      %p205 = por %p203, %p204
      %s207 = sadd.s32 %s206, 1
      %p210 = scmp.eq.s32.totalorder %s47, 1
      %p211 = scmp.ne.s32.totalorder %s206, %s208
      %p212 = scmp.eq.s32.totalorder %s47, 0
      %p213 = por %p211, %p212
      %p214 = scmp.ne.s32.totalorder %s206, %s208
      %p215 = scmp.eq.s32.totalorder %s52, 1
      %p216 = por %p214, %p215
      %p217 = scmp.ne.s32.totalorder %s208, %s209
      %p218 = scmp.eq.s32.totalorder %s52, 0
      %p219 = por %p217, %p218
      %p220 = scmp.ne.s32.totalorder %s208, %s209
      %p221 = scmp.eq.s32.totalorder %s53, 1
      %p222 = por %p220, %p221
      %p224 = scmp.ne.s32.totalorder %s209, %s223
      %p225 = scmp.eq.s32.totalorder %s53, 0
      %p226 = por %p224, %p225
      %s228 = sadd.s32 %s227, 1
      %p231 = scmp.eq.s32.totalorder %s47, 1
      %p232 = scmp.ne.s32.totalorder %s227, %s229
      %p233 = scmp.eq.s32.totalorder %s47, 0
      %p234 = por %p232, %p233
      %p235 = scmp.ne.s32.totalorder %s227, %s229
      %p236 = scmp.eq.s32.totalorder %s52, 1
      %p237 = por %p235, %p236
      %p238 = scmp.ne.s32.totalorder %s229, %s230
      %p239 = scmp.eq.s32.totalorder %s52, 0
      %p240 = por %p238, %p239
      %p241 = scmp.ne.s32.totalorder %s229, %s230
      %p242 = scmp.eq.s32.totalorder %s53, 1
      %p243 = por %p241, %p242
      %p245 = scmp.ne.s32.totalorder %s230, %s244
      %p246 = scmp.eq.s32.totalorder %s53, 0
      %p247 = por %p245, %p246
      %s249 = sadd.s32 %s248, 1
      %p252 = scmp.eq.s32.totalorder %s47, 1
      %p253 = scmp.ne.s32.totalorder %s248, %s250
      %p254 = scmp.eq.s32.totalorder %s47, 0
      %p255 = por %p253, %p254
      %p256 = scmp.ne.s32.totalorder %s248, %s250
      %p257 = scmp.eq.s32.totalorder %s52, 1
      %p258 = por %p256, %p257
      %p259 = scmp.ne.s32.totalorder %s250, %s251
      %p260 = scmp.eq.s32.totalorder %s52, 0
      %p261 = por %p259, %p260
      %p262 = scmp.ne.s32.totalorder %s250, %s251
      %p263 = scmp.eq.s32.totalorder %s53, 1
      %p264 = por %p262, %p263
      %p266 = scmp.ne.s32.totalorder %s251, %s265
      %p267 = scmp.eq.s32.totalorder %s53, 0
      %p268 = por %p266, %p267
      %s270 = sadd.s32 %s269, 1
      %p273 = scmp.eq.s32.totalorder %s47, 1
      %p274 = scmp.ne.s32.totalorder %s269, %s271
      %p275 = scmp.eq.s32.totalorder %s47, 0
      %p276 = por %p274, %p275
      %p277 = scmp.ne.s32.totalorder %s269, %s271
      %p278 = scmp.eq.s32.totalorder %s52, 1
      %p279 = por %p277, %p278
      %p280 = scmp.ne.s32.totalorder %s271, %s272
      %p281 = scmp.eq.s32.totalorder %s52, 0
      %p282 = por %p280, %p281
      %p283 = scmp.ne.s32.totalorder %s271, %s272
      %p284 = scmp.eq.s32.totalorder %s53, 1
      %p285 = por %p283, %p284
      %p287 = scmp.ne.s32.totalorder %s272, %s286
      %p288 = scmp.eq.s32.totalorder %s53, 0
      %p289 = por %p287, %p288
      %s291 = sadd.s32 %s290, 1
      %p294 = scmp.eq.s32.totalorder %s47, 1
      %p295 = scmp.ne.s32.totalorder %s290, %s292
      %p296 = scmp.eq.s32.totalorder %s47, 0
      %p297 = por %p295, %p296
      %p298 = scmp.ne.s32.totalorder %s290, %s292
      %p299 = scmp.eq.s32.totalorder %s52, 1
      %p300 = por %p298, %p299
      %p301 = scmp.ne.s32.totalorder %s292, %s293
      %p302 = scmp.eq.s32.totalorder %s52, 0
      %p303 = por %p301, %p302
      %p304 = scmp.ne.s32.totalorder %s292, %s293
      %p305 = scmp.eq.s32.totalorder %s53, 1
      %p306 = por %p304, %p305
      %p308 = scmp.ne.s32.totalorder %s293, %s307
      %p309 = scmp.eq.s32.totalorder %s53, 0
      %p310 = por %p308, %p309
      %s312 = sadd.s32 %s311, 1
      %p315 = scmp.eq.s32.totalorder %s47, 1
      %p316 = scmp.ne.s32.totalorder %s311, %s313
      %p317 = scmp.eq.s32.totalorder %s47, 0
      %p318 = por %p316, %p317
      %p319 = scmp.ne.s32.totalorder %s311, %s313
      %p320 = scmp.eq.s32.totalorder %s52, 1
      %p321 = por %p319, %p320
      %p322 = scmp.ne.s32.totalorder %s313, %s314
      %p323 = scmp.eq.s32.totalorder %s52, 0
      %p324 = por %p322, %p323
      %p325 = scmp.ne.s32.totalorder %s313, %s314
      %p326 = scmp.eq.s32.totalorder %s53, 1
      %p327 = por %p325, %p326
      %p329 = scmp.ne.s32.totalorder %s314, %s328
      %p330 = scmp.eq.s32.totalorder %s53, 0
      %p331 = por %p329, %p330
      %s333 = sadd.s32 %s332, 1
      %p336 = scmp.eq.s32.totalorder %s47, 1
      %p337 = scmp.ne.s32.totalorder %s332, %s334
      %p338 = scmp.eq.s32.totalorder %s47, 0
      %p339 = por %p337, %p338
      %p340 = scmp.ne.s32.totalorder %s332, %s334
      %p341 = scmp.eq.s32.totalorder %s52, 1
      %p342 = por %p340, %p341
      %p343 = scmp.ne.s32.totalorder %s334, %s335
      %p344 = scmp.eq.s32.totalorder %s52, 0
      %p345 = por %p343, %p344
      %p346 = scmp.ne.s32.totalorder %s334, %s335
      %p347 = scmp.eq.s32.totalorder %s53, 1
      %p348 = por %p346, %p347
      %p350 = scmp.ne.s32.totalorder %s335, %s349
      %p351 = scmp.eq.s32.totalorder %s53, 0
      %p352 = por %p350, %p351
      %s354 = sadd.s32 %s353, 1
      %p357 = scmp.eq.s32.totalorder %s47, 1
      %p358 = scmp.ne.s32.totalorder %s353, %s355
      %p359 = scmp.eq.s32.totalorder %s47, 0
      %p360 = por %p358, %p359
      %p361 = scmp.ne.s32.totalorder %s353, %s355
      %p362 = scmp.eq.s32.totalorder %s52, 1
      %p363 = por %p361, %p362
      %p364 = scmp.ne.s32.totalorder %s355, %s356
      %p365 = scmp.eq.s32.totalorder %s52, 0
      %p366 = por %p364, %p365
      %p367 = scmp.ne.s32.totalorder %s355, %s356
      %p368 = scmp.eq.s32.totalorder %s53, 1
      %p369 = por %p367, %p368
      %p371 = scmp.ne.s32.totalorder %s356, %s370
      %p372 = scmp.eq.s32.totalorder %s53, 0
      %p373 = por %p371, %p372
      %s375 = sadd.s32 %s374, 1
      %p378 = scmp.eq.s32.totalorder %s47, 1
      %p379 = scmp.ne.s32.totalorder %s374, %s376
      %p380 = scmp.eq.s32.totalorder %s47, 0
      %p381 = por %p379, %p380
      %p382 = scmp.ne.s32.totalorder %s374, %s376
      %p383 = scmp.eq.s32.totalorder %s52, 1
      %p384 = por %p382, %p383
      %p385 = scmp.ne.s32.totalorder %s376, %s377
      %p386 = scmp.eq.s32.totalorder %s52, 0
      %p387 = por %p385, %p386
      %p388 = scmp.ne.s32.totalorder %s376, %s377
      %p389 = scmp.eq.s32.totalorder %s53, 1
      %p390 = por %p388, %p389
      %p392 = scmp.ne.s32.totalorder %s377, %s391
      %p393 = scmp.eq.s32.totalorder %s53, 0
      %p394 = por %p392, %p393
      %s396 = sadd.s32 %s395, 1
      %p399 = scmp.eq.s32.totalorder %s47, 1
      %p400 = scmp.ne.s32.totalorder %s395, %s397
      %p401 = scmp.eq.s32.totalorder %s47, 0
      %p402 = por %p400, %p401
      %p403 = scmp.ne.s32.totalorder %s395, %s397
      %p404 = scmp.eq.s32.totalorder %s52, 1
      %p405 = por %p403, %p404
      %p406 = scmp.ne.s32.totalorder %s397, %s398
      %p407 = scmp.eq.s32.totalorder %s52, 0
      %p408 = por %p406, %p407
      %p409 = scmp.ne.s32.totalorder %s397, %s398
      %p410 = scmp.eq.s32.totalorder %s53, 1
      %p411 = por %p409, %p410
      %p413 = scmp.ne.s32.totalorder %s398, %s412
      %p414 = scmp.eq.s32.totalorder %s53, 0
      %p415 = por %p413, %p414
      %s417 = sadd.s32 %s416, 1
      %p420 = scmp.eq.s32.totalorder %s47, 1
      %p421 = scmp.ne.s32.totalorder %s416, %s418
      %p422 = scmp.eq.s32.totalorder %s47, 0
      %p423 = por %p421, %p422
      %p424 = scmp.ne.s32.totalorder %s416, %s418
      %p425 = scmp.eq.s32.totalorder %s52, 1
      %p426 = por %p424, %p425
      %p427 = scmp.ne.s32.totalorder %s418, %s419
      %p428 = scmp.eq.s32.totalorder %s52, 0
      %p429 = por %p427, %p428
      %p430 = scmp.ne.s32.totalorder %s418, %s419
      %p431 = scmp.eq.s32.totalorder %s53, 1
      %p432 = por %p430, %p431
      %p434 = scmp.ne.s32.totalorder %s419, %s433
      %p435 = scmp.eq.s32.totalorder %s53, 0
      %p436 = por %p434, %p435
      %s438 = sadd.s32 %s437, 1
      %p441 = scmp.eq.s32.totalorder %s47, 1
      %p442 = scmp.ne.s32.totalorder %s437, %s439
      %p443 = scmp.eq.s32.totalorder %s47, 0
      %p444 = por %p442, %p443
      %p445 = scmp.ne.s32.totalorder %s437, %s439
      %p446 = scmp.eq.s32.totalorder %s52, 1
      %p447 = por %p445, %p446
      %p448 = scmp.ne.s32.totalorder %s439, %s440
      %p449 = scmp.eq.s32.totalorder %s52, 0
      %p450 = por %p448, %p449
      %p451 = scmp.ne.s32.totalorder %s439, %s440
      %p452 = scmp.eq.s32.totalorder %s53, 1
      %p453 = por %p451, %p452
      %p455 = scmp.ne.s32.totalorder %s440, %s454
      %p456 = scmp.eq.s32.totalorder %s53, 0
      %p457 = por %p455, %p456
      %s459 = sadd.s32 %s458, 1
      %p462 = scmp.eq.s32.totalorder %s47, 1
      %p463 = scmp.ne.s32.totalorder %s458, %s460
      %p464 = scmp.eq.s32.totalorder %s47, 0
      %p465 = por %p463, %p464
      %p466 = scmp.ne.s32.totalorder %s458, %s460
      %p467 = scmp.eq.s32.totalorder %s52, 1
      %p468 = por %p466, %p467
      %p469 = scmp.ne.s32.totalorder %s460, %s461
      %p470 = scmp.eq.s32.totalorder %s52, 0
      %p471 = por %p469, %p470
      %p472 = scmp.ne.s32.totalorder %s460, %s461
      %p473 = scmp.eq.s32.totalorder %s53, 1
      %p474 = por %p472, %p473
      %p476 = scmp.ne.s32.totalorder %s461, %s475
      %p477 = scmp.eq.s32.totalorder %s53, 0
      %p478 = por %p476, %p477
      %s480 = sadd.s32 %s479, 1
      %p483 = scmp.eq.s32.totalorder %s47, 1
      %p484 = scmp.ne.s32.totalorder %s479, %s481
      %p485 = scmp.eq.s32.totalorder %s47, 0
      %p486 = por %p484, %p485
      %p487 = scmp.ne.s32.totalorder %s479, %s481
      %p488 = scmp.eq.s32.totalorder %s52, 1
      %p489 = por %p487, %p488
      %p490 = scmp.ne.s32.totalorder %s481, %s482
      %p491 = scmp.eq.s32.totalorder %s52, 0
      %p492 = por %p490, %p491
      %p493 = scmp.ne.s32.totalorder %s481, %s482
      %p494 = scmp.eq.s32.totalorder %s53, 1
      %p495 = por %p493, %p494
      %p497 = scmp.ne.s32.totalorder %s482, %s496
      %p498 = scmp.eq.s32.totalorder %s53, 0
      %p499 = por %p497, %p498
      %s501 = sadd.s32 %s500, 1
      %p504 = scmp.eq.s32.totalorder %s47, 1
      %p505 = scmp.ne.s32.totalorder %s500, %s502
      %p506 = scmp.eq.s32.totalorder %s47, 0
      %p507 = por %p505, %p506
      %p508 = scmp.ne.s32.totalorder %s500, %s502
      %p509 = scmp.eq.s32.totalorder %s52, 1
      %p510 = por %p508, %p509
      %p511 = scmp.ne.s32.totalorder %s502, %s503
      %p512 = scmp.eq.s32.totalorder %s52, 0
      %p513 = por %p511, %p512
      %p514 = scmp.ne.s32.totalorder %s502, %s503
      %p515 = scmp.eq.s32.totalorder %s53, 1
      %p516 = por %p514, %p515
      %p518 = scmp.ne.s32.totalorder %s503, %s517
      %p519 = scmp.eq.s32.totalorder %s53, 0
      %p520 = por %p518, %p519
      %s522 = sadd.s32 %s521, 1
      %p525 = scmp.eq.s32.totalorder %s47, 1
      %p526 = scmp.ne.s32.totalorder %s521, %s523
      %p527 = scmp.eq.s32.totalorder %s47, 0
      %p528 = por %p526, %p527
      %p529 = scmp.ne.s32.totalorder %s521, %s523
      %p530 = scmp.eq.s32.totalorder %s52, 1
      %p531 = por %p529, %p530
      %p532 = scmp.ne.s32.totalorder %s523, %s524
      %p533 = scmp.eq.s32.totalorder %s52, 0
      %p534 = por %p532, %p533
      %p535 = scmp.ne.s32.totalorder %s523, %s524
      %p536 = scmp.eq.s32.totalorder %s53, 1
      %p537 = por %p535, %p536
      %p539 = scmp.ne.s32.totalorder %s524, %s538
      %p540 = scmp.eq.s32.totalorder %s53, 0
      %p541 = por %p539, %p540
      %s543 = sadd.s32 %s542, 1
      %p546 = scmp.eq.s32.totalorder %s47, 1
      %p547 = scmp.ne.s32.totalorder %s542, %s544
      %p548 = scmp.eq.s32.totalorder %s47, 0
      %p549 = por %p547, %p548
      %p550 = scmp.ne.s32.totalorder %s542, %s544
      %p551 = scmp.eq.s32.totalorder %s52, 1
      %p552 = por %p550, %p551
      %p553 = scmp.ne.s32.totalorder %s544, %s545
      %p554 = scmp.eq.s32.totalorder %s52, 0
      %p555 = por %p553, %p554
      %p556 = scmp.ne.s32.totalorder %s544, %s545
      %p557 = scmp.eq.s32.totalorder %s53, 1
      %p558 = por %p556, %p557
      %p560 = scmp.ne.s32.totalorder %s545, %s559
      %p561 = scmp.eq.s32.totalorder %s53, 0
      %p562 = por %p560, %p561
      %s564 = sadd.s32 %s563, 1
      %p567 = scmp.eq.s32.totalorder %s47, 1
      %p568 = scmp.ne.s32.totalorder %s563, %s565
      %p569 = scmp.eq.s32.totalorder %s47, 0
      %p570 = por %p568, %p569
      %p571 = scmp.ne.s32.totalorder %s563, %s565
      %p572 = scmp.eq.s32.totalorder %s52, 1
      %p573 = por %p571, %p572
      %p574 = scmp.ne.s32.totalorder %s565, %s566
      %p575 = scmp.eq.s32.totalorder %s52, 0
      %p576 = por %p574, %p575
      %p577 = scmp.ne.s32.totalorder %s565, %s566
      %p578 = scmp.eq.s32.totalorder %s53, 1
      %p579 = por %p577, %p578
      %p581 = scmp.ne.s32.totalorder %s566, %s580
      %p582 = scmp.eq.s32.totalorder %s53, 0
      %p583 = por %p581, %p582
      %s585 = sadd.s32 %s584, 1
      %p588 = scmp.eq.s32.totalorder %s47, 1
      %p589 = scmp.ne.s32.totalorder %s584, %s586
      %p590 = scmp.eq.s32.totalorder %s47, 0
      %p591 = por %p589, %p590
      %p592 = scmp.ne.s32.totalorder %s584, %s586
      %p593 = scmp.eq.s32.totalorder %s52, 1
      %p594 = por %p592, %p593
      %p595 = scmp.ne.s32.totalorder %s586, %s587
      %p596 = scmp.eq.s32.totalorder %s52, 0
      %p597 = por %p595, %p596
      %p598 = scmp.ne.s32.totalorder %s586, %s587
      %p599 = scmp.eq.s32.totalorder %s53, 1
      %p600 = por %p598, %p599
      %p602 = scmp.ne.s32.totalorder %s587, %s601
      %p603 = scmp.eq.s32.totalorder %s53, 0
      %p604 = por %p602, %p603
      %s605 = ssub.s32 %s47, %s54
      %p606 = scmp.eq.s32.totalorder %s605, 0
      %s608 = sadd.s32 %s607, 1
      %s609 = scalar_select %p606, %s607, %s608
      %p612 = pneg %p606
      %p613 = scmp.eq.s32.totalorder %s47, 1
      %p614 = por %p612, %p613
      %p615 = scmp.ne.s32.totalorder %s607, %s610
      %p616 = scmp.eq.s32.totalorder %s47, 0
      %p617 = por %p615, %p616
      %p618 = scmp.ne.s32.totalorder %s607, %s610
      %p619 = scmp.eq.s32.totalorder %s52, 1
      %p620 = por %p618, %p619
      %p621 = scmp.ne.s32.totalorder %s610, %s611
      %p622 = scmp.eq.s32.totalorder %s52, 0
      %p623 = por %p621, %p622
      %p624 = scmp.ne.s32.totalorder %s610, %s611
      %p625 = scmp.eq.s32.totalorder %s53, 1
      %p626 = por %p624, %p625
      %p628 = scmp.ne.s32.totalorder %s611, %s627
      %p629 = scmp.eq.s32.totalorder %s53, 0
      %p630 = por %p628, %p629
      %p631 = scmp.le.s32.totalorder 1, %s47
      %p632 = scmp.lt.s32.totalorder %s47, 3
      %p633 = pnand %p631, %p632
      %p634 = pneg %p633
      // Predicated region
      $region9: #{tpu_custom_call.1} parent=5 // pred_check
        _
      $region10: #{tpu_custom_call.1} parent=5 // pred_check_branch
        %636 = sbr.rel (%p633) target = $region12
      $region11: #{tpu_custom_call.1} parent=5 // pred_region
        %s637 = ssub.s32 %s47, 1
        // Predicated region
        $region13: #{tpu_custom_call.1} parent=11 // pred_check
          %p638 = pneg %p198
        $region14: #{tpu_custom_call.1} parent=11 // pred_check_branch
          %640 = sbr.rel (%p638) target = $region16
        $region15: #{tpu_custom_call.1} parent=11 // pred_region
          _
        $region16: #{tpu_custom_call.1} parent=11 // pred_fallthru
          _
        // Predicated region
        $region17: #{tpu_custom_call.1} parent=11 // pred_check
          %p641 = pneg %p219
        $region18: #{tpu_custom_call.1} parent=11 // pred_check_branch
          %643 = sbr.rel (%p641) target = $region20
        $region19: #{tpu_custom_call.1} parent=11 // pred_region
          _
        $region20: #{tpu_custom_call.1} parent=11 // pred_fallthru
          _
        // Predicated region
        $region21: #{tpu_custom_call.1} parent=11 // pred_check
          %p644 = pneg %p240
        $region22: #{tpu_custom_call.1} parent=11 // pred_check_branch
          %646 = sbr.rel (%p644) target = $region24
        $region23: #{tpu_custom_call.1} parent=11 // pred_region
          _
        $region24: #{tpu_custom_call.1} parent=11 // pred_fallthru
          _
        // Predicated region
        $region25: #{tpu_custom_call.1} parent=11 // pred_check
          %p647 = pneg %p261
        $region26: #{tpu_custom_call.1} parent=11 // pred_check_branch
          %649 = sbr.rel (%p647) target = $region28
        $region27: #{tpu_custom_call.1} parent=11 // pred_region
          _
        $region28: #{tpu_custom_call.1} parent=11 // pred_fallthru
          _
        // Predicated region
        $region29: #{tpu_custom_call.1} parent=11 // pred_check
          %p650 = pneg %p282
        $region30: #{tpu_custom_call.1} parent=11 // pred_check_branch
          %652 = sbr.rel (%p650) target = $region32
        $region31: #{tpu_custom_call.1} parent=11 // pred_region
          %s654 = ssub.s32 16, 16
          %655 = vsyncadd [#allocation12], %s654
          %s657 = sshll.u32 [#allocation11], 4
          %s658 = int_to_ptr.vmem [resolvable:$true] %s657
          %660 = dma.hbm_to_vmem [thread:$0]  %s9, 16, %s658, [#allocation12]
        $region32: #{tpu_custom_call.1} parent=11 // pred_fallthru
          _
        // Predicated region
        $region33: #{tpu_custom_call.1} parent=11 // pred_check
          %p661 = pneg %p303
        $region34: #{tpu_custom_call.1} parent=11 // pred_check_branch
          %663 = sbr.rel (%p661) target = $region36
        $region35: #{tpu_custom_call.1} parent=11 // pred_region
          %s665 = ssub.s32 16, 16
          %666 = vsyncadd [#allocation12], %s665
          %s668 = sshll.u32 [#allocation13], 4
          %s669 = int_to_ptr.vmem [resolvable:$true] %s668
          %671 = dma.hbm_to_vmem [thread:$0]  %s10, 16, %s669, [#allocation12]
        $region36: #{tpu_custom_call.1} parent=11 // pred_fallthru
          _
        // Predicated region
        $region37: #{tpu_custom_call.1} parent=11 // pred_check
          %p672 = pneg %p324
        $region38: #{tpu_custom_call.1} parent=11 // pred_check_branch
          %674 = sbr.rel (%p672) target = $region40
        $region39: #{tpu_custom_call.1} parent=11 // pred_region
          %s676 = ssub.s32 16, 16
          %677 = vsyncadd [#allocation15], %s676
          %s679 = sshll.u32 [#allocation14], 4
          %s680 = int_to_ptr.vmem [resolvable:$true] %s679
          %682 = dma.hbm_to_vmem [thread:$0]  %s11, 16, %s680, [#allocation15]
        $region40: #{tpu_custom_call.1} parent=11 // pred_fallthru
          _
        // Predicated region
        $region41: #{tpu_custom_call.1} parent=11 // pred_check
          %p683 = pneg %p345
        $region42: #{tpu_custom_call.1} parent=11 // pred_check_branch
          %685 = sbr.rel (%p683) target = $region44
        $region43: #{tpu_custom_call.1} parent=11 // pred_region
          _
        $region44: #{tpu_custom_call.1} parent=11 // pred_fallthru
          _
        // Predicated region
        $region45: #{tpu_custom_call.1} parent=11 // pred_check
          %p686 = pneg %p366
        $region46: #{tpu_custom_call.1} parent=11 // pred_check_branch
          %688 = sbr.rel (%p686) target = $region48
        $region47: #{tpu_custom_call.1} parent=11 // pred_region
          _
        $region48: #{tpu_custom_call.1} parent=11 // pred_fallthru
          _
        // Predicated region
        $region49: #{tpu_custom_call.1} parent=11 // pred_check
          %p689 = pneg %p387
        $region50: #{tpu_custom_call.1} parent=11 // pred_check_branch
          %691 = sbr.rel (%p689) target = $region52
        $region51: #{tpu_custom_call.1} parent=11 // pred_region
          %s693 = ssub.s32 512, 512
          %694 = vsyncadd [#allocation15], %s693
          %s695 = sshll.u32 [#allocation16], 4
          %s696 = int_to_ptr.vmem [resolvable:$true] %s695
          %701 = dma.hbm_to_vmem [thread:$0]  %s14, 512, %s696, [#allocation15], 128, 128, 8
        $region52: #{tpu_custom_call.1} parent=11 // pred_fallthru
          _
        // Predicated region
        $region53: #{tpu_custom_call.1} parent=11 // pred_check
          %p702 = pneg %p408
        $region54: #{tpu_custom_call.1} parent=11 // pred_check_branch
          %704 = sbr.rel (%p702) target = $region56
        $region55: #{tpu_custom_call.1} parent=11 // pred_region
          %s706 = ssub.s32 512, 512
          %707 = vsyncadd [#allocation18], %s706
          %s708 = sshll.u32 [#allocation17], 4
          %s709 = int_to_ptr.vmem [resolvable:$true] %s708
          %714 = dma.hbm_to_vmem [thread:$0]  %s15, 512, %s709, [#allocation18], 128, 128, 8
        $region56: #{tpu_custom_call.1} parent=11 // pred_fallthru
          _
        // Predicated region
        $region57: #{tpu_custom_call.1} parent=11 // pred_check
          %p715 = pneg %p429
        $region58: #{tpu_custom_call.1} parent=11 // pred_check_branch
          %717 = sbr.rel (%p715) target = $region60
        $region59: #{tpu_custom_call.1} parent=11 // pred_region
          %s719 = ssub.s32 16, 16
          %720 = vsyncadd [#allocation18], %s719
          %s722 = sshll.u32 [#allocation19], 4
          %s723 = int_to_ptr.vmem [resolvable:$true] %s722
          %725 = dma.hbm_to_vmem [thread:$0]  %s16, 16, %s723, [#allocation18]
        $region60: #{tpu_custom_call.1} parent=11 // pred_fallthru
          _
        // Predicated region
        $region61: #{tpu_custom_call.1} parent=11 // pred_check
          %p726 = pneg %p450
        $region62: #{tpu_custom_call.1} parent=11 // pred_check_branch
          %728 = sbr.rel (%p726) target = $region64
        $region63: #{tpu_custom_call.1} parent=11 // pred_region
          %s730 = ssub.s32 16, 16
          %731 = vsyncadd [#allocation21], %s730
          %s733 = sshll.u32 [#allocation20], 4
          %s734 = int_to_ptr.vmem [resolvable:$true] %s733
          %736 = dma.hbm_to_vmem [thread:$0]  %s17, 16, %s734, [#allocation21]
        $region64: #{tpu_custom_call.1} parent=11 // pred_fallthru
          _
        // Predicated region
        $region65: #{tpu_custom_call.1} parent=11 // pred_check
          %p737 = pneg %p471
        $region66: #{tpu_custom_call.1} parent=11 // pred_check_branch
          %739 = sbr.rel (%p737) target = $region68
        $region67: #{tpu_custom_call.1} parent=11 // pred_region
          _
        $region68: #{tpu_custom_call.1} parent=11 // pred_fallthru
          _
        // Predicated region
        $region69: #{tpu_custom_call.1} parent=11 // pred_check
          %p740 = pneg %p492
        $region70: #{tpu_custom_call.1} parent=11 // pred_check_branch
          %742 = sbr.rel (%p740) target = $region72
        $region71: #{tpu_custom_call.1} parent=11 // pred_region
          %s744 = ssub.s32 512, 512
          %745 = vsyncadd [#allocation21], %s744
          %s746 = sshll.u32 [#allocation22], 4
          %s747 = int_to_ptr.vmem [resolvable:$true] %s746
          %752 = dma.hbm_to_vmem [thread:$0]  %s19, 512, %s747, [#allocation21], 128, 128, 8
        $region72: #{tpu_custom_call.1} parent=11 // pred_fallthru
          _
        // Predicated region
        $region73: #{tpu_custom_call.1} parent=11 // pred_check
          %p753 = pneg %p513
        $region74: #{tpu_custom_call.1} parent=11 // pred_check_branch
          %755 = sbr.rel (%p753) target = $region76
        $region75: #{tpu_custom_call.1} parent=11 // pred_region
          _
        $region76: #{tpu_custom_call.1} parent=11 // pred_fallthru
          _
        // Predicated region
        $region77: #{tpu_custom_call.1} parent=11 // pred_check
          %p756 = pneg %p534
        $region78: #{tpu_custom_call.1} parent=11 // pred_check_branch
          %758 = sbr.rel (%p756) target = $region80
        $region79: #{tpu_custom_call.1} parent=11 // pred_region
          _
        $region80: #{tpu_custom_call.1} parent=11 // pred_fallthru
          _
        // Predicated region
        $region81: #{tpu_custom_call.1} parent=11 // pred_check
          %p759 = pneg %p555
        $region82: #{tpu_custom_call.1} parent=11 // pred_check_branch
          %761 = sbr.rel (%p759) target = $region84
        $region83: #{tpu_custom_call.1} parent=11 // pred_region
          _
        $region84: #{tpu_custom_call.1} parent=11 // pred_fallthru
          _
        // Predicated region
        $region85: #{tpu_custom_call.1} parent=11 // pred_check
          %p762 = pneg %p576
        $region86: #{tpu_custom_call.1} parent=11 // pred_check_branch
          %764 = sbr.rel (%p762) target = $region88
        $region87: #{tpu_custom_call.1} parent=11 // pred_region
          _
        $region88: #{tpu_custom_call.1} parent=11 // pred_fallthru
          _
        // Predicated region
        $region89: #{tpu_custom_call.1} parent=11 // pred_check
          %p765 = pneg %p597
        $region90: #{tpu_custom_call.1} parent=11 // pred_check_branch
          %767 = sbr.rel (%p765) target = $region92
        $region91: #{tpu_custom_call.1} parent=11 // pred_region
          _
        $region92: #{tpu_custom_call.1} parent=11 // pred_fallthru
          _
      $region12: #{tpu_custom_call.1} parent=5 // pred_fallthru
        _
      %p768 = scmp.lt.s32.totalorder %s47, 2
      // Predicated region
      $region93: #{tpu_custom_call.1} parent=5 // pred_check
        %p769 = pneg %p768
      $region94: #{tpu_custom_call.1} parent=5 // pred_check_branch
        %771 = sbr.rel (%p769) target = $region96
      $region95: #{tpu_custom_call.1} parent=5 // pred_region
        // Predicated region
        $region97: #{tpu_custom_call.1} parent=95 // pred_check
          %p772 = pneg %p67
        $region98: #{tpu_custom_call.1} parent=95 // pred_check_branch
          %774 = sbr.rel (%p772) target = $region100
        $region99: #{tpu_custom_call.1} parent=95 // pred_region
          %s775 = sand.u32 %s57, 1
          %s776 = scalar_lea.sflag [#allocation3], %s775
          %s777 = sand.u32 %s57, 1
          %s778 = smul.addr %s777, 8
          %s779 = scalar_lea.vmem [#allocation2], %s778
          %s781 = ssub.s32 128, 128
          %782 = vsyncadd %s776, %s781
          %s783 = smul.addr %s47, 128
          %s784 = scalar_lea.hbm %s0, %s783
          %s786 = sshll.u32 %s779, 4
          %s787 = int_to_ptr.vmem [resolvable:$true] %s786
          %789 = dma.hbm_to_vmem [thread:$0]  %s784, 128, %s787, %s776
        $region100: #{tpu_custom_call.1} parent=95 // pred_fallthru
          _
        // Predicated region
        $region101: #{tpu_custom_call.1} parent=95 // pred_check
          %p790 = pneg %p93
        $region102: #{tpu_custom_call.1} parent=95 // pred_check_branch
          %792 = sbr.rel (%p790) target = $region104
        $region103: #{tpu_custom_call.1} parent=95 // pred_region
          %s793 = sand.u32 %s47, 1
          %s794 = scalar_lea.sflag [#allocation6], %s793
          %s795 = sand.u32 %s83, 1
          %s796 = smul.addr %s795, 8
          %s797 = scalar_lea.vmem [#allocation5], %s796
          %s799 = ssub.s32 128, 128
          %800 = vsyncadd %s794, %s799
          %s801 = smul.addr %s47, 128
          %s802 = scalar_lea.hbm %s1, %s801
          %s804 = sshll.u32 %s797, 4
          %s805 = int_to_ptr.vmem [resolvable:$true] %s804
          %807 = dma.hbm_to_vmem [thread:$0]  %s802, 128, %s805, %s794
        $region104: #{tpu_custom_call.1} parent=95 // pred_fallthru
          _
        // Predicated region
        $region105: #{tpu_custom_call.1} parent=95 // pred_check
          %p808 = pneg %p119
        $region106: #{tpu_custom_call.1} parent=95 // pred_check_branch
          %810 = sbr.rel (%p808) target = $region108
        $region107: #{tpu_custom_call.1} parent=95 // pred_region
          %s811 = sand.u32 %s47, 1
          %s812 = scalar_lea.sflag [#allocation6], %s811
          %s813 = sand.u32 %s109, 1
          %s814 = smul.addr %s813, 8
          %s815 = scalar_lea.vmem [#allocation7], %s814
          %s817 = ssub.s32 128, 128
          %818 = vsyncadd %s812, %s817
          %s819 = smul.addr %s47, 128
          %s820 = scalar_lea.hbm %s2, %s819
          %s822 = sshll.u32 %s815, 4
          %s823 = int_to_ptr.vmem [resolvable:$true] %s822
          %825 = dma.hbm_to_vmem [thread:$0]  %s820, 128, %s823, %s812
        $region108: #{tpu_custom_call.1} parent=95 // pred_fallthru
          _
        // Predicated region
        $region109: #{tpu_custom_call.1} parent=95 // pred_check
          %p826 = pneg %p145
        $region110: #{tpu_custom_call.1} parent=95 // pred_check_branch
          %828 = sbr.rel (%p826) target = $region112
        $region111: #{tpu_custom_call.1} parent=95 // pred_region
          %s829 = sand.u32 %s47, 1
          %s830 = scalar_lea.sflag [#allocation9], %s829
          %s831 = sand.u32 %s135, 1
          %s832 = smul.addr %s831, 2
          %s833 = scalar_lea.vmem [#allocation8], %s832
          %s835 = ssub.s32 32, 32
          %836 = vsyncadd %s830, %s835
          %s837 = smul.addr %s47, 32
          %s838 = scalar_lea.hbm %s3, %s837
          %s840 = sshll.u32 %s833, 4
          %s841 = int_to_ptr.vmem [resolvable:$true] %s840
          %843 = dma.hbm_to_vmem [thread:$0]  %s838, 32, %s841, %s830
        $region112: #{tpu_custom_call.1} parent=95 // pred_fallthru
          _
        // Predicated region
        $region113: #{tpu_custom_call.1} parent=95 // pred_check
          %p844 = pneg %p171
        $region114: #{tpu_custom_call.1} parent=95 // pred_check_branch
          %846 = sbr.rel (%p844) target = $region116
        $region115: #{tpu_custom_call.1} parent=95 // pred_region
          %s847 = sand.u32 %s47, 1
          %s848 = scalar_lea.sflag [#allocation9], %s847
          %s849 = sand.u32 %s161, 1
          %s850 = smul.addr %s849, 2
          %s851 = scalar_lea.vmem [#allocation10], %s850
          %s853 = ssub.s32 32, 32
          %854 = vsyncadd %s848, %s853
          %s855 = smul.addr %s47, 32
          %s856 = scalar_lea.hbm %s4, %s855
          %s858 = sshll.u32 %s851, 4
          %s859 = int_to_ptr.vmem [resolvable:$true] %s858
          %861 = dma.hbm_to_vmem [thread:$0]  %s856, 32, %s859, %s848
        $region116: #{tpu_custom_call.1} parent=95 // pred_fallthru
          _
      $region96: #{tpu_custom_call.1} parent=5 // pred_fallthru
        _
      %p862 = scmp.le.s32.totalorder 1, %s47
      %p863 = scmp.lt.s32.totalorder %s47, 3
      %p864 = pnand %p862, %p863
      %p865 = pneg %p864
      // Predicated region
      $region117: #{tpu_custom_call.1} parent=5 // pred_check
        _
      $region118: #{tpu_custom_call.1} parent=5 // pred_check_branch
        %867 = sbr.rel (%p864) target = $region120
      $region119: #{tpu_custom_call.1} parent=5 // pred_region
        %s868 = ssub.s32 %s47, 1
        %s869 = sand.u32 %s60, 1
        %s870 = scalar_lea.sflag [#allocation3], %s869
        %s871 = sand.u32 %s60, 1
        %s872 = smul.addr %s871, 8
        %s873 = scalar_lea.vmem [#allocation2], %s872
        // Predicated region
        $region121: #{tpu_custom_call.1} parent=119 // pred_check
          %p874 = pneg %p73
        $region122: #{tpu_custom_call.1} parent=119 // pred_check_branch
          %876 = sbr.rel (%p874) target = $region124
        $region123: #{tpu_custom_call.1} parent=119 // pred_region
          %877 = dma.done %s870, 128
        $region124: #{tpu_custom_call.1} parent=119 // pred_fallthru
          _
        %s878 = sand.u32 %s52, 1
        %s879 = scalar_lea.sflag [#allocation6], %s878
        %s880 = sand.u32 %s86, 1
        %s881 = smul.addr %s880, 8
        %s882 = scalar_lea.vmem [#allocation5], %s881
        // Predicated region
        $region125: #{tpu_custom_call.1} parent=119 // pred_check
          %p883 = pneg %p99
        $region126: #{tpu_custom_call.1} parent=119 // pred_check_branch
          %885 = sbr.rel (%p883) target = $region128
        $region127: #{tpu_custom_call.1} parent=119 // pred_region
          %886 = dma.done %s879, 128
        $region128: #{tpu_custom_call.1} parent=119 // pred_fallthru
          _
        %s887 = sand.u32 %s52, 1
        %s888 = scalar_lea.sflag [#allocation6], %s887
        %s889 = sand.u32 %s112, 1
        %s890 = smul.addr %s889, 8
        %s891 = scalar_lea.vmem [#allocation7], %s890
        // Predicated region
        $region129: #{tpu_custom_call.1} parent=119 // pred_check
          %p892 = pneg %p125
        $region130: #{tpu_custom_call.1} parent=119 // pred_check_branch
          %894 = sbr.rel (%p892) target = $region132
        $region131: #{tpu_custom_call.1} parent=119 // pred_region
          %895 = dma.done %s888, 128
        $region132: #{tpu_custom_call.1} parent=119 // pred_fallthru
          _
        %s896 = sand.u32 %s52, 1
        %s897 = scalar_lea.sflag [#allocation9], %s896
        %s898 = sand.u32 %s138, 1
        %s899 = smul.addr %s898, 2
        %s900 = scalar_lea.vmem [#allocation8], %s899
        // Predicated region
        $region133: #{tpu_custom_call.1} parent=119 // pred_check
          %p901 = pneg %p151
        $region134: #{tpu_custom_call.1} parent=119 // pred_check_branch
          %903 = sbr.rel (%p901) target = $region136
        $region135: #{tpu_custom_call.1} parent=119 // pred_region
          %904 = dma.done %s897, 32
        $region136: #{tpu_custom_call.1} parent=119 // pred_fallthru
          _
        %s905 = sand.u32 %s52, 1
        %s906 = scalar_lea.sflag [#allocation9], %s905
        %s907 = sand.u32 %s164, 1
        %s908 = smul.addr %s907, 2
        %s909 = scalar_lea.vmem [#allocation10], %s908
        // Predicated region
        $region137: #{tpu_custom_call.1} parent=119 // pred_check
          %p910 = pneg %p177
        $region138: #{tpu_custom_call.1} parent=119 // pred_check_branch
          %912 = sbr.rel (%p910) target = $region140
        $region139: #{tpu_custom_call.1} parent=119 // pred_region
          %913 = dma.done %s906, 32
        $region140: #{tpu_custom_call.1} parent=119 // pred_fallthru
          _
        // Predicated region
        $region141: #{tpu_custom_call.1} parent=119 // pred_check
          %p914 = pneg %p282
        $region142: #{tpu_custom_call.1} parent=119 // pred_check_branch
          %916 = sbr.rel (%p914) target = $region144
        $region143: #{tpu_custom_call.1} parent=119 // pred_region
          %917 = dma.done [#allocation12], 16
        $region144: #{tpu_custom_call.1} parent=119 // pred_fallthru
          _
        // Predicated region
        $region145: #{tpu_custom_call.1} parent=119 // pred_check
          %p918 = pneg %p303
        $region146: #{tpu_custom_call.1} parent=119 // pred_check_branch
          %920 = sbr.rel (%p918) target = $region148
        $region147: #{tpu_custom_call.1} parent=119 // pred_region
          %921 = dma.done [#allocation12], 16
        $region148: #{tpu_custom_call.1} parent=119 // pred_fallthru
          _
        // Predicated region
        $region149: #{tpu_custom_call.1} parent=119 // pred_check
          %p922 = pneg %p324
        $region150: #{tpu_custom_call.1} parent=119 // pred_check_branch
          %924 = sbr.rel (%p922) target = $region152
        $region151: #{tpu_custom_call.1} parent=119 // pred_region
          %925 = dma.done [#allocation15], 16
        $region152: #{tpu_custom_call.1} parent=119 // pred_fallthru
          _
        // Predicated region
        $region153: #{tpu_custom_call.1} parent=119 // pred_check
          %p926 = pneg %p387
        $region154: #{tpu_custom_call.1} parent=119 // pred_check_branch
          %928 = sbr.rel (%p926) target = $region156
        $region155: #{tpu_custom_call.1} parent=119 // pred_region
          %929 = dma.done [#allocation15], 512
        $region156: #{tpu_custom_call.1} parent=119 // pred_fallthru
          _
        // Predicated region
        $region157: #{tpu_custom_call.1} parent=119 // pred_check
          %p930 = pneg %p408
        $region158: #{tpu_custom_call.1} parent=119 // pred_check_branch
          %932 = sbr.rel (%p930) target = $region160
        $region159: #{tpu_custom_call.1} parent=119 // pred_region
          %933 = dma.done [#allocation18], 512
        $region160: #{tpu_custom_call.1} parent=119 // pred_fallthru
          _
        // Predicated region
        $region161: #{tpu_custom_call.1} parent=119 // pred_check
          %p934 = pneg %p429
        $region162: #{tpu_custom_call.1} parent=119 // pred_check_branch
          %936 = sbr.rel (%p934) target = $region164
        $region163: #{tpu_custom_call.1} parent=119 // pred_region
          %937 = dma.done [#allocation18], 16
        $region164: #{tpu_custom_call.1} parent=119 // pred_fallthru
          _
        // Predicated region
        $region165: #{tpu_custom_call.1} parent=119 // pred_check
          %p938 = pneg %p450
        $region166: #{tpu_custom_call.1} parent=119 // pred_check_branch
          %940 = sbr.rel (%p938) target = $region168
        $region167: #{tpu_custom_call.1} parent=119 // pred_region
          %941 = dma.done [#allocation21], 16
        $region168: #{tpu_custom_call.1} parent=119 // pred_fallthru
          _
        // Predicated region
        $region169: #{tpu_custom_call.1} parent=119 // pred_check
          %p942 = pneg %p492
        $region170: #{tpu_custom_call.1} parent=119 // pred_check_branch
          %944 = sbr.rel (%p942) target = $region172
        $region171: #{tpu_custom_call.1} parent=119 // pred_region
          %945 = dma.done [#allocation21], 512
        $region172: #{tpu_custom_call.1} parent=119 // pred_fallthru
          _
        %s946 = sand.u32 %s60, 1
        %s947 = scalar_lea.sflag [#allocation3], %s946
        %s948 = sand.u32 %s60, 1
        %s949 = smul.addr %s948, 8
        %s950 = scalar_lea.vmem [#allocation2], %s949
        %p951 = pneg %p73
        %p952 = pneg %p70
        %s953 = sand.u32 %s52, 1
        %s954 = scalar_lea.sflag [#allocation6], %s953
        %s955 = sand.u32 %s86, 1
        %s956 = smul.addr %s955, 8
        %s957 = scalar_lea.vmem [#allocation5], %s956
        %p958 = pneg %p99
        %p959 = pneg %p96
        %s960 = sand.u32 %s52, 1
        %s961 = scalar_lea.sflag [#allocation6], %s960
        %s962 = sand.u32 %s112, 1
        %s963 = smul.addr %s962, 8
        %s964 = scalar_lea.vmem [#allocation7], %s963
        %p965 = pneg %p125
        %p966 = pneg %p122
        %s967 = sand.u32 %s52, 1
        %s968 = scalar_lea.sflag [#allocation9], %s967
        %s969 = sand.u32 %s138, 1
        %s970 = smul.addr %s969, 2
        %s971 = scalar_lea.vmem [#allocation8], %s970
        %p972 = pneg %p151
        %p973 = pneg %p148
        %s974 = sand.u32 %s52, 1
        %s975 = scalar_lea.sflag [#allocation9], %s974
        %s976 = sand.u32 %s164, 1
        %s977 = smul.addr %s976, 2
        %s978 = scalar_lea.vmem [#allocation10], %s977
        %p979 = pneg %p177
        %p980 = pneg %p174
        %p981 = pneg %p198
        %p982 = pneg %p195
        %p983 = pneg %p219
        %p984 = pneg %p216
        %p985 = pneg %p240
        %p986 = pneg %p237
        %p987 = pneg %p261
        %p988 = pneg %p258
        %p989 = pneg %p282
        %p990 = pneg %p279
        %p991 = pneg %p303
        %p992 = pneg %p300
        %p993 = pneg %p324
        %p994 = pneg %p321
        %p995 = pneg %p345
        %p996 = pneg %p342
        %p997 = pneg %p366
        %p998 = pneg %p363
        %p999 = pneg %p387
        %p1000 = pneg %p384
        %p1001 = pneg %p408
        %p1002 = pneg %p405
        %p1003 = pneg %p429
        %p1004 = pneg %p426
        %p1005 = pneg %p450
        %p1006 = pneg %p447
        %p1007 = pneg %p471
        %p1008 = pneg %p468
        %p1009 = pneg %p492
        %p1010 = pneg %p489
        %p1011 = pneg %p513
        %p1012 = pneg %p510
        %p1013 = pneg %p534
        %p1014 = pneg %p531
        %p1015 = pneg %p555
        %p1016 = pneg %p552
        %p1017 = pneg %p576
        %p1018 = pneg %p573
        %p1019 = pneg %p597
        %p1020 = pneg %p594
        %p1021 = pneg %p623
        %p1022 = pneg %p620
        %s1023 = sand.u32 %s610, 1
        %s1024 = scalar_lea.sflag [#allocation4], %s1023
        %s1025 = sand.u32 %s610, 1
        %s1026 = smul.addr %s1025, 2
        %s1027 = scalar_lea.vmem [#allocation23], %s1026
        %v1028 = vld [vmem:[%s873] sm:$0xff]
        %v1029 = vld [vmem:[%s882] sm:$0xff]
        %v1030 = vld [vmem:[%s891] sm:$0xff]
        %v1031 = vld [vmem:[%s900] sm:$0x3]
        %v1032 = vunpack.c.0.s8 %v1031
        %v1033 = vcvt.s32.f32 %v1032
        %v1034 = vsub.f32 1.0, %v1033
        %v1035 = vmul.f32 %v1034, -1e+30
        %v1036 = vld [vmem:[%s909] sm:$0x3]
        %v1037 = vunpack.c.0.s8 %v1036
        %v1038 = vcvt.s32.f32 %v1037
        %v1039 = vsub.f32 1.0, %v1038
        %v1040 = vmul.f32 %v1039, -1e+30
        %v1041 = vld [vmem:[%s7] sm:$0xff]
        %v1042 = vld [vmem:[%s7 + $0x8] sm:$0xff]
        %v1043 = vld [vmem:[%s7 + $0x10] sm:$0xff]
        %v1044 = vld [vmem:[%s7 + $0x18] sm:$0xff]
        %v1045 = vld [vmem:[%s6] sm:$0xff]
        %v1046 = vld [vmem:[%s6 + $0x8] sm:$0xff]
        %v1047 = vld [vmem:[%s6 + $0x10] sm:$0xff]
        %v1048 = vld [vmem:[%s6 + $0x18] sm:$0xff]
        %v1049 = vld [vmem:[%s5] sm:$0xff]
        %v1050 = vld [vmem:[%s5 + $0x8] sm:$0xff]
        %v1051 = vld [vmem:[%s5 + $0x10] sm:$0xff]
        %v1052 = vld [vmem:[%s5 + $0x18] sm:$0xff]
        %v1053 = vld [vmem:[%s8] sm:$0xff]
        %v1054 = vld [vmem:[%s8 + $0x8] sm:$0xff]
        %v1055 = vld [vmem:[%s8 + $0x10] sm:$0xff]
        %v1056 = vld [vmem:[%s8 + $0x18] sm:$0xff]
        %v1057 = vld [vmem:[#allocation11] sm:$0x1]
        %vm1058 = vcmask 261120
        %v1060 = vsel %vm1058, %v1028, 0
        %1062 = vmatprep.subr.mxu0 0.0
        %1063 = vmatpush1.msra.mxu0 %v1041
        %1064 = vmatprep.subr.mxu0 0.0
        %1065 = vmatpush1.msra.mxu0 %v1042
        %1066 = vmatprep.subr.mxu0 0.0
        %1067 = vmatpush1.msra.mxu0 %v1043
        %1068 = vmatprep.subr.mxu0 0.0
        %1069 = vmatpush1.msra.mxu0 %v1044
        %1070 = vmatprep.subr.mxu0 0.0
        %1071 = vmatpush1.msra.mxu0 0.0
        %1072 = vmatprep.subr.mxu0 0.0
        %1073 = vmatpush1.msra.mxu0 0.0
        %1074 = vmatprep.subr.mxu0 0.0
        %1075 = vmatpush1.msra.mxu0 0.0
        %1076 = vmatprep.subr.mxu0 0.0
        %1077 = vmatpush1.msra.mxu0 0.0
        %1078 = vmatprep.subr.mxu0 0.0
        %1079 = vmatpush1.msra.mxu0 0.0
        %1080 = vmatprep.subr.mxu0 0.0
        %1081 = vmatpush1.msra.mxu0 0.0
        %1082 = vmatprep.subr.mxu0 0.0
        %1083 = vmatpush1.msra.mxu0 0.0
        %1084 = vmatprep.subr.mxu0 0.0
        %1085 = vmatpush1.msra.mxu0 0.0
        %1086 = vmatprep.subr.mxu0 0.0
        %1087 = vmatpush1.msra.mxu0 0.0
        %1088 = vmatprep.subr.mxu0 0.0
        %1089 = vmatpush1.msra.mxu0 0.0
        %1090 = vmatprep.subr.mxu0 0.0
        %1091 = vmatpush1.msra.mxu0 0.0
        %1092 = vmatprep.subr.mxu0 0.0
        %1093 = vmatpush1.msra.mxu0 0.0
        %1094 = vmatprep.subr.mxu0 0.0
        %1095 = vmatpush1.msra.mxu0 0.0
        %1096 = vmatprep.subr.mxu0 0.0
        %1097 = vmatpush1.msra.mxu0 0.0
        %1098 = vmatprep.subr.mxu0 0.0
        %1099 = vmatpush1.msra.mxu0 0.0
        %1100 = vmatprep.subr.mxu0 0.0
        %1101 = vmatpush1.msra.mxu0 0.0
        %1102 = vmatprep.subr.mxu0 0.0
        %1103 = vmatpush1.msra.mxu0 0.0
        %1104 = vmatprep.subr.mxu0 0.0
        %1105 = vmatpush1.msra.mxu0 0.0
        %1106 = vmatprep.subr.mxu0 0.0
        %1107 = vmatpush1.msra.mxu0 0.0
        %1108 = vmatprep.subr.mxu0 0.0
        %1109 = vmatpush1.msra.mxu0 0.0
        %1110 = vmatprep.subr.mxu0 0.0
        %1111 = vmatpush1.msra.mxu0 0.0
        %1112 = vmatprep.subr.mxu0 0.0
        %1113 = vmatpush1.msra.mxu0 0.0
        %1114 = vmatprep.subr.mxu0 0.0
        %1115 = vmatpush1.msra.mxu0 0.0
        %1116 = vmatprep.subr.mxu0 0.0
        %1117 = vmatpush1.msra.mxu0 0.0
        %1118 = vmatprep.subr.mxu0 0.0
        %1119 = vmatpush1.msra.mxu0 0.0
        %1120 = vmatprep.subr.mxu0 0.0
        %1121 = vmatpush1.msra.mxu0 0.0
        %1122 = vmatprep.subr.mxu0 0.0
        %1123 = vmatpush1.msra.mxu0 0.0
        %1124 = vmatprep.subr.mxu0 0.0
        %1125 = vmatpush1.msra.mxu0 0.0
        %1126 = vmatprep.mubr.f32.mxu0 0.0
        %1127 = vmatmul.mubr.f32.gmra.mrb[0].mxu0 %v1060
        %v1128 = vpop.f32.mrb[0].mxu0
        %v1129 = vadd.f32 0.0, %v1128
        %v1130 = vpop.f32.mrb[0].mxu0
        %1131 = vdwg.mxu0
        %1132 = vmatprep.subr.mxu0 0.0
        %1133 = vmatpush1.msra.mxu0 %v1045
        %1134 = vmatprep.subr.mxu0 0.0
        %1135 = vmatpush1.msra.mxu0 %v1046
        %1136 = vmatprep.subr.mxu0 0.0
        %1137 = vmatpush1.msra.mxu0 %v1047
        %1138 = vmatprep.subr.mxu0 0.0
        %1139 = vmatpush1.msra.mxu0 %v1048
        %1140 = vmatprep.subr.mxu0 0.0
        %1141 = vmatpush1.msra.mxu0 0.0
        %1142 = vmatprep.subr.mxu0 0.0
        %1143 = vmatpush1.msra.mxu0 0.0
        %1144 = vmatprep.subr.mxu0 0.0
        %1145 = vmatpush1.msra.mxu0 0.0
        %1146 = vmatprep.subr.mxu0 0.0
        %1147 = vmatpush1.msra.mxu0 0.0
        %1148 = vmatprep.subr.mxu0 0.0
        %1149 = vmatpush1.msra.mxu0 0.0
        %1150 = vmatprep.subr.mxu0 0.0
        %1151 = vmatpush1.msra.mxu0 0.0
        %1152 = vmatprep.subr.mxu0 0.0
        %1153 = vmatpush1.msra.mxu0 0.0
        %1154 = vmatprep.subr.mxu0 0.0
        %1155 = vmatpush1.msra.mxu0 0.0
        %1156 = vmatprep.subr.mxu0 0.0
        %1157 = vmatpush1.msra.mxu0 0.0
        %1158 = vmatprep.subr.mxu0 0.0
        %1159 = vmatpush1.msra.mxu0 0.0
        %1160 = vmatprep.subr.mxu0 0.0
        %1161 = vmatpush1.msra.mxu0 0.0
        %1162 = vmatprep.subr.mxu0 0.0
        %1163 = vmatpush1.msra.mxu0 0.0
        %1164 = vmatprep.subr.mxu0 0.0
        %1165 = vmatpush1.msra.mxu0 0.0
        %1166 = vmatprep.subr.mxu0 0.0
        %1167 = vmatpush1.msra.mxu0 0.0
        %1168 = vmatprep.subr.mxu0 0.0
        %1169 = vmatpush1.msra.mxu0 0.0
        %1170 = vmatprep.subr.mxu0 0.0
        %1171 = vmatpush1.msra.mxu0 0.0
        %1172 = vmatprep.subr.mxu0 0.0
        %1173 = vmatpush1.msra.mxu0 0.0
        %1174 = vmatprep.subr.mxu0 0.0
        %1175 = vmatpush1.msra.mxu0 0.0
        %1176 = vmatprep.subr.mxu0 0.0
        %1177 = vmatpush1.msra.mxu0 0.0
        %1178 = vmatprep.subr.mxu0 0.0
        %1179 = vmatpush1.msra.mxu0 0.0
        %1180 = vmatprep.subr.mxu0 0.0
        %1181 = vmatpush1.msra.mxu0 0.0
        %1182 = vmatprep.subr.mxu0 0.0
        %1183 = vmatpush1.msra.mxu0 0.0
        %1184 = vmatprep.subr.mxu0 0.0
        %1185 = vmatpush1.msra.mxu0 0.0
        %1186 = vmatprep.subr.mxu0 0.0
        %1187 = vmatpush1.msra.mxu0 0.0
        %1188 = vmatprep.subr.mxu0 0.0
        %1189 = vmatpush1.msra.mxu0 0.0
        %1190 = vmatprep.subr.mxu0 0.0
        %1191 = vmatpush1.msra.mxu0 0.0
        %1192 = vmatprep.subr.mxu0 0.0
        %1193 = vmatpush1.msra.mxu0 0.0
        %1194 = vmatprep.subr.mxu0 0.0
        %1195 = vmatpush1.msra.mxu0 0.0
        %1196 = vmatprep.mubr.f32.mxu0 0.0
        %1197 = vmatmul.mubr.f32.gmra.mrb[0].mxu0 %v1060
        %v1198 = vpop.f32.mrb[0].mxu0
        %v1199 = vadd.f32 0.0, %v1198
        %v1200 = vpop.f32.mrb[0].mxu0
        %1201 = vdwg.mxu0
        %1202 = vmatprep.subr.mxu0 0.0
        %1203 = vmatpush1.msra.mxu0 %v1049
        %1204 = vmatprep.subr.mxu0 0.0
        %1205 = vmatpush1.msra.mxu0 %v1050
        %1206 = vmatprep.subr.mxu0 0.0
        %1207 = vmatpush1.msra.mxu0 %v1051
        %1208 = vmatprep.subr.mxu0 0.0
        %1209 = vmatpush1.msra.mxu0 %v1052
        %1210 = vmatprep.subr.mxu0 0.0
        %1211 = vmatpush1.msra.mxu0 0.0
        %1212 = vmatprep.subr.mxu0 0.0
        %1213 = vmatpush1.msra.mxu0 0.0
        %1214 = vmatprep.subr.mxu0 0.0
        %1215 = vmatpush1.msra.mxu0 0.0
        %1216 = vmatprep.subr.mxu0 0.0
        %1217 = vmatpush1.msra.mxu0 0.0
        %1218 = vmatprep.subr.mxu0 0.0
        %1219 = vmatpush1.msra.mxu0 0.0
        %1220 = vmatprep.subr.mxu0 0.0
        %1221 = vmatpush1.msra.mxu0 0.0
        %1222 = vmatprep.subr.mxu0 0.0
        %1223 = vmatpush1.msra.mxu0 0.0
        %1224 = vmatprep.subr.mxu0 0.0
        %1225 = vmatpush1.msra.mxu0 0.0
        %1226 = vmatprep.subr.mxu0 0.0
        %1227 = vmatpush1.msra.mxu0 0.0
        %1228 = vmatprep.subr.mxu0 0.0
        %1229 = vmatpush1.msra.mxu0 0.0
        %1230 = vmatprep.subr.mxu0 0.0
        %1231 = vmatpush1.msra.mxu0 0.0
        %1232 = vmatprep.subr.mxu0 0.0
        %1233 = vmatpush1.msra.mxu0 0.0
        %1234 = vmatprep.subr.mxu0 0.0
        %1235 = vmatpush1.msra.mxu0 0.0
        %1236 = vmatprep.subr.mxu0 0.0
        %1237 = vmatpush1.msra.mxu0 0.0
        %1238 = vmatprep.subr.mxu0 0.0
        %1239 = vmatpush1.msra.mxu0 0.0
        %1240 = vmatprep.subr.mxu0 0.0
        %1241 = vmatpush1.msra.mxu0 0.0
        %1242 = vmatprep.subr.mxu0 0.0
        %1243 = vmatpush1.msra.mxu0 0.0
        %1244 = vmatprep.subr.mxu0 0.0
        %1245 = vmatpush1.msra.mxu0 0.0
        %1246 = vmatprep.subr.mxu0 0.0
        %1247 = vmatpush1.msra.mxu0 0.0
        %1248 = vmatprep.subr.mxu0 0.0
        %1249 = vmatpush1.msra.mxu0 0.0
        %1250 = vmatprep.subr.mxu0 0.0
        %1251 = vmatpush1.msra.mxu0 0.0
        %1252 = vmatprep.subr.mxu0 0.0
        %1253 = vmatpush1.msra.mxu0 0.0
        %1254 = vmatprep.subr.mxu0 0.0
        %1255 = vmatpush1.msra.mxu0 0.0
        %1256 = vmatprep.subr.mxu0 0.0
        %1257 = vmatpush1.msra.mxu0 0.0
        %1258 = vmatprep.subr.mxu0 0.0
        %1259 = vmatpush1.msra.mxu0 0.0
        %1260 = vmatprep.subr.mxu0 0.0
        %1261 = vmatpush1.msra.mxu0 0.0
        %1262 = vmatprep.subr.mxu0 0.0
        %1263 = vmatpush1.msra.mxu0 0.0
        %1264 = vmatprep.subr.mxu0 0.0
        %1265 = vmatpush1.msra.mxu0 0.0
        %1266 = vmatprep.mubr.f32.mxu0 0.0
        %1267 = vmatmul.mubr.f32.gmra.mrb[0].mxu0 %v1060
        %v1268 = vpop.f32.mrb[0].mxu0
        %v1269 = vadd.f32 0.0, %v1268
        %v1270 = vpop.f32.mrb[0].mxu0
        %1271 = vdwg.mxu0
        %1273 = vrot.lane.b32.xlu0 %v1129, 120
        %v1274 = vpop.permute.xlu0 %1273
        %1276 = vrot.lane.b32.xlu0 %v1129, 112
        %v1277 = vpop.permute.xlu0 %1276
        %1279 = vrot.lane.b32.xlu0 %v1129, 104
        %v1280 = vpop.permute.xlu0 %1279
        %v1282 = vcombine.low %v1129, %v1277
        %v1283 = vcombine.high %v1129, %v1277
        %v1285 = vunpack.c.l.s4 1983009808
        %v1286 = vunpack.c.0.s8 %v1285
        %v1287 = vlaneseq
        %v1288 = vshrl.u32 %v1287, 7
        %v1289 = vsub.s32 %v1286, %v1288
        %v1290 = vrot.slane %v1282, %v1289
        %v1292 = vunpack.c.l.s4 1983009808
        %v1293 = vunpack.c.0.s8 %v1292
        %v1294 = vlaneseq
        %v1295 = vshrl.u32 %v1294, 7
        %v1296 = vsub.s32 %v1293, %v1295
        %v1297 = vrot.slane %v1283, %v1296
        %v1298 = vcombine.low %v1274, %v1280
        %v1299 = vcombine.high %v1274, %v1280
        %v1301 = vunpack.c.l.s4 1983009808
        %v1302 = vunpack.c.0.s8 %v1301
        %v1303 = vlaneseq
        %v1304 = vshrl.u32 %v1303, 7
        %v1305 = vsub.s32 %v1302, %v1304
        %v1306 = vrot.slane %v1298, %v1305
        %v1308 = vunpack.c.l.s4 1983009808
        %v1309 = vunpack.c.0.s8 %v1308
        %v1310 = vlaneseq
        %v1311 = vshrl.u32 %v1310, 7
        %v1312 = vsub.s32 %v1309, %v1311
        %v1313 = vrot.slane %v1299, %v1312
        %v1314 = vcombine.low %v1290, %v1306
        %v1315 = vcombine.high %v1290, %v1306
        %v1317 = vunpack.c.l.s4 1934713408
        %v1318 = vunpack.c.0.s8 %v1317
        %v1319 = vlaneseq
        %v1320 = vshrl.u32 %v1319, 7
        %v1321 = vsub.s32 %v1318, %v1320
        %v1322 = vrot.slane %v1314, %v1321
        %v1324 = vunpack.c.l.s4 1934713408
        %v1325 = vunpack.c.0.s8 %v1324
        %v1326 = vlaneseq
        %v1327 = vshrl.u32 %v1326, 7
        %v1328 = vsub.s32 %v1325, %v1327
        %v1329 = vrot.slane %v1315, %v1328
        %v1330 = vcombine.low %v1297, %v1313
        %v1331 = vcombine.high %v1297, %v1313
        %v1333 = vunpack.c.l.s4 1934713408
        %v1334 = vunpack.c.0.s8 %v1333
        %v1335 = vlaneseq
        %v1336 = vshrl.u32 %v1335, 7
        %v1337 = vsub.s32 %v1334, %v1336
        %v1338 = vrot.slane %v1330, %v1337
        %v1340 = vunpack.c.l.s4 1934713408
        %v1341 = vunpack.c.0.s8 %v1340
        %v1342 = vlaneseq
        %v1343 = vshrl.u32 %v1342, 7
        %v1344 = vsub.s32 %v1341, %v1343
        %v1345 = vrot.slane %v1331, %v1344
        %v1346 = vcombine.high %v1322, 0.0
        %v1347 = vcombine.high %v1329, 0.0
        %v1348 = vcombine.high %v1338, 0.0
        %v1349 = vcombine.high %v1345, 0.0
        %v1350 = vcombine.low %v1322, %v1329
        %v1352 = vunpack.c.l.s4 1983009808
        %v1353 = vunpack.c.0.s8 %v1352
        %v1354 = vlaneseq
        %v1355 = vshrl.u32 %v1354, 7
        %v1356 = vsub.s32 %v1353, %v1355
        %v1357 = vrot.slane %v1350, %v1356
        %v1358 = vcombine.low %v1346, %v1347
        %v1360 = vunpack.c.l.s4 1983009808
        %v1361 = vunpack.c.0.s8 %v1360
        %v1362 = vlaneseq
        %v1363 = vshrl.u32 %v1362, 7
        %v1364 = vsub.s32 %v1361, %v1363
        %v1365 = vrot.slane %v1358, %v1364
        %v1366 = vcombine.low %v1338, %v1345
        %v1368 = vunpack.c.l.s4 1983009808
        %v1369 = vunpack.c.0.s8 %v1368
        %v1370 = vlaneseq
        %v1371 = vshrl.u32 %v1370, 7
        %v1372 = vsub.s32 %v1369, %v1371
        %v1373 = vrot.slane %v1366, %v1372
        %v1374 = vcombine.low %v1348, %v1349
        %v1376 = vunpack.c.l.s4 1983009808
        %v1377 = vunpack.c.0.s8 %v1376
        %v1378 = vlaneseq
        %v1379 = vshrl.u32 %v1378, 7
        %v1380 = vsub.s32 %v1377, %v1379
        %v1381 = vrot.slane %v1374, %v1380
        %v1382 = vcombine.low %v1357, %v1365
        %v1383 = vcombine.high %v1357, %v1365
        %v1385 = vunpack.c.l.s4 1934713408
        %v1386 = vunpack.c.0.s8 %v1385
        %v1387 = vlaneseq
        %v1388 = vshrl.u32 %v1387, 7
        %v1389 = vsub.s32 %v1386, %v1388
        %v1390 = vrot.slane %v1382, %v1389
        %v1392 = vunpack.c.l.s4 1934713408
        %v1393 = vunpack.c.0.s8 %v1392
        %v1394 = vlaneseq
        %v1395 = vshrl.u32 %v1394, 7
        %v1396 = vsub.s32 %v1393, %v1395
        %v1397 = vrot.slane %v1383, %v1396
        %v1398 = vcombine.low %v1373, %v1381
        %v1399 = vcombine.high %v1373, %v1381
        %v1401 = vunpack.c.l.s4 1934713408
        %v1402 = vunpack.c.0.s8 %v1401
        %v1403 = vlaneseq
        %v1404 = vshrl.u32 %v1403, 7
        %v1405 = vsub.s32 %v1402, %v1404
        %v1406 = vrot.slane %v1398, %v1405
        %v1408 = vunpack.c.l.s4 1934713408
        %v1409 = vunpack.c.0.s8 %v1408
        %v1410 = vlaneseq
        %v1411 = vshrl.u32 %v1410, 7
        %v1412 = vsub.s32 %v1409, %v1411
        %v1413 = vrot.slane %v1399, %v1412
        %v1414 = vcombine.low %v1390, %v1406
        %v1415 = vcombine.high %v1390, %v1406
        %v1416 = vcombine.low %v1397, %v1413
        %v1417 = vcombine.high %v1397, %v1413
        %1419 = vrot.lane.b32.xlu0 %v1199, 120
        %v1420 = vpop.permute.xlu0 %1419
        %1422 = vrot.lane.b32.xlu0 %v1199, 112
        %v1423 = vpop.permute.xlu0 %1422
        %1425 = vrot.lane.b32.xlu0 %v1199, 104
        %v1426 = vpop.permute.xlu0 %1425
        %v1428 = vcombine.low %v1199, %v1423
        %v1429 = vcombine.high %v1199, %v1423
        %v1431 = vunpack.c.l.s4 1983009808
        %v1432 = vunpack.c.0.s8 %v1431
        %v1433 = vlaneseq
        %v1434 = vshrl.u32 %v1433, 7
        %v1435 = vsub.s32 %v1432, %v1434
        %v1436 = vrot.slane %v1428, %v1435
        %v1438 = vunpack.c.l.s4 1983009808
        %v1439 = vunpack.c.0.s8 %v1438
        %v1440 = vlaneseq
        %v1441 = vshrl.u32 %v1440, 7
        %v1442 = vsub.s32 %v1439, %v1441
        %v1443 = vrot.slane %v1429, %v1442
        %v1444 = vcombine.low %v1420, %v1426
        %v1445 = vcombine.high %v1420, %v1426
        %v1447 = vunpack.c.l.s4 1983009808
        %v1448 = vunpack.c.0.s8 %v1447
        %v1449 = vlaneseq
        %v1450 = vshrl.u32 %v1449, 7
        %v1451 = vsub.s32 %v1448, %v1450
        %v1452 = vrot.slane %v1444, %v1451
        %v1454 = vunpack.c.l.s4 1983009808
        %v1455 = vunpack.c.0.s8 %v1454
        %v1456 = vlaneseq
        %v1457 = vshrl.u32 %v1456, 7
        %v1458 = vsub.s32 %v1455, %v1457
        %v1459 = vrot.slane %v1445, %v1458
        %v1460 = vcombine.low %v1436, %v1452
        %v1461 = vcombine.high %v1436, %v1452
        %v1463 = vunpack.c.l.s4 1934713408
        %v1464 = vunpack.c.0.s8 %v1463
        %v1465 = vlaneseq
        %v1466 = vshrl.u32 %v1465, 7
        %v1467 = vsub.s32 %v1464, %v1466
        %v1468 = vrot.slane %v1460, %v1467
        %v1470 = vunpack.c.l.s4 1934713408
        %v1471 = vunpack.c.0.s8 %v1470
        %v1472 = vlaneseq
        %v1473 = vshrl.u32 %v1472, 7
        %v1474 = vsub.s32 %v1471, %v1473
        %v1475 = vrot.slane %v1461, %v1474
        %v1476 = vcombine.low %v1443, %v1459
        %v1477 = vcombine.high %v1443, %v1459
        %v1479 = vunpack.c.l.s4 1934713408
        %v1480 = vunpack.c.0.s8 %v1479
        %v1481 = vlaneseq
        %v1482 = vshrl.u32 %v1481, 7
        %v1483 = vsub.s32 %v1480, %v1482
        %v1484 = vrot.slane %v1476, %v1483
        %v1486 = vunpack.c.l.s4 1934713408
        %v1487 = vunpack.c.0.s8 %v1486
        %v1488 = vlaneseq
        %v1489 = vshrl.u32 %v1488, 7
        %v1490 = vsub.s32 %v1487, %v1489
        %v1491 = vrot.slane %v1477, %v1490
        %v1492 = vcombine.high %v1468, 0.0
        %v1493 = vcombine.high %v1475, 0.0
        %v1494 = vcombine.high %v1484, 0.0
        %v1495 = vcombine.high %v1491, 0.0
        %v1496 = vcombine.low %v1468, %v1475
        %v1498 = vunpack.c.l.s4 1983009808
        %v1499 = vunpack.c.0.s8 %v1498
        %v1500 = vlaneseq
        %v1501 = vshrl.u32 %v1500, 7
        %v1502 = vsub.s32 %v1499, %v1501
        %v1503 = vrot.slane %v1496, %v1502
        %v1504 = vcombine.low %v1492, %v1493
        %v1506 = vunpack.c.l.s4 1983009808
        %v1507 = vunpack.c.0.s8 %v1506
        %v1508 = vlaneseq
        %v1509 = vshrl.u32 %v1508, 7
        %v1510 = vsub.s32 %v1507, %v1509
        %v1511 = vrot.slane %v1504, %v1510
        %v1512 = vcombine.low %v1484, %v1491
        %v1514 = vunpack.c.l.s4 1983009808
        %v1515 = vunpack.c.0.s8 %v1514
        %v1516 = vlaneseq
        %v1517 = vshrl.u32 %v1516, 7
        %v1518 = vsub.s32 %v1515, %v1517
        %v1519 = vrot.slane %v1512, %v1518
        %v1520 = vcombine.low %v1494, %v1495
        %v1522 = vunpack.c.l.s4 1983009808
        %v1523 = vunpack.c.0.s8 %v1522
        %v1524 = vlaneseq
        %v1525 = vshrl.u32 %v1524, 7
        %v1526 = vsub.s32 %v1523, %v1525
        %v1527 = vrot.slane %v1520, %v1526
        %v1528 = vcombine.low %v1503, %v1511
        %v1529 = vcombine.high %v1503, %v1511
        %v1531 = vunpack.c.l.s4 1934713408
        %v1532 = vunpack.c.0.s8 %v1531
        %v1533 = vlaneseq
        %v1534 = vshrl.u32 %v1533, 7
        %v1535 = vsub.s32 %v1532, %v1534
        %v1536 = vrot.slane %v1528, %v1535
        %v1538 = vunpack.c.l.s4 1934713408
        %v1539 = vunpack.c.0.s8 %v1538
        %v1540 = vlaneseq
        %v1541 = vshrl.u32 %v1540, 7
        %v1542 = vsub.s32 %v1539, %v1541
        %v1543 = vrot.slane %v1529, %v1542
        %v1544 = vcombine.low %v1519, %v1527
        %v1545 = vcombine.high %v1519, %v1527
        %v1547 = vunpack.c.l.s4 1934713408
        %v1548 = vunpack.c.0.s8 %v1547
        %v1549 = vlaneseq
        %v1550 = vshrl.u32 %v1549, 7
        %v1551 = vsub.s32 %v1548, %v1550
        %v1552 = vrot.slane %v1544, %v1551
        %v1554 = vunpack.c.l.s4 1934713408
        %v1555 = vunpack.c.0.s8 %v1554
        %v1556 = vlaneseq
        %v1557 = vshrl.u32 %v1556, 7
        %v1558 = vsub.s32 %v1555, %v1557
        %v1559 = vrot.slane %v1545, %v1558
        %v1560 = vcombine.low %v1536, %v1552
        %v1561 = vcombine.high %v1536, %v1552
        %v1562 = vcombine.low %v1543, %v1559
        %v1563 = vcombine.high %v1543, %v1559
        %1565 = vrot.lane.b32.xlu0 %v1269, 120
        %v1566 = vpop.permute.xlu0 %1565
        %1568 = vrot.lane.b32.xlu0 %v1269, 112
        %v1569 = vpop.permute.xlu0 %1568
        %1571 = vrot.lane.b32.xlu0 %v1269, 104
        %v1572 = vpop.permute.xlu0 %1571
        %v1574 = vcombine.low %v1269, %v1569
        %v1575 = vcombine.high %v1269, %v1569
        %v1577 = vunpack.c.l.s4 1983009808
        %v1578 = vunpack.c.0.s8 %v1577
        %v1579 = vlaneseq
        %v1580 = vshrl.u32 %v1579, 7
        %v1581 = vsub.s32 %v1578, %v1580
        %v1582 = vrot.slane %v1574, %v1581
        %v1584 = vunpack.c.l.s4 1983009808
        %v1585 = vunpack.c.0.s8 %v1584
        %v1586 = vlaneseq
        %v1587 = vshrl.u32 %v1586, 7
        %v1588 = vsub.s32 %v1585, %v1587
        %v1589 = vrot.slane %v1575, %v1588
        %v1590 = vcombine.low %v1566, %v1572
        %v1591 = vcombine.high %v1566, %v1572
        %v1593 = vunpack.c.l.s4 1983009808
        %v1594 = vunpack.c.0.s8 %v1593
        %v1595 = vlaneseq
        %v1596 = vshrl.u32 %v1595, 7
        %v1597 = vsub.s32 %v1594, %v1596
        %v1598 = vrot.slane %v1590, %v1597
        %v1600 = vunpack.c.l.s4 1983009808
        %v1601 = vunpack.c.0.s8 %v1600
        %v1602 = vlaneseq
        %v1603 = vshrl.u32 %v1602, 7
        %v1604 = vsub.s32 %v1601, %v1603
        %v1605 = vrot.slane %v1591, %v1604
        %v1606 = vcombine.low %v1582, %v1598
        %v1607 = vcombine.high %v1582, %v1598
        %v1609 = vunpack.c.l.s4 1934713408
        %v1610 = vunpack.c.0.s8 %v1609
        %v1611 = vlaneseq
        %v1612 = vshrl.u32 %v1611, 7
        %v1613 = vsub.s32 %v1610, %v1612
        %v1614 = vrot.slane %v1606, %v1613
        %v1616 = vunpack.c.l.s4 1934713408
        %v1617 = vunpack.c.0.s8 %v1616
        %v1618 = vlaneseq
        %v1619 = vshrl.u32 %v1618, 7
        %v1620 = vsub.s32 %v1617, %v1619
        %v1621 = vrot.slane %v1607, %v1620
        %v1622 = vcombine.low %v1589, %v1605
        %v1623 = vcombine.high %v1589, %v1605
        %v1625 = vunpack.c.l.s4 1934713408
        %v1626 = vunpack.c.0.s8 %v1625
        %v1627 = vlaneseq
        %v1628 = vshrl.u32 %v1627, 7
        %v1629 = vsub.s32 %v1626, %v1628
        %v1630 = vrot.slane %v1622, %v1629
        %v1632 = vunpack.c.l.s4 1934713408
        %v1633 = vunpack.c.0.s8 %v1632
        %v1634 = vlaneseq
        %v1635 = vshrl.u32 %v1634, 7
        %v1636 = vsub.s32 %v1633, %v1635
        %v1637 = vrot.slane %v1623, %v1636
        %v1638 = vcombine.high %v1614, 0.0
        %v1639 = vcombine.high %v1621, 0.0
        %v1640 = vcombine.high %v1630, 0.0
        %v1641 = vcombine.high %v1637, 0.0
        %v1642 = vcombine.low %v1614, %v1621
        %v1644 = vunpack.c.l.s4 1983009808
        %v1645 = vunpack.c.0.s8 %v1644
        %v1646 = vlaneseq
        %v1647 = vshrl.u32 %v1646, 7
        %v1648 = vsub.s32 %v1645, %v1647
        %v1649 = vrot.slane %v1642, %v1648
        %v1650 = vcombine.low %v1638, %v1639
        %v1652 = vunpack.c.l.s4 1983009808
        %v1653 = vunpack.c.0.s8 %v1652
        %v1654 = vlaneseq
        %v1655 = vshrl.u32 %v1654, 7
        %v1656 = vsub.s32 %v1653, %v1655
        %v1657 = vrot.slane %v1650, %v1656
        %v1658 = vcombine.low %v1630, %v1637
        %v1660 = vunpack.c.l.s4 1983009808
        %v1661 = vunpack.c.0.s8 %v1660
        %v1662 = vlaneseq
        %v1663 = vshrl.u32 %v1662, 7
        %v1664 = vsub.s32 %v1661, %v1663
        %v1665 = vrot.slane %v1658, %v1664
        %v1666 = vcombine.low %v1640, %v1641
        %v1668 = vunpack.c.l.s4 1983009808
        %v1669 = vunpack.c.0.s8 %v1668
        %v1670 = vlaneseq
        %v1671 = vshrl.u32 %v1670, 7
        %v1672 = vsub.s32 %v1669, %v1671
        %v1673 = vrot.slane %v1666, %v1672
        %v1674 = vcombine.low %v1649, %v1657
        %v1675 = vcombine.high %v1649, %v1657
        %v1677 = vunpack.c.l.s4 1934713408
        %v1678 = vunpack.c.0.s8 %v1677
        %v1679 = vlaneseq
        %v1680 = vshrl.u32 %v1679, 7
        %v1681 = vsub.s32 %v1678, %v1680
        %v1682 = vrot.slane %v1674, %v1681
        %v1684 = vunpack.c.l.s4 1934713408
        %v1685 = vunpack.c.0.s8 %v1684
        %v1686 = vlaneseq
        %v1687 = vshrl.u32 %v1686, 7
        %v1688 = vsub.s32 %v1685, %v1687
        %v1689 = vrot.slane %v1675, %v1688
        %v1690 = vcombine.low %v1665, %v1673
        %v1691 = vcombine.high %v1665, %v1673
        %v1693 = vunpack.c.l.s4 1934713408
        %v1694 = vunpack.c.0.s8 %v1693
        %v1695 = vlaneseq
        %v1696 = vshrl.u32 %v1695, 7
        %v1697 = vsub.s32 %v1694, %v1696
        %v1698 = vrot.slane %v1690, %v1697
        %v1700 = vunpack.c.l.s4 1934713408
        %v1701 = vunpack.c.0.s8 %v1700
        %v1702 = vlaneseq
        %v1703 = vshrl.u32 %v1702, 7
        %v1704 = vsub.s32 %v1701, %v1703
        %v1705 = vrot.slane %v1691, %v1704
        %v1706 = vcombine.low %v1682, %v1698
        %v1707 = vcombine.high %v1682, %v1698
        %v1708 = vcombine.low %v1689, %v1705
        %v1709 = vcombine.high %v1689, %v1705
        %vm1710 = vcmask 64512
        %v1712 = vsel %vm1710, %v1706, 0
        %v1715 = vsel %vm1710, %v1560, 0
        %1717 = vmatprep.subr.mxu0 0.0
        %1718 = vmatpush1.xpose.msra.mxu0 %v1715
        %1719 = vmatprep.subr.mxu0 0.0
        %1720 = vmatpush1.xpose.msra.mxu0 0.0
        %1721 = vmatprep.subr.mxu0 0.0
        %1722 = vmatpush1.xpose.msra.mxu0 0.0
        %1723 = vmatprep.subr.mxu0 0.0
        %1724 = vmatpush1.xpose.msra.mxu0 0.0
        %1725 = vmatprep.subr.mxu0 0.0
        %1726 = vmatpush1.xpose.msra.mxu0 0.0
        %1727 = vmatprep.subr.mxu0 0.0
        %1728 = vmatpush1.xpose.msra.mxu0 0.0
        %1729 = vmatprep.subr.mxu0 0.0
        %1730 = vmatpush1.xpose.msra.mxu0 0.0
        %1731 = vmatprep.subr.mxu0 0.0
        %1732 = vmatpush1.xpose.msra.mxu0 0.0
        %1733 = vmatprep.subr.mxu0 0.0
        %1734 = vmatpush1.xpose.msra.mxu0 0.0
        %1735 = vmatprep.subr.mxu0 0.0
        %1736 = vmatpush1.xpose.msra.mxu0 0.0
        %1737 = vmatprep.subr.mxu0 0.0
        %1738 = vmatpush1.xpose.msra.mxu0 0.0
        %1739 = vmatprep.subr.mxu0 0.0
        %1740 = vmatpush1.xpose.msra.mxu0 0.0
        %1741 = vmatprep.subr.mxu0 0.0
        %1742 = vmatpush1.xpose.msra.mxu0 0.0
        %1743 = vmatprep.subr.mxu0 0.0
        %1744 = vmatpush1.xpose.msra.mxu0 0.0
        %1745 = vmatprep.subr.mxu0 0.0
        %1746 = vmatpush1.xpose.msra.mxu0 0.0
        %1747 = vmatprep.subr.mxu0 0.0
        %1748 = vmatpush1.xpose.msra.mxu0 0.0
        %1749 = vmatprep.subr.mxu0 0.0
        %1750 = vmatpush1.xpose.msra.mxu0 0.0
        %1751 = vmatprep.subr.mxu0 0.0
        %1752 = vmatpush1.xpose.msra.mxu0 0.0
        %1753 = vmatprep.subr.mxu0 0.0
        %1754 = vmatpush1.xpose.msra.mxu0 0.0
        %1755 = vmatprep.subr.mxu0 0.0
        %1756 = vmatpush1.xpose.msra.mxu0 0.0
        %1757 = vmatprep.subr.mxu0 0.0
        %1758 = vmatpush1.xpose.msra.mxu0 0.0
        %1759 = vmatprep.subr.mxu0 0.0
        %1760 = vmatpush1.xpose.msra.mxu0 0.0
        %1761 = vmatprep.subr.mxu0 0.0
        %1762 = vmatpush1.xpose.msra.mxu0 0.0
        %1763 = vmatprep.subr.mxu0 0.0
        %1764 = vmatpush1.xpose.msra.mxu0 0.0
        %1765 = vmatprep.subr.mxu0 0.0
        %1766 = vmatpush1.xpose.msra.mxu0 0.0
        %1767 = vmatprep.subr.mxu0 0.0
        %1768 = vmatpush1.xpose.msra.mxu0 0.0
        %1769 = vmatprep.subr.mxu0 0.0
        %1770 = vmatpush1.xpose.msra.mxu0 0.0
        %1771 = vmatprep.subr.mxu0 0.0
        %1772 = vmatpush1.xpose.msra.mxu0 0.0
        %1773 = vmatprep.subr.mxu0 0.0
        %1774 = vmatpush1.xpose.msra.mxu0 0.0
        %1775 = vmatprep.subr.mxu0 0.0
        %1776 = vmatpush1.xpose.msra.mxu0 0.0
        %1777 = vmatprep.subr.mxu0 0.0
        %1778 = vmatpush1.xpose.msra.mxu0 0.0
        %1779 = vmatprep.subr.mxu0 0.0
        %1780 = vmatpush1.xpose.msra.mxu0 0.0
        %1781 = vmatprep.mubr.f32.mxu0 0.0
        %1782 = vmatmul.mubr.f32.gmra.mrb[0].mxu0 %v1712
        %v1783 = vpop.f32.mrb[0].mxu0
        %v1784 = vadd.f32 0.0, %v1783
        %v1785 = vpop.f32.mrb[0].mxu0
        %1786 = vdwg.mxu0
        %v1788 = vsel %vm1710, %v1707, 0
        %v1791 = vsel %vm1710, %v1561, 0
        %1793 = vmatprep.subr.mxu0 0.0
        %1794 = vmatpush1.xpose.msra.mxu0 %v1791
        %1795 = vmatprep.subr.mxu0 0.0
        %1796 = vmatpush1.xpose.msra.mxu0 0.0
        %1797 = vmatprep.subr.mxu0 0.0
        %1798 = vmatpush1.xpose.msra.mxu0 0.0
        %1799 = vmatprep.subr.mxu0 0.0
        %1800 = vmatpush1.xpose.msra.mxu0 0.0
        %1801 = vmatprep.subr.mxu0 0.0
        %1802 = vmatpush1.xpose.msra.mxu0 0.0
        %1803 = vmatprep.subr.mxu0 0.0
        %1804 = vmatpush1.xpose.msra.mxu0 0.0
        %1805 = vmatprep.subr.mxu0 0.0
        %1806 = vmatpush1.xpose.msra.mxu0 0.0
        %1807 = vmatprep.subr.mxu0 0.0
        %1808 = vmatpush1.xpose.msra.mxu0 0.0
        %1809 = vmatprep.subr.mxu0 0.0
        %1810 = vmatpush1.xpose.msra.mxu0 0.0
        %1811 = vmatprep.subr.mxu0 0.0
        %1812 = vmatpush1.xpose.msra.mxu0 0.0
        %1813 = vmatprep.subr.mxu0 0.0
        %1814 = vmatpush1.xpose.msra.mxu0 0.0
        %1815 = vmatprep.subr.mxu0 0.0
        %1816 = vmatpush1.xpose.msra.mxu0 0.0
        %1817 = vmatprep.subr.mxu0 0.0
        %1818 = vmatpush1.xpose.msra.mxu0 0.0
        %1819 = vmatprep.subr.mxu0 0.0
        %1820 = vmatpush1.xpose.msra.mxu0 0.0
        %1821 = vmatprep.subr.mxu0 0.0
        %1822 = vmatpush1.xpose.msra.mxu0 0.0
        %1823 = vmatprep.subr.mxu0 0.0
        %1824 = vmatpush1.xpose.msra.mxu0 0.0
        %1825 = vmatprep.subr.mxu0 0.0
        %1826 = vmatpush1.xpose.msra.mxu0 0.0
        %1827 = vmatprep.subr.mxu0 0.0
        %1828 = vmatpush1.xpose.msra.mxu0 0.0
        %1829 = vmatprep.subr.mxu0 0.0
        %1830 = vmatpush1.xpose.msra.mxu0 0.0
        %1831 = vmatprep.subr.mxu0 0.0
        %1832 = vmatpush1.xpose.msra.mxu0 0.0
        %1833 = vmatprep.subr.mxu0 0.0
        %1834 = vmatpush1.xpose.msra.mxu0 0.0
        %1835 = vmatprep.subr.mxu0 0.0
        %1836 = vmatpush1.xpose.msra.mxu0 0.0
        %1837 = vmatprep.subr.mxu0 0.0
        %1838 = vmatpush1.xpose.msra.mxu0 0.0
        %1839 = vmatprep.subr.mxu0 0.0
        %1840 = vmatpush1.xpose.msra.mxu0 0.0
        %1841 = vmatprep.subr.mxu0 0.0
        %1842 = vmatpush1.xpose.msra.mxu0 0.0
        %1843 = vmatprep.subr.mxu0 0.0
        %1844 = vmatpush1.xpose.msra.mxu0 0.0
        %1845 = vmatprep.subr.mxu0 0.0
        %1846 = vmatpush1.xpose.msra.mxu0 0.0
        %1847 = vmatprep.subr.mxu0 0.0
        %1848 = vmatpush1.xpose.msra.mxu0 0.0
        %1849 = vmatprep.subr.mxu0 0.0
        %1850 = vmatpush1.xpose.msra.mxu0 0.0
        %1851 = vmatprep.subr.mxu0 0.0
        %1852 = vmatpush1.xpose.msra.mxu0 0.0
        %1853 = vmatprep.subr.mxu0 0.0
        %1854 = vmatpush1.xpose.msra.mxu0 0.0
        %1855 = vmatprep.subr.mxu0 0.0
        %1856 = vmatpush1.xpose.msra.mxu0 0.0
        %1857 = vmatprep.mubr.f32.mxu0 0.0
        %1858 = vmatmul.mubr.f32.gmra.mrb[0].mxu0 %v1788
        %v1859 = vpop.f32.mrb[0].mxu0
        %v1860 = vadd.f32 0.0, %v1859
        %v1861 = vpop.f32.mrb[0].mxu0
        %1862 = vdwg.mxu0
        %v1864 = vsel %vm1710, %v1708, 0
        %v1867 = vsel %vm1710, %v1562, 0
        %1869 = vmatprep.subr.mxu0 0.0
        %1870 = vmatpush1.xpose.msra.mxu0 %v1867
        %1871 = vmatprep.subr.mxu0 0.0
        %1872 = vmatpush1.xpose.msra.mxu0 0.0
        %1873 = vmatprep.subr.mxu0 0.0
        %1874 = vmatpush1.xpose.msra.mxu0 0.0
        %1875 = vmatprep.subr.mxu0 0.0
        %1876 = vmatpush1.xpose.msra.mxu0 0.0
        %1877 = vmatprep.subr.mxu0 0.0
        %1878 = vmatpush1.xpose.msra.mxu0 0.0
        %1879 = vmatprep.subr.mxu0 0.0
        %1880 = vmatpush1.xpose.msra.mxu0 0.0
        %1881 = vmatprep.subr.mxu0 0.0
        %1882 = vmatpush1.xpose.msra.mxu0 0.0
        %1883 = vmatprep.subr.mxu0 0.0
        %1884 = vmatpush1.xpose.msra.mxu0 0.0
        %1885 = vmatprep.subr.mxu0 0.0
        %1886 = vmatpush1.xpose.msra.mxu0 0.0
        %1887 = vmatprep.subr.mxu0 0.0
        %1888 = vmatpush1.xpose.msra.mxu0 0.0
        %1889 = vmatprep.subr.mxu0 0.0
        %1890 = vmatpush1.xpose.msra.mxu0 0.0
        %1891 = vmatprep.subr.mxu0 0.0
        %1892 = vmatpush1.xpose.msra.mxu0 0.0
        %1893 = vmatprep.subr.mxu0 0.0
        %1894 = vmatpush1.xpose.msra.mxu0 0.0
        %1895 = vmatprep.subr.mxu0 0.0
        %1896 = vmatpush1.xpose.msra.mxu0 0.0
        %1897 = vmatprep.subr.mxu0 0.0
        %1898 = vmatpush1.xpose.msra.mxu0 0.0
        %1899 = vmatprep.subr.mxu0 0.0
        %1900 = vmatpush1.xpose.msra.mxu0 0.0
        %1901 = vmatprep.subr.mxu0 0.0
        %1902 = vmatpush1.xpose.msra.mxu0 0.0
        %1903 = vmatprep.subr.mxu0 0.0
        %1904 = vmatpush1.xpose.msra.mxu0 0.0
        %1905 = vmatprep.subr.mxu0 0.0
        %1906 = vmatpush1.xpose.msra.mxu0 0.0
        %1907 = vmatprep.subr.mxu0 0.0
        %1908 = vmatpush1.xpose.msra.mxu0 0.0
        %1909 = vmatprep.subr.mxu0 0.0
        %1910 = vmatpush1.xpose.msra.mxu0 0.0
        %1911 = vmatprep.subr.mxu0 0.0
        %1912 = vmatpush1.xpose.msra.mxu0 0.0
        %1913 = vmatprep.subr.mxu0 0.0
        %1914 = vmatpush1.xpose.msra.mxu0 0.0
        %1915 = vmatprep.subr.mxu0 0.0
        %1916 = vmatpush1.xpose.msra.mxu0 0.0
        %1917 = vmatprep.subr.mxu0 0.0
        %1918 = vmatpush1.xpose.msra.mxu0 0.0
        %1919 = vmatprep.subr.mxu0 0.0
        %1920 = vmatpush1.xpose.msra.mxu0 0.0
        %1921 = vmatprep.subr.mxu0 0.0
        %1922 = vmatpush1.xpose.msra.mxu0 0.0
        %1923 = vmatprep.subr.mxu0 0.0
        %1924 = vmatpush1.xpose.msra.mxu0 0.0
        %1925 = vmatprep.subr.mxu0 0.0
        %1926 = vmatpush1.xpose.msra.mxu0 0.0
        %1927 = vmatprep.subr.mxu0 0.0
        %1928 = vmatpush1.xpose.msra.mxu0 0.0
        %1929 = vmatprep.subr.mxu0 0.0
        %1930 = vmatpush1.xpose.msra.mxu0 0.0
        %1931 = vmatprep.subr.mxu0 0.0
        %1932 = vmatpush1.xpose.msra.mxu0 0.0
        %1933 = vmatprep.mubr.f32.mxu0 0.0
        %1934 = vmatmul.mubr.f32.gmra.mrb[0].mxu0 %v1864
        %v1935 = vpop.f32.mrb[0].mxu0
        %v1936 = vadd.f32 0.0, %v1935
        %v1937 = vpop.f32.mrb[0].mxu0
        %1938 = vdwg.mxu0
        %v1940 = vsel %vm1710, %v1709, 0
        %v1943 = vsel %vm1710, %v1563, 0
        %1945 = vmatprep.subr.mxu0 0.0
        %1946 = vmatpush1.xpose.msra.mxu0 %v1943
        %1947 = vmatprep.subr.mxu0 0.0
        %1948 = vmatpush1.xpose.msra.mxu0 0.0
        %1949 = vmatprep.subr.mxu0 0.0
        %1950 = vmatpush1.xpose.msra.mxu0 0.0
        %1951 = vmatprep.subr.mxu0 0.0
        %1952 = vmatpush1.xpose.msra.mxu0 0.0
        %1953 = vmatprep.subr.mxu0 0.0
        %1954 = vmatpush1.xpose.msra.mxu0 0.0
        %1955 = vmatprep.subr.mxu0 0.0
        %1956 = vmatpush1.xpose.msra.mxu0 0.0
        %1957 = vmatprep.subr.mxu0 0.0
        %1958 = vmatpush1.xpose.msra.mxu0 0.0
        %1959 = vmatprep.subr.mxu0 0.0
        %1960 = vmatpush1.xpose.msra.mxu0 0.0
        %1961 = vmatprep.subr.mxu0 0.0
        %1962 = vmatpush1.xpose.msra.mxu0 0.0
        %1963 = vmatprep.subr.mxu0 0.0
        %1964 = vmatpush1.xpose.msra.mxu0 0.0
        %1965 = vmatprep.subr.mxu0 0.0
        %1966 = vmatpush1.xpose.msra.mxu0 0.0
        %1967 = vmatprep.subr.mxu0 0.0
        %1968 = vmatpush1.xpose.msra.mxu0 0.0
        %1969 = vmatprep.subr.mxu0 0.0
        %1970 = vmatpush1.xpose.msra.mxu0 0.0
        %1971 = vmatprep.subr.mxu0 0.0
        %1972 = vmatpush1.xpose.msra.mxu0 0.0
        %1973 = vmatprep.subr.mxu0 0.0
        %1974 = vmatpush1.xpose.msra.mxu0 0.0
        %1975 = vmatprep.subr.mxu0 0.0
        %1976 = vmatpush1.xpose.msra.mxu0 0.0
        %1977 = vmatprep.subr.mxu0 0.0
        %1978 = vmatpush1.xpose.msra.mxu0 0.0
        %1979 = vmatprep.subr.mxu0 0.0
        %1980 = vmatpush1.xpose.msra.mxu0 0.0
        %1981 = vmatprep.subr.mxu0 0.0
        %1982 = vmatpush1.xpose.msra.mxu0 0.0
        %1983 = vmatprep.subr.mxu0 0.0
        %1984 = vmatpush1.xpose.msra.mxu0 0.0
        %1985 = vmatprep.subr.mxu0 0.0
        %1986 = vmatpush1.xpose.msra.mxu0 0.0
        %1987 = vmatprep.subr.mxu0 0.0
        %1988 = vmatpush1.xpose.msra.mxu0 0.0
        %1989 = vmatprep.subr.mxu0 0.0
        %1990 = vmatpush1.xpose.msra.mxu0 0.0
        %1991 = vmatprep.subr.mxu0 0.0
        %1992 = vmatpush1.xpose.msra.mxu0 0.0
        %1993 = vmatprep.subr.mxu0 0.0
        %1994 = vmatpush1.xpose.msra.mxu0 0.0
        %1995 = vmatprep.subr.mxu0 0.0
        %1996 = vmatpush1.xpose.msra.mxu0 0.0
        %1997 = vmatprep.subr.mxu0 0.0
        %1998 = vmatpush1.xpose.msra.mxu0 0.0
        %1999 = vmatprep.subr.mxu0 0.0
        %2000 = vmatpush1.xpose.msra.mxu0 0.0
        %2001 = vmatprep.subr.mxu0 0.0
        %2002 = vmatpush1.xpose.msra.mxu0 0.0
        %2003 = vmatprep.subr.mxu0 0.0
        %2004 = vmatpush1.xpose.msra.mxu0 0.0
        %2005 = vmatprep.subr.mxu0 0.0
        %2006 = vmatpush1.xpose.msra.mxu0 0.0
        %2007 = vmatprep.subr.mxu0 0.0
        %2008 = vmatpush1.xpose.msra.mxu0 0.0
        %2009 = vmatprep.mubr.f32.mxu0 0.0
        %2010 = vmatmul.mubr.f32.gmra.mrb[0].mxu0 %v1940
        %v2011 = vpop.f32.mrb[0].mxu0
        %v2012 = vadd.f32 0.0, %v2011
        %v2013 = vpop.f32.mrb[0].mxu0
        %2014 = vdwg.mxu0
        %v2015 = vadd.f32 %v1784, %v1035
        %v2016 = vadd.f32 %v1860, %v1035
        %v2017 = vadd.f32 %v1936, %v1035
        %v2018 = vadd.f32 %v2012, %v1035
        %v2019 = vsel %vm1710, %v2015, -inf
        %2020 = vmax.xlane.f32.xlu0 %v2019
        %v2021 = vpop.xlane.xlu0 %2020
        %v2022 = vsel %vm1710, %v2016, -inf
        %2023 = vmax.xlane.f32.xlu0 %v2022
        %v2024 = vpop.xlane.xlu0 %2023
        %v2025 = vsel %vm1710, %v2017, -inf
        %2026 = vmax.xlane.f32.xlu0 %v2025
        %v2027 = vpop.xlane.xlu0 %2026
        %v2028 = vsel %vm1710, %v2018, -inf
        %2029 = vmax.xlane.f32.xlu0 %v2028
        %v2030 = vpop.xlane.xlu0 %2029
        %v2031 = vsub.f32 %v2015, %v2021
        %v2032 = vsub.f32 %v2016, %v2024
        %v2033 = vsub.f32 %v2017, %v2027
        %v2034 = vsub.f32 %v2018, %v2030
        %v2035 = vmul.f32 %v2031, 1.442695
        %v2036 = vpow.pop %v2035
        %v2037 = vmul.f32 %v2032, 1.442695
        %v2038 = vpow.pop %v2037
        %v2039 = vmul.f32 %v2033, 1.442695
        %v2040 = vpow.pop %v2039
        %v2041 = vmul.f32 %v2034, 1.442695
        %v2042 = vpow.pop %v2041
        %v2043 = vsel %vm1710, %v2036, 0.0
        %2044 = vadd.xlane.f32.xlu0 %v2043
        %v2045 = vpop.xlane.xlu0 %2044
        %v2046 = vsel %vm1710, %v2038, 0.0
        %2047 = vadd.xlane.f32.xlu0 %v2046
        %v2048 = vpop.xlane.xlu0 %2047
        %v2049 = vsel %vm1710, %v2040, 0.0
        %2050 = vadd.xlane.f32.xlu0 %v2049
        %v2051 = vpop.xlane.xlu0 %2050
        %v2052 = vsel %vm1710, %v2042, 0.0
        %2053 = vadd.xlane.f32.xlu0 %v2052
        %v2054 = vpop.xlane.xlu0 %2053
        %v2055 = vrcp.pop %v2045
        %v2056 = vrcp.pop %v2048
        %v2057 = vrcp.pop %v2051
        %v2058 = vrcp.pop %v2054
        %v2059 = vmul.f32 %v2036, %v2055
        %v2060 = vmul.f32 %v2038, %v2056
        %v2061 = vmul.f32 %v2040, %v2057
        %v2062 = vmul.f32 %v2042, %v2058
        %v2064 = vsel %vm1710, %v2059, 0
        %2066 = vmatprep.subr.mxu0 0.0
        %2067 = vmatpush1.msra.mxu0 %v1414
        %2068 = vmatprep.subr.mxu0 0.0
        %2069 = vmatpush1.msra.mxu0 0.0
        %2070 = vmatprep.subr.mxu0 0.0
        %2071 = vmatpush1.msra.mxu0 0.0
        %2072 = vmatprep.subr.mxu0 0.0
        %2073 = vmatpush1.msra.mxu0 0.0
        %2074 = vmatprep.subr.mxu0 0.0
        %2075 = vmatpush1.msra.mxu0 0.0
        %2076 = vmatprep.subr.mxu0 0.0
        %2077 = vmatpush1.msra.mxu0 0.0
        %2078 = vmatprep.subr.mxu0 0.0
        %2079 = vmatpush1.msra.mxu0 0.0
        %2080 = vmatprep.subr.mxu0 0.0
        %2081 = vmatpush1.msra.mxu0 0.0
        %2082 = vmatprep.subr.mxu0 0.0
        %2083 = vmatpush1.msra.mxu0 0.0
        %2084 = vmatprep.subr.mxu0 0.0
        %2085 = vmatpush1.msra.mxu0 0.0
        %2086 = vmatprep.subr.mxu0 0.0
        %2087 = vmatpush1.msra.mxu0 0.0
        %2088 = vmatprep.subr.mxu0 0.0
        %2089 = vmatpush1.msra.mxu0 0.0
        %2090 = vmatprep.subr.mxu0 0.0
        %2091 = vmatpush1.msra.mxu0 0.0
        %2092 = vmatprep.subr.mxu0 0.0
        %2093 = vmatpush1.msra.mxu0 0.0
        %2094 = vmatprep.subr.mxu0 0.0
        %2095 = vmatpush1.msra.mxu0 0.0
        %2096 = vmatprep.subr.mxu0 0.0
        %2097 = vmatpush1.msra.mxu0 0.0
        %2098 = vmatprep.subr.mxu0 0.0
        %2099 = vmatpush1.msra.mxu0 0.0
        %2100 = vmatprep.subr.mxu0 0.0
        %2101 = vmatpush1.msra.mxu0 0.0
        %2102 = vmatprep.subr.mxu0 0.0
        %2103 = vmatpush1.msra.mxu0 0.0
        %2104 = vmatprep.subr.mxu0 0.0
        %2105 = vmatpush1.msra.mxu0 0.0
        %2106 = vmatprep.subr.mxu0 0.0
        %2107 = vmatpush1.msra.mxu0 0.0
        %2108 = vmatprep.subr.mxu0 0.0
        %2109 = vmatpush1.msra.mxu0 0.0
        %2110 = vmatprep.subr.mxu0 0.0
        %2111 = vmatpush1.msra.mxu0 0.0
        %2112 = vmatprep.subr.mxu0 0.0
        %2113 = vmatpush1.msra.mxu0 0.0
        %2114 = vmatprep.subr.mxu0 0.0
        %2115 = vmatpush1.msra.mxu0 0.0
        %2116 = vmatprep.subr.mxu0 0.0
        %2117 = vmatpush1.msra.mxu0 0.0
        %2118 = vmatprep.subr.mxu0 0.0
        %2119 = vmatpush1.msra.mxu0 0.0
        %2120 = vmatprep.subr.mxu0 0.0
        %2121 = vmatpush1.msra.mxu0 0.0
        %2122 = vmatprep.subr.mxu0 0.0
        %2123 = vmatpush1.msra.mxu0 0.0
        %2124 = vmatprep.subr.mxu0 0.0
        %2125 = vmatpush1.msra.mxu0 0.0
        %2126 = vmatprep.subr.mxu0 0.0
        %2127 = vmatpush1.msra.mxu0 0.0
        %2128 = vmatprep.subr.mxu0 0.0
        %2129 = vmatpush1.msra.mxu0 0.0
        %2130 = vmatprep.mubr.f32.mxu0 0.0
        %2131 = vmatmul.mubr.f32.gmra.mrb[0].mxu0 %v2064
        %v2132 = vpop.f32.mrb[0].mxu0
        %v2133 = vadd.f32 0.0, %v2132
        %v2134 = vpop.f32.mrb[0].mxu0
        %2135 = vdwg.mxu0
        %v2137 = vsel %vm1710, %v2060, 0
        %2139 = vmatprep.subr.mxu0 0.0
        %2140 = vmatpush1.msra.mxu0 %v1415
        %2141 = vmatprep.subr.mxu0 0.0
        %2142 = vmatpush1.msra.mxu0 0.0
        %2143 = vmatprep.subr.mxu0 0.0
        %2144 = vmatpush1.msra.mxu0 0.0
        %2145 = vmatprep.subr.mxu0 0.0
        %2146 = vmatpush1.msra.mxu0 0.0
        %2147 = vmatprep.subr.mxu0 0.0
        %2148 = vmatpush1.msra.mxu0 0.0
        %2149 = vmatprep.subr.mxu0 0.0
        %2150 = vmatpush1.msra.mxu0 0.0
        %2151 = vmatprep.subr.mxu0 0.0
        %2152 = vmatpush1.msra.mxu0 0.0
        %2153 = vmatprep.subr.mxu0 0.0
        %2154 = vmatpush1.msra.mxu0 0.0
        %2155 = vmatprep.subr.mxu0 0.0
        %2156 = vmatpush1.msra.mxu0 0.0
        %2157 = vmatprep.subr.mxu0 0.0
        %2158 = vmatpush1.msra.mxu0 0.0
        %2159 = vmatprep.subr.mxu0 0.0
        %2160 = vmatpush1.msra.mxu0 0.0
        %2161 = vmatprep.subr.mxu0 0.0
        %2162 = vmatpush1.msra.mxu0 0.0
        %2163 = vmatprep.subr.mxu0 0.0
        %2164 = vmatpush1.msra.mxu0 0.0
        %2165 = vmatprep.subr.mxu0 0.0
        %2166 = vmatpush1.msra.mxu0 0.0
        %2167 = vmatprep.subr.mxu0 0.0
        %2168 = vmatpush1.msra.mxu0 0.0
        %2169 = vmatprep.subr.mxu0 0.0
        %2170 = vmatpush1.msra.mxu0 0.0
        %2171 = vmatprep.subr.mxu0 0.0
        %2172 = vmatpush1.msra.mxu0 0.0
        %2173 = vmatprep.subr.mxu0 0.0
        %2174 = vmatpush1.msra.mxu0 0.0
        %2175 = vmatprep.subr.mxu0 0.0
        %2176 = vmatpush1.msra.mxu0 0.0
        %2177 = vmatprep.subr.mxu0 0.0
        %2178 = vmatpush1.msra.mxu0 0.0
        %2179 = vmatprep.subr.mxu0 0.0
        %2180 = vmatpush1.msra.mxu0 0.0
        %2181 = vmatprep.subr.mxu0 0.0
        %2182 = vmatpush1.msra.mxu0 0.0
        %2183 = vmatprep.subr.mxu0 0.0
        %2184 = vmatpush1.msra.mxu0 0.0
        %2185 = vmatprep.subr.mxu0 0.0
        %2186 = vmatpush1.msra.mxu0 0.0
        %2187 = vmatprep.subr.mxu0 0.0
        %2188 = vmatpush1.msra.mxu0 0.0
        %2189 = vmatprep.subr.mxu0 0.0
        %2190 = vmatpush1.msra.mxu0 0.0
        %2191 = vmatprep.subr.mxu0 0.0
        %2192 = vmatpush1.msra.mxu0 0.0
        %2193 = vmatprep.subr.mxu0 0.0
        %2194 = vmatpush1.msra.mxu0 0.0
        %2195 = vmatprep.subr.mxu0 0.0
        %2196 = vmatpush1.msra.mxu0 0.0
        %2197 = vmatprep.subr.mxu0 0.0
        %2198 = vmatpush1.msra.mxu0 0.0
        %2199 = vmatprep.subr.mxu0 0.0
        %2200 = vmatpush1.msra.mxu0 0.0
        %2201 = vmatprep.subr.mxu0 0.0
        %2202 = vmatpush1.msra.mxu0 0.0
        %2203 = vmatprep.mubr.f32.mxu0 0.0
        %2204 = vmatmul.mubr.f32.gmra.mrb[0].mxu0 %v2137
        %v2205 = vpop.f32.mrb[0].mxu0
        %v2206 = vadd.f32 0.0, %v2205
        %v2207 = vpop.f32.mrb[0].mxu0
        %2208 = vdwg.mxu0
        %v2210 = vsel %vm1710, %v2061, 0
        %2212 = vmatprep.subr.mxu0 0.0
        %2213 = vmatpush1.msra.mxu0 %v1416
        %2214 = vmatprep.subr.mxu0 0.0
        %2215 = vmatpush1.msra.mxu0 0.0
        %2216 = vmatprep.subr.mxu0 0.0
        %2217 = vmatpush1.msra.mxu0 0.0
        %2218 = vmatprep.subr.mxu0 0.0
        %2219 = vmatpush1.msra.mxu0 0.0
        %2220 = vmatprep.subr.mxu0 0.0
        %2221 = vmatpush1.msra.mxu0 0.0
        %2222 = vmatprep.subr.mxu0 0.0
        %2223 = vmatpush1.msra.mxu0 0.0
        %2224 = vmatprep.subr.mxu0 0.0
        %2225 = vmatpush1.msra.mxu0 0.0
        %2226 = vmatprep.subr.mxu0 0.0
        %2227 = vmatpush1.msra.mxu0 0.0
        %2228 = vmatprep.subr.mxu0 0.0
        %2229 = vmatpush1.msra.mxu0 0.0
        %2230 = vmatprep.subr.mxu0 0.0
        %2231 = vmatpush1.msra.mxu0 0.0
        %2232 = vmatprep.subr.mxu0 0.0
        %2233 = vmatpush1.msra.mxu0 0.0
        %2234 = vmatprep.subr.mxu0 0.0
        %2235 = vmatpush1.msra.mxu0 0.0
        %2236 = vmatprep.subr.mxu0 0.0
        %2237 = vmatpush1.msra.mxu0 0.0
        %2238 = vmatprep.subr.mxu0 0.0
        %2239 = vmatpush1.msra.mxu0 0.0
        %2240 = vmatprep.subr.mxu0 0.0
        %2241 = vmatpush1.msra.mxu0 0.0
        %2242 = vmatprep.subr.mxu0 0.0
        %2243 = vmatpush1.msra.mxu0 0.0
        %2244 = vmatprep.subr.mxu0 0.0
        %2245 = vmatpush1.msra.mxu0 0.0
        %2246 = vmatprep.subr.mxu0 0.0
        %2247 = vmatpush1.msra.mxu0 0.0
        %2248 = vmatprep.subr.mxu0 0.0
        %2249 = vmatpush1.msra.mxu0 0.0
        %2250 = vmatprep.subr.mxu0 0.0
        %2251 = vmatpush1.msra.mxu0 0.0
        %2252 = vmatprep.subr.mxu0 0.0
        %2253 = vmatpush1.msra.mxu0 0.0
        %2254 = vmatprep.subr.mxu0 0.0
        %2255 = vmatpush1.msra.mxu0 0.0
        %2256 = vmatprep.subr.mxu0 0.0
        %2257 = vmatpush1.msra.mxu0 0.0
        %2258 = vmatprep.subr.mxu0 0.0
        %2259 = vmatpush1.msra.mxu0 0.0
        %2260 = vmatprep.subr.mxu0 0.0
        %2261 = vmatpush1.msra.mxu0 0.0
        %2262 = vmatprep.subr.mxu0 0.0
        %2263 = vmatpush1.msra.mxu0 0.0
        %2264 = vmatprep.subr.mxu0 0.0
        %2265 = vmatpush1.msra.mxu0 0.0
        %2266 = vmatprep.subr.mxu0 0.0
        %2267 = vmatpush1.msra.mxu0 0.0
        %2268 = vmatprep.subr.mxu0 0.0
        %2269 = vmatpush1.msra.mxu0 0.0
        %2270 = vmatprep.subr.mxu0 0.0
        %2271 = vmatpush1.msra.mxu0 0.0
        %2272 = vmatprep.subr.mxu0 0.0
        %2273 = vmatpush1.msra.mxu0 0.0
        %2274 = vmatprep.subr.mxu0 0.0
        %2275 = vmatpush1.msra.mxu0 0.0
        %2276 = vmatprep.mubr.f32.mxu0 0.0
        %2277 = vmatmul.mubr.f32.gmra.mrb[0].mxu0 %v2210
        %v2278 = vpop.f32.mrb[0].mxu0
        %v2279 = vadd.f32 0.0, %v2278
        %v2280 = vpop.f32.mrb[0].mxu0
        %2281 = vdwg.mxu0
        %v2283 = vsel %vm1710, %v2062, 0
        %2285 = vmatprep.subr.mxu0 0.0
        %2286 = vmatpush1.msra.mxu0 %v1417
        %2287 = vmatprep.subr.mxu0 0.0
        %2288 = vmatpush1.msra.mxu0 0.0
        %2289 = vmatprep.subr.mxu0 0.0
        %2290 = vmatpush1.msra.mxu0 0.0
        %2291 = vmatprep.subr.mxu0 0.0
        %2292 = vmatpush1.msra.mxu0 0.0
        %2293 = vmatprep.subr.mxu0 0.0
        %2294 = vmatpush1.msra.mxu0 0.0
        %2295 = vmatprep.subr.mxu0 0.0
        %2296 = vmatpush1.msra.mxu0 0.0
        %2297 = vmatprep.subr.mxu0 0.0
        %2298 = vmatpush1.msra.mxu0 0.0
        %2299 = vmatprep.subr.mxu0 0.0
        %2300 = vmatpush1.msra.mxu0 0.0
        %2301 = vmatprep.subr.mxu0 0.0
        %2302 = vmatpush1.msra.mxu0 0.0
        %2303 = vmatprep.subr.mxu0 0.0
        %2304 = vmatpush1.msra.mxu0 0.0
        %2305 = vmatprep.subr.mxu0 0.0
        %2306 = vmatpush1.msra.mxu0 0.0
        %2307 = vmatprep.subr.mxu0 0.0
        %2308 = vmatpush1.msra.mxu0 0.0
        %2309 = vmatprep.subr.mxu0 0.0
        %2310 = vmatpush1.msra.mxu0 0.0
        %2311 = vmatprep.subr.mxu0 0.0
        %2312 = vmatpush1.msra.mxu0 0.0
        %2313 = vmatprep.subr.mxu0 0.0
        %2314 = vmatpush1.msra.mxu0 0.0
        %2315 = vmatprep.subr.mxu0 0.0
        %2316 = vmatpush1.msra.mxu0 0.0
        %2317 = vmatprep.subr.mxu0 0.0
        %2318 = vmatpush1.msra.mxu0 0.0
        %2319 = vmatprep.subr.mxu0 0.0
        %2320 = vmatpush1.msra.mxu0 0.0
        %2321 = vmatprep.subr.mxu0 0.0
        %2322 = vmatpush1.msra.mxu0 0.0
        %2323 = vmatprep.subr.mxu0 0.0
        %2324 = vmatpush1.msra.mxu0 0.0
        %2325 = vmatprep.subr.mxu0 0.0
        %2326 = vmatpush1.msra.mxu0 0.0
        %2327 = vmatprep.subr.mxu0 0.0
        %2328 = vmatpush1.msra.mxu0 0.0
        %2329 = vmatprep.subr.mxu0 0.0
        %2330 = vmatpush1.msra.mxu0 0.0
        %2331 = vmatprep.subr.mxu0 0.0
        %2332 = vmatpush1.msra.mxu0 0.0
        %2333 = vmatprep.subr.mxu0 0.0
        %2334 = vmatpush1.msra.mxu0 0.0
        %2335 = vmatprep.subr.mxu0 0.0
        %2336 = vmatpush1.msra.mxu0 0.0
        %2337 = vmatprep.subr.mxu0 0.0
        %2338 = vmatpush1.msra.mxu0 0.0
        %2339 = vmatprep.subr.mxu0 0.0
        %2340 = vmatpush1.msra.mxu0 0.0
        %2341 = vmatprep.subr.mxu0 0.0
        %2342 = vmatpush1.msra.mxu0 0.0
        %2343 = vmatprep.subr.mxu0 0.0
        %2344 = vmatpush1.msra.mxu0 0.0
        %2345 = vmatprep.subr.mxu0 0.0
        %2346 = vmatpush1.msra.mxu0 0.0
        %2347 = vmatprep.subr.mxu0 0.0
        %2348 = vmatpush1.msra.mxu0 0.0
        %2349 = vmatprep.mubr.f32.mxu0 0.0
        %2350 = vmatmul.mubr.f32.gmra.mrb[0].mxu0 %v2283
        %v2351 = vpop.f32.mrb[0].mxu0
        %v2352 = vadd.f32 0.0, %v2351
        %v2353 = vpop.f32.mrb[0].mxu0
        %2354 = vdwg.mxu0
        %v2355 = vcombine.low %v2133, %v2279
        %v2356 = vcombine.high %v2133, %v2279
        %v2358 = vunpack.c.l.s4 1983009808
        %v2359 = vunpack.c.0.s8 %v2358
        %v2360 = vlaneseq
        %v2361 = vshrl.u32 %v2360, 7
        %v2362 = vsub.s32 %v2359, %v2361
        %v2363 = vrot.slane %v2355, %v2362
        %v2365 = vunpack.c.l.s4 1983009808
        %v2366 = vunpack.c.0.s8 %v2365
        %v2367 = vlaneseq
        %v2368 = vshrl.u32 %v2367, 7
        %v2369 = vsub.s32 %v2366, %v2368
        %v2370 = vrot.slane %v2356, %v2369
        %v2371 = vcombine.low %v2206, %v2352
        %v2372 = vcombine.high %v2206, %v2352
        %v2374 = vunpack.c.l.s4 1983009808
        %v2375 = vunpack.c.0.s8 %v2374
        %v2376 = vlaneseq
        %v2377 = vshrl.u32 %v2376, 7
        %v2378 = vsub.s32 %v2375, %v2377
        %v2379 = vrot.slane %v2371, %v2378
        %v2381 = vunpack.c.l.s4 1983009808
        %v2382 = vunpack.c.0.s8 %v2381
        %v2383 = vlaneseq
        %v2384 = vshrl.u32 %v2383, 7
        %v2385 = vsub.s32 %v2382, %v2384
        %v2386 = vrot.slane %v2372, %v2385
        %v2387 = vcombine.low %v2363, %v2379
        %v2388 = vcombine.high %v2363, %v2379
        %v2390 = vunpack.c.l.s4 1934713408
        %v2391 = vunpack.c.0.s8 %v2390
        %v2392 = vlaneseq
        %v2393 = vshrl.u32 %v2392, 7
        %v2394 = vsub.s32 %v2391, %v2393
        %v2395 = vrot.slane %v2387, %v2394
        %v2397 = vunpack.c.l.s4 1934713408
        %v2398 = vunpack.c.0.s8 %v2397
        %v2399 = vlaneseq
        %v2400 = vshrl.u32 %v2399, 7
        %v2401 = vsub.s32 %v2398, %v2400
        %v2402 = vrot.slane %v2388, %v2401
        %v2403 = vcombine.low %v2370, %v2386
        %v2404 = vcombine.high %v2370, %v2386
        %v2406 = vunpack.c.l.s4 1934713408
        %v2407 = vunpack.c.0.s8 %v2406
        %v2408 = vlaneseq
        %v2409 = vshrl.u32 %v2408, 7
        %v2410 = vsub.s32 %v2407, %v2409
        %v2411 = vrot.slane %v2403, %v2410
        %v2413 = vunpack.c.l.s4 1934713408
        %v2414 = vunpack.c.0.s8 %v2413
        %v2415 = vlaneseq
        %v2416 = vshrl.u32 %v2415, 7
        %v2417 = vsub.s32 %v2414, %v2416
        %v2418 = vrot.slane %v2404, %v2417
        %v2419 = vcombine.high %v2395, 0.0
        %v2420 = vcombine.high %v2402, 0.0
        %v2421 = vcombine.high %v2411, 0.0
        %v2422 = vcombine.high %v2418, 0.0
        %v2423 = vcombine.low %v2395, %v2402
        %v2425 = vunpack.c.l.s4 1983009808
        %v2426 = vunpack.c.0.s8 %v2425
        %v2427 = vlaneseq
        %v2428 = vshrl.u32 %v2427, 7
        %v2429 = vsub.s32 %v2426, %v2428
        %v2430 = vrot.slane %v2423, %v2429
        %v2431 = vcombine.low %v2419, %v2420
        %v2433 = vunpack.c.l.s4 1983009808
        %v2434 = vunpack.c.0.s8 %v2433
        %v2435 = vlaneseq
        %v2436 = vshrl.u32 %v2435, 7
        %v2437 = vsub.s32 %v2434, %v2436
        %v2438 = vrot.slane %v2431, %v2437
        %v2439 = vcombine.low %v2411, %v2418
        %v2441 = vunpack.c.l.s4 1983009808
        %v2442 = vunpack.c.0.s8 %v2441
        %v2443 = vlaneseq
        %v2444 = vshrl.u32 %v2443, 7
        %v2445 = vsub.s32 %v2442, %v2444
        %v2446 = vrot.slane %v2439, %v2445
        %v2447 = vcombine.low %v2421, %v2422
        %v2449 = vunpack.c.l.s4 1983009808
        %v2450 = vunpack.c.0.s8 %v2449
        %v2451 = vlaneseq
        %v2452 = vshrl.u32 %v2451, 7
        %v2453 = vsub.s32 %v2450, %v2452
        %v2454 = vrot.slane %v2447, %v2453
        %v2455 = vcombine.low %v2430, %v2438
        %v2456 = vcombine.high %v2430, %v2438
        %v2458 = vunpack.c.l.s4 1934713408
        %v2459 = vunpack.c.0.s8 %v2458
        %v2460 = vlaneseq
        %v2461 = vshrl.u32 %v2460, 7
        %v2462 = vsub.s32 %v2459, %v2461
        %v2463 = vrot.slane %v2455, %v2462
        %v2465 = vunpack.c.l.s4 1934713408
        %v2466 = vunpack.c.0.s8 %v2465
        %v2467 = vlaneseq
        %v2468 = vshrl.u32 %v2467, 7
        %v2469 = vsub.s32 %v2466, %v2468
        %v2470 = vrot.slane %v2456, %v2469
        %v2471 = vcombine.low %v2446, %v2454
        %v2472 = vcombine.high %v2446, %v2454
        %v2474 = vunpack.c.l.s4 1934713408
        %v2475 = vunpack.c.0.s8 %v2474
        %v2476 = vlaneseq
        %v2477 = vshrl.u32 %v2476, 7
        %v2478 = vsub.s32 %v2475, %v2477
        %v2479 = vrot.slane %v2471, %v2478
        %v2481 = vunpack.c.l.s4 1934713408
        %v2482 = vunpack.c.0.s8 %v2481
        %v2483 = vlaneseq
        %v2484 = vshrl.u32 %v2483, 7
        %v2485 = vsub.s32 %v2482, %v2484
        %v2486 = vrot.slane %v2472, %v2485
        %v2487 = vcombine.low %v2463, %v2479
        %v2488 = vcombine.high %v2463, %v2479
        %v2489 = vcombine.low %v2470, %v2486
        %v2490 = vcombine.high %v2470, %v2486
        %2492 = vrot.lane.b32.xlu0 %v2488, 8
        %v2493 = vpop.permute.xlu0 %2492
        %2496 = vrot.lane.b32.xlu0 %v2489, 16
        %v2497 = vpop.permute.xlu0 %2496
        %2500 = vrot.lane.b32.xlu0 %v2490, 24
        %v2501 = vpop.permute.xlu0 %2500
        %v2503 = vsel %vm1710, %v2487, %v2493
        %vm2504 = vcmask 130048
        %v2505 = vsel %vm2504, %v2503, %v2497
        %vm2506 = vcmask 195584
        %v2507 = vsel %vm2506, %v2505, %v2501
        %v2509 = vlaneseq
        %v2510 = vshrl.u32 %v2509, 7
        %v2511 = vsub.s32 0, %v2510
        %v2512 = vrot.slane %v1057, %v2511
        %v2515 = vsel %vm1058, %v2507, 0
        %2517 = vmatprep.subr.mxu0 0.0
        %2518 = vmatpush1.msra.mxu0 %v1053
        %2519 = vmatprep.subr.mxu0 0.0
        %2520 = vmatpush1.msra.mxu0 %v1054
        %2521 = vmatprep.subr.mxu0 0.0
        %2522 = vmatpush1.msra.mxu0 %v1055
        %2523 = vmatprep.subr.mxu0 0.0
        %2524 = vmatpush1.msra.mxu0 %v1056
        %2525 = vmatprep.subr.mxu0 0.0
        %2526 = vmatpush1.msra.mxu0 0.0
        %2527 = vmatprep.subr.mxu0 0.0
        %2528 = vmatpush1.msra.mxu0 0.0
        %2529 = vmatprep.subr.mxu0 0.0
        %2530 = vmatpush1.msra.mxu0 0.0
        %2531 = vmatprep.subr.mxu0 0.0
        %2532 = vmatpush1.msra.mxu0 0.0
        %2533 = vmatprep.subr.mxu0 0.0
        %2534 = vmatpush1.msra.mxu0 0.0
        %2535 = vmatprep.subr.mxu0 0.0
        %2536 = vmatpush1.msra.mxu0 0.0
        %2537 = vmatprep.subr.mxu0 0.0
        %2538 = vmatpush1.msra.mxu0 0.0
        %2539 = vmatprep.subr.mxu0 0.0
        %2540 = vmatpush1.msra.mxu0 0.0
        %2541 = vmatprep.subr.mxu0 0.0
        %2542 = vmatpush1.msra.mxu0 0.0
        %2543 = vmatprep.subr.mxu0 0.0
        %2544 = vmatpush1.msra.mxu0 0.0
        %2545 = vmatprep.subr.mxu0 0.0
        %2546 = vmatpush1.msra.mxu0 0.0
        %2547 = vmatprep.subr.mxu0 0.0
        %2548 = vmatpush1.msra.mxu0 0.0
        %2549 = vmatprep.subr.mxu0 0.0
        %2550 = vmatpush1.msra.mxu0 0.0
        %2551 = vmatprep.subr.mxu0 0.0
        %2552 = vmatpush1.msra.mxu0 0.0
        %2553 = vmatprep.subr.mxu0 0.0
        %2554 = vmatpush1.msra.mxu0 0.0
        %2555 = vmatprep.subr.mxu0 0.0
        %2556 = vmatpush1.msra.mxu0 0.0
        %2557 = vmatprep.subr.mxu0 0.0
        %2558 = vmatpush1.msra.mxu0 0.0
        %2559 = vmatprep.subr.mxu0 0.0
        %2560 = vmatpush1.msra.mxu0 0.0
        %2561 = vmatprep.subr.mxu0 0.0
        %2562 = vmatpush1.msra.mxu0 0.0
        %2563 = vmatprep.subr.mxu0 0.0
        %2564 = vmatpush1.msra.mxu0 0.0
        %2565 = vmatprep.subr.mxu0 0.0
        %2566 = vmatpush1.msra.mxu0 0.0
        %2567 = vmatprep.subr.mxu0 0.0
        %2568 = vmatpush1.msra.mxu0 0.0
        %2569 = vmatprep.subr.mxu0 0.0
        %2570 = vmatpush1.msra.mxu0 0.0
        %2571 = vmatprep.subr.mxu0 0.0
        %2572 = vmatpush1.msra.mxu0 0.0
        %2573 = vmatprep.subr.mxu0 0.0
        %2574 = vmatpush1.msra.mxu0 0.0
        %2575 = vmatprep.subr.mxu0 0.0
        %2576 = vmatpush1.msra.mxu0 0.0
        %2577 = vmatprep.subr.mxu0 0.0
        %2578 = vmatpush1.msra.mxu0 0.0
        %2579 = vmatprep.subr.mxu0 0.0
        %2580 = vmatpush1.msra.mxu0 0.0
        %2581 = vmatprep.mubr.f32.mxu0 0.0
        %2582 = vmatmul.mubr.f32.gmra.mrb[0].mxu0 %v2515
        %v2583 = vpop.f32.mrb[0].mxu0
        %v2584 = vadd.f32 %v2512, %v2583
        %v2585 = vpop.f32.mrb[0].mxu0
        %2586 = vdwg.mxu0
        %v2587 = vadd.f32 %v2584, %v1028
        %v2588 = vld [vmem:[#allocation13] sm:$0x1]
        %v2589 = vld [vmem:[#allocation14] sm:$0x1]
        %v2590 = vsel %vm1058, %v2587, 0.0
        %2591 = vadd.xlane.f32.xlu0 %v2590
        %v2592 = vpop.xlane.xlu0 %2591
        %v2593 = vrcp.pop 32.0
        %v2594 = vmul.f32 %v2592, %v2593
        %v2595 = vsub.f32 %v2587, %v2594
        %v2596 = vmul.f32 %v2595, %v2595
        %v2597 = vsel %vm1058, %v2596, 0.0
        %2598 = vadd.xlane.f32.xlu0 %v2597
        %v2599 = vpop.xlane.xlu0 %2598
        %v2600 = vmul.f32 %v2599, %v2593
        %v2601 = vadd.f32 %v2600, 1e-05
        %v2602 = vrsqrt.pop %v2601
        %v2603 = vmul.f32 %v2595, %v2602
        %v2605 = vlaneseq
        %v2606 = vshrl.u32 %v2605, 7
        %v2607 = vsub.s32 0, %v2606
        %v2608 = vrot.slane %v2588, %v2607
        %v2610 = vmul.f32 %v2603, %v2608
        %v2612 = vlaneseq
        %v2613 = vshrl.u32 %v2612, 7
        %v2614 = vsub.s32 0, %v2613
        %v2615 = vrot.slane %v2589, %v2614
        %v2617 = vadd.f32 %v2610, %v2615
        %v2618 = vld [vmem:[#allocation16] sm:$0xff]
        %v2619 = vld [vmem:[#allocation16 + $0x8] sm:$0xff]
        %v2620 = vld [vmem:[#allocation16 + $0x10] sm:$0xff]
        %v2621 = vld [vmem:[#allocation16 + $0x18] sm:$0xff]
        %v2622 = vld [vmem:[%s13] sm:$0xff]
        %v2623 = vld [vmem:[%s13 + $0x8] sm:$0xff]
        %v2624 = vld [vmem:[%s13 + $0x10] sm:$0xff]
        %v2625 = vld [vmem:[%s13 + $0x18] sm:$0xff]
        %v2626 = vld [vmem:[%s12] sm:$0xff]
        %v2627 = vld [vmem:[%s12 + $0x8] sm:$0xff]
        %v2628 = vld [vmem:[%s12 + $0x10] sm:$0xff]
        %v2629 = vld [vmem:[%s12 + $0x18] sm:$0xff]
        %v2630 = vld [vmem:[#allocation17] sm:$0xff]
        %v2631 = vld [vmem:[#allocation17 + $0x8] sm:$0xff]
        %v2632 = vld [vmem:[#allocation17 + $0x10] sm:$0xff]
        %v2633 = vld [vmem:[#allocation17 + $0x18] sm:$0xff]
        %v2634 = vld [vmem:[#allocation19] sm:$0x1]
        %v2636 = vsel %vm1058, %v1029, 0
        %2638 = vmatprep.subr.mxu0 0.0
        %2639 = vmatpush1.msra.mxu0 %v2618
        %2640 = vmatprep.subr.mxu0 0.0
        %2641 = vmatpush1.msra.mxu0 %v2619
        %2642 = vmatprep.subr.mxu0 0.0
        %2643 = vmatpush1.msra.mxu0 %v2620
        %2644 = vmatprep.subr.mxu0 0.0
        %2645 = vmatpush1.msra.mxu0 %v2621
        %2646 = vmatprep.subr.mxu0 0.0
        %2647 = vmatpush1.msra.mxu0 0.0
        %2648 = vmatprep.subr.mxu0 0.0
        %2649 = vmatpush1.msra.mxu0 0.0
        %2650 = vmatprep.subr.mxu0 0.0
        %2651 = vmatpush1.msra.mxu0 0.0
        %2652 = vmatprep.subr.mxu0 0.0
        %2653 = vmatpush1.msra.mxu0 0.0
        %2654 = vmatprep.subr.mxu0 0.0
        %2655 = vmatpush1.msra.mxu0 0.0
        %2656 = vmatprep.subr.mxu0 0.0
        %2657 = vmatpush1.msra.mxu0 0.0
        %2658 = vmatprep.subr.mxu0 0.0
        %2659 = vmatpush1.msra.mxu0 0.0
        %2660 = vmatprep.subr.mxu0 0.0
        %2661 = vmatpush1.msra.mxu0 0.0
        %2662 = vmatprep.subr.mxu0 0.0
        %2663 = vmatpush1.msra.mxu0 0.0
        %2664 = vmatprep.subr.mxu0 0.0
        %2665 = vmatpush1.msra.mxu0 0.0
        %2666 = vmatprep.subr.mxu0 0.0
        %2667 = vmatpush1.msra.mxu0 0.0
        %2668 = vmatprep.subr.mxu0 0.0
        %2669 = vmatpush1.msra.mxu0 0.0
        %2670 = vmatprep.subr.mxu0 0.0
        %2671 = vmatpush1.msra.mxu0 0.0
        %2672 = vmatprep.subr.mxu0 0.0
        %2673 = vmatpush1.msra.mxu0 0.0
        %2674 = vmatprep.subr.mxu0 0.0
        %2675 = vmatpush1.msra.mxu0 0.0
        %2676 = vmatprep.subr.mxu0 0.0
        %2677 = vmatpush1.msra.mxu0 0.0
        %2678 = vmatprep.subr.mxu0 0.0
        %2679 = vmatpush1.msra.mxu0 0.0
        %2680 = vmatprep.subr.mxu0 0.0
        %2681 = vmatpush1.msra.mxu0 0.0
        %2682 = vmatprep.subr.mxu0 0.0
        %2683 = vmatpush1.msra.mxu0 0.0
        %2684 = vmatprep.subr.mxu0 0.0
        %2685 = vmatpush1.msra.mxu0 0.0
        %2686 = vmatprep.subr.mxu0 0.0
        %2687 = vmatpush1.msra.mxu0 0.0
        %2688 = vmatprep.subr.mxu0 0.0
        %2689 = vmatpush1.msra.mxu0 0.0
        %2690 = vmatprep.subr.mxu0 0.0
        %2691 = vmatpush1.msra.mxu0 0.0
        %2692 = vmatprep.subr.mxu0 0.0
        %2693 = vmatpush1.msra.mxu0 0.0
        %2694 = vmatprep.subr.mxu0 0.0
        %2695 = vmatpush1.msra.mxu0 0.0
        %2696 = vmatprep.subr.mxu0 0.0
        %2697 = vmatpush1.msra.mxu0 0.0
        %2698 = vmatprep.subr.mxu0 0.0
        %2699 = vmatpush1.msra.mxu0 0.0
        %2700 = vmatprep.subr.mxu0 0.0
        %2701 = vmatpush1.msra.mxu0 0.0
        %2702 = vmatprep.mubr.f32.mxu0 0.0
        %2703 = vmatmul.mubr.f32.gmra.mrb[0].mxu0 %v2636
        %v2704 = vpop.f32.mrb[0].mxu0
        %v2705 = vadd.f32 0.0, %v2704
        %v2706 = vpop.f32.mrb[0].mxu0
        %2707 = vdwg.mxu0
        %v2709 = vsel %vm1058, %v1030, 0
        %2711 = vmatprep.subr.mxu0 0.0
        %2712 = vmatpush1.msra.mxu0 %v2622
        %2713 = vmatprep.subr.mxu0 0.0
        %2714 = vmatpush1.msra.mxu0 %v2623
        %2715 = vmatprep.subr.mxu0 0.0
        %2716 = vmatpush1.msra.mxu0 %v2624
        %2717 = vmatprep.subr.mxu0 0.0
        %2718 = vmatpush1.msra.mxu0 %v2625
        %2719 = vmatprep.subr.mxu0 0.0
        %2720 = vmatpush1.msra.mxu0 0.0
        %2721 = vmatprep.subr.mxu0 0.0
        %2722 = vmatpush1.msra.mxu0 0.0
        %2723 = vmatprep.subr.mxu0 0.0
        %2724 = vmatpush1.msra.mxu0 0.0
        %2725 = vmatprep.subr.mxu0 0.0
        %2726 = vmatpush1.msra.mxu0 0.0
        %2727 = vmatprep.subr.mxu0 0.0
        %2728 = vmatpush1.msra.mxu0 0.0
        %2729 = vmatprep.subr.mxu0 0.0
        %2730 = vmatpush1.msra.mxu0 0.0
        %2731 = vmatprep.subr.mxu0 0.0
        %2732 = vmatpush1.msra.mxu0 0.0
        %2733 = vmatprep.subr.mxu0 0.0
        %2734 = vmatpush1.msra.mxu0 0.0
        %2735 = vmatprep.subr.mxu0 0.0
        %2736 = vmatpush1.msra.mxu0 0.0
        %2737 = vmatprep.subr.mxu0 0.0
        %2738 = vmatpush1.msra.mxu0 0.0
        %2739 = vmatprep.subr.mxu0 0.0
        %2740 = vmatpush1.msra.mxu0 0.0
        %2741 = vmatprep.subr.mxu0 0.0
        %2742 = vmatpush1.msra.mxu0 0.0
        %2743 = vmatprep.subr.mxu0 0.0
        %2744 = vmatpush1.msra.mxu0 0.0
        %2745 = vmatprep.subr.mxu0 0.0
        %2746 = vmatpush1.msra.mxu0 0.0
        %2747 = vmatprep.subr.mxu0 0.0
        %2748 = vmatpush1.msra.mxu0 0.0
        %2749 = vmatprep.subr.mxu0 0.0
        %2750 = vmatpush1.msra.mxu0 0.0
        %2751 = vmatprep.subr.mxu0 0.0
        %2752 = vmatpush1.msra.mxu0 0.0
        %2753 = vmatprep.subr.mxu0 0.0
        %2754 = vmatpush1.msra.mxu0 0.0
        %2755 = vmatprep.subr.mxu0 0.0
        %2756 = vmatpush1.msra.mxu0 0.0
        %2757 = vmatprep.subr.mxu0 0.0
        %2758 = vmatpush1.msra.mxu0 0.0
        %2759 = vmatprep.subr.mxu0 0.0
        %2760 = vmatpush1.msra.mxu0 0.0
        %2761 = vmatprep.subr.mxu0 0.0
        %2762 = vmatpush1.msra.mxu0 0.0
        %2763 = vmatprep.subr.mxu0 0.0
        %2764 = vmatpush1.msra.mxu0 0.0
        %2765 = vmatprep.subr.mxu0 0.0
        %2766 = vmatpush1.msra.mxu0 0.0
        %2767 = vmatprep.subr.mxu0 0.0
        %2768 = vmatpush1.msra.mxu0 0.0
        %2769 = vmatprep.subr.mxu0 0.0
        %2770 = vmatpush1.msra.mxu0 0.0
        %2771 = vmatprep.subr.mxu0 0.0
        %2772 = vmatpush1.msra.mxu0 0.0
        %2773 = vmatprep.subr.mxu0 0.0
        %2774 = vmatpush1.msra.mxu0 0.0
        %2775 = vmatprep.mubr.f32.mxu0 0.0
        %2776 = vmatmul.mubr.f32.gmra.mrb[0].mxu0 %v2709
        %v2777 = vpop.f32.mrb[0].mxu0
        %v2778 = vadd.f32 0.0, %v2777
        %v2779 = vpop.f32.mrb[0].mxu0
        %2780 = vdwg.mxu0
        %v2782 = vsel %vm1058, %v2617, 0
        %2784 = vmatprep.subr.mxu0 0.0
        %2785 = vmatpush1.msra.mxu0 %v2626
        %2786 = vmatprep.subr.mxu0 0.0
        %2787 = vmatpush1.msra.mxu0 %v2627
        %2788 = vmatprep.subr.mxu0 0.0
        %2789 = vmatpush1.msra.mxu0 %v2628
        %2790 = vmatprep.subr.mxu0 0.0
        %2791 = vmatpush1.msra.mxu0 %v2629
        %2792 = vmatprep.subr.mxu0 0.0
        %2793 = vmatpush1.msra.mxu0 0.0
        %2794 = vmatprep.subr.mxu0 0.0
        %2795 = vmatpush1.msra.mxu0 0.0
        %2796 = vmatprep.subr.mxu0 0.0
        %2797 = vmatpush1.msra.mxu0 0.0
        %2798 = vmatprep.subr.mxu0 0.0
        %2799 = vmatpush1.msra.mxu0 0.0
        %2800 = vmatprep.subr.mxu0 0.0
        %2801 = vmatpush1.msra.mxu0 0.0
        %2802 = vmatprep.subr.mxu0 0.0
        %2803 = vmatpush1.msra.mxu0 0.0
        %2804 = vmatprep.subr.mxu0 0.0
        %2805 = vmatpush1.msra.mxu0 0.0
        %2806 = vmatprep.subr.mxu0 0.0
        %2807 = vmatpush1.msra.mxu0 0.0
        %2808 = vmatprep.subr.mxu0 0.0
        %2809 = vmatpush1.msra.mxu0 0.0
        %2810 = vmatprep.subr.mxu0 0.0
        %2811 = vmatpush1.msra.mxu0 0.0
        %2812 = vmatprep.subr.mxu0 0.0
        %2813 = vmatpush1.msra.mxu0 0.0
        %2814 = vmatprep.subr.mxu0 0.0
        %2815 = vmatpush1.msra.mxu0 0.0
        %2816 = vmatprep.subr.mxu0 0.0
        %2817 = vmatpush1.msra.mxu0 0.0
        %2818 = vmatprep.subr.mxu0 0.0
        %2819 = vmatpush1.msra.mxu0 0.0
        %2820 = vmatprep.subr.mxu0 0.0
        %2821 = vmatpush1.msra.mxu0 0.0
        %2822 = vmatprep.subr.mxu0 0.0
        %2823 = vmatpush1.msra.mxu0 0.0
        %2824 = vmatprep.subr.mxu0 0.0
        %2825 = vmatpush1.msra.mxu0 0.0
        %2826 = vmatprep.subr.mxu0 0.0
        %2827 = vmatpush1.msra.mxu0 0.0
        %2828 = vmatprep.subr.mxu0 0.0
        %2829 = vmatpush1.msra.mxu0 0.0
        %2830 = vmatprep.subr.mxu0 0.0
        %2831 = vmatpush1.msra.mxu0 0.0
        %2832 = vmatprep.subr.mxu0 0.0
        %2833 = vmatpush1.msra.mxu0 0.0
        %2834 = vmatprep.subr.mxu0 0.0
        %2835 = vmatpush1.msra.mxu0 0.0
        %2836 = vmatprep.subr.mxu0 0.0
        %2837 = vmatpush1.msra.mxu0 0.0
        %2838 = vmatprep.subr.mxu0 0.0
        %2839 = vmatpush1.msra.mxu0 0.0
        %2840 = vmatprep.subr.mxu0 0.0
        %2841 = vmatpush1.msra.mxu0 0.0
        %2842 = vmatprep.subr.mxu0 0.0
        %2843 = vmatpush1.msra.mxu0 0.0
        %2844 = vmatprep.subr.mxu0 0.0
        %2845 = vmatpush1.msra.mxu0 0.0
        %2846 = vmatprep.subr.mxu0 0.0
        %2847 = vmatpush1.msra.mxu0 0.0
        %2848 = vmatprep.mubr.f32.mxu0 0.0
        %2849 = vmatmul.mubr.f32.gmra.mrb[0].mxu0 %v2782
        %v2850 = vpop.f32.mrb[0].mxu0
        %v2851 = vadd.f32 0.0, %v2850
        %v2852 = vpop.f32.mrb[0].mxu0
        %2853 = vdwg.mxu0
        %2855 = vrot.lane.b32.xlu0 %v2705, 120
        %v2856 = vpop.permute.xlu0 %2855
        %2858 = vrot.lane.b32.xlu0 %v2705, 112
        %v2859 = vpop.permute.xlu0 %2858
        %2861 = vrot.lane.b32.xlu0 %v2705, 104
        %v2862 = vpop.permute.xlu0 %2861
        %v2864 = vcombine.low %v2705, %v2859
        %v2865 = vcombine.high %v2705, %v2859
        %v2867 = vunpack.c.l.s4 1983009808
        %v2868 = vunpack.c.0.s8 %v2867
        %v2869 = vlaneseq
        %v2870 = vshrl.u32 %v2869, 7
        %v2871 = vsub.s32 %v2868, %v2870
        %v2872 = vrot.slane %v2864, %v2871
        %v2874 = vunpack.c.l.s4 1983009808
        %v2875 = vunpack.c.0.s8 %v2874
        %v2876 = vlaneseq
        %v2877 = vshrl.u32 %v2876, 7
        %v2878 = vsub.s32 %v2875, %v2877
        %v2879 = vrot.slane %v2865, %v2878
        %v2880 = vcombine.low %v2856, %v2862
        %v2881 = vcombine.high %v2856, %v2862
        %v2883 = vunpack.c.l.s4 1983009808
        %v2884 = vunpack.c.0.s8 %v2883
        %v2885 = vlaneseq
        %v2886 = vshrl.u32 %v2885, 7
        %v2887 = vsub.s32 %v2884, %v2886
        %v2888 = vrot.slane %v2880, %v2887
        %v2890 = vunpack.c.l.s4 1983009808
        %v2891 = vunpack.c.0.s8 %v2890
        %v2892 = vlaneseq
        %v2893 = vshrl.u32 %v2892, 7
        %v2894 = vsub.s32 %v2891, %v2893
        %v2895 = vrot.slane %v2881, %v2894
        %v2896 = vcombine.low %v2872, %v2888
        %v2897 = vcombine.high %v2872, %v2888
        %v2899 = vunpack.c.l.s4 1934713408
        %v2900 = vunpack.c.0.s8 %v2899
        %v2901 = vlaneseq
        %v2902 = vshrl.u32 %v2901, 7
        %v2903 = vsub.s32 %v2900, %v2902
        %v2904 = vrot.slane %v2896, %v2903
        %v2906 = vunpack.c.l.s4 1934713408
        %v2907 = vunpack.c.0.s8 %v2906
        %v2908 = vlaneseq
        %v2909 = vshrl.u32 %v2908, 7
        %v2910 = vsub.s32 %v2907, %v2909
        %v2911 = vrot.slane %v2897, %v2910
        %v2912 = vcombine.low %v2879, %v2895
        %v2913 = vcombine.high %v2879, %v2895
        %v2915 = vunpack.c.l.s4 1934713408
        %v2916 = vunpack.c.0.s8 %v2915
        %v2917 = vlaneseq
        %v2918 = vshrl.u32 %v2917, 7
        %v2919 = vsub.s32 %v2916, %v2918
        %v2920 = vrot.slane %v2912, %v2919
        %v2922 = vunpack.c.l.s4 1934713408
        %v2923 = vunpack.c.0.s8 %v2922
        %v2924 = vlaneseq
        %v2925 = vshrl.u32 %v2924, 7
        %v2926 = vsub.s32 %v2923, %v2925
        %v2927 = vrot.slane %v2913, %v2926
        %v2928 = vcombine.high %v2904, 0.0
        %v2929 = vcombine.high %v2911, 0.0
        %v2930 = vcombine.high %v2920, 0.0
        %v2931 = vcombine.high %v2927, 0.0
        %v2932 = vcombine.low %v2904, %v2911
        %v2934 = vunpack.c.l.s4 1983009808
        %v2935 = vunpack.c.0.s8 %v2934
        %v2936 = vlaneseq
        %v2937 = vshrl.u32 %v2936, 7
        %v2938 = vsub.s32 %v2935, %v2937
        %v2939 = vrot.slane %v2932, %v2938
        %v2940 = vcombine.low %v2928, %v2929
        %v2942 = vunpack.c.l.s4 1983009808
        %v2943 = vunpack.c.0.s8 %v2942
        %v2944 = vlaneseq
        %v2945 = vshrl.u32 %v2944, 7
        %v2946 = vsub.s32 %v2943, %v2945
        %v2947 = vrot.slane %v2940, %v2946
        %v2948 = vcombine.low %v2920, %v2927
        %v2950 = vunpack.c.l.s4 1983009808
        %v2951 = vunpack.c.0.s8 %v2950
        %v2952 = vlaneseq
        %v2953 = vshrl.u32 %v2952, 7
        %v2954 = vsub.s32 %v2951, %v2953
        %v2955 = vrot.slane %v2948, %v2954
        %v2956 = vcombine.low %v2930, %v2931
        %v2958 = vunpack.c.l.s4 1983009808
        %v2959 = vunpack.c.0.s8 %v2958
        %v2960 = vlaneseq
        %v2961 = vshrl.u32 %v2960, 7
        %v2962 = vsub.s32 %v2959, %v2961
        %v2963 = vrot.slane %v2956, %v2962
        %v2964 = vcombine.low %v2939, %v2947
        %v2965 = vcombine.high %v2939, %v2947
        %v2967 = vunpack.c.l.s4 1934713408
        %v2968 = vunpack.c.0.s8 %v2967
        %v2969 = vlaneseq
        %v2970 = vshrl.u32 %v2969, 7
        %v2971 = vsub.s32 %v2968, %v2970
        %v2972 = vrot.slane %v2964, %v2971
        %v2974 = vunpack.c.l.s4 1934713408
        %v2975 = vunpack.c.0.s8 %v2974
        %v2976 = vlaneseq
        %v2977 = vshrl.u32 %v2976, 7
        %v2978 = vsub.s32 %v2975, %v2977
        %v2979 = vrot.slane %v2965, %v2978
        %v2980 = vcombine.low %v2955, %v2963
        %v2981 = vcombine.high %v2955, %v2963
        %v2983 = vunpack.c.l.s4 1934713408
        %v2984 = vunpack.c.0.s8 %v2983
        %v2985 = vlaneseq
        %v2986 = vshrl.u32 %v2985, 7
        %v2987 = vsub.s32 %v2984, %v2986
        %v2988 = vrot.slane %v2980, %v2987
        %v2990 = vunpack.c.l.s4 1934713408
        %v2991 = vunpack.c.0.s8 %v2990
        %v2992 = vlaneseq
        %v2993 = vshrl.u32 %v2992, 7
        %v2994 = vsub.s32 %v2991, %v2993
        %v2995 = vrot.slane %v2981, %v2994
        %v2996 = vcombine.low %v2972, %v2988
        %v2997 = vcombine.high %v2972, %v2988
        %v2998 = vcombine.low %v2979, %v2995
        %v2999 = vcombine.high %v2979, %v2995
        %3001 = vrot.lane.b32.xlu0 %v2778, 120
        %v3002 = vpop.permute.xlu0 %3001
        %3004 = vrot.lane.b32.xlu0 %v2778, 112
        %v3005 = vpop.permute.xlu0 %3004
        %3007 = vrot.lane.b32.xlu0 %v2778, 104
        %v3008 = vpop.permute.xlu0 %3007
        %v3010 = vcombine.low %v2778, %v3005
        %v3011 = vcombine.high %v2778, %v3005
        %v3013 = vunpack.c.l.s4 1983009808
        %v3014 = vunpack.c.0.s8 %v3013
        %v3015 = vlaneseq
        %v3016 = vshrl.u32 %v3015, 7
        %v3017 = vsub.s32 %v3014, %v3016
        %v3018 = vrot.slane %v3010, %v3017
        %v3020 = vunpack.c.l.s4 1983009808
        %v3021 = vunpack.c.0.s8 %v3020
        %v3022 = vlaneseq
        %v3023 = vshrl.u32 %v3022, 7
        %v3024 = vsub.s32 %v3021, %v3023
        %v3025 = vrot.slane %v3011, %v3024
        %v3026 = vcombine.low %v3002, %v3008
        %v3027 = vcombine.high %v3002, %v3008
        %v3029 = vunpack.c.l.s4 1983009808
        %v3030 = vunpack.c.0.s8 %v3029
        %v3031 = vlaneseq
        %v3032 = vshrl.u32 %v3031, 7
        %v3033 = vsub.s32 %v3030, %v3032
        %v3034 = vrot.slane %v3026, %v3033
        %v3036 = vunpack.c.l.s4 1983009808
        %v3037 = vunpack.c.0.s8 %v3036
        %v3038 = vlaneseq
        %v3039 = vshrl.u32 %v3038, 7
        %v3040 = vsub.s32 %v3037, %v3039
        %v3041 = vrot.slane %v3027, %v3040
        %v3042 = vcombine.low %v3018, %v3034
        %v3043 = vcombine.high %v3018, %v3034
        %v3045 = vunpack.c.l.s4 1934713408
        %v3046 = vunpack.c.0.s8 %v3045
        %v3047 = vlaneseq
        %v3048 = vshrl.u32 %v3047, 7
        %v3049 = vsub.s32 %v3046, %v3048
        %v3050 = vrot.slane %v3042, %v3049
        %v3052 = vunpack.c.l.s4 1934713408
        %v3053 = vunpack.c.0.s8 %v3052
        %v3054 = vlaneseq
        %v3055 = vshrl.u32 %v3054, 7
        %v3056 = vsub.s32 %v3053, %v3055
        %v3057 = vrot.slane %v3043, %v3056
        %v3058 = vcombine.low %v3025, %v3041
        %v3059 = vcombine.high %v3025, %v3041
        %v3061 = vunpack.c.l.s4 1934713408
        %v3062 = vunpack.c.0.s8 %v3061
        %v3063 = vlaneseq
        %v3064 = vshrl.u32 %v3063, 7
        %v3065 = vsub.s32 %v3062, %v3064
        %v3066 = vrot.slane %v3058, %v3065
        %v3068 = vunpack.c.l.s4 1934713408
        %v3069 = vunpack.c.0.s8 %v3068
        %v3070 = vlaneseq
        %v3071 = vshrl.u32 %v3070, 7
        %v3072 = vsub.s32 %v3069, %v3071
        %v3073 = vrot.slane %v3059, %v3072
        %v3074 = vcombine.high %v3050, 0.0
        %v3075 = vcombine.high %v3057, 0.0
        %v3076 = vcombine.high %v3066, 0.0
        %v3077 = vcombine.high %v3073, 0.0
        %v3078 = vcombine.low %v3050, %v3057
        %v3080 = vunpack.c.l.s4 1983009808
        %v3081 = vunpack.c.0.s8 %v3080
        %v3082 = vlaneseq
        %v3083 = vshrl.u32 %v3082, 7
        %v3084 = vsub.s32 %v3081, %v3083
        %v3085 = vrot.slane %v3078, %v3084
        %v3086 = vcombine.low %v3074, %v3075
        %v3088 = vunpack.c.l.s4 1983009808
        %v3089 = vunpack.c.0.s8 %v3088
        %v3090 = vlaneseq
        %v3091 = vshrl.u32 %v3090, 7
        %v3092 = vsub.s32 %v3089, %v3091
        %v3093 = vrot.slane %v3086, %v3092
        %v3094 = vcombine.low %v3066, %v3073
        %v3096 = vunpack.c.l.s4 1983009808
        %v3097 = vunpack.c.0.s8 %v3096
        %v3098 = vlaneseq
        %v3099 = vshrl.u32 %v3098, 7
        %v3100 = vsub.s32 %v3097, %v3099
        %v3101 = vrot.slane %v3094, %v3100
        %v3102 = vcombine.low %v3076, %v3077
        %v3104 = vunpack.c.l.s4 1983009808
        %v3105 = vunpack.c.0.s8 %v3104
        %v3106 = vlaneseq
        %v3107 = vshrl.u32 %v3106, 7
        %v3108 = vsub.s32 %v3105, %v3107
        %v3109 = vrot.slane %v3102, %v3108
        %v3110 = vcombine.low %v3085, %v3093
        %v3111 = vcombine.high %v3085, %v3093
        %v3113 = vunpack.c.l.s4 1934713408
        %v3114 = vunpack.c.0.s8 %v3113
        %v3115 = vlaneseq
        %v3116 = vshrl.u32 %v3115, 7
        %v3117 = vsub.s32 %v3114, %v3116
        %v3118 = vrot.slane %v3110, %v3117
        %v3120 = vunpack.c.l.s4 1934713408
        %v3121 = vunpack.c.0.s8 %v3120
        %v3122 = vlaneseq
        %v3123 = vshrl.u32 %v3122, 7
        %v3124 = vsub.s32 %v3121, %v3123
        %v3125 = vrot.slane %v3111, %v3124
        %v3126 = vcombine.low %v3101, %v3109
        %v3127 = vcombine.high %v3101, %v3109
        %v3129 = vunpack.c.l.s4 1934713408
        %v3130 = vunpack.c.0.s8 %v3129
        %v3131 = vlaneseq
        %v3132 = vshrl.u32 %v3131, 7
        %v3133 = vsub.s32 %v3130, %v3132
        %v3134 = vrot.slane %v3126, %v3133
        %v3136 = vunpack.c.l.s4 1934713408
        %v3137 = vunpack.c.0.s8 %v3136
        %v3138 = vlaneseq
        %v3139 = vshrl.u32 %v3138, 7
        %v3140 = vsub.s32 %v3137, %v3139
        %v3141 = vrot.slane %v3127, %v3140
        %v3142 = vcombine.low %v3118, %v3134
        %v3143 = vcombine.high %v3118, %v3134
        %v3144 = vcombine.low %v3125, %v3141
        %v3145 = vcombine.high %v3125, %v3141
        %3147 = vrot.lane.b32.xlu0 %v2851, 120
        %v3148 = vpop.permute.xlu0 %3147
        %3150 = vrot.lane.b32.xlu0 %v2851, 112
        %v3151 = vpop.permute.xlu0 %3150
        %3153 = vrot.lane.b32.xlu0 %v2851, 104
        %v3154 = vpop.permute.xlu0 %3153
        %v3156 = vcombine.low %v2851, %v3151
        %v3157 = vcombine.high %v2851, %v3151
        %v3159 = vunpack.c.l.s4 1983009808
        %v3160 = vunpack.c.0.s8 %v3159
        %v3161 = vlaneseq
        %v3162 = vshrl.u32 %v3161, 7
        %v3163 = vsub.s32 %v3160, %v3162
        %v3164 = vrot.slane %v3156, %v3163
        %v3166 = vunpack.c.l.s4 1983009808
        %v3167 = vunpack.c.0.s8 %v3166
        %v3168 = vlaneseq
        %v3169 = vshrl.u32 %v3168, 7
        %v3170 = vsub.s32 %v3167, %v3169
        %v3171 = vrot.slane %v3157, %v3170
        %v3172 = vcombine.low %v3148, %v3154
        %v3173 = vcombine.high %v3148, %v3154
        %v3175 = vunpack.c.l.s4 1983009808
        %v3176 = vunpack.c.0.s8 %v3175
        %v3177 = vlaneseq
        %v3178 = vshrl.u32 %v3177, 7
        %v3179 = vsub.s32 %v3176, %v3178
        %v3180 = vrot.slane %v3172, %v3179
        %v3182 = vunpack.c.l.s4 1983009808
        %v3183 = vunpack.c.0.s8 %v3182
        %v3184 = vlaneseq
        %v3185 = vshrl.u32 %v3184, 7
        %v3186 = vsub.s32 %v3183, %v3185
        %v3187 = vrot.slane %v3173, %v3186
        %v3188 = vcombine.low %v3164, %v3180
        %v3189 = vcombine.high %v3164, %v3180
        %v3191 = vunpack.c.l.s4 1934713408
        %v3192 = vunpack.c.0.s8 %v3191
        %v3193 = vlaneseq
        %v3194 = vshrl.u32 %v3193, 7
        %v3195 = vsub.s32 %v3192, %v3194
        %v3196 = vrot.slane %v3188, %v3195
        %v3198 = vunpack.c.l.s4 1934713408
        %v3199 = vunpack.c.0.s8 %v3198
        %v3200 = vlaneseq
        %v3201 = vshrl.u32 %v3200, 7
        %v3202 = vsub.s32 %v3199, %v3201
        %v3203 = vrot.slane %v3189, %v3202
        %v3204 = vcombine.low %v3171, %v3187
        %v3205 = vcombine.high %v3171, %v3187
        %v3207 = vunpack.c.l.s4 1934713408
        %v3208 = vunpack.c.0.s8 %v3207
        %v3209 = vlaneseq
        %v3210 = vshrl.u32 %v3209, 7
        %v3211 = vsub.s32 %v3208, %v3210
        %v3212 = vrot.slane %v3204, %v3211
        %v3214 = vunpack.c.l.s4 1934713408
        %v3215 = vunpack.c.0.s8 %v3214
        %v3216 = vlaneseq
        %v3217 = vshrl.u32 %v3216, 7
        %v3218 = vsub.s32 %v3215, %v3217
        %v3219 = vrot.slane %v3205, %v3218
        %v3220 = vcombine.high %v3196, 0.0
        %v3221 = vcombine.high %v3203, 0.0
        %v3222 = vcombine.high %v3212, 0.0
        %v3223 = vcombine.high %v3219, 0.0
        %v3224 = vcombine.low %v3196, %v3203
        %v3226 = vunpack.c.l.s4 1983009808
        %v3227 = vunpack.c.0.s8 %v3226
        %v3228 = vlaneseq
        %v3229 = vshrl.u32 %v3228, 7
        %v3230 = vsub.s32 %v3227, %v3229
        %v3231 = vrot.slane %v3224, %v3230
        %v3232 = vcombine.low %v3220, %v3221
        %v3234 = vunpack.c.l.s4 1983009808
        %v3235 = vunpack.c.0.s8 %v3234
        %v3236 = vlaneseq
        %v3237 = vshrl.u32 %v3236, 7
        %v3238 = vsub.s32 %v3235, %v3237
        %v3239 = vrot.slane %v3232, %v3238
        %v3240 = vcombine.low %v3212, %v3219
        %v3242 = vunpack.c.l.s4 1983009808
        %v3243 = vunpack.c.0.s8 %v3242
        %v3244 = vlaneseq
        %v3245 = vshrl.u32 %v3244, 7
        %v3246 = vsub.s32 %v3243, %v3245
        %v3247 = vrot.slane %v3240, %v3246
        %v3248 = vcombine.low %v3222, %v3223
        %v3250 = vunpack.c.l.s4 1983009808
        %v3251 = vunpack.c.0.s8 %v3250
        %v3252 = vlaneseq
        %v3253 = vshrl.u32 %v3252, 7
        %v3254 = vsub.s32 %v3251, %v3253
        %v3255 = vrot.slane %v3248, %v3254
        %v3256 = vcombine.low %v3231, %v3239
        %v3257 = vcombine.high %v3231, %v3239
        %v3259 = vunpack.c.l.s4 1934713408
        %v3260 = vunpack.c.0.s8 %v3259
        %v3261 = vlaneseq
        %v3262 = vshrl.u32 %v3261, 7
        %v3263 = vsub.s32 %v3260, %v3262
        %v3264 = vrot.slane %v3256, %v3263
        %v3266 = vunpack.c.l.s4 1934713408
        %v3267 = vunpack.c.0.s8 %v3266
        %v3268 = vlaneseq
        %v3269 = vshrl.u32 %v3268, 7
        %v3270 = vsub.s32 %v3267, %v3269
        %v3271 = vrot.slane %v3257, %v3270
        %v3272 = vcombine.low %v3247, %v3255
        %v3273 = vcombine.high %v3247, %v3255
        %v3275 = vunpack.c.l.s4 1934713408
        %v3276 = vunpack.c.0.s8 %v3275
        %v3277 = vlaneseq
        %v3278 = vshrl.u32 %v3277, 7
        %v3279 = vsub.s32 %v3276, %v3278
        %v3280 = vrot.slane %v3272, %v3279
        %v3282 = vunpack.c.l.s4 1934713408
        %v3283 = vunpack.c.0.s8 %v3282
        %v3284 = vlaneseq
        %v3285 = vshrl.u32 %v3284, 7
        %v3286 = vsub.s32 %v3283, %v3285
        %v3287 = vrot.slane %v3273, %v3286
        %v3288 = vcombine.low %v3264, %v3280
        %v3289 = vcombine.high %v3264, %v3280
        %v3290 = vcombine.low %v3271, %v3287
        %v3291 = vcombine.high %v3271, %v3287
        %v3293 = vsel %vm1710, %v3288, 0
        %v3296 = vsel %vm1710, %v3142, 0
        %3298 = vmatprep.subr.mxu0 0.0
        %3299 = vmatpush1.xpose.msra.mxu0 %v3296
        %3300 = vmatprep.subr.mxu0 0.0
        %3301 = vmatpush1.xpose.msra.mxu0 0.0
        %3302 = vmatprep.subr.mxu0 0.0
        %3303 = vmatpush1.xpose.msra.mxu0 0.0
        %3304 = vmatprep.subr.mxu0 0.0
        %3305 = vmatpush1.xpose.msra.mxu0 0.0
        %3306 = vmatprep.subr.mxu0 0.0
        %3307 = vmatpush1.xpose.msra.mxu0 0.0
        %3308 = vmatprep.subr.mxu0 0.0
        %3309 = vmatpush1.xpose.msra.mxu0 0.0
        %3310 = vmatprep.subr.mxu0 0.0
        %3311 = vmatpush1.xpose.msra.mxu0 0.0
        %3312 = vmatprep.subr.mxu0 0.0
        %3313 = vmatpush1.xpose.msra.mxu0 0.0
        %3314 = vmatprep.subr.mxu0 0.0
        %3315 = vmatpush1.xpose.msra.mxu0 0.0
        %3316 = vmatprep.subr.mxu0 0.0
        %3317 = vmatpush1.xpose.msra.mxu0 0.0
        %3318 = vmatprep.subr.mxu0 0.0
        %3319 = vmatpush1.xpose.msra.mxu0 0.0
        %3320 = vmatprep.subr.mxu0 0.0
        %3321 = vmatpush1.xpose.msra.mxu0 0.0
        %3322 = vmatprep.subr.mxu0 0.0
        %3323 = vmatpush1.xpose.msra.mxu0 0.0
        %3324 = vmatprep.subr.mxu0 0.0
        %3325 = vmatpush1.xpose.msra.mxu0 0.0
        %3326 = vmatprep.subr.mxu0 0.0
        %3327 = vmatpush1.xpose.msra.mxu0 0.0
        %3328 = vmatprep.subr.mxu0 0.0
        %3329 = vmatpush1.xpose.msra.mxu0 0.0
        %3330 = vmatprep.subr.mxu0 0.0
        %3331 = vmatpush1.xpose.msra.mxu0 0.0
        %3332 = vmatprep.subr.mxu0 0.0
        %3333 = vmatpush1.xpose.msra.mxu0 0.0
        %3334 = vmatprep.subr.mxu0 0.0
        %3335 = vmatpush1.xpose.msra.mxu0 0.0
        %3336 = vmatprep.subr.mxu0 0.0
        %3337 = vmatpush1.xpose.msra.mxu0 0.0
        %3338 = vmatprep.subr.mxu0 0.0
        %3339 = vmatpush1.xpose.msra.mxu0 0.0
        %3340 = vmatprep.subr.mxu0 0.0
        %3341 = vmatpush1.xpose.msra.mxu0 0.0
        %3342 = vmatprep.subr.mxu0 0.0
        %3343 = vmatpush1.xpose.msra.mxu0 0.0
        %3344 = vmatprep.subr.mxu0 0.0
        %3345 = vmatpush1.xpose.msra.mxu0 0.0
        %3346 = vmatprep.subr.mxu0 0.0
        %3347 = vmatpush1.xpose.msra.mxu0 0.0
        %3348 = vmatprep.subr.mxu0 0.0
        %3349 = vmatpush1.xpose.msra.mxu0 0.0
        %3350 = vmatprep.subr.mxu0 0.0
        %3351 = vmatpush1.xpose.msra.mxu0 0.0
        %3352 = vmatprep.subr.mxu0 0.0
        %3353 = vmatpush1.xpose.msra.mxu0 0.0
        %3354 = vmatprep.subr.mxu0 0.0
        %3355 = vmatpush1.xpose.msra.mxu0 0.0
        %3356 = vmatprep.subr.mxu0 0.0
        %3357 = vmatpush1.xpose.msra.mxu0 0.0
        %3358 = vmatprep.subr.mxu0 0.0
        %3359 = vmatpush1.xpose.msra.mxu0 0.0
        %3360 = vmatprep.subr.mxu0 0.0
        %3361 = vmatpush1.xpose.msra.mxu0 0.0
        %3362 = vmatprep.mubr.f32.mxu0 0.0
        %3363 = vmatmul.mubr.f32.gmra.mrb[0].mxu0 %v3293
        %v3364 = vpop.f32.mrb[0].mxu0
        %v3365 = vadd.f32 0.0, %v3364
        %v3366 = vpop.f32.mrb[0].mxu0
        %3367 = vdwg.mxu0
        %v3369 = vsel %vm1710, %v3289, 0
        %v3372 = vsel %vm1710, %v3143, 0
        %3374 = vmatprep.subr.mxu0 0.0
        %3375 = vmatpush1.xpose.msra.mxu0 %v3372
        %3376 = vmatprep.subr.mxu0 0.0
        %3377 = vmatpush1.xpose.msra.mxu0 0.0
        %3378 = vmatprep.subr.mxu0 0.0
        %3379 = vmatpush1.xpose.msra.mxu0 0.0
        %3380 = vmatprep.subr.mxu0 0.0
        %3381 = vmatpush1.xpose.msra.mxu0 0.0
        %3382 = vmatprep.subr.mxu0 0.0
        %3383 = vmatpush1.xpose.msra.mxu0 0.0
        %3384 = vmatprep.subr.mxu0 0.0
        %3385 = vmatpush1.xpose.msra.mxu0 0.0
        %3386 = vmatprep.subr.mxu0 0.0
        %3387 = vmatpush1.xpose.msra.mxu0 0.0
        %3388 = vmatprep.subr.mxu0 0.0
        %3389 = vmatpush1.xpose.msra.mxu0 0.0
        %3390 = vmatprep.subr.mxu0 0.0
        %3391 = vmatpush1.xpose.msra.mxu0 0.0
        %3392 = vmatprep.subr.mxu0 0.0
        %3393 = vmatpush1.xpose.msra.mxu0 0.0
        %3394 = vmatprep.subr.mxu0 0.0
        %3395 = vmatpush1.xpose.msra.mxu0 0.0
        %3396 = vmatprep.subr.mxu0 0.0
        %3397 = vmatpush1.xpose.msra.mxu0 0.0
        %3398 = vmatprep.subr.mxu0 0.0
        %3399 = vmatpush1.xpose.msra.mxu0 0.0
        %3400 = vmatprep.subr.mxu0 0.0
        %3401 = vmatpush1.xpose.msra.mxu0 0.0
        %3402 = vmatprep.subr.mxu0 0.0
        %3403 = vmatpush1.xpose.msra.mxu0 0.0
        %3404 = vmatprep.subr.mxu0 0.0
        %3405 = vmatpush1.xpose.msra.mxu0 0.0
        %3406 = vmatprep.subr.mxu0 0.0
        %3407 = vmatpush1.xpose.msra.mxu0 0.0
        %3408 = vmatprep.subr.mxu0 0.0
        %3409 = vmatpush1.xpose.msra.mxu0 0.0
        %3410 = vmatprep.subr.mxu0 0.0
        %3411 = vmatpush1.xpose.msra.mxu0 0.0
        %3412 = vmatprep.subr.mxu0 0.0
        %3413 = vmatpush1.xpose.msra.mxu0 0.0
        %3414 = vmatprep.subr.mxu0 0.0
        %3415 = vmatpush1.xpose.msra.mxu0 0.0
        %3416 = vmatprep.subr.mxu0 0.0
        %3417 = vmatpush1.xpose.msra.mxu0 0.0
        %3418 = vmatprep.subr.mxu0 0.0
        %3419 = vmatpush1.xpose.msra.mxu0 0.0
        %3420 = vmatprep.subr.mxu0 0.0
        %3421 = vmatpush1.xpose.msra.mxu0 0.0
        %3422 = vmatprep.subr.mxu0 0.0
        %3423 = vmatpush1.xpose.msra.mxu0 0.0
        %3424 = vmatprep.subr.mxu0 0.0
        %3425 = vmatpush1.xpose.msra.mxu0 0.0
        %3426 = vmatprep.subr.mxu0 0.0
        %3427 = vmatpush1.xpose.msra.mxu0 0.0
        %3428 = vmatprep.subr.mxu0 0.0
        %3429 = vmatpush1.xpose.msra.mxu0 0.0
        %3430 = vmatprep.subr.mxu0 0.0
        %3431 = vmatpush1.xpose.msra.mxu0 0.0
        %3432 = vmatprep.subr.mxu0 0.0
        %3433 = vmatpush1.xpose.msra.mxu0 0.0
        %3434 = vmatprep.subr.mxu0 0.0
        %3435 = vmatpush1.xpose.msra.mxu0 0.0
        %3436 = vmatprep.subr.mxu0 0.0
        %3437 = vmatpush1.xpose.msra.mxu0 0.0
        %3438 = vmatprep.mubr.f32.mxu0 0.0
        %3439 = vmatmul.mubr.f32.gmra.mrb[0].mxu0 %v3369
        %v3440 = vpop.f32.mrb[0].mxu0
        %v3441 = vadd.f32 0.0, %v3440
        %v3442 = vpop.f32.mrb[0].mxu0
        %3443 = vdwg.mxu0
        %v3445 = vsel %vm1710, %v3290, 0
        %v3448 = vsel %vm1710, %v3144, 0
        %3450 = vmatprep.subr.mxu0 0.0
        %3451 = vmatpush1.xpose.msra.mxu0 %v3448
        %3452 = vmatprep.subr.mxu0 0.0
        %3453 = vmatpush1.xpose.msra.mxu0 0.0
        %3454 = vmatprep.subr.mxu0 0.0
        %3455 = vmatpush1.xpose.msra.mxu0 0.0
        %3456 = vmatprep.subr.mxu0 0.0
        %3457 = vmatpush1.xpose.msra.mxu0 0.0
        %3458 = vmatprep.subr.mxu0 0.0
        %3459 = vmatpush1.xpose.msra.mxu0 0.0
        %3460 = vmatprep.subr.mxu0 0.0
        %3461 = vmatpush1.xpose.msra.mxu0 0.0
        %3462 = vmatprep.subr.mxu0 0.0
        %3463 = vmatpush1.xpose.msra.mxu0 0.0
        %3464 = vmatprep.subr.mxu0 0.0
        %3465 = vmatpush1.xpose.msra.mxu0 0.0
        %3466 = vmatprep.subr.mxu0 0.0
        %3467 = vmatpush1.xpose.msra.mxu0 0.0
        %3468 = vmatprep.subr.mxu0 0.0
        %3469 = vmatpush1.xpose.msra.mxu0 0.0
        %3470 = vmatprep.subr.mxu0 0.0
        %3471 = vmatpush1.xpose.msra.mxu0 0.0
        %3472 = vmatprep.subr.mxu0 0.0
        %3473 = vmatpush1.xpose.msra.mxu0 0.0
        %3474 = vmatprep.subr.mxu0 0.0
        %3475 = vmatpush1.xpose.msra.mxu0 0.0
        %3476 = vmatprep.subr.mxu0 0.0
        %3477 = vmatpush1.xpose.msra.mxu0 0.0
        %3478 = vmatprep.subr.mxu0 0.0
        %3479 = vmatpush1.xpose.msra.mxu0 0.0
        %3480 = vmatprep.subr.mxu0 0.0
        %3481 = vmatpush1.xpose.msra.mxu0 0.0
        %3482 = vmatprep.subr.mxu0 0.0
        %3483 = vmatpush1.xpose.msra.mxu0 0.0
        %3484 = vmatprep.subr.mxu0 0.0
        %3485 = vmatpush1.xpose.msra.mxu0 0.0
        %3486 = vmatprep.subr.mxu0 0.0
        %3487 = vmatpush1.xpose.msra.mxu0 0.0
        %3488 = vmatprep.subr.mxu0 0.0
        %3489 = vmatpush1.xpose.msra.mxu0 0.0
        %3490 = vmatprep.subr.mxu0 0.0
        %3491 = vmatpush1.xpose.msra.mxu0 0.0
        %3492 = vmatprep.subr.mxu0 0.0
        %3493 = vmatpush1.xpose.msra.mxu0 0.0
        %3494 = vmatprep.subr.mxu0 0.0
        %3495 = vmatpush1.xpose.msra.mxu0 0.0
        %3496 = vmatprep.subr.mxu0 0.0
        %3497 = vmatpush1.xpose.msra.mxu0 0.0
        %3498 = vmatprep.subr.mxu0 0.0
        %3499 = vmatpush1.xpose.msra.mxu0 0.0
        %3500 = vmatprep.subr.mxu0 0.0
        %3501 = vmatpush1.xpose.msra.mxu0 0.0
        %3502 = vmatprep.subr.mxu0 0.0
        %3503 = vmatpush1.xpose.msra.mxu0 0.0
        %3504 = vmatprep.subr.mxu0 0.0
        %3505 = vmatpush1.xpose.msra.mxu0 0.0
        %3506 = vmatprep.subr.mxu0 0.0
        %3507 = vmatpush1.xpose.msra.mxu0 0.0
        %3508 = vmatprep.subr.mxu0 0.0
        %3509 = vmatpush1.xpose.msra.mxu0 0.0
        %3510 = vmatprep.subr.mxu0 0.0
        %3511 = vmatpush1.xpose.msra.mxu0 0.0
        %3512 = vmatprep.subr.mxu0 0.0
        %3513 = vmatpush1.xpose.msra.mxu0 0.0
        %3514 = vmatprep.mubr.f32.mxu0 0.0
        %3515 = vmatmul.mubr.f32.gmra.mrb[0].mxu0 %v3445
        %v3516 = vpop.f32.mrb[0].mxu0
        %v3517 = vadd.f32 0.0, %v3516
        %v3518 = vpop.f32.mrb[0].mxu0
        %3519 = vdwg.mxu0
        %v3521 = vsel %vm1710, %v3291, 0
        %v3524 = vsel %vm1710, %v3145, 0
        %3526 = vmatprep.subr.mxu0 0.0
        %3527 = vmatpush1.xpose.msra.mxu0 %v3524
        %3528 = vmatprep.subr.mxu0 0.0
        %3529 = vmatpush1.xpose.msra.mxu0 0.0
        %3530 = vmatprep.subr.mxu0 0.0
        %3531 = vmatpush1.xpose.msra.mxu0 0.0
        %3532 = vmatprep.subr.mxu0 0.0
        %3533 = vmatpush1.xpose.msra.mxu0 0.0
        %3534 = vmatprep.subr.mxu0 0.0
        %3535 = vmatpush1.xpose.msra.mxu0 0.0
        %3536 = vmatprep.subr.mxu0 0.0
        %3537 = vmatpush1.xpose.msra.mxu0 0.0
        %3538 = vmatprep.subr.mxu0 0.0
        %3539 = vmatpush1.xpose.msra.mxu0 0.0
        %3540 = vmatprep.subr.mxu0 0.0
        %3541 = vmatpush1.xpose.msra.mxu0 0.0
        %3542 = vmatprep.subr.mxu0 0.0
        %3543 = vmatpush1.xpose.msra.mxu0 0.0
        %3544 = vmatprep.subr.mxu0 0.0
        %3545 = vmatpush1.xpose.msra.mxu0 0.0
        %3546 = vmatprep.subr.mxu0 0.0
        %3547 = vmatpush1.xpose.msra.mxu0 0.0
        %3548 = vmatprep.subr.mxu0 0.0
        %3549 = vmatpush1.xpose.msra.mxu0 0.0
        %3550 = vmatprep.subr.mxu0 0.0
        %3551 = vmatpush1.xpose.msra.mxu0 0.0
        %3552 = vmatprep.subr.mxu0 0.0
        %3553 = vmatpush1.xpose.msra.mxu0 0.0
        %3554 = vmatprep.subr.mxu0 0.0
        %3555 = vmatpush1.xpose.msra.mxu0 0.0
        %3556 = vmatprep.subr.mxu0 0.0
        %3557 = vmatpush1.xpose.msra.mxu0 0.0
        %3558 = vmatprep.subr.mxu0 0.0
        %3559 = vmatpush1.xpose.msra.mxu0 0.0
        %3560 = vmatprep.subr.mxu0 0.0
        %3561 = vmatpush1.xpose.msra.mxu0 0.0
        %3562 = vmatprep.subr.mxu0 0.0
        %3563 = vmatpush1.xpose.msra.mxu0 0.0
        %3564 = vmatprep.subr.mxu0 0.0
        %3565 = vmatpush1.xpose.msra.mxu0 0.0
        %3566 = vmatprep.subr.mxu0 0.0
        %3567 = vmatpush1.xpose.msra.mxu0 0.0
        %3568 = vmatprep.subr.mxu0 0.0
        %3569 = vmatpush1.xpose.msra.mxu0 0.0
        %3570 = vmatprep.subr.mxu0 0.0
        %3571 = vmatpush1.xpose.msra.mxu0 0.0
        %3572 = vmatprep.subr.mxu0 0.0
        %3573 = vmatpush1.xpose.msra.mxu0 0.0
        %3574 = vmatprep.subr.mxu0 0.0
        %3575 = vmatpush1.xpose.msra.mxu0 0.0
        %3576 = vmatprep.subr.mxu0 0.0
        %3577 = vmatpush1.xpose.msra.mxu0 0.0
        %3578 = vmatprep.subr.mxu0 0.0
        %3579 = vmatpush1.xpose.msra.mxu0 0.0
        %3580 = vmatprep.subr.mxu0 0.0
        %3581 = vmatpush1.xpose.msra.mxu0 0.0
        %3582 = vmatprep.subr.mxu0 0.0
        %3583 = vmatpush1.xpose.msra.mxu0 0.0
        %3584 = vmatprep.subr.mxu0 0.0
        %3585 = vmatpush1.xpose.msra.mxu0 0.0
        %3586 = vmatprep.subr.mxu0 0.0
        %3587 = vmatpush1.xpose.msra.mxu0 0.0
        %3588 = vmatprep.subr.mxu0 0.0
        %3589 = vmatpush1.xpose.msra.mxu0 0.0
        %3590 = vmatprep.mubr.f32.mxu0 0.0
        %3591 = vmatmul.mubr.f32.gmra.mrb[0].mxu0 %v3521
        %v3592 = vpop.f32.mrb[0].mxu0
        %v3593 = vadd.f32 0.0, %v3592
        %v3594 = vpop.f32.mrb[0].mxu0
        %3595 = vdwg.mxu0
        %v3596 = vadd.f32 %v3365, %v1040
        %v3597 = vadd.f32 %v3441, %v1040
        %v3598 = vadd.f32 %v3517, %v1040
        %v3599 = vadd.f32 %v3593, %v1040
        %v3600 = vsel %vm1710, %v3596, -inf
        %3601 = vmax.xlane.f32.xlu0 %v3600
        %v3602 = vpop.xlane.xlu0 %3601
        %v3603 = vsel %vm1710, %v3597, -inf
        %3604 = vmax.xlane.f32.xlu0 %v3603
        %v3605 = vpop.xlane.xlu0 %3604
        %v3606 = vsel %vm1710, %v3598, -inf
        %3607 = vmax.xlane.f32.xlu0 %v3606
        %v3608 = vpop.xlane.xlu0 %3607
        %v3609 = vsel %vm1710, %v3599, -inf
        %3610 = vmax.xlane.f32.xlu0 %v3609
        %v3611 = vpop.xlane.xlu0 %3610
        %v3612 = vsub.f32 %v3596, %v3602
        %v3613 = vsub.f32 %v3597, %v3605
        %v3614 = vsub.f32 %v3598, %v3608
        %v3615 = vsub.f32 %v3599, %v3611
        %v3616 = vmul.f32 %v3612, 1.442695
        %v3617 = vpow.pop %v3616
        %v3618 = vmul.f32 %v3613, 1.442695
        %v3619 = vpow.pop %v3618
        %v3620 = vmul.f32 %v3614, 1.442695
        %v3621 = vpow.pop %v3620
        %v3622 = vmul.f32 %v3615, 1.442695
        %v3623 = vpow.pop %v3622
        %v3624 = vsel %vm1710, %v3617, 0.0
        %3625 = vadd.xlane.f32.xlu0 %v3624
        %v3626 = vpop.xlane.xlu0 %3625
        %v3627 = vsel %vm1710, %v3619, 0.0
        %3628 = vadd.xlane.f32.xlu0 %v3627
        %v3629 = vpop.xlane.xlu0 %3628
        %v3630 = vsel %vm1710, %v3621, 0.0
        %3631 = vadd.xlane.f32.xlu0 %v3630
        %v3632 = vpop.xlane.xlu0 %3631
        %v3633 = vsel %vm1710, %v3623, 0.0
        %3634 = vadd.xlane.f32.xlu0 %v3633
        %v3635 = vpop.xlane.xlu0 %3634
        %v3636 = vrcp.pop %v3626
        %v3637 = vrcp.pop %v3629
        %v3638 = vrcp.pop %v3632
        %v3639 = vrcp.pop %v3635
        %v3640 = vmul.f32 %v3617, %v3636
        %v3641 = vmul.f32 %v3619, %v3637
        %v3642 = vmul.f32 %v3621, %v3638
        %v3643 = vmul.f32 %v3623, %v3639
        %v3645 = vsel %vm1710, %v3640, 0
        %3647 = vmatprep.subr.mxu0 0.0
        %3648 = vmatpush1.msra.mxu0 %v2996
        %3649 = vmatprep.subr.mxu0 0.0
        %3650 = vmatpush1.msra.mxu0 0.0
        %3651 = vmatprep.subr.mxu0 0.0
        %3652 = vmatpush1.msra.mxu0 0.0
        %3653 = vmatprep.subr.mxu0 0.0
        %3654 = vmatpush1.msra.mxu0 0.0
        %3655 = vmatprep.subr.mxu0 0.0
        %3656 = vmatpush1.msra.mxu0 0.0
        %3657 = vmatprep.subr.mxu0 0.0
        %3658 = vmatpush1.msra.mxu0 0.0
        %3659 = vmatprep.subr.mxu0 0.0
        %3660 = vmatpush1.msra.mxu0 0.0
        %3661 = vmatprep.subr.mxu0 0.0
        %3662 = vmatpush1.msra.mxu0 0.0
        %3663 = vmatprep.subr.mxu0 0.0
        %3664 = vmatpush1.msra.mxu0 0.0
        %3665 = vmatprep.subr.mxu0 0.0
        %3666 = vmatpush1.msra.mxu0 0.0
        %3667 = vmatprep.subr.mxu0 0.0
        %3668 = vmatpush1.msra.mxu0 0.0
        %3669 = vmatprep.subr.mxu0 0.0
        %3670 = vmatpush1.msra.mxu0 0.0
        %3671 = vmatprep.subr.mxu0 0.0
        %3672 = vmatpush1.msra.mxu0 0.0
        %3673 = vmatprep.subr.mxu0 0.0
        %3674 = vmatpush1.msra.mxu0 0.0
        %3675 = vmatprep.subr.mxu0 0.0
        %3676 = vmatpush1.msra.mxu0 0.0
        %3677 = vmatprep.subr.mxu0 0.0
        %3678 = vmatpush1.msra.mxu0 0.0
        %3679 = vmatprep.subr.mxu0 0.0
        %3680 = vmatpush1.msra.mxu0 0.0
        %3681 = vmatprep.subr.mxu0 0.0
        %3682 = vmatpush1.msra.mxu0 0.0
        %3683 = vmatprep.subr.mxu0 0.0
        %3684 = vmatpush1.msra.mxu0 0.0
        %3685 = vmatprep.subr.mxu0 0.0
        %3686 = vmatpush1.msra.mxu0 0.0
        %3687 = vmatprep.subr.mxu0 0.0
        %3688 = vmatpush1.msra.mxu0 0.0
        %3689 = vmatprep.subr.mxu0 0.0
        %3690 = vmatpush1.msra.mxu0 0.0
        %3691 = vmatprep.subr.mxu0 0.0
        %3692 = vmatpush1.msra.mxu0 0.0
        %3693 = vmatprep.subr.mxu0 0.0
        %3694 = vmatpush1.msra.mxu0 0.0
        %3695 = vmatprep.subr.mxu0 0.0
        %3696 = vmatpush1.msra.mxu0 0.0
        %3697 = vmatprep.subr.mxu0 0.0
        %3698 = vmatpush1.msra.mxu0 0.0
        %3699 = vmatprep.subr.mxu0 0.0
        %3700 = vmatpush1.msra.mxu0 0.0
        %3701 = vmatprep.subr.mxu0 0.0
        %3702 = vmatpush1.msra.mxu0 0.0
        %3703 = vmatprep.subr.mxu0 0.0
        %3704 = vmatpush1.msra.mxu0 0.0
        %3705 = vmatprep.subr.mxu0 0.0
        %3706 = vmatpush1.msra.mxu0 0.0
        %3707 = vmatprep.subr.mxu0 0.0
        %3708 = vmatpush1.msra.mxu0 0.0
        %3709 = vmatprep.subr.mxu0 0.0
        %3710 = vmatpush1.msra.mxu0 0.0
        %3711 = vmatprep.mubr.f32.mxu0 0.0
        %3712 = vmatmul.mubr.f32.gmra.mrb[0].mxu0 %v3645
        %v3713 = vpop.f32.mrb[0].mxu0
        %v3714 = vadd.f32 0.0, %v3713
        %v3715 = vpop.f32.mrb[0].mxu0
        %3716 = vdwg.mxu0
        %v3718 = vsel %vm1710, %v3641, 0
        %3720 = vmatprep.subr.mxu0 0.0
        %3721 = vmatpush1.msra.mxu0 %v2997
        %3722 = vmatprep.subr.mxu0 0.0
        %3723 = vmatpush1.msra.mxu0 0.0
        %3724 = vmatprep.subr.mxu0 0.0
        %3725 = vmatpush1.msra.mxu0 0.0
        %3726 = vmatprep.subr.mxu0 0.0
        %3727 = vmatpush1.msra.mxu0 0.0
        %3728 = vmatprep.subr.mxu0 0.0
        %3729 = vmatpush1.msra.mxu0 0.0
        %3730 = vmatprep.subr.mxu0 0.0
        %3731 = vmatpush1.msra.mxu0 0.0
        %3732 = vmatprep.subr.mxu0 0.0
        %3733 = vmatpush1.msra.mxu0 0.0
        %3734 = vmatprep.subr.mxu0 0.0
        %3735 = vmatpush1.msra.mxu0 0.0
        %3736 = vmatprep.subr.mxu0 0.0
        %3737 = vmatpush1.msra.mxu0 0.0
        %3738 = vmatprep.subr.mxu0 0.0
        %3739 = vmatpush1.msra.mxu0 0.0
        %3740 = vmatprep.subr.mxu0 0.0
        %3741 = vmatpush1.msra.mxu0 0.0
        %3742 = vmatprep.subr.mxu0 0.0
        %3743 = vmatpush1.msra.mxu0 0.0
        %3744 = vmatprep.subr.mxu0 0.0
        %3745 = vmatpush1.msra.mxu0 0.0
        %3746 = vmatprep.subr.mxu0 0.0
        %3747 = vmatpush1.msra.mxu0 0.0
        %3748 = vmatprep.subr.mxu0 0.0
        %3749 = vmatpush1.msra.mxu0 0.0
        %3750 = vmatprep.subr.mxu0 0.0
        %3751 = vmatpush1.msra.mxu0 0.0
        %3752 = vmatprep.subr.mxu0 0.0
        %3753 = vmatpush1.msra.mxu0 0.0
        %3754 = vmatprep.subr.mxu0 0.0
        %3755 = vmatpush1.msra.mxu0 0.0
        %3756 = vmatprep.subr.mxu0 0.0
        %3757 = vmatpush1.msra.mxu0 0.0
        %3758 = vmatprep.subr.mxu0 0.0
        %3759 = vmatpush1.msra.mxu0 0.0
        %3760 = vmatprep.subr.mxu0 0.0
        %3761 = vmatpush1.msra.mxu0 0.0
        %3762 = vmatprep.subr.mxu0 0.0
        %3763 = vmatpush1.msra.mxu0 0.0
        %3764 = vmatprep.subr.mxu0 0.0
        %3765 = vmatpush1.msra.mxu0 0.0
        %3766 = vmatprep.subr.mxu0 0.0
        %3767 = vmatpush1.msra.mxu0 0.0
        %3768 = vmatprep.subr.mxu0 0.0
        %3769 = vmatpush1.msra.mxu0 0.0
        %3770 = vmatprep.subr.mxu0 0.0
        %3771 = vmatpush1.msra.mxu0 0.0
        %3772 = vmatprep.subr.mxu0 0.0
        %3773 = vmatpush1.msra.mxu0 0.0
        %3774 = vmatprep.subr.mxu0 0.0
        %3775 = vmatpush1.msra.mxu0 0.0
        %3776 = vmatprep.subr.mxu0 0.0
        %3777 = vmatpush1.msra.mxu0 0.0
        %3778 = vmatprep.subr.mxu0 0.0
        %3779 = vmatpush1.msra.mxu0 0.0
        %3780 = vmatprep.subr.mxu0 0.0
        %3781 = vmatpush1.msra.mxu0 0.0
        %3782 = vmatprep.subr.mxu0 0.0
        %3783 = vmatpush1.msra.mxu0 0.0
        %3784 = vmatprep.mubr.f32.mxu0 0.0
        %3785 = vmatmul.mubr.f32.gmra.mrb[0].mxu0 %v3718
        %v3786 = vpop.f32.mrb[0].mxu0
        %v3787 = vadd.f32 0.0, %v3786
        %v3788 = vpop.f32.mrb[0].mxu0
        %3789 = vdwg.mxu0
        %v3791 = vsel %vm1710, %v3642, 0
        %3793 = vmatprep.subr.mxu0 0.0
        %3794 = vmatpush1.msra.mxu0 %v2998
        %3795 = vmatprep.subr.mxu0 0.0
        %3796 = vmatpush1.msra.mxu0 0.0
        %3797 = vmatprep.subr.mxu0 0.0
        %3798 = vmatpush1.msra.mxu0 0.0
        %3799 = vmatprep.subr.mxu0 0.0
        %3800 = vmatpush1.msra.mxu0 0.0
        %3801 = vmatprep.subr.mxu0 0.0
        %3802 = vmatpush1.msra.mxu0 0.0
        %3803 = vmatprep.subr.mxu0 0.0
        %3804 = vmatpush1.msra.mxu0 0.0
        %3805 = vmatprep.subr.mxu0 0.0
        %3806 = vmatpush1.msra.mxu0 0.0
        %3807 = vmatprep.subr.mxu0 0.0
        %3808 = vmatpush1.msra.mxu0 0.0
        %3809 = vmatprep.subr.mxu0 0.0
        %3810 = vmatpush1.msra.mxu0 0.0
        %3811 = vmatprep.subr.mxu0 0.0
        %3812 = vmatpush1.msra.mxu0 0.0
        %3813 = vmatprep.subr.mxu0 0.0
        %3814 = vmatpush1.msra.mxu0 0.0
        %3815 = vmatprep.subr.mxu0 0.0
        %3816 = vmatpush1.msra.mxu0 0.0
        %3817 = vmatprep.subr.mxu0 0.0
        %3818 = vmatpush1.msra.mxu0 0.0
        %3819 = vmatprep.subr.mxu0 0.0
        %3820 = vmatpush1.msra.mxu0 0.0
        %3821 = vmatprep.subr.mxu0 0.0
        %3822 = vmatpush1.msra.mxu0 0.0
        %3823 = vmatprep.subr.mxu0 0.0
        %3824 = vmatpush1.msra.mxu0 0.0
        %3825 = vmatprep.subr.mxu0 0.0
        %3826 = vmatpush1.msra.mxu0 0.0
        %3827 = vmatprep.subr.mxu0 0.0
        %3828 = vmatpush1.msra.mxu0 0.0
        %3829 = vmatprep.subr.mxu0 0.0
        %3830 = vmatpush1.msra.mxu0 0.0
        %3831 = vmatprep.subr.mxu0 0.0
        %3832 = vmatpush1.msra.mxu0 0.0
        %3833 = vmatprep.subr.mxu0 0.0
        %3834 = vmatpush1.msra.mxu0 0.0
        %3835 = vmatprep.subr.mxu0 0.0
        %3836 = vmatpush1.msra.mxu0 0.0
        %3837 = vmatprep.subr.mxu0 0.0
        %3838 = vmatpush1.msra.mxu0 0.0
        %3839 = vmatprep.subr.mxu0 0.0
        %3840 = vmatpush1.msra.mxu0 0.0
        %3841 = vmatprep.subr.mxu0 0.0
        %3842 = vmatpush1.msra.mxu0 0.0
        %3843 = vmatprep.subr.mxu0 0.0
        %3844 = vmatpush1.msra.mxu0 0.0
        %3845 = vmatprep.subr.mxu0 0.0
        %3846 = vmatpush1.msra.mxu0 0.0
        %3847 = vmatprep.subr.mxu0 0.0
        %3848 = vmatpush1.msra.mxu0 0.0
        %3849 = vmatprep.subr.mxu0 0.0
        %3850 = vmatpush1.msra.mxu0 0.0
        %3851 = vmatprep.subr.mxu0 0.0
        %3852 = vmatpush1.msra.mxu0 0.0
        %3853 = vmatprep.subr.mxu0 0.0
        %3854 = vmatpush1.msra.mxu0 0.0
        %3855 = vmatprep.subr.mxu0 0.0
        %3856 = vmatpush1.msra.mxu0 0.0
        %3857 = vmatprep.mubr.f32.mxu0 0.0
        %3858 = vmatmul.mubr.f32.gmra.mrb[0].mxu0 %v3791
        %v3859 = vpop.f32.mrb[0].mxu0
        %v3860 = vadd.f32 0.0, %v3859
        %v3861 = vpop.f32.mrb[0].mxu0
        %3862 = vdwg.mxu0
        %v3864 = vsel %vm1710, %v3643, 0
        %3866 = vmatprep.subr.mxu0 0.0
        %3867 = vmatpush1.msra.mxu0 %v2999
        %3868 = vmatprep.subr.mxu0 0.0
        %3869 = vmatpush1.msra.mxu0 0.0
        %3870 = vmatprep.subr.mxu0 0.0
        %3871 = vmatpush1.msra.mxu0 0.0
        %3872 = vmatprep.subr.mxu0 0.0
        %3873 = vmatpush1.msra.mxu0 0.0
        %3874 = vmatprep.subr.mxu0 0.0
        %3875 = vmatpush1.msra.mxu0 0.0
        %3876 = vmatprep.subr.mxu0 0.0
        %3877 = vmatpush1.msra.mxu0 0.0
        %3878 = vmatprep.subr.mxu0 0.0
        %3879 = vmatpush1.msra.mxu0 0.0
        %3880 = vmatprep.subr.mxu0 0.0
        %3881 = vmatpush1.msra.mxu0 0.0
        %3882 = vmatprep.subr.mxu0 0.0
        %3883 = vmatpush1.msra.mxu0 0.0
        %3884 = vmatprep.subr.mxu0 0.0
        %3885 = vmatpush1.msra.mxu0 0.0
        %3886 = vmatprep.subr.mxu0 0.0
        %3887 = vmatpush1.msra.mxu0 0.0
        %3888 = vmatprep.subr.mxu0 0.0
        %3889 = vmatpush1.msra.mxu0 0.0
        %3890 = vmatprep.subr.mxu0 0.0
        %3891 = vmatpush1.msra.mxu0 0.0
        %3892 = vmatprep.subr.mxu0 0.0
        %3893 = vmatpush1.msra.mxu0 0.0
        %3894 = vmatprep.subr.mxu0 0.0
        %3895 = vmatpush1.msra.mxu0 0.0
        %3896 = vmatprep.subr.mxu0 0.0
        %3897 = vmatpush1.msra.mxu0 0.0
        %3898 = vmatprep.subr.mxu0 0.0
        %3899 = vmatpush1.msra.mxu0 0.0
        %3900 = vmatprep.subr.mxu0 0.0
        %3901 = vmatpush1.msra.mxu0 0.0
        %3902 = vmatprep.subr.mxu0 0.0
        %3903 = vmatpush1.msra.mxu0 0.0
        %3904 = vmatprep.subr.mxu0 0.0
        %3905 = vmatpush1.msra.mxu0 0.0
        %3906 = vmatprep.subr.mxu0 0.0
        %3907 = vmatpush1.msra.mxu0 0.0
        %3908 = vmatprep.subr.mxu0 0.0
        %3909 = vmatpush1.msra.mxu0 0.0
        %3910 = vmatprep.subr.mxu0 0.0
        %3911 = vmatpush1.msra.mxu0 0.0
        %3912 = vmatprep.subr.mxu0 0.0
        %3913 = vmatpush1.msra.mxu0 0.0
        %3914 = vmatprep.subr.mxu0 0.0
        %3915 = vmatpush1.msra.mxu0 0.0
        %3916 = vmatprep.subr.mxu0 0.0
        %3917 = vmatpush1.msra.mxu0 0.0
        %3918 = vmatprep.subr.mxu0 0.0
        %3919 = vmatpush1.msra.mxu0 0.0
        %3920 = vmatprep.subr.mxu0 0.0
        %3921 = vmatpush1.msra.mxu0 0.0
        %3922 = vmatprep.subr.mxu0 0.0
        %3923 = vmatpush1.msra.mxu0 0.0
        %3924 = vmatprep.subr.mxu0 0.0
        %3925 = vmatpush1.msra.mxu0 0.0
        %3926 = vmatprep.subr.mxu0 0.0
        %3927 = vmatpush1.msra.mxu0 0.0
        %3928 = vmatprep.subr.mxu0 0.0
        %3929 = vmatpush1.msra.mxu0 0.0
        %3930 = vmatprep.mubr.f32.mxu0 0.0
        %3931 = vmatmul.mubr.f32.gmra.mrb[0].mxu0 %v3864
        %v3932 = vpop.f32.mrb[0].mxu0
        %v3933 = vadd.f32 0.0, %v3932
        %v3934 = vpop.f32.mrb[0].mxu0
        %3935 = vdwg.mxu0
        %v3936 = vcombine.low %v3714, %v3860
        %v3937 = vcombine.high %v3714, %v3860
        %v3939 = vunpack.c.l.s4 1983009808
        %v3940 = vunpack.c.0.s8 %v3939
        %v3941 = vlaneseq
        %v3942 = vshrl.u32 %v3941, 7
        %v3943 = vsub.s32 %v3940, %v3942
        %v3944 = vrot.slane %v3936, %v3943
        %v3946 = vunpack.c.l.s4 1983009808
        %v3947 = vunpack.c.0.s8 %v3946
        %v3948 = vlaneseq
        %v3949 = vshrl.u32 %v3948, 7
        %v3950 = vsub.s32 %v3947, %v3949
        %v3951 = vrot.slane %v3937, %v3950
        %v3952 = vcombine.low %v3787, %v3933
        %v3953 = vcombine.high %v3787, %v3933
        %v3955 = vunpack.c.l.s4 1983009808
        %v3956 = vunpack.c.0.s8 %v3955
        %v3957 = vlaneseq
        %v3958 = vshrl.u32 %v3957, 7
        %v3959 = vsub.s32 %v3956, %v3958
        %v3960 = vrot.slane %v3952, %v3959
        %v3962 = vunpack.c.l.s4 1983009808
        %v3963 = vunpack.c.0.s8 %v3962
        %v3964 = vlaneseq
        %v3965 = vshrl.u32 %v3964, 7
        %v3966 = vsub.s32 %v3963, %v3965
        %v3967 = vrot.slane %v3953, %v3966
        %v3968 = vcombine.low %v3944, %v3960
        %v3969 = vcombine.high %v3944, %v3960
        %v3971 = vunpack.c.l.s4 1934713408
        %v3972 = vunpack.c.0.s8 %v3971
        %v3973 = vlaneseq
        %v3974 = vshrl.u32 %v3973, 7
        %v3975 = vsub.s32 %v3972, %v3974
        %v3976 = vrot.slane %v3968, %v3975
        %v3978 = vunpack.c.l.s4 1934713408
        %v3979 = vunpack.c.0.s8 %v3978
        %v3980 = vlaneseq
        %v3981 = vshrl.u32 %v3980, 7
        %v3982 = vsub.s32 %v3979, %v3981
        %v3983 = vrot.slane %v3969, %v3982
        %v3984 = vcombine.low %v3951, %v3967
        %v3985 = vcombine.high %v3951, %v3967
        %v3987 = vunpack.c.l.s4 1934713408
        %v3988 = vunpack.c.0.s8 %v3987
        %v3989 = vlaneseq
        %v3990 = vshrl.u32 %v3989, 7
        %v3991 = vsub.s32 %v3988, %v3990
        %v3992 = vrot.slane %v3984, %v3991
        %v3994 = vunpack.c.l.s4 1934713408
        %v3995 = vunpack.c.0.s8 %v3994
        %v3996 = vlaneseq
        %v3997 = vshrl.u32 %v3996, 7
        %v3998 = vsub.s32 %v3995, %v3997
        %v3999 = vrot.slane %v3985, %v3998
        %v4000 = vcombine.high %v3976, 0.0
        %v4001 = vcombine.high %v3983, 0.0
        %v4002 = vcombine.high %v3992, 0.0
        %v4003 = vcombine.high %v3999, 0.0
        %v4004 = vcombine.low %v3976, %v3983
        %v4006 = vunpack.c.l.s4 1983009808
        %v4007 = vunpack.c.0.s8 %v4006
        %v4008 = vlaneseq
        %v4009 = vshrl.u32 %v4008, 7
        %v4010 = vsub.s32 %v4007, %v4009
        %v4011 = vrot.slane %v4004, %v4010
        %v4012 = vcombine.low %v4000, %v4001
        %v4014 = vunpack.c.l.s4 1983009808
        %v4015 = vunpack.c.0.s8 %v4014
        %v4016 = vlaneseq
        %v4017 = vshrl.u32 %v4016, 7
        %v4018 = vsub.s32 %v4015, %v4017
        %v4019 = vrot.slane %v4012, %v4018
        %v4020 = vcombine.low %v3992, %v3999
        %v4022 = vunpack.c.l.s4 1983009808
        %v4023 = vunpack.c.0.s8 %v4022
        %v4024 = vlaneseq
        %v4025 = vshrl.u32 %v4024, 7
        %v4026 = vsub.s32 %v4023, %v4025
        %v4027 = vrot.slane %v4020, %v4026
        %v4028 = vcombine.low %v4002, %v4003
        %v4030 = vunpack.c.l.s4 1983009808
        %v4031 = vunpack.c.0.s8 %v4030
        %v4032 = vlaneseq
        %v4033 = vshrl.u32 %v4032, 7
        %v4034 = vsub.s32 %v4031, %v4033
        %v4035 = vrot.slane %v4028, %v4034
        %v4036 = vcombine.low %v4011, %v4019
        %v4037 = vcombine.high %v4011, %v4019
        %v4039 = vunpack.c.l.s4 1934713408
        %v4040 = vunpack.c.0.s8 %v4039
        %v4041 = vlaneseq
        %v4042 = vshrl.u32 %v4041, 7
        %v4043 = vsub.s32 %v4040, %v4042
        %v4044 = vrot.slane %v4036, %v4043
        %v4046 = vunpack.c.l.s4 1934713408
        %v4047 = vunpack.c.0.s8 %v4046
        %v4048 = vlaneseq
        %v4049 = vshrl.u32 %v4048, 7
        %v4050 = vsub.s32 %v4047, %v4049
        %v4051 = vrot.slane %v4037, %v4050
        %v4052 = vcombine.low %v4027, %v4035
        %v4053 = vcombine.high %v4027, %v4035
        %v4055 = vunpack.c.l.s4 1934713408
        %v4056 = vunpack.c.0.s8 %v4055
        %v4057 = vlaneseq
        %v4058 = vshrl.u32 %v4057, 7
        %v4059 = vsub.s32 %v4056, %v4058
        %v4060 = vrot.slane %v4052, %v4059
        %v4062 = vunpack.c.l.s4 1934713408
        %v4063 = vunpack.c.0.s8 %v4062
        %v4064 = vlaneseq
        %v4065 = vshrl.u32 %v4064, 7
        %v4066 = vsub.s32 %v4063, %v4065
        %v4067 = vrot.slane %v4053, %v4066
        %v4068 = vcombine.low %v4044, %v4060
        %v4069 = vcombine.high %v4044, %v4060
        %v4070 = vcombine.low %v4051, %v4067
        %v4071 = vcombine.high %v4051, %v4067
        %4073 = vrot.lane.b32.xlu0 %v4069, 8
        %v4074 = vpop.permute.xlu0 %4073
        %4077 = vrot.lane.b32.xlu0 %v4070, 16
        %v4078 = vpop.permute.xlu0 %4077
        %4081 = vrot.lane.b32.xlu0 %v4071, 24
        %v4082 = vpop.permute.xlu0 %4081
        %v4084 = vsel %vm1710, %v4068, %v4074
        %v4085 = vsel %vm2504, %v4084, %v4078
        %v4086 = vsel %vm2506, %v4085, %v4082
        %v4088 = vlaneseq
        %v4089 = vshrl.u32 %v4088, 7
        %v4090 = vsub.s32 0, %v4089
        %v4091 = vrot.slane %v2634, %v4090
        %v4094 = vsel %vm1058, %v4086, 0
        %4096 = vmatprep.subr.mxu0 0.0
        %4097 = vmatpush1.msra.mxu0 %v2630
        %4098 = vmatprep.subr.mxu0 0.0
        %4099 = vmatpush1.msra.mxu0 %v2631
        %4100 = vmatprep.subr.mxu0 0.0
        %4101 = vmatpush1.msra.mxu0 %v2632
        %4102 = vmatprep.subr.mxu0 0.0
        %4103 = vmatpush1.msra.mxu0 %v2633
        %4104 = vmatprep.subr.mxu0 0.0
        %4105 = vmatpush1.msra.mxu0 0.0
        %4106 = vmatprep.subr.mxu0 0.0
        %4107 = vmatpush1.msra.mxu0 0.0
        %4108 = vmatprep.subr.mxu0 0.0
        %4109 = vmatpush1.msra.mxu0 0.0
        %4110 = vmatprep.subr.mxu0 0.0
        %4111 = vmatpush1.msra.mxu0 0.0
        %4112 = vmatprep.subr.mxu0 0.0
        %4113 = vmatpush1.msra.mxu0 0.0
        %4114 = vmatprep.subr.mxu0 0.0
        %4115 = vmatpush1.msra.mxu0 0.0
        %4116 = vmatprep.subr.mxu0 0.0
        %4117 = vmatpush1.msra.mxu0 0.0
        %4118 = vmatprep.subr.mxu0 0.0
        %4119 = vmatpush1.msra.mxu0 0.0
        %4120 = vmatprep.subr.mxu0 0.0
        %4121 = vmatpush1.msra.mxu0 0.0
        %4122 = vmatprep.subr.mxu0 0.0
        %4123 = vmatpush1.msra.mxu0 0.0
        %4124 = vmatprep.subr.mxu0 0.0
        %4125 = vmatpush1.msra.mxu0 0.0
        %4126 = vmatprep.subr.mxu0 0.0
        %4127 = vmatpush1.msra.mxu0 0.0
        %4128 = vmatprep.subr.mxu0 0.0
        %4129 = vmatpush1.msra.mxu0 0.0
        %4130 = vmatprep.subr.mxu0 0.0
        %4131 = vmatpush1.msra.mxu0 0.0
        %4132 = vmatprep.subr.mxu0 0.0
        %4133 = vmatpush1.msra.mxu0 0.0
        %4134 = vmatprep.subr.mxu0 0.0
        %4135 = vmatpush1.msra.mxu0 0.0
        %4136 = vmatprep.subr.mxu0 0.0
        %4137 = vmatpush1.msra.mxu0 0.0
        %4138 = vmatprep.subr.mxu0 0.0
        %4139 = vmatpush1.msra.mxu0 0.0
        %4140 = vmatprep.subr.mxu0 0.0
        %4141 = vmatpush1.msra.mxu0 0.0
        %4142 = vmatprep.subr.mxu0 0.0
        %4143 = vmatpush1.msra.mxu0 0.0
        %4144 = vmatprep.subr.mxu0 0.0
        %4145 = vmatpush1.msra.mxu0 0.0
        %4146 = vmatprep.subr.mxu0 0.0
        %4147 = vmatpush1.msra.mxu0 0.0
        %4148 = vmatprep.subr.mxu0 0.0
        %4149 = vmatpush1.msra.mxu0 0.0
        %4150 = vmatprep.subr.mxu0 0.0
        %4151 = vmatpush1.msra.mxu0 0.0
        %4152 = vmatprep.subr.mxu0 0.0
        %4153 = vmatpush1.msra.mxu0 0.0
        %4154 = vmatprep.subr.mxu0 0.0
        %4155 = vmatpush1.msra.mxu0 0.0
        %4156 = vmatprep.subr.mxu0 0.0
        %4157 = vmatpush1.msra.mxu0 0.0
        %4158 = vmatprep.subr.mxu0 0.0
        %4159 = vmatpush1.msra.mxu0 0.0
        %4160 = vmatprep.mubr.f32.mxu0 0.0
        %4161 = vmatmul.mubr.f32.gmra.mrb[0].mxu0 %v4094
        %v4162 = vpop.f32.mrb[0].mxu0
        %v4163 = vadd.f32 %v4091, %v4162
        %v4164 = vpop.f32.mrb[0].mxu0
        %4165 = vdwg.mxu0
        %v4166 = vadd.f32 %v4163, %v2617
        %v4167 = vld [vmem:[#allocation20] sm:$0x1]
        %v4168 = vld [vmem:[%s18] sm:$0x1]
        %v4169 = vsel %vm1058, %v4166, 0.0
        %4170 = vadd.xlane.f32.xlu0 %v4169
        %v4171 = vpop.xlane.xlu0 %4170
        %v4172 = vmul.f32 %v4171, %v2593
        %v4173 = vsub.f32 %v4166, %v4172
        %v4174 = vmul.f32 %v4173, %v4173
        %v4175 = vsel %vm1058, %v4174, 0.0
        %4176 = vadd.xlane.f32.xlu0 %v4175
        %v4177 = vpop.xlane.xlu0 %4176
        %v4178 = vmul.f32 %v4177, %v2593
        %v4179 = vadd.f32 %v4178, 1e-05
        %v4180 = vrsqrt.pop %v4179
        %v4181 = vmul.f32 %v4173, %v4180
        %v4183 = vlaneseq
        %v4184 = vshrl.u32 %v4183, 7
        %v4185 = vsub.s32 0, %v4184
        %v4186 = vrot.slane %v4167, %v4185
        %v4188 = vmul.f32 %v4181, %v4186
        %v4190 = vlaneseq
        %v4191 = vshrl.u32 %v4190, 7
        %v4192 = vsub.s32 0, %v4191
        %v4193 = vrot.slane %v4168, %v4192
        %v4195 = vadd.f32 %v4188, %v4193
        %v4196 = vld [vmem:[#allocation22] sm:$0xff]
        %v4197 = vld [vmem:[#allocation22 + $0x8] sm:$0xff]
        %v4198 = vld [vmem:[#allocation22 + $0x10] sm:$0xff]
        %v4199 = vld [vmem:[#allocation22 + $0x18] sm:$0xff]
        %v4200 = vld [vmem:[%s20] sm:$0x1]
        %v4202 = vlaneseq
        %v4203 = vshrl.u32 %v4202, 7
        %v4204 = vsub.s32 0, %v4203
        %v4205 = vrot.slane %v4200, %v4204
        %v4208 = vsel %vm1058, %v4195, 0
        %4210 = vmatprep.subr.mxu0 0.0
        %4211 = vmatpush1.msra.mxu0 %v4196
        %4212 = vmatprep.subr.mxu0 0.0
        %4213 = vmatpush1.msra.mxu0 %v4197
        %4214 = vmatprep.subr.mxu0 0.0
        %4215 = vmatpush1.msra.mxu0 %v4198
        %4216 = vmatprep.subr.mxu0 0.0
        %4217 = vmatpush1.msra.mxu0 %v4199
        %4218 = vmatprep.subr.mxu0 0.0
        %4219 = vmatpush1.msra.mxu0 0.0
        %4220 = vmatprep.subr.mxu0 0.0
        %4221 = vmatpush1.msra.mxu0 0.0
        %4222 = vmatprep.subr.mxu0 0.0
        %4223 = vmatpush1.msra.mxu0 0.0
        %4224 = vmatprep.subr.mxu0 0.0
        %4225 = vmatpush1.msra.mxu0 0.0
        %4226 = vmatprep.subr.mxu0 0.0
        %4227 = vmatpush1.msra.mxu0 0.0
        %4228 = vmatprep.subr.mxu0 0.0
        %4229 = vmatpush1.msra.mxu0 0.0
        %4230 = vmatprep.subr.mxu0 0.0
        %4231 = vmatpush1.msra.mxu0 0.0
        %4232 = vmatprep.subr.mxu0 0.0
        %4233 = vmatpush1.msra.mxu0 0.0
        %4234 = vmatprep.subr.mxu0 0.0
        %4235 = vmatpush1.msra.mxu0 0.0
        %4236 = vmatprep.subr.mxu0 0.0
        %4237 = vmatpush1.msra.mxu0 0.0
        %4238 = vmatprep.subr.mxu0 0.0
        %4239 = vmatpush1.msra.mxu0 0.0
        %4240 = vmatprep.subr.mxu0 0.0
        %4241 = vmatpush1.msra.mxu0 0.0
        %4242 = vmatprep.subr.mxu0 0.0
        %4243 = vmatpush1.msra.mxu0 0.0
        %4244 = vmatprep.subr.mxu0 0.0
        %4245 = vmatpush1.msra.mxu0 0.0
        %4246 = vmatprep.subr.mxu0 0.0
        %4247 = vmatpush1.msra.mxu0 0.0
        %4248 = vmatprep.subr.mxu0 0.0
        %4249 = vmatpush1.msra.mxu0 0.0
        %4250 = vmatprep.subr.mxu0 0.0
        %4251 = vmatpush1.msra.mxu0 0.0
        %4252 = vmatprep.subr.mxu0 0.0
        %4253 = vmatpush1.msra.mxu0 0.0
        %4254 = vmatprep.subr.mxu0 0.0
        %4255 = vmatpush1.msra.mxu0 0.0
        %4256 = vmatprep.subr.mxu0 0.0
        %4257 = vmatpush1.msra.mxu0 0.0
        %4258 = vmatprep.subr.mxu0 0.0
        %4259 = vmatpush1.msra.mxu0 0.0
        %4260 = vmatprep.subr.mxu0 0.0
        %4261 = vmatpush1.msra.mxu0 0.0
        %4262 = vmatprep.subr.mxu0 0.0
        %4263 = vmatpush1.msra.mxu0 0.0
        %4264 = vmatprep.subr.mxu0 0.0
        %4265 = vmatpush1.msra.mxu0 0.0
        %4266 = vmatprep.subr.mxu0 0.0
        %4267 = vmatpush1.msra.mxu0 0.0
        %4268 = vmatprep.subr.mxu0 0.0
        %4269 = vmatpush1.msra.mxu0 0.0
        %4270 = vmatprep.subr.mxu0 0.0
        %4271 = vmatpush1.msra.mxu0 0.0
        %4272 = vmatprep.subr.mxu0 0.0
        %4273 = vmatpush1.msra.mxu0 0.0
        %4274 = vmatprep.mubr.f32.mxu0 0.0
        %4275 = vmatmul.mubr.f32.gmra.mrb[0].mxu0 %v4208
        %v4276 = vpop.f32.mrb[0].mxu0
        %v4277 = vadd.f32 %v4205, %v4276
        %v4278 = vpop.f32.mrb[0].mxu0
        %4279 = vdwg.mxu0
        %v4280 = vmax.f32 %v4277, 0.0
        %v4281 = vld [vmem:[%s21] sm:$0xff]
        %v4282 = vld [vmem:[%s21 + $0x8] sm:$0xff]
        %v4283 = vld [vmem:[%s21 + $0x10] sm:$0xff]
        %v4284 = vld [vmem:[%s21 + $0x18] sm:$0xff]
        %v4285 = vld [vmem:[%s21 + $0x20] sm:$0xff]
        %v4286 = vld [vmem:[%s21 + $0x28] sm:$0xff]
        %v4287 = vld [vmem:[%s21 + $0x30] sm:$0xff]
        %v4288 = vld [vmem:[%s21 + $0x38] sm:$0xff]
        %v4289 = vld [vmem:[%s21 + $0x40] sm:$0xff]
        %v4290 = vld [vmem:[%s21 + $0x48] sm:$0xff]
        %v4291 = vld [vmem:[%s21 + $0x50] sm:$0xff]
        %v4292 = vld [vmem:[%s21 + $0x58] sm:$0xff]
        %v4293 = vld [vmem:[%s21 + $0x60] sm:$0xff]
        %v4294 = vld [vmem:[%s21 + $0x68] sm:$0xff]
        %v4295 = vld [vmem:[%s21 + $0x70] sm:$0xff]
        %v4296 = vld [vmem:[%s21 + $0x78] sm:$0xff]
        %v4297 = vld [vmem:[%s22] sm:$0x1]
        %v4299 = vlaneseq
        %v4300 = vshrl.u32 %v4299, 7
        %v4301 = vsub.s32 0, %v4300
        %v4302 = vrot.slane %v4297, %v4301
        %4304 = vmatprep.subr.mxu0 0.0
        %4305 = vmatpush1.msra.mxu0 %v4281
        %4306 = vmatprep.subr.mxu0 0.0
        %4307 = vmatpush1.msra.mxu0 %v4282
        %4308 = vmatprep.subr.mxu0 0.0
        %4309 = vmatpush1.msra.mxu0 %v4283
        %4310 = vmatprep.subr.mxu0 0.0
        %4311 = vmatpush1.msra.mxu0 %v4284
        %4312 = vmatprep.subr.mxu0 0.0
        %4313 = vmatpush1.msra.mxu0 %v4285
        %4314 = vmatprep.subr.mxu0 0.0
        %4315 = vmatpush1.msra.mxu0 %v4286
        %4316 = vmatprep.subr.mxu0 0.0
        %4317 = vmatpush1.msra.mxu0 %v4287
        %4318 = vmatprep.subr.mxu0 0.0
        %4319 = vmatpush1.msra.mxu0 %v4288
        %4320 = vmatprep.subr.mxu0 0.0
        %4321 = vmatpush1.msra.mxu0 %v4289
        %4322 = vmatprep.subr.mxu0 0.0
        %4323 = vmatpush1.msra.mxu0 %v4290
        %4324 = vmatprep.subr.mxu0 0.0
        %4325 = vmatpush1.msra.mxu0 %v4291
        %4326 = vmatprep.subr.mxu0 0.0
        %4327 = vmatpush1.msra.mxu0 %v4292
        %4328 = vmatprep.subr.mxu0 0.0
        %4329 = vmatpush1.msra.mxu0 %v4293
        %4330 = vmatprep.subr.mxu0 0.0
        %4331 = vmatpush1.msra.mxu0 %v4294
        %4332 = vmatprep.subr.mxu0 0.0
        %4333 = vmatpush1.msra.mxu0 %v4295
        %4334 = vmatprep.subr.mxu0 0.0
        %4335 = vmatpush1.msra.mxu0 %v4296
        %4336 = vmatprep.subr.mxu0 0.0
        %4337 = vmatpush1.msra.mxu0 0.0
        %4338 = vmatprep.subr.mxu0 0.0
        %4339 = vmatpush1.msra.mxu0 0.0
        %4340 = vmatprep.subr.mxu0 0.0
        %4341 = vmatpush1.msra.mxu0 0.0
        %4342 = vmatprep.subr.mxu0 0.0
        %4343 = vmatpush1.msra.mxu0 0.0
        %4344 = vmatprep.subr.mxu0 0.0
        %4345 = vmatpush1.msra.mxu0 0.0
        %4346 = vmatprep.subr.mxu0 0.0
        %4347 = vmatpush1.msra.mxu0 0.0
        %4348 = vmatprep.subr.mxu0 0.0
        %4349 = vmatpush1.msra.mxu0 0.0
        %4350 = vmatprep.subr.mxu0 0.0
        %4351 = vmatpush1.msra.mxu0 0.0
        %4352 = vmatprep.subr.mxu0 0.0
        %4353 = vmatpush1.msra.mxu0 0.0
        %4354 = vmatprep.subr.mxu0 0.0
        %4355 = vmatpush1.msra.mxu0 0.0
        %4356 = vmatprep.subr.mxu0 0.0
        %4357 = vmatpush1.msra.mxu0 0.0
        %4358 = vmatprep.subr.mxu0 0.0
        %4359 = vmatpush1.msra.mxu0 0.0
        %4360 = vmatprep.subr.mxu0 0.0
        %4361 = vmatpush1.msra.mxu0 0.0
        %4362 = vmatprep.subr.mxu0 0.0
        %4363 = vmatpush1.msra.mxu0 0.0
        %4364 = vmatprep.subr.mxu0 0.0
        %4365 = vmatpush1.msra.mxu0 0.0
        %4366 = vmatprep.subr.mxu0 0.0
        %4367 = vmatpush1.msra.mxu0 0.0
        %4368 = vmatprep.mubr.f32.mxu0 0.0
        %4369 = vmatmul.mubr.f32.gmra.mrb[0].mxu0 %v4280
        %v4370 = vpop.f32.mrb[0].mxu0
        %v4371 = vadd.f32 %v4302, %v4370
        %v4372 = vpop.f32.mrb[0].mxu0
        %4373 = vdwg.mxu0
        %v4374 = vadd.f32 %v4371, %v4195
        %v4375 = vld [vmem:[%s23] sm:$0x1]
        %v4376 = vld [vmem:[%s24] sm:$0x1]
        %v4377 = vsel %vm1058, %v4374, 0.0
        %4378 = vadd.xlane.f32.xlu0 %v4377
        %v4379 = vpop.xlane.xlu0 %4378
        %v4380 = vmul.f32 %v4379, %v2593
        %v4381 = vsub.f32 %v4374, %v4380
        %v4382 = vmul.f32 %v4381, %v4381
        %v4383 = vsel %vm1058, %v4382, 0.0
        %4384 = vadd.xlane.f32.xlu0 %v4383
        %v4385 = vpop.xlane.xlu0 %4384
        %v4386 = vmul.f32 %v4385, %v2593
        %v4387 = vadd.f32 %v4386, 1e-05
        %v4388 = vrsqrt.pop %v4387
        %v4389 = vmul.f32 %v4381, %v4388
        %v4391 = vlaneseq
        %v4392 = vshrl.u32 %v4391, 7
        %v4393 = vsub.s32 0, %v4392
        %v4394 = vrot.slane %v4375, %v4393
        %v4396 = vmul.f32 %v4389, %v4394
        %v4398 = vlaneseq
        %v4399 = vshrl.u32 %v4398, 7
        %v4400 = vsub.s32 0, %v4399
        %v4401 = vrot.slane %v4376, %v4400
        %v4403 = vadd.f32 %v4396, %v4401
        %v4404 = vcombine.high %v4403, 0.0
        %v4406 = vunpack.c.l.s4 1983009808
        %v4407 = vunpack.c.0.s8 %v4406
        %v4408 = vlaneseq
        %v4409 = vshrl.u32 %v4408, 7
        %v4410 = vsub.s32 %v4407, %v4409
        %v4411 = vrot.slane %v4403, %v4410
        %v4413 = vunpack.c.l.s4 1983009808
        %v4414 = vunpack.c.0.s8 %v4413
        %v4415 = vlaneseq
        %v4416 = vshrl.u32 %v4415, 7
        %v4417 = vsub.s32 %v4414, %v4416
        %v4418 = vrot.slane %v4404, %v4417
        %v4419 = vcombine.high %v4411, 0.0
        %v4421 = vunpack.c.l.s4 1934713408
        %v4422 = vunpack.c.0.s8 %v4421
        %v4423 = vlaneseq
        %v4424 = vshrl.u32 %v4423, 7
        %v4425 = vsub.s32 %v4422, %v4424
        %v4426 = vrot.slane %v4411, %v4425
        %v4428 = vunpack.c.l.s4 1934713408
        %v4429 = vunpack.c.0.s8 %v4428
        %v4430 = vlaneseq
        %v4431 = vshrl.u32 %v4430, 7
        %v4432 = vsub.s32 %v4429, %v4431
        %v4433 = vrot.slane %v4419, %v4432
        %v4434 = vcombine.high %v4418, 0.0
        %v4436 = vunpack.c.l.s4 1934713408
        %v4437 = vunpack.c.0.s8 %v4436
        %v4438 = vlaneseq
        %v4439 = vshrl.u32 %v4438, 7
        %v4440 = vsub.s32 %v4437, %v4439
        %v4441 = vrot.slane %v4418, %v4440
        %v4443 = vunpack.c.l.s4 1934713408
        %v4444 = vunpack.c.0.s8 %v4443
        %v4445 = vlaneseq
        %v4446 = vshrl.u32 %v4445, 7
        %v4447 = vsub.s32 %v4444, %v4446
        %v4448 = vrot.slane %v4434, %v4447
        %v4449 = vcombine.high %v4426, 0.0
        %v4450 = vcombine.high %v4433, 0.0
        %v4451 = vcombine.high %v4441, 0.0
        %v4452 = vcombine.high %v4448, 0.0
        %4454 = vrot.lane.b32.xlu0 %v4449, 32
        %v4455 = vpop.permute.xlu0 %4454
        %4458 = vrot.lane.b32.xlu0 %v4433, 64
        %v4459 = vpop.permute.xlu0 %4458
        %4462 = vrot.lane.b32.xlu0 %v4450, 96
        %v4463 = vpop.permute.xlu0 %4462
        %4466 = vrot.lane.b32.xlu0 %v4451, 32
        %v4467 = vpop.permute.xlu0 %4466
        %4470 = vrot.lane.b32.xlu0 %v4448, 64
        %v4471 = vpop.permute.xlu0 %4470
        %4474 = vrot.lane.b32.xlu0 %v4452, 96
        %v4475 = vpop.permute.xlu0 %4474
        %v4477 = vsel %vm1058, %v4426, %v4455
        %vm4478 = vcmask 523264
        %v4479 = vsel %vm4478, %v4477, %v4459
        %vm4480 = vcmask 785408
        %v4481 = vsel %vm4480, %v4479, %v4463
        %v4482 = vsel %vm1058, %v4441, %v4467
        %v4483 = vsel %vm4478, %v4482, %v4471
        %v4484 = vsel %vm4480, %v4483, %v4475
        %v4487 = vcombine.low %v4481, %v4484
        %v4489 = vunpack.c.l.s4 1966171168
        %v4490 = vunpack.c.0.s8 %v4489
        %v4491 = vlaneseq
        %v4492 = vshrl.u32 %v4491, 7
        %v4493 = vsub.s32 %v4490, %v4492
        %v4494 = vrot.slane %v4487, %v4493
        %v4496 = vunpack.c.l.s4 1966171168
        %v4497 = vunpack.c.0.s8 %v4496
        %v4498 = vlaneseq
        %v4499 = vshrl.u32 %v4498, 7
        %v4500 = vsub.s32 %v4497, %v4499
        %v4501 = vrot.slane %v4494, %v4500
        %v4503 = vlaneseq
        %vm4504 = vcmp.ge.s32.totalorder %v4503, 0
        %vm4505 = vcmp.lt.s32.totalorder %v4503, 256
        %vm4506 = vmand %vm4504, %vm4505
        %4507 = vst.msk [vmem:[%s1027] sm:$0x3] %vm4506, %v4501
        %s4508 = sand.u32 %s610, 1
        %s4509 = scalar_lea.sflag [#allocation4], %s4508
        %s4510 = sand.u32 %s610, 1
        %s4511 = smul.addr %s4510, 2
        %s4512 = scalar_lea.vmem [#allocation23], %s4511
        // Predicated region
        $region173: #{tpu_custom_call.1} parent=119 // pred_check
          %p4513 = pneg %p620
        $region174: #{tpu_custom_call.1} parent=119 // pred_check_branch
          %4515 = sbr.rel (%p4513) target = $region176
        $region175: #{tpu_custom_call.1} parent=119 // pred_region
          %s4517 = ssub.s32 32, 32
          %4518 = vsyncadd %s4509, %s4517
          %s4519 = smul.addr %s52, 2
          %s4520 = smul.addr %s4519, 16
          %s4521 = scalar_lea.hbm %s25, %s4520
          %s4523 = sshll.u32 %s4512, 4
          %s4524 = int_to_ptr.vmem [resolvable:$true] %s4523
          %4526 = dma.vmem_to_hbm [thread:$0]  %s4524, 32, %s4521, %s4509
        $region176: #{tpu_custom_call.1} parent=119 // pred_fallthru
          _
      $region120: #{tpu_custom_call.1} parent=5 // pred_fallthru
        _
      %p4527 = scmp.le.s32.totalorder 2, %s47
      // Predicated region
      $region177: #{tpu_custom_call.1} parent=5 // pred_check
        %p4528 = pneg %p4527
      $region178: #{tpu_custom_call.1} parent=5 // pred_check_branch
        %4530 = sbr.rel (%p4528) target = $region180
      $region179: #{tpu_custom_call.1} parent=5 // pred_region
        %s4531 = ssub.s32 %s47, 2
        // Predicated region
        $region181: #{tpu_custom_call.1} parent=179 // pred_check
          %p4532 = pneg %p626
        $region182: #{tpu_custom_call.1} parent=179 // pred_check_branch
          %4534 = sbr.rel (%p4532) target = $region184
        $region183: #{tpu_custom_call.1} parent=179 // pred_region
          %s4535 = sand.u32 %s611, 1
          %s4536 = scalar_lea.sflag [#allocation4], %s4535
          %s4537 = sand.u32 %s611, 1
          %s4538 = smul.addr %s4537, 2
          %s4539 = scalar_lea.vmem [#allocation23], %s4538
          %4540 = dma.done %s4536, 32
        $region184: #{tpu_custom_call.1} parent=179 // pred_fallthru
          _
      $region180: #{tpu_custom_call.1} parent=5 // pred_fallthru
        _
    $region6: #{tpu_custom_call.1} parent=1 // loop_footer
      %s51 = sadd.s32 1, %s47
    $region7: #{tpu_custom_call.1} parent=1 // loop_footer_branch
      %46 = sbr.rel target = $region3
    $region8: #{tpu_custom_call.1} parent=1 // loop_exit
      _
    %4541 = vsyncpa [#allocation3], 1
    %s4542 = scalar_lea.sflag [#allocation3], 1
    %4543 = vsyncpa %s4542, 1
    %4544 = vsyncpa [#allocation6], 1
    %s4545 = scalar_lea.sflag [#allocation6], 1
    %4546 = vsyncpa %s4545, 1
    %4547 = vsyncpa [#allocation9], 1
    %s4548 = scalar_lea.sflag [#allocation9], 1
    %4549 = vsyncpa %s4548, 1
    %4550 = vsyncpa [#allocation12], 1
    %4551 = vsyncpa [#allocation15], 1
    %4552 = vsyncpa [#allocation18], 1
    %4553 = vsyncpa [#allocation21], 1
    %4554 = vsyncpa [#allocation4], 1
    %s4555 = scalar_lea.sflag [#allocation4], 1
    %4556 = vsyncpa %s4555, 1

</llo_original>
